<compile_context>
chip_gen: v7x
topology: tpu7x:2x2x1
jax: 0.10.0
libtpu: 0.0.40
codegen_flags: <defaults>
</compile_context>

<pallas_src>
import functools
import math

import numpy as np

import jax
import jax.numpy as jnp
from jax import lax
from jax.experimental import pallas as pl
from jax.experimental.pallas import tpu as pltpu

# ------------------------- configuration (small shapes) ----------------------
NPLANES_IN = 4
NPLANES_OUT = 3
NPLANES_INTERM = 8
FEATURES = 8           # DnCNN hidden features
DEPTH = 3              # DnCNN depth
RESIDUAL = True        # global residual of N3Net
KERNEL = 3

K_NEIGH = 2            # N3Block: number of neighbors
PATCHSIZE = 8
STRIDE = 4
EMBED_FEATURES = 8
EMBED_OUT = 8
EMBED_DEPTH = 2

LANES = 128            # pad all conv outputs to lane-dense 128-wide stores


# ------------------------------ Pallas kernels --------------------------------
def conv_bias_kernel(a_ref, w_ref, b_ref, o_ref, *, relu):
    # a: (TM, K) im2col rows, w: (K, 128) zero-padded, b: (1, 128)
    acc = jnp.dot(a_ref[...], w_ref[...], preferred_element_type=jnp.float32)
    acc = acc + b_ref[...]
    if relu:
        acc = jnp.maximum(acc, 0.0)
    o_ref[...] = acc.astype(o_ref.dtype)


def conv_bias_res_kernel(a_ref, w_ref, b_ref, r_ref, o_ref, *, relu):
    # same as conv_bias_kernel with a fused residual add (r zero-padded to 128 lanes)
    acc = jnp.dot(a_ref[...], w_ref[...], preferred_element_type=jnp.float32)
    acc = acc + b_ref[...]
    if relu:
        acc = jnp.maximum(acc, 0.0)
    acc = acc + r_ref[...]
    o_ref[...] = acc.astype(o_ref.dtype)


def conv_bn_relu_kernel(a_ref, w_ref, g_ref, beta_ref, o_ref, *, eps):
    # raw conv (no bias) -> train-mode BatchNorm over all M rows -> ReLU, fully fused.
    # grid must be (1,) so the batch statistics cover the whole (B*H*W, C) output.
    acc = jnp.dot(a_ref[...], w_ref[...], preferred_element_type=jnp.float32)
    mu = jnp.mean(acc, axis=0, keepdims=True)
    var = jnp.maximum(jnp.mean(acc * acc, axis=0, keepdims=True) - mu * mu, 0.0)
    inv = lax.rsqrt(var + eps)
    o_ref[...] = jnp.maximum((acc - mu) * (g_ref[...] * inv) + beta_ref[...],
                             0.0).astype(o_ref.dtype)


def n3_agg_kernel(xe_ref, y_ref, o_ref, *, k):
    # xe: (1, N, Ep) patch embeddings (ye == xe), y: (1, N, F) patches to aggregate
    xe = xe_ref[0]
    yv = y_ref[0]
    xx = jnp.sum(xe * xe, axis=1, keepdims=True)                  # (N, 1)
    xy = lax.dot_general(xe, xe, (((1,), (1,)), ((), ())),
                         preferred_element_type=jnp.float32)      # (N, N) = xe @ xe.T
    dist = jnp.maximum(xx + xx.T - 2.0 * xy, 0.0)                 # squared euclid
    n = dist.shape[0]
    row = lax.broadcasted_iota(jnp.int32, (n, n), 0)
    col = lax.broadcasted_iota(jnp.int32, (n, n), 1)
    # exclude self-match (index_neighbours exclude_self=True); temperature = 1
    logits = jnp.where(row == col, jnp.float32(-1e30), -dist)
    for j in range(k):   # continuous k-NN relaxation (static unroll, k small)
        m = jnp.max(logits, axis=1, keepdims=True)
        e = jnp.exp(logits - m)
        w = e * pl.reciprocal(jnp.sum(e, axis=1, keepdims=True), approx=True)
        z = jnp.dot(w, yv, preferred_element_type=jnp.float32)    # (N, F)
        o_ref[0, j] = z.astype(o_ref.dtype)
        logits = logits + jnp.log(jnp.maximum(1.0 - w, 1e-12))


def fold_kernel(z_ref, x_ref, fm_ref, o_ref, *, k, c):
    # z: (1, k, N*p*p, C) aggregated patches, x: (1, H*W, C) passthrough image rows,
    # fm: (H*W, N*p*p) overlap-averaging fold matrix (1/count baked in).
    fm = fm_ref[...]
    o_ref[0, :, 0:c] = x_ref[0]
    for j in range(k):
        o_ref[0, :, (j + 1) * c:(j + 2) * c] = jnp.dot(
            fm, z_ref[0, j], preferred_element_type=jnp.float32).astype(o_ref.dtype)


# ------------------------------ Pallas wrappers --------------------------------
def _pad_lanes(x, width=LANES):
    return jnp.pad(x, ((0, 0), (0, width - x.shape[1])))


def im2col_nhwc(x_rows, B, H, W, C, ksize):
    """(B*H*W, C) rows -> (B*H*W, ksize*ksize*C) im2col rows (NHWC, 'same' padding)."""
    pad = ksize // 2
    x = x_rows.reshape(B, H, W, C)
    xp = jnp.pad(x, ((0, 0), (pad, pad), (pad, pad), (0, 0)))
    cols = [xp[:, dy:dy + H, dx:dx + W, :] for dy in range(ksize) for dx in range(ksize)]
    return jnp.concatenate(cols, axis=-1).reshape(B * H * W, ksize * ksize * C)


def conv_rows(x_rows, B, H, W, weight, bias, *, relu=False, residual=None):
    """3x3 'same' conv on (B*H*W, Cin) rows -> (B*H*W, Cout) rows.

    bias / ReLU / residual are fused into the Pallas matmul epilogue; the output is
    written lane-dense (128 wide) and sliced back to Cout outside the kernel.
    """
    Cout, Cin, kh, kw = weight.shape
    a = im2col_nhwc(x_rows, B, H, W, Cin, kh)
    M, K = a.shape
    wmat = _pad_lanes(weight.transpose(2, 3, 1, 0).reshape(kh * kw * Cin, Cout))
    bvec = bias if bias is not None else jnp.zeros((Cout,), jnp.float32)
    bvec = jnp.pad(bvec, (0, LANES - Cout)).reshape(1, LANES)

    TM = 256 if M % 256 == 0 else M       # 2 parallel grid steps -> both v7x TCs
    grid = (M // TM,)
    specs = [pl.BlockSpec((TM, K), lambda i: (i, 0)),
             pl.BlockSpec((K, LANES), lambda i: (0, 0)),
             pl.BlockSpec((1, LANES), lambda i: (0, 0))]
    args = [a, wmat, bvec]
    if residual is None:
        kern = functools.partial(conv_bias_kernel, relu=relu)
    else:
        kern = functools.partial(conv_bias_res_kernel, relu=relu)
        specs.append(pl.BlockSpec((TM, LANES), lambda i: (i, 0)))
        args.append(_pad_lanes(residual))

    out = pl.pallas_call(
        kern,
        out_shape=jax.ShapeDtypeStruct((M, LANES), jnp.float32),
        grid=grid,
        in_specs=specs,
        out_specs=pl.BlockSpec((TM, LANES), lambda i: (i, 0)),
        compiler_params=pltpu.CompilerParams(dimension_semantics=("parallel",)),
    )(*args)
    return out[:, :Cout]


def conv_bn_relu_rows(x_rows, B, H, W, weight, gamma, beta, eps=1e-5):
    """Fused conv(no bias) + train-mode BatchNorm + ReLU on (B*H*W, C) rows."""
    Cout, Cin, kh, kw = weight.shape
    a = im2col_nhwc(x_rows, B, H, W, Cin, kh)
    M, K = a.shape
    wmat = _pad_lanes(weight.transpose(2, 3, 1, 0).reshape(kh * kw * Cin, Cout))
    g = jnp.pad(gamma, (0, LANES - Cout)).reshape(1, LANES)
    bt = jnp.pad(beta, (0, LANES - Cout)).reshape(1, LANES)
    out = pl.pallas_call(
        functools.partial(conv_bn_relu_kernel, eps=eps),
        out_shape=jax.ShapeDtypeStruct((M, LANES), jnp.float32),
        grid=(1,),
        in_specs=[pl.BlockSpec((M, K), lambda i: (0, 0)),
                  pl.BlockSpec((K, LANES), lambda i: (0, 0)),
                  pl.BlockSpec((1, LANES), lambda i: (0, 0)),
                  pl.BlockSpec((1, LANES), lambda i: (0, 0))],
        out_specs=pl.BlockSpec((M, LANES), lambda i: (0, 0)),
        compiler_params=pltpu.CompilerParams(dimension_semantics=("arbitrary",)),
    )(a, wmat, g, bt)
    return out[:, :Cout]


def n3_aggregate_pallas(xe_p, y_p, k):
    """xe_p: (B, N, p*p*E), y_p: (B, N, p*p*C) -> (B, k, N, p*p*C)."""
    B, N, Ep = xe_p.shape
    F = y_p.shape[2]
    return pl.pallas_call(
        functools.partial(n3_agg_kernel, k=k),
        out_shape=jax.ShapeDtypeStruct((B, k, N, F), jnp.float32),
        grid=(B,),
        in_specs=[pl.BlockSpec((1, N, Ep), lambda b: (b, 0, 0)),
                  pl.BlockSpec((1, N, F), lambda b: (b, 0, 0))],
        out_specs=pl.BlockSpec((1, k, N, F), lambda b: (b, 0, 0, 0)),
        compiler_params=pltpu.CompilerParams(dimension_semantics=("parallel",)),
    )(xe_p, y_p)


def fold_pallas(z_r, x3, fm, k, c):
    """z_r: (B, k, N*p*p, C), x3: (B, H*W, C), fm: (H*W, N*p*p) -> (B, H*W, (k+1)*C)."""
    B, _, Npp, _ = z_r.shape
    HW = x3.shape[1]
    return pl.pallas_call(
        functools.partial(fold_kernel, k=k, c=c),
        out_shape=jax.ShapeDtypeStruct((B, HW, (k + 1) * c), jnp.float32),
        grid=(B,),
        in_specs=[pl.BlockSpec((1, k, Npp, c), lambda b: (b, 0, 0, 0)),
                  pl.BlockSpec((1, HW, c), lambda b: (b, 0, 0)),
                  pl.BlockSpec((HW, Npp), lambda b: (0, 0))],
        out_specs=pl.BlockSpec((1, HW, (k + 1) * c), lambda b: (b, 0, 0)),
        compiler_params=pltpu.CompilerParams(dimension_semantics=("parallel",)),
    )(z_r, x3, fm)


# ------------------------------- patch utilities -------------------------------
def im2patch_nhwc(x, p, s):
    """(B, H, W, C) -> (B, Npatches, p*p*C), pixel-major / channel-minor patch vectors."""
    B, H, W, C = x.shape
    nh = (H - p) // s + 1
    nw = (W - p) // s + 1
    pats = [x[:, i * s:i * s + p, j * s:j * s + p, :].reshape(B, p * p * C)
            for i in range(nh) for j in range(nw)]
    return jnp.stack(pats, axis=1)


@functools.lru_cache(maxsize=None)
def _fold_matrix_np(H, W, p, s):
    """Static (H*W, N*p*p) overlap-averaging fold matrix (1/count baked in)."""
    nh = (H - p) // s + 1
    nw = (W - p) // s + 1
    count = np.zeros((H, W), np.float32)
    for i in range(nh):
        for j in range(nw):
            count[i * s:i * s + p, j * s:j * s + p] += 1.0
    fm = np.zeros((H * W, nh * nw * p * p), np.float32)
    n = 0
    for i in range(nh):
        for j in range(nw):
            for py in range(p):
                for px in range(p):
                    y, x = i * s + py, j * s + px
                    fm[y * W + x, n * p * p + py * p + px] = 1.0 / count[y, x]
            n += 1
    return fm


# ------------------------------- parameter init --------------------------------
def init_conv(key, cin, cout, ksize, bias=True):
    kw_, kb = jax.random.split(key)
    std = math.sqrt(2.0 / (ksize * ksize * cout))
    w = std * jax.random.normal(kw_, (cout, cin, ksize, ksize), jnp.float32)
    b = 0.01 * jax.random.normal(kb, (cout,), jnp.float32) if bias else None
    return w, b


def init_bn(key, c, b_min=0.025):
    g = jax.random.normal(key, (c,), jnp.float32) * math.sqrt(2.0 / (9 * c))
    g = jnp.maximum(jnp.abs(g), b_min)   # dncnn_batchnorm_init: abs with min magnitude
    beta = jnp.zeros((c,), jnp.float32)
    return g, beta


def init_dncnn(key, nin, nout, features, ksize, depth):
    keys = jax.random.split(key, 2 * depth)
    p = {}
    p["conv1_w"], p["conv1_b"] = init_conv(keys[0], nin, features, ksize, bias=True)
    mids = []
    for i in range(depth - 2):
        w, _ = init_conv(keys[1 + 2 * i], features, features, ksize, bias=False)
        g, b = init_bn(keys[2 + 2 * i], features)
        mids.append((w, g, b))
    p["mid"] = mids
    p["conv2_w"], p["conv2_b"] = init_conv(keys[-1], features, nout, ksize, bias=True)
    return p


def init_embedcnn(key, nin, nout, features, ksize, depth):
    keys = jax.random.split(key, 2 * depth + 2)
    mids = []
    chan = nin
    for i in range(depth - 1):
        w, _ = init_conv(keys[2 * i], chan, features, ksize, bias=False)
        g, b = init_bn(keys[2 * i + 1], features)
        mids.append((w, g, b))
        chan = features
    lw, lb = init_conv(keys[-1], chan, nout, ksize, bias=True)
    return {"mid": mids, "last_w": lw, "last_b": lb}


def init_n3net(key):
    k1, k2, k3 = jax.random.split(key, 3)
    return {
        "dncnn0": init_dncnn(k1, NPLANES_IN, NPLANES_INTERM, FEATURES, KERNEL, DEPTH),
        "n3block0": {
            "embedcnn": init_embedcnn(k2, NPLANES_INTERM, EMBED_OUT,
                                      EMBED_FEATURES, KERNEL, EMBED_DEPTH)
        },
        "dncnn1": init_dncnn(k3, (K_NEIGH + 1) * NPLANES_INTERM,
                             NPLANES_OUT, FEATURES, KERNEL, DEPTH),
    }


# --------------------------------- forward pass --------------------------------
def dncnn_forward(x_rows, B, H, W, params, nplanes_in, nplanes_out,
                  residual=True, extra_residual=None):
    # conv1 + ReLU (fused);  mid: conv + BN + ReLU (fused);  conv2 + residual (fused)
    h = conv_rows(x_rows, B, H, W, params["conv1_w"], params["conv1_b"], relu=True)
    for (w, g, b) in params["mid"]:
        h = conv_bn_relu_rows(h, B, H, W, w, g, b)
    res = None
    if residual or extra_residual is not None:
        res = jnp.zeros((x_rows.shape[0], nplanes_out), jnp.float32)
        if residual:
            ns = min(nplanes_in, nplanes_out)    # nplanes_residual is None
            res = res.at[:, :ns].add(x_rows[:, :ns])
        if extra_residual is not None:
            ne = extra_residual.shape[1]
            res = res.at[:, :ne].add(extra_residual)
    return conv_rows(h, B, H, W, params["conv2_w"], params["conv2_b"],
                     relu=False, residual=res)


def embedcnn_forward(x_rows, B, H, W, params):
    h = x_rows
    for (w, g, b) in params["mid"]:
        h = conv_bn_relu_rows(h, B, H, W, w, g, b)
    return conv_rows(h, B, H, W, params["last_w"], params["last_b"], relu=False)


def n3block_forward(x_rows, B, H, W, params, k, patchsize, stride):
    if k <= 0:
        return x_rows
    C = x_rows.shape[1]
    xe_rows = embedcnn_forward(x_rows, B, H, W, params["embedcnn"])
    x_img = x_rows.reshape(B, H, W, C)
    xe_img = xe_rows.reshape(B, H, W, xe_rows.shape[1])
    xe_p = im2patch_nhwc(xe_img, patchsize, stride)           # (B, N, p*p*E)
    y_p = im2patch_nhwc(x_img, patchsize, stride)             # (B, N, p*p*C)
    N = y_p.shape[1]
    # NOTE: the 3x3 patch grid is far smaller than nl_match_window=15, so the
    # matching window covers every patch (minus self).
    z = n3_aggregate_pallas(xe_p, y_p, k)                     # (B, k, N, p*p*C)
    z_r = z.reshape(B, k, N * patchsize * patchsize, C)       # (B, k, N*p*p, C)
    fm = jnp.asarray(_fold_matrix_np(H, W, patchsize, stride))
    out = fold_pallas(z_r, x_rows.reshape(B, H * W, C), fm, k, C)
    return out.reshape(B * H * W, (k + 1) * C)                # [x, agg_1, ..., agg_k]


@jax.jit
def n3net_forward(x, params):
    B, Cin, H, W = x.shape
    x_rows = x.transpose(0, 2, 3, 1).reshape(B * H * W, Cin)  # single entry transpose
    h = dncnn_forward(x_rows, B, H, W, params["dncnn0"],
                      NPLANES_IN, NPLANES_INTERM, residual=True)
    h = n3block_forward(h, B, H, W, params["n3block0"], K_NEIGH, PATCHSIZE, STRIDE)
    nin2 = (K_NEIGH + 1) * NPLANES_INTERM
    extra = x_rows[:, :min(NPLANES_IN, NPLANES_OUT)] if RESIDUAL else None
    h = dncnn_forward(h, B, H, W, params["dncnn1"], nin2, NPLANES_OUT,
                      residual=True, extra_residual=extra)    # global residual fused in
    return h.reshape(B, H, W, NPLANES_OUT).transpose(0, 3, 1, 2)


# ------------------------------------ main --------------------------------------
if __name__ == "__main__":
    key = jax.random.PRNGKey(0)
    kx, kp = jax.random.split(key)
    params = init_n3net(kp)
    x = jax.random.normal(kx, (2, NPLANES_IN, 16, 16), jnp.float32)

    out = n3net_forward(x, params)
    out = jax.block_until_ready(out)
    assert out.shape == (2, NPLANES_OUT, 16, 16), out.shape
    assert bool(jnp.all(jnp.isfinite(out)))
    print("KERNEL_OK")
</pallas_src>

<mosaic_0001>
module attributes {stable_mosaic.version = 11 : i64} {
  func.func @conv_bias_kernel(%arg0: i32, %arg1: memref<256x36xf32, #tpu.memory_space<vmem>>, %arg2: memref<36x128xf32, #tpu.memory_space<vmem>>, %arg3: memref<1x128xf32, #tpu.memory_space<vmem>>, %arg4: memref<256x128xf32, #tpu.memory_space<vmem>>) attributes {dimension_semantics = [#tpu.dimension_semantics<parallel>], iteration_bounds = array<i64: 2>, scalar_prefetch = 0 : i64, scratch_operands = 0 : i64, tpu.core_type = #tpu.core_type<tc>, window_params = [{transform_indices = @transform_0, window_bounds = array<i64: 256, 36>}, {pipeline_mode = #tpu.pipeline_mode<synchronous>, transform_indices = @transform_1, window_bounds = array<i64: 36, 128>}, {pipeline_mode = #tpu.pipeline_mode<synchronous>, transform_indices = @transform_2, window_bounds = array<i64: 1, 128>}, {transform_indices = @transform_3, window_bounds = array<i64: 256, 128>}]} {
    %c0 = arith.constant 0 : index
    %c0_0 = arith.constant 0 : index
    %0 = vector.load %arg1[%c0, %c0_0] : memref<256x36xf32, #tpu.memory_space<vmem>>, vector<256x36xf32>
    %c0_1 = arith.constant 0 : index
    %c0_2 = arith.constant 0 : index
    %1 = vector.load %arg2[%c0_1, %c0_2] : memref<36x128xf32, #tpu.memory_space<vmem>>, vector<36x128xf32>
    %cst = arith.constant dense<0.000000e+00> : vector<256x128xf32>
    %2 = tpu.matmul %0, %1, %cst {dimension_numbers = #tpu.dot_dimension_numbers<[1], [0], [0], [1], [0, 0, 1, 1], [], []>} : vector<256x36xf32>, vector<36x128xf32>, vector<256x128xf32> -> vector<256x128xf32>
    %c0_3 = arith.constant 0 : index
    %c0_4 = arith.constant 0 : index
    %3 = vector.load %arg3[%c0_3, %c0_4] : memref<1x128xf32, #tpu.memory_space<vmem>>, vector<1x128xf32>
    %4 = vector.broadcast %3 : vector<1x128xf32> to vector<256x128xf32>
    %5 = arith.addf %2, %4 : vector<256x128xf32>
    %cst_5 = arith.constant 0.000000e+00 : f32
    %6 = vector.broadcast %cst_5 : f32 to vector<256x128xf32>
    %7 = arith.maximumf %5, %6 : vector<256x128xf32>
    %c0_6 = arith.constant 0 : index
    %c0_7 = arith.constant 0 : index
    %8 = vector.load %arg4[%c0_6, %c0_7] : memref<256x128xf32, #tpu.memory_space<vmem>>, vector<256x128xf32>
    tpu.vector_store %arg4[%c0_6, %c0_7], %7 {strides = array<i32>} : memref<256x128xf32, #tpu.memory_space<vmem>>, vector<256x128xf32>,
    return
  }
  func.func @transform_0(%arg0: i32) -> (i32, i32) {
    %c0_i32 = arith.constant 0 : i32
    %c0_i32_0 = arith.constant 0 : i32
    return %arg0, %c0_i32 : i32, i32
  }
  func.func @transform_1(%arg0: i32) -> (i32, i32) {
    %c0_i32 = arith.constant 0 : i32
    %c0_i32_0 = arith.constant 0 : i32
    %c0_i32_1 = arith.constant 0 : i32
    return %c0_i32, %c0_i32_0 : i32, i32
  }
  func.func @transform_2(%arg0: i32) -> (i32, i32) {
    %c0_i32 = arith.constant 0 : i32
    %c0_i32_0 = arith.constant 0 : i32
    %c0_i32_1 = arith.constant 0 : i32
    return %c0_i32, %c0_i32_0 : i32, i32
  }
  func.func @transform_3(%arg0: i32) -> (i32, i32) {
    %c0_i32 = arith.constant 0 : i32
    %c0_i32_0 = arith.constant 0 : i32
    return %arg0, %c0_i32 : i32, i32
  }
}

module attributes {stable_mosaic.version = 11 : i64} {
  func.func @conv_bn_relu_kernel(%arg0: i32, %arg1: memref<512x72xf32, #tpu.memory_space<vmem>>, %arg2: memref<72x128xf32, #tpu.memory_space<vmem>>, %arg3: memref<1x128xf32, #tpu.memory_space<vmem>>, %arg4: memref<1x128xf32, #tpu.memory_space<vmem>>, %arg5: memref<512x128xf32, #tpu.memory_space<vmem>>) attributes {dimension_semantics = [#tpu.dimension_semantics<arbitrary>], iteration_bounds = array<i64: 1>, scalar_prefetch = 0 : i64, scratch_operands = 0 : i64, tpu.core_type = #tpu.core_type<tc>, window_params = [{pipeline_mode = #tpu.pipeline_mode<synchronous>, transform_indices = @transform_0, window_bounds = array<i64: 512, 72>}, {pipeline_mode = #tpu.pipeline_mode<synchronous>, transform_indices = @transform_1, window_bounds = array<i64: 72, 128>}, {pipeline_mode = #tpu.pipeline_mode<synchronous>, transform_indices = @transform_2, window_bounds = array<i64: 1, 128>}, {pipeline_mode = #tpu.pipeline_mode<synchronous>, transform_indices = @transform_3, window_bounds = array<i64: 1, 128>}, {pipeline_mode = #tpu.pipeline_mode<synchronous>, transform_indices = @transform_4, window_bounds = array<i64: 512, 128>}]} {
    %c0 = arith.constant 0 : index
    %c0_0 = arith.constant 0 : index
    %0 = vector.load %arg1[%c0, %c0_0] : memref<512x72xf32, #tpu.memory_space<vmem>>, vector<512x72xf32>
    %c0_1 = arith.constant 0 : index
    %c0_2 = arith.constant 0 : index
    %1 = vector.load %arg2[%c0_1, %c0_2] : memref<72x128xf32, #tpu.memory_space<vmem>>, vector<72x128xf32>
    %cst = arith.constant dense<0.000000e+00> : vector<512x128xf32>
    %2 = tpu.matmul %0, %1, %cst {dimension_numbers = #tpu.dot_dimension_numbers<[1], [0], [0], [1], [0, 0, 1, 1], [], []>} : vector<512x72xf32>, vector<72x128xf32>, vector<512x128xf32> -> vector<512x128xf32>
    %cst_3 = arith.constant dense<0.000000e+00> : vector<128xf32>
    %3 = vector.multi_reduction <add>, %2, %cst_3 [0] : vector<512x128xf32> to vector<128xf32>
    %4 = vector.shape_cast %3 : vector<128xf32> to vector<1x128xf32>
    %cst_4 = arith.constant 5.120000e+02 : f32
    %5 = vector.broadcast %cst_4 : f32 to vector<1x128xf32>
    %6 = arith.divf %4, %5 : vector<1x128xf32>
    %7 = arith.mulf %2, %2 : vector<512x128xf32>
    %cst_5 = arith.constant dense<0.000000e+00> : vector<128xf32>
    %8 = vector.multi_reduction <add>, %7, %cst_5 [0] : vector<512x128xf32> to vector<128xf32>
    %9 = vector.shape_cast %8 : vector<128xf32> to vector<1x128xf32>
    %cst_6 = arith.constant 5.120000e+02 : f32
    %10 = vector.broadcast %cst_6 : f32 to vector<1x128xf32>
    %11 = arith.divf %9, %10 : vector<1x128xf32>
    %12 = arith.mulf %6, %6 : vector<1x128xf32>
    %13 = arith.subf %11, %12 : vector<1x128xf32>
    %cst_7 = arith.constant 0.000000e+00 : f32
    %14 = vector.broadcast %cst_7 : f32 to vector<1x128xf32>
    %15 = arith.maximumf %13, %14 : vector<1x128xf32>
    %cst_8 = arith.constant 9.99999974E-6 : f32
    %16 = vector.broadcast %cst_8 : f32 to vector<1x128xf32>
    %17 = arith.addf %15, %16 : vector<1x128xf32>
    %18 = math.rsqrt %17 : vector<1x128xf32>
    %19 = vector.broadcast %6 : vector<1x128xf32> to vector<512x128xf32>
    %20 = arith.subf %2, %19 : vector<512x128xf32>
    %c0_9 = arith.constant 0 : index
    %c0_10 = arith.constant 0 : index
    %21 = vector.load %arg3[%c0_9, %c0_10] : memref<1x128xf32, #tpu.memory_space<vmem>>, vector<1x128xf32>
    %22 = arith.mulf %21, %18 : vector<1x128xf32>
    %23 = vector.broadcast %22 : vector<1x128xf32> to vector<512x128xf32>
    %24 = arith.mulf %20, %23 : vector<512x128xf32>
    %c0_11 = arith.constant 0 : index
    %c0_12 = arith.constant 0 : index
    %25 = vector.load %arg4[%c0_11, %c0_12] : memref<1x128xf32, #tpu.memory_space<vmem>>, vector<1x128xf32>
    %26 = vector.broadcast %25 : vector<1x128xf32> to vector<512x128xf32>
    %27 = arith.addf %24, %26 : vector<512x128xf32>
    %cst_13 = arith.constant 0.000000e+00 : f32
    %28 = vector.broadcast %cst_13 : f32 to vector<512x128xf32>
    %29 = arith.maximumf %27, %28 : vector<512x128xf32>
    %c0_14 = arith.constant 0 : index
    %c0_15 = arith.constant 0 : index
    %30 = vector.load %arg5[%c0_14, %c0_15] : memref<512x128xf32, #tpu.memory_space<vmem>>, vector<512x128xf32>
    tpu.vector_store %arg5[%c0_14, %c0_15], %29 {strides = array<i32>} : memref<512x128xf32, #tpu.memory_space<vmem>>, vector<512x128xf32>,
    return
  }
  func.func @transform_0(%arg0: i32) -> (i32, i32) {
    %c0_i32 = arith.constant 0 : i32
    %c0_i32_0 = arith.constant 0 : i32
    %c0_i32_1 = arith.constant 0 : i32
    return %c0_i32, %c0_i32_0 : i32, i32
  }
  func.func @transform_1(%arg0: i32) -> (i32, i32) {
    %c0_i32 = arith.constant 0 : i32
    %c0_i32_0 = arith.constant 0 : i32
    %c0_i32_1 = arith.constant 0 : i32
    return %c0_i32, %c0_i32_0 : i32, i32
  }
  func.func @transform_2(%arg0: i32) -> (i32, i32) {
    %c0_i32 = arith.constant 0 : i32
    %c0_i32_0 = arith.constant 0 : i32
    %c0_i32_1 = arith.constant 0 : i32
    return %c0_i32, %c0_i32_0 : i32, i32
  }
  func.func @transform_3(%arg0: i32) -> (i32, i32) {
    %c0_i32 = arith.constant 0 : i32
    %c0_i32_0 = arith.constant 0 : i32
    %c0_i32_1 = arith.constant 0 : i32
    return %c0_i32, %c0_i32_0 : i32, i32
  }
  func.func @transform_4(%arg0: i32) -> (i32, i32) {
    %c0_i32 = arith.constant 0 : i32
    %c0_i32_0 = arith.constant 0 : i32
    %c0_i32_1 = arith.constant 0 : i32
    return %c0_i32, %c0_i32_0 : i32, i32
  }
}

module attributes {stable_mosaic.version = 11 : i64} {
  func.func @conv_bias_res_kernel(%arg0: i32, %arg1: memref<256x72xf32, #tpu.memory_space<vmem>>, %arg2: memref<72x128xf32, #tpu.memory_space<vmem>>, %arg3: memref<1x128xf32, #tpu.memory_space<vmem>>, %arg4: memref<256x128xf32, #tpu.memory_space<vmem>>, %arg5: memref<256x128xf32, #tpu.memory_space<vmem>>) attributes {dimension_semantics = [#tpu.dimension_semantics<parallel>], iteration_bounds = array<i64: 2>, scalar_prefetch = 0 : i64, scratch_operands = 0 : i64, tpu.core_type = #tpu.core_type<tc>, window_params = [{transform_indices = @transform_0, window_bounds = array<i64: 256, 72>}, {pipeline_mode = #tpu.pipeline_mode<synchronous>, transform_indices = @transform_1, window_bounds = array<i64: 72, 128>}, {pipeline_mode = #tpu.pipeline_mode<synchronous>, transform_indices = @transform_2, window_bounds = array<i64: 1, 128>}, {transform_indices = @transform_3, window_bounds = array<i64: 256, 128>}, {transform_indices = @transform_4, window_bounds = array<i64: 256, 128>}]} {
    %c0 = arith.constant 0 : index
    %c0_0 = arith.constant 0 : index
    %0 = vector.load %arg1[%c0, %c0_0] : memref<256x72xf32, #tpu.memory_space<vmem>>, vector<256x72xf32>
    %c0_1 = arith.constant 0 : index
    %c0_2 = arith.constant 0 : index
    %1 = vector.load %arg2[%c0_1, %c0_2] : memref<72x128xf32, #tpu.memory_space<vmem>>, vector<72x128xf32>
    %cst = arith.constant dense<0.000000e+00> : vector<256x128xf32>
    %2 = tpu.matmul %0, %1, %cst {dimension_numbers = #tpu.dot_dimension_numbers<[1], [0], [0], [1], [0, 0, 1, 1], [], []>} : vector<256x72xf32>, vector<72x128xf32>, vector<256x128xf32> -> vector<256x128xf32>
    %c0_3 = arith.constant 0 : index
    %c0_4 = arith.constant 0 : index
    %3 = vector.load %arg3[%c0_3, %c0_4] : memref<1x128xf32, #tpu.memory_space<vmem>>, vector<1x128xf32>
    %4 = vector.broadcast %3 : vector<1x128xf32> to vector<256x128xf32>
    %5 = arith.addf %2, %4 : vector<256x128xf32>
    %c0_5 = arith.constant 0 : index
    %c0_6 = arith.constant 0 : index
    %6 = vector.load %arg4[%c0_5, %c0_6] : memref<256x128xf32, #tpu.memory_space<vmem>>, vector<256x128xf32>
    %7 = arith.addf %5, %6 : vector<256x128xf32>
    %c0_7 = arith.constant 0 : index
    %c0_8 = arith.constant 0 : index
    %8 = vector.load %arg5[%c0_7, %c0_8] : memref<256x128xf32, #tpu.memory_space<vmem>>, vector<256x128xf32>
    tpu.vector_store %arg5[%c0_7, %c0_8], %7 {strides = array<i32>} : memref<256x128xf32, #tpu.memory_space<vmem>>, vector<256x128xf32>,
    return
  }
  func.func @transform_0(%arg0: i32) -> (i32, i32) {
    %c0_i32 = arith.constant 0 : i32
    %c0_i32_0 = arith.constant 0 : i32
    return %arg0, %c0_i32 : i32, i32
  }
  func.func @transform_1(%arg0: i32) -> (i32, i32) {
    %c0_i32 = arith.constant 0 : i32
    %c0_i32_0 = arith.constant 0 : i32
    %c0_i32_1 = arith.constant 0 : i32
    return %c0_i32, %c0_i32_0 : i32, i32
  }
  func.func @transform_2(%arg0: i32) -> (i32, i32) {
    %c0_i32 = arith.constant 0 : i32
    %c0_i32_0 = arith.constant 0 : i32
    %c0_i32_1 = arith.constant 0 : i32
    return %c0_i32, %c0_i32_0 : i32, i32
  }
  func.func @transform_3(%arg0: i32) -> (i32, i32) {
    %c0_i32 = arith.constant 0 : i32
    %c0_i32_0 = arith.constant 0 : i32
    return %arg0, %c0_i32 : i32, i32
  }
  func.func @transform_4(%arg0: i32) -> (i32, i32) {
    %c0_i32 = arith.constant 0 : i32
    %c0_i32_0 = arith.constant 0 : i32
    return %arg0, %c0_i32 : i32, i32
  }
}

module attributes {stable_mosaic.version = 11 : i64} {
  func.func @conv_bias_kernel(%arg0: i32, %arg1: memref<256x72xf32, #tpu.memory_space<vmem>>, %arg2: memref<72x128xf32, #tpu.memory_space<vmem>>, %arg3: memref<1x128xf32, #tpu.memory_space<vmem>>, %arg4: memref<256x128xf32, #tpu.memory_space<vmem>>) attributes {dimension_semantics = [#tpu.dimension_semantics<parallel>], iteration_bounds = array<i64: 2>, scalar_prefetch = 0 : i64, scratch_operands = 0 : i64, tpu.core_type = #tpu.core_type<tc>, window_params = [{transform_indices = @transform_0, window_bounds = array<i64: 256, 72>}, {pipeline_mode = #tpu.pipeline_mode<synchronous>, transform_indices = @transform_1, window_bounds = array<i64: 72, 128>}, {pipeline_mode = #tpu.pipeline_mode<synchronous>, transform_indices = @transform_2, window_bounds = array<i64: 1, 128>}, {transform_indices = @transform_3, window_bounds = array<i64: 256, 128>}]} {
    %c0 = arith.constant 0 : index
    %c0_0 = arith.constant 0 : index
    %0 = vector.load %arg1[%c0, %c0_0] : memref<256x72xf32, #tpu.memory_space<vmem>>, vector<256x72xf32>
    %c0_1 = arith.constant 0 : index
    %c0_2 = arith.constant 0 : index
    %1 = vector.load %arg2[%c0_1, %c0_2] : memref<72x128xf32, #tpu.memory_space<vmem>>, vector<72x128xf32>
    %cst = arith.constant dense<0.000000e+00> : vector<256x128xf32>
    %2 = tpu.matmul %0, %1, %cst {dimension_numbers = #tpu.dot_dimension_numbers<[1], [0], [0], [1], [0, 0, 1, 1], [], []>} : vector<256x72xf32>, vector<72x128xf32>, vector<256x128xf32> -> vector<256x128xf32>
    %c0_3 = arith.constant 0 : index
    %c0_4 = arith.constant 0 : index
    %3 = vector.load %arg3[%c0_3, %c0_4] : memref<1x128xf32, #tpu.memory_space<vmem>>, vector<1x128xf32>
    %4 = vector.broadcast %3 : vector<1x128xf32> to vector<256x128xf32>
    %5 = arith.addf %2, %4 : vector<256x128xf32>
    %c0_5 = arith.constant 0 : index
    %c0_6 = arith.constant 0 : index
    %6 = vector.load %arg4[%c0_5, %c0_6] : memref<256x128xf32, #tpu.memory_space<vmem>>, vector<256x128xf32>
    tpu.vector_store %arg4[%c0_5, %c0_6], %5 {strides = array<i32>} : memref<256x128xf32, #tpu.memory_space<vmem>>, vector<256x128xf32>,
    return
  }
  func.func @transform_0(%arg0: i32) -> (i32, i32) {
    %c0_i32 = arith.constant 0 : i32
    %c0_i32_0 = arith.constant 0 : i32
    return %arg0, %c0_i32 : i32, i32
  }
  func.func @transform_1(%arg0: i32) -> (i32, i32) {
    %c0_i32 = arith.constant 0 : i32
    %c0_i32_0 = arith.constant 0 : i32
    %c0_i32_1 = arith.constant 0 : i32
    return %c0_i32, %c0_i32_0 : i32, i32
  }
  func.func @transform_2(%arg0: i32) -> (i32, i32) {
    %c0_i32 = arith.constant 0 : i32
    %c0_i32_0 = arith.constant 0 : i32
    %c0_i32_1 = arith.constant 0 : i32
    return %c0_i32, %c0_i32_0 : i32, i32
  }
  func.func @transform_3(%arg0: i32) -> (i32, i32) {
    %c0_i32 = arith.constant 0 : i32
    %c0_i32_0 = arith.constant 0 : i32
    return %arg0, %c0_i32 : i32, i32
  }
}

module attributes {stable_mosaic.version = 11 : i64} {
  func.func @n3_agg_kernel(%arg0: i32, %arg1: memref<1x9x512xf32, #tpu.memory_space<vmem>>, %arg2: memref<1x9x512xf32, #tpu.memory_space<vmem>>, %arg3: memref<1x2x9x512xf32, #tpu.memory_space<vmem>>) attributes {dimension_semantics = [#tpu.dimension_semantics<parallel>], iteration_bounds = array<i64: 2>, scalar_prefetch = 0 : i64, scratch_operands = 0 : i64, tpu.core_type = #tpu.core_type<tc>, window_params = [{transform_indices = @transform_0, window_bounds = array<i64: 1, 9, 512>}, {transform_indices = @transform_1, window_bounds = array<i64: 1, 9, 512>}, {transform_indices = @transform_2, window_bounds = array<i64: 1, 2, 9, 512>}]} {
    %c0 = arith.constant 0 : index
    %c0_0 = arith.constant 0 : index
    %c0_1 = arith.constant 0 : index
    %0 = vector.load %arg1[%c0, %c0_0, %c0_1] : memref<1x9x512xf32, #tpu.memory_space<vmem>>, vector<1x9x512xf32>
    %1 = vector.shape_cast %0 : vector<1x9x512xf32> to vector<9x512xf32>
    %c0_2 = arith.constant 0 : index
    %c0_3 = arith.constant 0 : index
    %c0_4 = arith.constant 0 : index
    %2 = vector.load %arg2[%c0_2, %c0_3, %c0_4] : memref<1x9x512xf32, #tpu.memory_space<vmem>>, vector<1x9x512xf32>
    %3 = vector.shape_cast %2 : vector<1x9x512xf32> to vector<9x512xf32>
    %4 = arith.mulf %1, %1 : vector<9x512xf32>
    %cst = arith.constant dense<0.000000e+00> : vector<9xf32>
    %5 = vector.multi_reduction <add>, %4, %cst [1] : vector<9x512xf32> to vector<9xf32>
    %6 = vector.shape_cast %5 : vector<9xf32> to vector<9x1xf32>
    %cst_5 = arith.constant dense<0.000000e+00> : vector<9x9xf32>
    %7 = tpu.matmul %1, %1, %cst_5 {dimension_numbers = #tpu.dot_dimension_numbers<[1], [1], [0], [0], [0, 0, 1, 0], [], []>} : vector<9x512xf32>, vector<9x512xf32>, vector<9x9xf32> -> vector<9x9xf32>
    %8 = tpu.transpose %6, [1, 0] : vector<9x1xf32> -> vector<1x9xf32>
    %9 = vector.broadcast %6 : vector<9x1xf32> to vector<9x9xf32>
    %10 = vector.broadcast %8 : vector<1x9xf32> to vector<9x9xf32>
    %11 = arith.addf %9, %10 : vector<9x9xf32>
    %cst_6 = arith.constant 2.000000e+00 : f32
    %12 = vector.broadcast %cst_6 : f32 to vector<9x9xf32>
    %13 = arith.mulf %12, %7 : vector<9x9xf32>
    %14 = arith.subf %11, %13 : vector<9x9xf32>
    %cst_7 = arith.constant 0.000000e+00 : f32
    %15 = vector.broadcast %cst_7 : f32 to vector<9x9xf32>
    %16 = arith.maximumf %14, %15 : vector<9x9xf32>
    %17 = tpu.iota {dimensions = array<i32: 0>} : vector<9x9xi32>
    %18 = tpu.iota {dimensions = array<i32: 1>} : vector<9x9xi32>
    %19 = arith.cmpi eq, %17, %18 : vector<9x9xi32>
    %cst_8 = arith.constant 0.000000e+00 : f32
    %20 = vector.broadcast %cst_8 : f32 to vector<9x9xf32>
    %21 = arith.subf %20, %16 : vector<9x9xf32>
    %cst_9 = arith.constant -1.000000e+30 : f32
    %22 = vector.broadcast %cst_9 : f32 to vector<9x9xf32>
    %23 = arith.select %19, %22, %21 : vector<9x9xi1>, vector<9x9xf32>
    %cst_10 = arith.constant dense<0xFF800000> : vector<9xf32>
    %24 = vector.multi_reduction <maximumf>, %23, %cst_10 [1] : vector<9x9xf32> to vector<9xf32>
    %25 = vector.shape_cast %24 : vector<9xf32> to vector<9x1xf32>
    %26 = vector.broadcast %25 : vector<9x1xf32> to vector<9x9xf32>
    %27 = arith.subf %23, %26 : vector<9x9xf32>
    %28 = math.exp %27 : vector<9x9xf32>
    %cst_11 = arith.constant dense<0.000000e+00> : vector<9xf32>
    %29 = vector.multi_reduction <add>, %28, %cst_11 [1] : vector<9x9xf32> to vector<9xf32>
    %30 = vector.shape_cast %29 : vector<9xf32> to vector<9x1xf32>
    %31 = tpu.reciprocal %30 {approx = true} : vector<9x1xf32> -> vector<9x1xf32>
    %32 = vector.broadcast %31 : vector<9x1xf32> to vector<9x9xf32>
    %33 = arith.mulf %28, %32 : vector<9x9xf32>
    %cst_12 = arith.constant dense<0.000000e+00> : vector<9x512xf32>
    %34 = tpu.matmul %33, %3, %cst_12 {dimension_numbers = #tpu.dot_dimension_numbers<[1], [0], [0], [1], [0, 0, 1, 1], [], []>} : vector<9x9xf32>, vector<9x512xf32>, vector<9x512xf32> -> vector<9x512xf32>
    %c0_13 = arith.constant 0 : index
    %c0_14 = arith.constant 0 : index
    %c0_15 = arith.constant 0 : index
    %c0_16 = arith.constant 0 : index
    %35 = vector.load %arg3[%c0_13, %c0_14, %c0_15, %c0_16] : memref<1x2x9x512xf32, #tpu.memory_space<vmem>>, vector<1x1x9x512xf32>
    %36 = vector.shape_cast %35 : vector<1x1x9x512xf32> to vector<9x512xf32>
    %37 = vector.shape_cast %34 : vector<9x512xf32> to vector<1x1x9x512xf32>
    tpu.vector_store %arg3[%c0_13, %c0_14, %c0_15, %c0_16], %37 {strides = array<i32>} : memref<1x2x9x512xf32, #tpu.memory_space<vmem>>, vector<1x1x9x512xf32>,
    %cst_17 = arith.constant 1.000000e+00 : f32
    %38 = vector.broadcast %cst_17 : f32 to vector<9x9xf32>
    %39 = arith.subf %38, %33 : vector<9x9xf32>
    %cst_18 = arith.constant 9.99999996E-13 : f32
    %40 = vector.broadcast %cst_18 : f32 to vector<9x9xf32>
    %41 = arith.maximumf %39, %40 : vector<9x9xf32>
    %42 = math.log %41 : vector<9x9xf32>
    %43 = arith.addf %23, %42 : vector<9x9xf32>
    %cst_19 = arith.constant dense<0xFF800000> : vector<9xf32>
    %44 = vector.multi_reduction <maximumf>, %43, %cst_19 [1] : vector<9x9xf32> to vector<9xf32>
    %45 = vector.shape_cast %44 : vector<9xf32> to vector<9x1xf32>
    %46 = vector.broadcast %45 : vector<9x1xf32> to vector<9x9xf32>
    %47 = arith.subf %43, %46 : vector<9x9xf32>
    %48 = math.exp %47 : vector<9x9xf32>
    %cst_20 = arith.constant dense<0.000000e+00> : vector<9xf32>
    %49 = vector.multi_reduction <add>, %48, %cst_20 [1] : vector<9x9xf32> to vector<9xf32>
    %50 = vector.shape_cast %49 : vector<9xf32> to vector<9x1xf32>
    %51 = tpu.reciprocal %50 {approx = true} : vector<9x1xf32> -> vector<9x1xf32>
    %52 = vector.broadcast %51 : vector<9x1xf32> to vector<9x9xf32>
    %53 = arith.mulf %48, %52 : vector<9x9xf32>
    %cst_21 = arith.constant dense<0.000000e+00> : vector<9x512xf32>
    %54 = tpu.matmul %53, %3, %cst_21 {dimension_numbers = #tpu.dot_dimension_numbers<[1], [0], [0], [1], [0, 0, 1, 1], [], []>} : vector<9x9xf32>, vector<9x512xf32>, vector<9x512xf32> -> vector<9x512xf32>
    %c0_22 = arith.constant 0 : index
    %c1 = arith.constant 1 : index
    %c0_23 = arith.constant 0 : index
    %c0_24 = arith.constant 0 : index
    %55 = vector.load %arg3[%c0_22, %c1, %c0_23, %c0_24] : memref<1x2x9x512xf32, #tpu.memory_space<vmem>>, vector<1x1x9x512xf32>
    %56 = vector.shape_cast %55 : vector<1x1x9x512xf32> to vector<9x512xf32>
    %57 = vector.shape_cast %54 : vector<9x512xf32> to vector<1x1x9x512xf32>
    tpu.vector_store %arg3[%c0_22, %c1, %c0_23, %c0_24], %57 {strides = array<i32>} : memref<1x2x9x512xf32, #tpu.memory_space<vmem>>, vector<1x1x9x512xf32>,
    return
  }
  func.func @transform_0(%arg0: i32) -> (i32, i32, i32) {
    %c0_i32 = arith.constant 0 : i32
    %c0_i32_0 = arith.constant 0 : i32
    %c0_i32_1 = arith.constant 0 : i32
    return %arg0, %c0_i32, %c0_i32_0 : i32, i32, i32
  }
  func.func @transform_1(%arg0: i32) -> (i32, i32, i32) {
    %c0_i32 = arith.constant 0 : i32
    %c0_i32_0 = arith.constant 0 : i32
    %c0_i32_1 = arith.constant 0 : i32
    return %arg0, %c0_i32, %c0_i32_0 : i32, i32, i32
  }
  func.func @transform_2(%arg0: i32) -> (i32, i32, i32, i32) {
    %c0_i32 = arith.constant 0 : i32
    %c0_i32_0 = arith.constant 0 : i32
    %c0_i32_1 = arith.constant 0 : i32
    %c0_i32_2 = arith.constant 0 : i32
    return %arg0, %c0_i32, %c0_i32_0, %c0_i32_1 : i32, i32, i32, i32
  }
}

module attributes {stable_mosaic.version = 11 : i64} {
  func.func @fold_kernel(%arg0: i32, %arg1: memref<1x2x576x8xf32, #tpu.memory_space<vmem>>, %arg2: memref<1x256x8xf32, #tpu.memory_space<vmem>>, %arg3: memref<256x576xf32, #tpu.memory_space<vmem>>, %arg4: memref<1x256x24xf32, #tpu.memory_space<vmem>>) attributes {dimension_semantics = [#tpu.dimension_semantics<parallel>], iteration_bounds = array<i64: 2>, scalar_prefetch = 0 : i64, scratch_operands = 0 : i64, tpu.core_type = #tpu.core_type<tc>, window_params = [{transform_indices = @transform_0, window_bounds = array<i64: 1, 2, 576, 8>}, {transform_indices = @transform_1, window_bounds = array<i64: 1, 256, 8>}, {pipeline_mode = #tpu.pipeline_mode<synchronous>, transform_indices = @transform_2, window_bounds = array<i64: 256, 576>}, {transform_indices = @transform_3, window_bounds = array<i64: 1, 256, 24>}]} {
    %c0 = arith.constant 0 : index
    %c0_0 = arith.constant 0 : index
    %0 = vector.load %arg3[%c0, %c0_0] : memref<256x576xf32, #tpu.memory_space<vmem>>, vector<256x576xf32>
    %c0_1 = arith.constant 0 : index
    %c0_2 = arith.constant 0 : index
    %c0_3 = arith.constant 0 : index
    %1 = vector.load %arg2[%c0_1, %c0_2, %c0_3] : memref<1x256x8xf32, #tpu.memory_space<vmem>>, vector<1x256x8xf32>
    %2 = vector.shape_cast %1 : vector<1x256x8xf32> to vector<256x8xf32>
    %c0_4 = arith.constant 0 : index
    %c0_5 = arith.constant 0 : index
    %c0_6 = arith.constant 0 : index
    %3 = vector.load %arg4[%c0_4, %c0_5, %c0_6] : memref<1x256x24xf32, #tpu.memory_space<vmem>>, vector<1x256x8xf32>
    %4 = vector.shape_cast %3 : vector<1x256x8xf32> to vector<256x8xf32>
    %5 = vector.shape_cast %2 : vector<256x8xf32> to vector<1x256x8xf32>
    tpu.vector_store %arg4[%c0_4, %c0_5, %c0_6], %5 {strides = array<i32>} : memref<1x256x24xf32, #tpu.memory_space<vmem>>, vector<1x256x8xf32>,
    %c0_7 = arith.constant 0 : index
    %c0_8 = arith.constant 0 : index
    %c0_9 = arith.constant 0 : index
    %c0_10 = arith.constant 0 : index
    %6 = vector.load %arg1[%c0_7, %c0_8, %c0_9, %c0_10] : memref<1x2x576x8xf32, #tpu.memory_space<vmem>>, vector<1x1x576x8xf32>
    %7 = vector.shape_cast %6 : vector<1x1x576x8xf32> to vector<576x8xf32>
    %cst = arith.constant dense<0.000000e+00> : vector<256x8xf32>
    %8 = tpu.matmul %0, %7, %cst {dimension_numbers = #tpu.dot_dimension_numbers<[1], [0], [0], [1], [0, 0, 1, 1], [], []>} : vector<256x576xf32>, vector<576x8xf32>, vector<256x8xf32> -> vector<256x8xf32>
    %c0_11 = arith.constant 0 : index
    %c0_12 = arith.constant 0 : index
    %c8 = arith.constant 8 : index
    %9 = vector.load %arg4[%c0_11, %c0_12, %c8] : memref<1x256x24xf32, #tpu.memory_space<vmem>>, vector<1x256x8xf32>
    %10 = vector.shape_cast %9 : vector<1x256x8xf32> to vector<256x8xf32>
    %11 = vector.shape_cast %8 : vector<256x8xf32> to vector<1x256x8xf32>
    tpu.vector_store %arg4[%c0_11, %c0_12, %c8], %11 {strides = array<i32>} : memref<1x256x24xf32, #tpu.memory_space<vmem>>, vector<1x256x8xf32>,
    %c0_13 = arith.constant 0 : index
    %c1 = arith.constant 1 : index
    %c0_14 = arith.constant 0 : index
    %c0_15 = arith.constant 0 : index
    %12 = vector.load %arg1[%c0_13, %c1, %c0_14, %c0_15] : memref<1x2x576x8xf32, #tpu.memory_space<vmem>>, vector<1x1x576x8xf32>
    %13 = vector.shape_cast %12 : vector<1x1x576x8xf32> to vector<576x8xf32>
    %cst_16 = arith.constant dense<0.000000e+00> : vector<256x8xf32>
    %14 = tpu.matmul %0, %13, %cst_16 {dimension_numbers = #tpu.dot_dimension_numbers<[1], [0], [0], [1], [0, 0, 1, 1], [], []>} : vector<256x576xf32>, vector<576x8xf32>, vector<256x8xf32> -> vector<256x8xf32>
    %c0_17 = arith.constant 0 : index
    %c0_18 = arith.constant 0 : index
    %c16 = arith.constant 16 : index
    %15 = vector.load %arg4[%c0_17, %c0_18, %c16] : memref<1x256x24xf32, #tpu.memory_space<vmem>>, vector<1x256x8xf32>
    %16 = vector.shape_cast %15 : vector<1x256x8xf32> to vector<256x8xf32>
    %17 = vector.shape_cast %14 : vector<256x8xf32> to vector<1x256x8xf32>
    tpu.vector_store %arg4[%c0_17, %c0_18, %c16], %17 {strides = array<i32>} : memref<1x256x24xf32, #tpu.memory_space<vmem>>, vector<1x256x8xf32>,
    return
  }
  func.func @transform_0(%arg0: i32) -> (i32, i32, i32, i32) {
    %c0_i32 = arith.constant 0 : i32
    %c0_i32_0 = arith.constant 0 : i32
    %c0_i32_1 = arith.constant 0 : i32
    %c0_i32_2 = arith.constant 0 : i32
    return %arg0, %c0_i32, %c0_i32_0, %c0_i32_1 : i32, i32, i32, i32
  }
  func.func @transform_1(%arg0: i32) -> (i32, i32, i32) {
    %c0_i32 = arith.constant 0 : i32
    %c0_i32_0 = arith.constant 0 : i32
    %c0_i32_1 = arith.constant 0 : i32
    return %arg0, %c0_i32, %c0_i32_0 : i32, i32, i32
  }
  func.func @transform_2(%arg0: i32) -> (i32, i32) {
    %c0_i32 = arith.constant 0 : i32
    %c0_i32_0 = arith.constant 0 : i32
    %c0_i32_1 = arith.constant 0 : i32
    return %c0_i32, %c0_i32_0 : i32, i32
  }
  func.func @transform_3(%arg0: i32) -> (i32, i32, i32) {
    %c0_i32 = arith.constant 0 : i32
    %c0_i32_0 = arith.constant 0 : i32
    %c0_i32_1 = arith.constant 0 : i32
    return %arg0, %c0_i32, %c0_i32_0 : i32, i32, i32
  }
}

module attributes {stable_mosaic.version = 11 : i64} {
  func.func @conv_bias_kernel(%arg0: i32, %arg1: memref<256x216xf32, #tpu.memory_space<vmem>>, %arg2: memref<216x128xf32, #tpu.memory_space<vmem>>, %arg3: memref<1x128xf32, #tpu.memory_space<vmem>>, %arg4: memref<256x128xf32, #tpu.memory_space<vmem>>) attributes {dimension_semantics = [#tpu.dimension_semantics<parallel>], iteration_bounds = array<i64: 2>, scalar_prefetch = 0 : i64, scratch_operands = 0 : i64, tpu.core_type = #tpu.core_type<tc>, window_params = [{transform_indices = @transform_0, window_bounds = array<i64: 256, 216>}, {pipeline_mode = #tpu.pipeline_mode<synchronous>, transform_indices = @transform_1, window_bounds = array<i64: 216, 128>}, {pipeline_mode = #tpu.pipeline_mode<synchronous>, transform_indices = @transform_2, window_bounds = array<i64: 1, 128>}, {transform_indices = @transform_3, window_bounds = array<i64: 256, 128>}]} {
    %c0 = arith.constant 0 : index
    %c0_0 = arith.constant 0 : index
    %0 = vector.load %arg1[%c0, %c0_0] : memref<256x216xf32, #tpu.memory_space<vmem>>, vector<256x216xf32>
    %c0_1 = arith.constant 0 : index
    %c0_2 = arith.constant 0 : index
    %1 = vector.load %arg2[%c0_1, %c0_2] : memref<216x128xf32, #tpu.memory_space<vmem>>, vector<216x128xf32>
    %cst = arith.constant dense<0.000000e+00> : vector<256x128xf32>
    %2 = tpu.matmul %0, %1, %cst {dimension_numbers = #tpu.dot_dimension_numbers<[1], [0], [0], [1], [0, 0, 1, 1], [], []>} : vector<256x216xf32>, vector<216x128xf32>, vector<256x128xf32> -> vector<256x128xf32>
    %c0_3 = arith.constant 0 : index
    %c0_4 = arith.constant 0 : index
    %3 = vector.load %arg3[%c0_3, %c0_4] : memref<1x128xf32, #tpu.memory_space<vmem>>, vector<1x128xf32>
    %4 = vector.broadcast %3 : vector<1x128xf32> to vector<256x128xf32>
    %5 = arith.addf %2, %4 : vector<256x128xf32>
    %cst_5 = arith.constant 0.000000e+00 : f32
    %6 = vector.broadcast %cst_5 : f32 to vector<256x128xf32>
    %7 = arith.maximumf %5, %6 : vector<256x128xf32>
    %c0_6 = arith.constant 0 : index
    %c0_7 = arith.constant 0 : index
    %8 = vector.load %arg4[%c0_6, %c0_7] : memref<256x128xf32, #tpu.memory_space<vmem>>, vector<256x128xf32>
    tpu.vector_store %arg4[%c0_6, %c0_7], %7 {strides = array<i32>} : memref<256x128xf32, #tpu.memory_space<vmem>>, vector<256x128xf32>,
    return
  }
  func.func @transform_0(%arg0: i32) -> (i32, i32) {
    %c0_i32 = arith.constant 0 : i32
    %c0_i32_0 = arith.constant 0 : i32
    return %arg0, %c0_i32 : i32, i32
  }
  func.func @transform_1(%arg0: i32) -> (i32, i32) {
    %c0_i32 = arith.constant 0 : i32
    %c0_i32_0 = arith.constant 0 : i32
    %c0_i32_1 = arith.constant 0 : i32
    return %c0_i32, %c0_i32_0 : i32, i32
  }
  func.func @transform_2(%arg0: i32) -> (i32, i32) {
    %c0_i32 = arith.constant 0 : i32
    %c0_i32_0 = arith.constant 0 : i32
    %c0_i32_1 = arith.constant 0 : i32
    return %c0_i32, %c0_i32_0 : i32, i32
  }
  func.func @transform_3(%arg0: i32) -> (i32, i32) {
    %c0_i32 = arith.constant 0 : i32
    %c0_i32_0 = arith.constant 0 : i32
    return %arg0, %c0_i32 : i32, i32
  }
}

</mosaic_0001>

<llo_original>
// kernel: n3net_forward.10
$region0: #{n3net_forward.10}
  #allocation0 [shape = 'u32[]', space=smem, size = 0x4, offset = 0x4, fixed_abs, tag = 'smem constant byte address 0x4 - core index']
  #allocation1 [shape = 'u32[144,128]{1,0:T(1,128)}', space=vmem, size = 0x12000, scoped, tag = 'internal scratch']
  %s0 = inlined_call_operand.vmem [shape: f32[512,36], index: 0, kind: input, shape index: {}]
  %s1 = inlined_call_operand.vmem [shape: f32[36,128], index: 1, kind: input, shape index: {}]
  %s2 = inlined_call_operand.vmem [shape: f32[1,128], index: 2, kind: input, shape index: {}]
  %s3 = inlined_call_operand.vmem [shape: f32[512,128], index: 3, kind: output, shape index: {}]
  %s4 = sld [smem:[#allocation0]]
  $region45: #{n3net_forward.10} parent=0
    _
  %s6 = ssub.s32 1, %s4
  %s7 = scalar_select 0, %s6, %s4
  loop: start=0, step=1, limit=4
  $region2: #{n3net_forward.10} parent=0 // loop_pre_header
    _
  $region3: #{n3net_forward.10} parent=0 // loop_header
    %s9 = sphi 0, %s13
    %p10 = scmp.ge.s32.totalorder %s9, 4
    %s19 = sphi 0, %s21
    %s22 = sphi 0, %s19
    %s23 = sphi 0, %s22
    %s39 = sphi 0, %s23
    %s43 = sphi 0, %s43
    %s45 = sphi 0, %s43
    %s46 = sphi 0, %s45
    %s60 = sphi 0, %s46
    %s64 = sphi 0, %s64
    %s66 = sphi 0, %s64
    %s67 = sphi 0, %s66
    %s81 = sphi 0, %s67
    %s87 = sphi 0, %s89
    %s90 = sphi 0, %s87
    %s91 = sphi 0, %s90
    %s107 = sphi 0, %s91
  $region4: #{n3net_forward.10} parent=0 // loop_header_branch
    %12 = sbr.rel (%p10) target = $region8
  $region5: #{n3net_forward.10} parent=0 // loop_body
    %s14 = ssub.s32 %s9, 1
    %s15 = ssub.s32 %s9, 2
    %s16 = sadd.s32 %s9, 1
    %s17 = ssub.s32 %s9, %s16
    %p18 = scmp.eq.s32.totalorder %s17, 0
    %s20 = sadd.s32 %s19, 1
    %s21 = scalar_select %p18, %s19, %s20
    %p24 = pneg %p18
    %p25 = scmp.eq.s32.totalorder %s9, 1
    %p26 = por %p24, %p25
    %p27 = scmp.ne.s32.totalorder %s19, %s22
    %p28 = scmp.eq.s32.totalorder %s9, 0
    %p29 = por %p27, %p28
    %p30 = scmp.ne.s32.totalorder %s19, %s22
    %p31 = scmp.eq.s32.totalorder %s14, 1
    %p32 = por %p30, %p31
    %p33 = scmp.ne.s32.totalorder %s22, %s23
    %p34 = scmp.eq.s32.totalorder %s14, 0
    %p35 = por %p33, %p34
    %p36 = scmp.ne.s32.totalorder %s22, %s23
    %p37 = scmp.eq.s32.totalorder %s15, 1
    %p38 = por %p36, %p37
    %p40 = scmp.ne.s32.totalorder %s23, %s39
    %p41 = scmp.eq.s32.totalorder %s15, 0
    %p42 = por %p40, %p41
    %s44 = sadd.s32 %s43, 1
    %p47 = scmp.eq.s32.totalorder %s9, 1
    %p48 = scmp.ne.s32.totalorder %s43, %s45
    %p49 = scmp.eq.s32.totalorder %s9, 0
    %p50 = por %p48, %p49
    %p51 = scmp.ne.s32.totalorder %s43, %s45
    %p52 = scmp.eq.s32.totalorder %s14, 1
    %p53 = por %p51, %p52
    %p54 = scmp.ne.s32.totalorder %s45, %s46
    %p55 = scmp.eq.s32.totalorder %s14, 0
    %p56 = por %p54, %p55
    %p57 = scmp.ne.s32.totalorder %s45, %s46
    %p58 = scmp.eq.s32.totalorder %s15, 1
    %p59 = por %p57, %p58
    %p61 = scmp.ne.s32.totalorder %s46, %s60
    %p62 = scmp.eq.s32.totalorder %s15, 0
    %p63 = por %p61, %p62
    %s65 = sadd.s32 %s64, 1
    %p68 = scmp.eq.s32.totalorder %s9, 1
    %p69 = scmp.ne.s32.totalorder %s64, %s66
    %p70 = scmp.eq.s32.totalorder %s9, 0
    %p71 = por %p69, %p70
    %p72 = scmp.ne.s32.totalorder %s64, %s66
    %p73 = scmp.eq.s32.totalorder %s14, 1
    %p74 = por %p72, %p73
    %p75 = scmp.ne.s32.totalorder %s66, %s67
    %p76 = scmp.eq.s32.totalorder %s14, 0
    %p77 = por %p75, %p76
    %p78 = scmp.ne.s32.totalorder %s66, %s67
    %p79 = scmp.eq.s32.totalorder %s15, 1
    %p80 = por %p78, %p79
    %p82 = scmp.ne.s32.totalorder %s67, %s81
    %p83 = scmp.eq.s32.totalorder %s15, 0
    %p84 = por %p82, %p83
    %s85 = ssub.s32 %s9, %s16
    %p86 = scmp.eq.s32.totalorder %s85, 0
    %s88 = sadd.s32 %s87, 1
    %s89 = scalar_select %p86, %s87, %s88
    %p92 = pneg %p86
    %p93 = scmp.eq.s32.totalorder %s9, 1
    %p94 = por %p92, %p93
    %p95 = scmp.ne.s32.totalorder %s87, %s90
    %p96 = scmp.eq.s32.totalorder %s9, 0
    %p97 = por %p95, %p96
    %p98 = scmp.ne.s32.totalorder %s87, %s90
    %p99 = scmp.eq.s32.totalorder %s14, 1
    %p100 = por %p98, %p99
    %p101 = scmp.ne.s32.totalorder %s90, %s91
    %p102 = scmp.eq.s32.totalorder %s14, 0
    %p103 = por %p101, %p102
    %p104 = scmp.ne.s32.totalorder %s90, %s91
    %p105 = scmp.eq.s32.totalorder %s15, 1
    %p106 = por %p104, %p105
    %p108 = scmp.ne.s32.totalorder %s91, %s107
    %p109 = scmp.eq.s32.totalorder %s15, 0
    %p110 = por %p108, %p109
    %p111 = scmp.le.s32.totalorder 1, %s9
    %p112 = scmp.lt.s32.totalorder %s9, 3
    %p113 = pnand %p111, %p112
    %p114 = pneg %p113
    // Predicated region
    $region9: #{n3net_forward.10} parent=5 // pred_check
      _
    $region10: #{n3net_forward.10} parent=5 // pred_check_branch
      %116 = sbr.rel (%p113) target = $region12
    $region11: #{n3net_forward.10} parent=5 // pred_region
      %s117 = ssub.s32 %s9, 1
      // Predicated region
      $region13: #{n3net_forward.10} parent=11 // pred_check
        %p118 = pneg %p56
      $region14: #{n3net_forward.10} parent=11 // pred_check_branch
        %120 = sbr.rel (%p118) target = $region16
      $region15: #{n3net_forward.10} parent=11 // pred_region
        _
      $region16: #{n3net_forward.10} parent=11 // pred_fallthru
        _
      // Predicated region
      $region17: #{n3net_forward.10} parent=11 // pred_check
        %p121 = pneg %p77
      $region18: #{n3net_forward.10} parent=11 // pred_check_branch
        %123 = sbr.rel (%p121) target = $region20
      $region19: #{n3net_forward.10} parent=11 // pred_region
        _
      $region20: #{n3net_forward.10} parent=11 // pred_fallthru
        _
    $region12: #{n3net_forward.10} parent=5 // pred_fallthru
      _
    %p124 = scmp.lt.s32.totalorder %s9, 2
    // Predicated region
    $region21: #{n3net_forward.10} parent=5 // pred_check
      %p125 = pneg %p124
    $region22: #{n3net_forward.10} parent=5 // pred_check_branch
      %127 = sbr.rel (%p125) target = $region24
    $region23: #{n3net_forward.10} parent=5 // pred_region
      // Predicated region
      $region25: #{n3net_forward.10} parent=23 // pred_check
        %p128 = pneg %p29
      $region26: #{n3net_forward.10} parent=23 // pred_check_branch
        %130 = sbr.rel (%p128) target = $region28
      $region27: #{n3net_forward.10} parent=23 // pred_region
        %s131 = smul.u32 32, %s9
        %p132 = scmp.lt.s32.totalorder %s131, 63
        %s133 = scalar_select %p132, %s131, 63
        %s134 = smul.addr %s133, 8
        %s135 = scalar_lea.vmem %s0, %s134
        %s136 = smul.u32 32, %s9
      $region28: #{n3net_forward.10} parent=23 // pred_fallthru
        _
    $region24: #{n3net_forward.10} parent=5 // pred_fallthru
      _
    %p137 = scmp.le.s32.totalorder 1, %s9
    %p138 = scmp.lt.s32.totalorder %s9, 3
    %p139 = pnand %p137, %p138
    %p140 = pneg %p139
    // Predicated region
    $region29: #{n3net_forward.10} parent=5 // pred_check
      _
    $region30: #{n3net_forward.10} parent=5 // pred_check_branch
      %142 = sbr.rel (%p139) target = $region32
    $region31: #{n3net_forward.10} parent=5 // pred_region
      %s143 = ssub.s32 %s9, 1
      %s144 = smul.u32 32, %s14
      %p145 = scmp.lt.s32.totalorder %s144, 63
      %s146 = scalar_select %p145, %s144, 63
      %s147 = smul.addr %s146, 8
      %s148 = scalar_lea.vmem %s0, %s147
      %p149 = pneg %p35
      %p150 = pneg %p32
      %p151 = pneg %p56
      %p152 = pneg %p53
      %p153 = pneg %p77
      %p154 = pneg %p74
      %p155 = pneg %p103
      %p156 = pneg %p100
      %s157 = smul.u32 32, %s14
      %p158 = scmp.lt.s32.totalorder %s157, 63
      %s159 = scalar_select %p158, %s157, 63
      %s160 = smul.addr %s159, 8
      %s161 = scalar_lea.vmem %s3, %s160
      %s162 = smul.u32 32, %s14
      %p163 = scmp.lt.s32.totalorder %s162, 63
      %s164 = scalar_select %p163, %s162, 63
      %s165 = smul.addr %s164, 8
      %s166 = scalar_lea.vmem %s0, %s165
      %s167 = smul.u32 32, %s14
      %s168 = smul.u32 32, %s14
      %p169 = scmp.lt.s32.totalorder %s168, 63
      %s170 = scalar_select %p169, %s168, 63
      %s171 = smul.addr %s170, 8
      %s172 = scalar_lea.vmem %s3, %s171
      %s173 = smul.u32 32, %s14
      %v174 = vld [vmem:[%s166] sm:$0xff]
      %v175 = vld [vmem:[%s166 + $0x8] sm:$0xff]
      %v176 = vld [vmem:[%s166 + $0x10] sm:$0xff]
      %v177 = vld [vmem:[%s166 + $0x18] sm:$0xff]
      %v178 = vld [vmem:[%s166 + $0x20] sm:$0xff]
      %v179 = vld [vmem:[%s166 + $0x28] sm:$0xff]
      %v180 = vld [vmem:[%s166 + $0x30] sm:$0xff]
      %v181 = vld [vmem:[%s166 + $0x38] sm:$0xff]
      %v182 = vld [vmem:[%s166 + $0x40] sm:$0xff]
      %v183 = vld [vmem:[%s166 + $0x48] sm:$0xff]
      %v184 = vld [vmem:[%s166 + $0x50] sm:$0xff]
      %v185 = vld [vmem:[%s166 + $0x58] sm:$0xff]
      %v186 = vld [vmem:[%s166 + $0x60] sm:$0xff]
      %v187 = vld [vmem:[%s166 + $0x68] sm:$0xff]
      %v188 = vld [vmem:[%s166 + $0x70] sm:$0xff]
      %v189 = vld [vmem:[%s166 + $0x78] sm:$0xff]
      %v190 = vld [vmem:[%s166 + $0x80] sm:$0xff]
      %v191 = vld [vmem:[%s166 + $0x88] sm:$0xff]
      %v192 = vld [vmem:[%s166 + $0x90] sm:$0xff]
      %v193 = vld [vmem:[%s166 + $0x98] sm:$0xff]
      %v194 = vld [vmem:[%s166 + $0xa0] sm:$0xff]
      %v195 = vld [vmem:[%s166 + $0xa8] sm:$0xff]
      %v196 = vld [vmem:[%s166 + $0xb0] sm:$0xff]
      %v197 = vld [vmem:[%s166 + $0xb8] sm:$0xff]
      %v198 = vld [vmem:[%s166 + $0xc0] sm:$0xff]
      %v199 = vld [vmem:[%s166 + $0xc8] sm:$0xff]
      %v200 = vld [vmem:[%s166 + $0xd0] sm:$0xff]
      %v201 = vld [vmem:[%s166 + $0xd8] sm:$0xff]
      %v202 = vld [vmem:[%s166 + $0xe0] sm:$0xff]
      %v203 = vld [vmem:[%s166 + $0xe8] sm:$0xff]
      %v204 = vld [vmem:[%s166 + $0xf0] sm:$0xff]
      %v205 = vld [vmem:[%s166 + $0xf8] sm:$0xff]
      %v206 = vld [vmem:[%s1] sm:$0xff]
      %v207 = vld [vmem:[%s1 + $0x8] sm:$0xff]
      %v208 = vld [vmem:[%s1 + $0x10] sm:$0xff]
      %v209 = vld [vmem:[%s1 + $0x18] sm:$0xff]
      %v210 = vld [vmem:[%s1 + $0x20] sm:$0xf]
      %v211 = vld [vmem:[%s2] sm:$0x1]
      %v213 = vlaneseq
      %v214 = vshrl.u32 %v213, 7
      %v215 = vsub.s32 0, %v214
      %v216 = vrot.slane %v211, %v215
      %vm218 = vcmask 293888
      %v220 = vsel %vm218, %v174, 0
      %v223 = vsel %vm218, %v175, 0
      %v226 = vsel %vm218, %v176, 0
      %v229 = vsel %vm218, %v177, 0
      %v232 = vsel %vm218, %v178, 0
      %v235 = vsel %vm218, %v179, 0
      %v238 = vsel %vm218, %v180, 0
      %v241 = vsel %vm218, %v181, 0
      %v244 = vsel %vm218, %v182, 0
      %v247 = vsel %vm218, %v183, 0
      %v250 = vsel %vm218, %v184, 0
      %v253 = vsel %vm218, %v185, 0
      %v256 = vsel %vm218, %v186, 0
      %v259 = vsel %vm218, %v187, 0
      %v262 = vsel %vm218, %v188, 0
      %v265 = vsel %vm218, %v189, 0
      %v268 = vsel %vm218, %v190, 0
      %v271 = vsel %vm218, %v191, 0
      %v274 = vsel %vm218, %v192, 0
      %v277 = vsel %vm218, %v193, 0
      %v280 = vsel %vm218, %v194, 0
      %v283 = vsel %vm218, %v195, 0
      %v286 = vsel %vm218, %v196, 0
      %v289 = vsel %vm218, %v197, 0
      %v292 = vsel %vm218, %v198, 0
      %v295 = vsel %vm218, %v199, 0
      %v298 = vsel %vm218, %v200, 0
      %v301 = vsel %vm218, %v201, 0
      %v304 = vsel %vm218, %v202, 0
      %v307 = vsel %vm218, %v203, 0
      %v310 = vsel %vm218, %v204, 0
      %v313 = vsel %vm218, %v205, 0
      %vm315 = vcmask 1043456
      %v317 = vsel %vm315, %v210, 0
      %319 = vmatprep.subr.mxu0 0.0
      %320 = vmatpush1.msra.mxu0 %v206
      %321 = vmatprep.subr.mxu0 0.0
      %322 = vmatpush1.msra.mxu0 %v207
      %323 = vmatprep.subr.mxu0 0.0
      %324 = vmatpush1.msra.mxu0 %v208
      %325 = vmatprep.subr.mxu0 0.0
      %326 = vmatpush1.msra.mxu0 %v209
      %327 = vmatprep.subr.mxu0 0.0
      %328 = vmatpush1.msra.mxu0 %v317
      %329 = vmatprep.subr.mxu0 0.0
      %330 = vmatpush1.msra.mxu0 0.0
      %331 = vmatprep.subr.mxu0 0.0
      %332 = vmatpush1.msra.mxu0 0.0
      %333 = vmatprep.subr.mxu0 0.0
      %334 = vmatpush1.msra.mxu0 0.0
      %335 = vmatprep.subr.mxu0 0.0
      %336 = vmatpush1.msra.mxu0 0.0
      %337 = vmatprep.subr.mxu0 0.0
      %338 = vmatpush1.msra.mxu0 0.0
      %339 = vmatprep.subr.mxu0 0.0
      %340 = vmatpush1.msra.mxu0 0.0
      %341 = vmatprep.subr.mxu0 0.0
      %342 = vmatpush1.msra.mxu0 0.0
      %343 = vmatprep.subr.mxu0 0.0
      %344 = vmatpush1.msra.mxu0 0.0
      %345 = vmatprep.subr.mxu0 0.0
      %346 = vmatpush1.msra.mxu0 0.0
      %347 = vmatprep.subr.mxu0 0.0
      %348 = vmatpush1.msra.mxu0 0.0
      %349 = vmatprep.subr.mxu0 0.0
      %350 = vmatpush1.msra.mxu0 0.0
      %351 = vmatprep.subr.mxu0 0.0
      %352 = vmatpush1.msra.mxu0 0.0
      %353 = vmatprep.subr.mxu0 0.0
      %354 = vmatpush1.msra.mxu0 0.0
      %355 = vmatprep.subr.mxu0 0.0
      %356 = vmatpush1.msra.mxu0 0.0
      %357 = vmatprep.subr.mxu0 0.0
      %358 = vmatpush1.msra.mxu0 0.0
      %359 = vmatprep.subr.mxu0 0.0
      %360 = vmatpush1.msra.mxu0 0.0
      %361 = vmatprep.subr.mxu0 0.0
      %362 = vmatpush1.msra.mxu0 0.0
      %363 = vmatprep.subr.mxu0 0.0
      %364 = vmatpush1.msra.mxu0 0.0
      %365 = vmatprep.subr.mxu0 0.0
      %366 = vmatpush1.msra.mxu0 0.0
      %367 = vmatprep.subr.mxu0 0.0
      %368 = vmatpush1.msra.mxu0 0.0
      %369 = vmatprep.subr.mxu0 0.0
      %370 = vmatpush1.msra.mxu0 0.0
      %371 = vmatprep.subr.mxu0 0.0
      %372 = vmatpush1.msra.mxu0 0.0
      %373 = vmatprep.subr.mxu0 0.0
      %374 = vmatpush1.msra.mxu0 0.0
      %375 = vmatprep.subr.mxu0 0.0
      %376 = vmatpush1.msra.mxu0 0.0
      %377 = vmatprep.subr.mxu0 0.0
      %378 = vmatpush1.msra.mxu0 0.0
      %379 = vmatprep.subr.mxu0 0.0
      %380 = vmatpush1.msra.mxu0 0.0
      %381 = vmatprep.subr.mxu0 0.0
      %382 = vmatpush1.msra.mxu0 0.0
      %383 = vmatprep.mubr.f32.mxu0 0.0
      %384 = vmatmul.mubr.f32.gmra.mrb[0].mxu0 %v220
      %v385 = vpop.f32.mrb[0].mxu0
      %v386 = vadd.f32 %v216, %v385
      %v387 = vpop.f32.mrb[0].mxu0
      %388 = vmatprep.mubr.f32.mxu0 0.0
      %389 = vmatmul.mubr.f32.gmra.mrb[0].mxu0 %v223
      %v390 = vpop.f32.mrb[0].mxu0
      %v391 = vadd.f32 %v216, %v390
      %v392 = vpop.f32.mrb[0].mxu0
      %393 = vmatprep.mubr.f32.mxu0 0.0
      %394 = vmatmul.mubr.f32.gmra.mrb[0].mxu0 %v226
      %v395 = vpop.f32.mrb[0].mxu0
      %v396 = vadd.f32 %v216, %v395
      %v397 = vpop.f32.mrb[0].mxu0
      %398 = vmatprep.mubr.f32.mxu0 0.0
      %399 = vmatmul.mubr.f32.gmra.mrb[0].mxu0 %v229
      %v400 = vpop.f32.mrb[0].mxu0
      %v401 = vadd.f32 %v216, %v400
      %v402 = vpop.f32.mrb[0].mxu0
      %403 = vmatprep.mubr.f32.mxu0 0.0
      %404 = vmatmul.mubr.f32.gmra.mrb[0].mxu0 %v232
      %v405 = vpop.f32.mrb[0].mxu0
      %v406 = vadd.f32 %v216, %v405
      %v407 = vpop.f32.mrb[0].mxu0
      %408 = vmatprep.mubr.f32.mxu0 0.0
      %409 = vmatmul.mubr.f32.gmra.mrb[0].mxu0 %v235
      %v410 = vpop.f32.mrb[0].mxu0
      %v411 = vadd.f32 %v216, %v410
      %v412 = vpop.f32.mrb[0].mxu0
      %413 = vmatprep.mubr.f32.mxu0 0.0
      %414 = vmatmul.mubr.f32.gmra.mrb[0].mxu0 %v238
      %v415 = vpop.f32.mrb[0].mxu0
      %v416 = vadd.f32 %v216, %v415
      %v417 = vpop.f32.mrb[0].mxu0
      %418 = vmatprep.mubr.f32.mxu0 0.0
      %419 = vmatmul.mubr.f32.gmra.mrb[0].mxu0 %v241
      %v420 = vpop.f32.mrb[0].mxu0
      %v421 = vadd.f32 %v216, %v420
      %v422 = vpop.f32.mrb[0].mxu0
      %423 = vmatprep.mubr.f32.mxu0 0.0
      %424 = vmatmul.mubr.f32.gmra.mrb[0].mxu0 %v244
      %v425 = vpop.f32.mrb[0].mxu0
      %v426 = vadd.f32 %v216, %v425
      %v427 = vpop.f32.mrb[0].mxu0
      %428 = vmatprep.mubr.f32.mxu0 0.0
      %429 = vmatmul.mubr.f32.gmra.mrb[0].mxu0 %v247
      %v430 = vpop.f32.mrb[0].mxu0
      %v431 = vadd.f32 %v216, %v430
      %v432 = vpop.f32.mrb[0].mxu0
      %433 = vmatprep.mubr.f32.mxu0 0.0
      %434 = vmatmul.mubr.f32.gmra.mrb[0].mxu0 %v250
      %v435 = vpop.f32.mrb[0].mxu0
      %v436 = vadd.f32 %v216, %v435
      %v437 = vpop.f32.mrb[0].mxu0
      %438 = vmatprep.mubr.f32.mxu0 0.0
      %439 = vmatmul.mubr.f32.gmra.mrb[0].mxu0 %v253
      %v440 = vpop.f32.mrb[0].mxu0
      %v441 = vadd.f32 %v216, %v440
      %v442 = vpop.f32.mrb[0].mxu0
      %443 = vmatprep.mubr.f32.mxu0 0.0
      %444 = vmatmul.mubr.f32.gmra.mrb[0].mxu0 %v256
      %v445 = vpop.f32.mrb[0].mxu0
      %v446 = vadd.f32 %v216, %v445
      %v447 = vpop.f32.mrb[0].mxu0
      %448 = vmatprep.mubr.f32.mxu0 0.0
      %449 = vmatmul.mubr.f32.gmra.mrb[0].mxu0 %v259
      %v450 = vpop.f32.mrb[0].mxu0
      %v451 = vadd.f32 %v216, %v450
      %v452 = vpop.f32.mrb[0].mxu0
      %453 = vmatprep.mubr.f32.mxu0 0.0
      %454 = vmatmul.mubr.f32.gmra.mrb[0].mxu0 %v262
      %v455 = vpop.f32.mrb[0].mxu0
      %v456 = vadd.f32 %v216, %v455
      %v457 = vpop.f32.mrb[0].mxu0
      %458 = vmatprep.mubr.f32.mxu0 0.0
      %459 = vmatmul.mubr.f32.gmra.mrb[0].mxu0 %v265
      %v460 = vpop.f32.mrb[0].mxu0
      %v461 = vadd.f32 %v216, %v460
      %v462 = vpop.f32.mrb[0].mxu0
      %463 = vmatprep.mubr.f32.mxu0 0.0
      %464 = vmatmul.mubr.f32.gmra.mrb[0].mxu0 %v268
      %v465 = vpop.f32.mrb[0].mxu0
      %v466 = vadd.f32 %v216, %v465
      %v467 = vpop.f32.mrb[0].mxu0
      %468 = vmatprep.mubr.f32.mxu0 0.0
      %469 = vmatmul.mubr.f32.gmra.mrb[0].mxu0 %v271
      %v470 = vpop.f32.mrb[0].mxu0
      %v471 = vadd.f32 %v216, %v470
      %v472 = vpop.f32.mrb[0].mxu0
      %473 = vmatprep.mubr.f32.mxu0 0.0
      %474 = vmatmul.mubr.f32.gmra.mrb[0].mxu0 %v274
      %v475 = vpop.f32.mrb[0].mxu0
      %v476 = vadd.f32 %v216, %v475
      %v477 = vpop.f32.mrb[0].mxu0
      %478 = vmatprep.mubr.f32.mxu0 0.0
      %479 = vmatmul.mubr.f32.gmra.mrb[0].mxu0 %v277
      %v480 = vpop.f32.mrb[0].mxu0
      %v481 = vadd.f32 %v216, %v480
      %v482 = vpop.f32.mrb[0].mxu0
      %483 = vmatprep.mubr.f32.mxu0 0.0
      %484 = vmatmul.mubr.f32.gmra.mrb[0].mxu0 %v280
      %v485 = vpop.f32.mrb[0].mxu0
      %v486 = vadd.f32 %v216, %v485
      %v487 = vpop.f32.mrb[0].mxu0
      %488 = vmatprep.mubr.f32.mxu0 0.0
      %489 = vmatmul.mubr.f32.gmra.mrb[0].mxu0 %v283
      %v490 = vpop.f32.mrb[0].mxu0
      %v491 = vadd.f32 %v216, %v490
      %v492 = vpop.f32.mrb[0].mxu0
      %493 = vmatprep.mubr.f32.mxu0 0.0
      %494 = vmatmul.mubr.f32.gmra.mrb[0].mxu0 %v286
      %v495 = vpop.f32.mrb[0].mxu0
      %v496 = vadd.f32 %v216, %v495
      %v497 = vpop.f32.mrb[0].mxu0
      %498 = vmatprep.mubr.f32.mxu0 0.0
      %499 = vmatmul.mubr.f32.gmra.mrb[0].mxu0 %v289
      %v500 = vpop.f32.mrb[0].mxu0
      %v501 = vadd.f32 %v216, %v500
      %v502 = vpop.f32.mrb[0].mxu0
      %503 = vmatprep.mubr.f32.mxu0 0.0
      %504 = vmatmul.mubr.f32.gmra.mrb[0].mxu0 %v292
      %v505 = vpop.f32.mrb[0].mxu0
      %v506 = vadd.f32 %v216, %v505
      %v507 = vpop.f32.mrb[0].mxu0
      %508 = vmatprep.mubr.f32.mxu0 0.0
      %509 = vmatmul.mubr.f32.gmra.mrb[0].mxu0 %v295
      %v510 = vpop.f32.mrb[0].mxu0
      %v511 = vadd.f32 %v216, %v510
      %v512 = vpop.f32.mrb[0].mxu0
      %513 = vmatprep.mubr.f32.mxu0 0.0
      %514 = vmatmul.mubr.f32.gmra.mrb[0].mxu0 %v298
      %v515 = vpop.f32.mrb[0].mxu0
      %v516 = vadd.f32 %v216, %v515
      %v517 = vpop.f32.mrb[0].mxu0
      %518 = vmatprep.mubr.f32.mxu0 0.0
      %519 = vmatmul.mubr.f32.gmra.mrb[0].mxu0 %v301
      %v520 = vpop.f32.mrb[0].mxu0
      %v521 = vadd.f32 %v216, %v520
      %v522 = vpop.f32.mrb[0].mxu0
      %523 = vmatprep.mubr.f32.mxu0 0.0
      %524 = vmatmul.mubr.f32.gmra.mrb[0].mxu0 %v304
      %v525 = vpop.f32.mrb[0].mxu0
      %v526 = vadd.f32 %v216, %v525
      %v527 = vpop.f32.mrb[0].mxu0
      %528 = vmatprep.mubr.f32.mxu0 0.0
      %529 = vmatmul.mubr.f32.gmra.mrb[0].mxu0 %v307
      %v530 = vpop.f32.mrb[0].mxu0
      %v531 = vadd.f32 %v216, %v530
      %v532 = vpop.f32.mrb[0].mxu0
      %533 = vmatprep.mubr.f32.mxu0 0.0
      %534 = vmatmul.mubr.f32.gmra.mrb[0].mxu0 %v310
      %v535 = vpop.f32.mrb[0].mxu0
      %v536 = vadd.f32 %v216, %v535
      %v537 = vpop.f32.mrb[0].mxu0
      %538 = vmatprep.mubr.f32.mxu0 0.0
      %539 = vmatmul.mubr.f32.gmra.mrb[0].mxu0 %v313
      %v540 = vpop.f32.mrb[0].mxu0
      %v541 = vadd.f32 %v216, %v540
      %v542 = vpop.f32.mrb[0].mxu0
      %543 = vdwg.mxu0
      %v544 = vmax.f32 %v386, 0.0
      %v545 = vmax.f32 %v391, 0.0
      %v546 = vmax.f32 %v396, 0.0
      %v547 = vmax.f32 %v401, 0.0
      %v548 = vmax.f32 %v406, 0.0
      %v549 = vmax.f32 %v411, 0.0
      %v550 = vmax.f32 %v416, 0.0
      %v551 = vmax.f32 %v421, 0.0
      %v552 = vmax.f32 %v426, 0.0
      %v553 = vmax.f32 %v431, 0.0
      %v554 = vmax.f32 %v436, 0.0
      %v555 = vmax.f32 %v441, 0.0
      %v556 = vmax.f32 %v446, 0.0
      %v557 = vmax.f32 %v451, 0.0
      %v558 = vmax.f32 %v456, 0.0
      %v559 = vmax.f32 %v461, 0.0
      %v560 = vmax.f32 %v466, 0.0
      %v561 = vmax.f32 %v471, 0.0
      %v562 = vmax.f32 %v476, 0.0
      %v563 = vmax.f32 %v481, 0.0
      %v564 = vmax.f32 %v486, 0.0
      %v565 = vmax.f32 %v491, 0.0
      %v566 = vmax.f32 %v496, 0.0
      %v567 = vmax.f32 %v501, 0.0
      %v568 = vmax.f32 %v506, 0.0
      %v569 = vmax.f32 %v511, 0.0
      %v570 = vmax.f32 %v516, 0.0
      %v571 = vmax.f32 %v521, 0.0
      %v572 = vmax.f32 %v526, 0.0
      %v573 = vmax.f32 %v531, 0.0
      %v574 = vmax.f32 %v536, 0.0
      %v575 = vmax.f32 %v541, 0.0
      %576 = vst [vmem:[%s172] sm:$0xff] %v544
      %577 = vst [vmem:[%s172 + $0x8] sm:$0xff] %v545
      %578 = vst [vmem:[%s172 + $0x10] sm:$0xff] %v546
      %579 = vst [vmem:[%s172 + $0x18] sm:$0xff] %v547
      %580 = vst [vmem:[%s172 + $0x20] sm:$0xff] %v548
      %581 = vst [vmem:[%s172 + $0x28] sm:$0xff] %v549
      %582 = vst [vmem:[%s172 + $0x30] sm:$0xff] %v550
      %583 = vst [vmem:[%s172 + $0x38] sm:$0xff] %v551
      %584 = vst [vmem:[%s172 + $0x40] sm:$0xff] %v552
      %585 = vst [vmem:[%s172 + $0x48] sm:$0xff] %v553
      %586 = vst [vmem:[%s172 + $0x50] sm:$0xff] %v554
      %587 = vst [vmem:[%s172 + $0x58] sm:$0xff] %v555
      %588 = vst [vmem:[%s172 + $0x60] sm:$0xff] %v556
      %589 = vst [vmem:[%s172 + $0x68] sm:$0xff] %v557
      %590 = vst [vmem:[%s172 + $0x70] sm:$0xff] %v558
      %591 = vst [vmem:[%s172 + $0x78] sm:$0xff] %v559
      %592 = vst [vmem:[%s172 + $0x80] sm:$0xff] %v560
      %593 = vst [vmem:[%s172 + $0x88] sm:$0xff] %v561
      %594 = vst [vmem:[%s172 + $0x90] sm:$0xff] %v562
      %595 = vst [vmem:[%s172 + $0x98] sm:$0xff] %v563
      %596 = vst [vmem:[%s172 + $0xa0] sm:$0xff] %v564
      %597 = vst [vmem:[%s172 + $0xa8] sm:$0xff] %v565
      %598 = vst [vmem:[%s172 + $0xb0] sm:$0xff] %v566
      %599 = vst [vmem:[%s172 + $0xb8] sm:$0xff] %v567
      %600 = vst [vmem:[%s172 + $0xc0] sm:$0xff] %v568
      %601 = vst [vmem:[%s172 + $0xc8] sm:$0xff] %v569
      %602 = vst [vmem:[%s172 + $0xd0] sm:$0xff] %v570
      %603 = vst [vmem:[%s172 + $0xd8] sm:$0xff] %v571
      %604 = vst [vmem:[%s172 + $0xe0] sm:$0xff] %v572
      %605 = vst [vmem:[%s172 + $0xe8] sm:$0xff] %v573
      %606 = vst [vmem:[%s172 + $0xf0] sm:$0xff] %v574
      %607 = vst [vmem:[%s172 + $0xf8] sm:$0xff] %v575
      %s608 = smul.u32 32, %s14
      %p609 = scmp.lt.s32.totalorder %s608, 63
      %s610 = scalar_select %p609, %s608, 63
      %s611 = smul.addr %s610, 8
      %s612 = scalar_lea.vmem %s3, %s611
      // Predicated region
      $region33: #{n3net_forward.10} parent=31 // pred_check
        %p613 = pneg %p100
      $region34: #{n3net_forward.10} parent=31 // pred_check_branch
        %615 = sbr.rel (%p613) target = $region36
      $region35: #{n3net_forward.10} parent=31 // pred_region
        %s616 = smul.u32 32, %s14
      $region36: #{n3net_forward.10} parent=31 // pred_fallthru
        _
    $region32: #{n3net_forward.10} parent=5 // pred_fallthru
      _
    %p617 = scmp.le.s32.totalorder 2, %s9
    // Predicated region
    $region37: #{n3net_forward.10} parent=5 // pred_check
      %p618 = pneg %p617
    $region38: #{n3net_forward.10} parent=5 // pred_check_branch
      %620 = sbr.rel (%p618) target = $region40
    $region39: #{n3net_forward.10} parent=5 // pred_region
      %s621 = ssub.s32 %s9, 2
      // Predicated region
      $region41: #{n3net_forward.10} parent=39 // pred_check
        %p622 = pneg %p106
      $region42: #{n3net_forward.10} parent=39 // pred_check_branch
        %624 = sbr.rel (%p622) target = $region44
      $region43: #{n3net_forward.10} parent=39 // pred_region
        %s625 = smul.u32 32, %s15
        %p626 = scmp.lt.s32.totalorder %s625, 63
        %s627 = scalar_select %p626, %s625, 63
        %s628 = smul.addr %s627, 8
        %s629 = scalar_lea.vmem %s3, %s628
      $region44: #{n3net_forward.10} parent=39 // pred_fallthru
        _
    $region40: #{n3net_forward.10} parent=5 // pred_fallthru
      _
  $region6: #{n3net_forward.10} parent=0 // loop_footer
    %s13 = sadd.s32 1, %s9
  $region7: #{n3net_forward.10} parent=0 // loop_footer_branch
    %8 = sbr.rel target = $region3
  $region8: #{n3net_forward.10} parent=0 // loop_exit
    _

// kernel: n3net_forward.12
$region0: #{n3net_forward.12}
  #allocation0 [shape = 'u32[]', space=smem, size = 0x4, offset = 0x4, fixed_abs, tag = 'smem constant byte address 0x4 - core index']
  #allocation1 [shape = 'u32[144,128]{1,0:T(1,128)}', space=vmem, size = 0x12000, scoped, tag = 'internal scratch']
  %s0 = inlined_call_operand.vmem [shape: f32[512,72], index: 0, kind: input, shape index: {}]
  %s1 = inlined_call_operand.vmem [shape: f32[72,128], index: 1, kind: input, shape index: {}]
  %s2 = inlined_call_operand.vmem [shape: f32[1,128], index: 2, kind: input, shape index: {}]
  %s3 = inlined_call_operand.vmem [shape: f32[512,128], index: 3, kind: input, shape index: {}]
  %s4 = inlined_call_operand.vmem [shape: f32[512,128], index: 4, kind: output, shape index: {}]
  %s5 = sld [smem:[#allocation0]]
  $region49: #{n3net_forward.12} parent=0
    _
  %s7 = ssub.s32 1, %s5
  %s8 = scalar_select 0, %s7, %s5
  loop: start=0, step=1, limit=4
  $region2: #{n3net_forward.12} parent=0 // loop_pre_header
    _
  $region3: #{n3net_forward.12} parent=0 // loop_header
    %s10 = sphi 0, %s14
    %p11 = scmp.ge.s32.totalorder %s10, 4
    %s20 = sphi 0, %s22
    %s23 = sphi 0, %s20
    %s24 = sphi 0, %s23
    %s40 = sphi 0, %s24
    %s44 = sphi 0, %s44
    %s46 = sphi 0, %s44
    %s47 = sphi 0, %s46
    %s61 = sphi 0, %s47
    %s65 = sphi 0, %s65
    %s67 = sphi 0, %s65
    %s68 = sphi 0, %s67
    %s82 = sphi 0, %s68
    %s88 = sphi 0, %s90
    %s91 = sphi 0, %s88
    %s92 = sphi 0, %s91
    %s108 = sphi 0, %s92
    %s114 = sphi 0, %s116
    %s117 = sphi 0, %s114
    %s118 = sphi 0, %s117
    %s134 = sphi 0, %s118
  $region4: #{n3net_forward.12} parent=0 // loop_header_branch
    %13 = sbr.rel (%p11) target = $region8
  $region5: #{n3net_forward.12} parent=0 // loop_body
    %s15 = ssub.s32 %s10, 1
    %s16 = ssub.s32 %s10, 2
    %s17 = sadd.s32 %s10, 1
    %s18 = ssub.s32 %s10, %s17
    %p19 = scmp.eq.s32.totalorder %s18, 0
    %s21 = sadd.s32 %s20, 1
    %s22 = scalar_select %p19, %s20, %s21
    %p25 = pneg %p19
    %p26 = scmp.eq.s32.totalorder %s10, 1
    %p27 = por %p25, %p26
    %p28 = scmp.ne.s32.totalorder %s20, %s23
    %p29 = scmp.eq.s32.totalorder %s10, 0
    %p30 = por %p28, %p29
    %p31 = scmp.ne.s32.totalorder %s20, %s23
    %p32 = scmp.eq.s32.totalorder %s15, 1
    %p33 = por %p31, %p32
    %p34 = scmp.ne.s32.totalorder %s23, %s24
    %p35 = scmp.eq.s32.totalorder %s15, 0
    %p36 = por %p34, %p35
    %p37 = scmp.ne.s32.totalorder %s23, %s24
    %p38 = scmp.eq.s32.totalorder %s16, 1
    %p39 = por %p37, %p38
    %p41 = scmp.ne.s32.totalorder %s24, %s40
    %p42 = scmp.eq.s32.totalorder %s16, 0
    %p43 = por %p41, %p42
    %s45 = sadd.s32 %s44, 1
    %p48 = scmp.eq.s32.totalorder %s10, 1
    %p49 = scmp.ne.s32.totalorder %s44, %s46
    %p50 = scmp.eq.s32.totalorder %s10, 0
    %p51 = por %p49, %p50
    %p52 = scmp.ne.s32.totalorder %s44, %s46
    %p53 = scmp.eq.s32.totalorder %s15, 1
    %p54 = por %p52, %p53
    %p55 = scmp.ne.s32.totalorder %s46, %s47
    %p56 = scmp.eq.s32.totalorder %s15, 0
    %p57 = por %p55, %p56
    %p58 = scmp.ne.s32.totalorder %s46, %s47
    %p59 = scmp.eq.s32.totalorder %s16, 1
    %p60 = por %p58, %p59
    %p62 = scmp.ne.s32.totalorder %s47, %s61
    %p63 = scmp.eq.s32.totalorder %s16, 0
    %p64 = por %p62, %p63
    %s66 = sadd.s32 %s65, 1
    %p69 = scmp.eq.s32.totalorder %s10, 1
    %p70 = scmp.ne.s32.totalorder %s65, %s67
    %p71 = scmp.eq.s32.totalorder %s10, 0
    %p72 = por %p70, %p71
    %p73 = scmp.ne.s32.totalorder %s65, %s67
    %p74 = scmp.eq.s32.totalorder %s15, 1
    %p75 = por %p73, %p74
    %p76 = scmp.ne.s32.totalorder %s67, %s68
    %p77 = scmp.eq.s32.totalorder %s15, 0
    %p78 = por %p76, %p77
    %p79 = scmp.ne.s32.totalorder %s67, %s68
    %p80 = scmp.eq.s32.totalorder %s16, 1
    %p81 = por %p79, %p80
    %p83 = scmp.ne.s32.totalorder %s68, %s82
    %p84 = scmp.eq.s32.totalorder %s16, 0
    %p85 = por %p83, %p84
    %s86 = ssub.s32 %s10, %s17
    %p87 = scmp.eq.s32.totalorder %s86, 0
    %s89 = sadd.s32 %s88, 1
    %s90 = scalar_select %p87, %s88, %s89
    %p93 = pneg %p87
    %p94 = scmp.eq.s32.totalorder %s10, 1
    %p95 = por %p93, %p94
    %p96 = scmp.ne.s32.totalorder %s88, %s91
    %p97 = scmp.eq.s32.totalorder %s10, 0
    %p98 = por %p96, %p97
    %p99 = scmp.ne.s32.totalorder %s88, %s91
    %p100 = scmp.eq.s32.totalorder %s15, 1
    %p101 = por %p99, %p100
    %p102 = scmp.ne.s32.totalorder %s91, %s92
    %p103 = scmp.eq.s32.totalorder %s15, 0
    %p104 = por %p102, %p103
    %p105 = scmp.ne.s32.totalorder %s91, %s92
    %p106 = scmp.eq.s32.totalorder %s16, 1
    %p107 = por %p105, %p106
    %p109 = scmp.ne.s32.totalorder %s92, %s108
    %p110 = scmp.eq.s32.totalorder %s16, 0
    %p111 = por %p109, %p110
    %s112 = ssub.s32 %s10, %s17
    %p113 = scmp.eq.s32.totalorder %s112, 0
    %s115 = sadd.s32 %s114, 1
    %s116 = scalar_select %p113, %s114, %s115
    %p119 = pneg %p113
    %p120 = scmp.eq.s32.totalorder %s10, 1
    %p121 = por %p119, %p120
    %p122 = scmp.ne.s32.totalorder %s114, %s117
    %p123 = scmp.eq.s32.totalorder %s10, 0
    %p124 = por %p122, %p123
    %p125 = scmp.ne.s32.totalorder %s114, %s117
    %p126 = scmp.eq.s32.totalorder %s15, 1
    %p127 = por %p125, %p126
    %p128 = scmp.ne.s32.totalorder %s117, %s118
    %p129 = scmp.eq.s32.totalorder %s15, 0
    %p130 = por %p128, %p129
    %p131 = scmp.ne.s32.totalorder %s117, %s118
    %p132 = scmp.eq.s32.totalorder %s16, 1
    %p133 = por %p131, %p132
    %p135 = scmp.ne.s32.totalorder %s118, %s134
    %p136 = scmp.eq.s32.totalorder %s16, 0
    %p137 = por %p135, %p136
    %p138 = scmp.le.s32.totalorder 1, %s10
    %p139 = scmp.lt.s32.totalorder %s10, 3
    %p140 = pnand %p138, %p139
    %p141 = pneg %p140
    // Predicated region
    $region9: #{n3net_forward.12} parent=5 // pred_check
      _
    $region10: #{n3net_forward.12} parent=5 // pred_check_branch
      %143 = sbr.rel (%p140) target = $region12
    $region11: #{n3net_forward.12} parent=5 // pred_region
      %s144 = ssub.s32 %s10, 1
      // Predicated region
      $region13: #{n3net_forward.12} parent=11 // pred_check
        %p145 = pneg %p57
      $region14: #{n3net_forward.12} parent=11 // pred_check_branch
        %147 = sbr.rel (%p145) target = $region16
      $region15: #{n3net_forward.12} parent=11 // pred_region
        _
      $region16: #{n3net_forward.12} parent=11 // pred_fallthru
        _
      // Predicated region
      $region17: #{n3net_forward.12} parent=11 // pred_check
        %p148 = pneg %p78
      $region18: #{n3net_forward.12} parent=11 // pred_check_branch
        %150 = sbr.rel (%p148) target = $region20
      $region19: #{n3net_forward.12} parent=11 // pred_region
        _
      $region20: #{n3net_forward.12} parent=11 // pred_fallthru
        _
    $region12: #{n3net_forward.12} parent=5 // pred_fallthru
      _
    %p151 = scmp.lt.s32.totalorder %s10, 2
    // Predicated region
    $region21: #{n3net_forward.12} parent=5 // pred_check
      %p152 = pneg %p151
    $region22: #{n3net_forward.12} parent=5 // pred_check_branch
      %154 = sbr.rel (%p152) target = $region24
    $region23: #{n3net_forward.12} parent=5 // pred_region
      // Predicated region
      $region25: #{n3net_forward.12} parent=23 // pred_check
        %p155 = pneg %p30
      $region26: #{n3net_forward.12} parent=23 // pred_check_branch
        %157 = sbr.rel (%p155) target = $region28
      $region27: #{n3net_forward.12} parent=23 // pred_region
        %s158 = smul.u32 32, %s10
        %p159 = scmp.lt.s32.totalorder %s158, 63
        %s160 = scalar_select %p159, %s158, 63
        %s161 = smul.addr %s160, 8
        %s162 = scalar_lea.vmem %s0, %s161
        %s163 = smul.u32 32, %s10
      $region28: #{n3net_forward.12} parent=23 // pred_fallthru
        _
      // Predicated region
      $region29: #{n3net_forward.12} parent=23 // pred_check
        %p164 = pneg %p98
      $region30: #{n3net_forward.12} parent=23 // pred_check_branch
        %166 = sbr.rel (%p164) target = $region32
      $region31: #{n3net_forward.12} parent=23 // pred_region
        %s167 = smul.u32 32, %s10
        %p168 = scmp.lt.s32.totalorder %s167, 63
        %s169 = scalar_select %p168, %s167, 63
        %s170 = smul.addr %s169, 8
        %s171 = scalar_lea.vmem %s3, %s170
        %s172 = smul.u32 32, %s10
      $region32: #{n3net_forward.12} parent=23 // pred_fallthru
        _
    $region24: #{n3net_forward.12} parent=5 // pred_fallthru
      _
    %p173 = scmp.le.s32.totalorder 1, %s10
    %p174 = scmp.lt.s32.totalorder %s10, 3
    %p175 = pnand %p173, %p174
    %p176 = pneg %p175
    // Predicated region
    $region33: #{n3net_forward.12} parent=5 // pred_check
      _
    $region34: #{n3net_forward.12} parent=5 // pred_check_branch
      %178 = sbr.rel (%p175) target = $region36
    $region35: #{n3net_forward.12} parent=5 // pred_region
      %s179 = ssub.s32 %s10, 1
      %s180 = smul.u32 32, %s15
      %p181 = scmp.lt.s32.totalorder %s180, 63
      %s182 = scalar_select %p181, %s180, 63
      %s183 = smul.addr %s182, 8
      %s184 = scalar_lea.vmem %s0, %s183
      %p185 = pneg %p36
      %p186 = pneg %p33
      %p187 = pneg %p57
      %p188 = pneg %p54
      %p189 = pneg %p78
      %p190 = pneg %p75
      %s191 = smul.u32 32, %s15
      %p192 = scmp.lt.s32.totalorder %s191, 63
      %s193 = scalar_select %p192, %s191, 63
      %s194 = smul.addr %s193, 8
      %s195 = scalar_lea.vmem %s3, %s194
      %p196 = pneg %p104
      %p197 = pneg %p101
      %p198 = pneg %p130
      %p199 = pneg %p127
      %s200 = smul.u32 32, %s15
      %p201 = scmp.lt.s32.totalorder %s200, 63
      %s202 = scalar_select %p201, %s200, 63
      %s203 = smul.addr %s202, 8
      %s204 = scalar_lea.vmem %s4, %s203
      %s205 = smul.u32 32, %s15
      %p206 = scmp.lt.s32.totalorder %s205, 63
      %s207 = scalar_select %p206, %s205, 63
      %s208 = smul.addr %s207, 8
      %s209 = scalar_lea.vmem %s0, %s208
      %s210 = smul.u32 32, %s15
      %s211 = smul.u32 32, %s15
      %p212 = scmp.lt.s32.totalorder %s211, 63
      %s213 = scalar_select %p212, %s211, 63
      %s214 = smul.addr %s213, 8
      %s215 = scalar_lea.vmem %s3, %s214
      %s216 = smul.u32 32, %s15
      %s217 = smul.u32 32, %s15
      %p218 = scmp.lt.s32.totalorder %s217, 63
      %s219 = scalar_select %p218, %s217, 63
      %s220 = smul.addr %s219, 8
      %s221 = scalar_lea.vmem %s4, %s220
      %s222 = smul.u32 32, %s15
      %v223 = vld [vmem:[%s209] sm:$0xff]
      %v224 = vld [vmem:[%s209 + $0x8] sm:$0xff]
      %v225 = vld [vmem:[%s209 + $0x10] sm:$0xff]
      %v226 = vld [vmem:[%s209 + $0x18] sm:$0xff]
      %v227 = vld [vmem:[%s209 + $0x20] sm:$0xff]
      %v228 = vld [vmem:[%s209 + $0x28] sm:$0xff]
      %v229 = vld [vmem:[%s209 + $0x30] sm:$0xff]
      %v230 = vld [vmem:[%s209 + $0x38] sm:$0xff]
      %v231 = vld [vmem:[%s209 + $0x40] sm:$0xff]
      %v232 = vld [vmem:[%s209 + $0x48] sm:$0xff]
      %v233 = vld [vmem:[%s209 + $0x50] sm:$0xff]
      %v234 = vld [vmem:[%s209 + $0x58] sm:$0xff]
      %v235 = vld [vmem:[%s209 + $0x60] sm:$0xff]
      %v236 = vld [vmem:[%s209 + $0x68] sm:$0xff]
      %v237 = vld [vmem:[%s209 + $0x70] sm:$0xff]
      %v238 = vld [vmem:[%s209 + $0x78] sm:$0xff]
      %v239 = vld [vmem:[%s209 + $0x80] sm:$0xff]
      %v240 = vld [vmem:[%s209 + $0x88] sm:$0xff]
      %v241 = vld [vmem:[%s209 + $0x90] sm:$0xff]
      %v242 = vld [vmem:[%s209 + $0x98] sm:$0xff]
      %v243 = vld [vmem:[%s209 + $0xa0] sm:$0xff]
      %v244 = vld [vmem:[%s209 + $0xa8] sm:$0xff]
      %v245 = vld [vmem:[%s209 + $0xb0] sm:$0xff]
      %v246 = vld [vmem:[%s209 + $0xb8] sm:$0xff]
      %v247 = vld [vmem:[%s209 + $0xc0] sm:$0xff]
      %v248 = vld [vmem:[%s209 + $0xc8] sm:$0xff]
      %v249 = vld [vmem:[%s209 + $0xd0] sm:$0xff]
      %v250 = vld [vmem:[%s209 + $0xd8] sm:$0xff]
      %v251 = vld [vmem:[%s209 + $0xe0] sm:$0xff]
      %v252 = vld [vmem:[%s209 + $0xe8] sm:$0xff]
      %v253 = vld [vmem:[%s209 + $0xf0] sm:$0xff]
      %v254 = vld [vmem:[%s209 + $0xf8] sm:$0xff]
      %v255 = vld [vmem:[%s1] sm:$0xff]
      %v256 = vld [vmem:[%s1 + $0x8] sm:$0xff]
      %v257 = vld [vmem:[%s1 + $0x10] sm:$0xff]
      %v258 = vld [vmem:[%s1 + $0x18] sm:$0xff]
      %v259 = vld [vmem:[%s1 + $0x20] sm:$0xff]
      %v260 = vld [vmem:[%s1 + $0x28] sm:$0xff]
      %v261 = vld [vmem:[%s1 + $0x30] sm:$0xff]
      %v262 = vld [vmem:[%s1 + $0x38] sm:$0xff]
      %v263 = vld [vmem:[%s1 + $0x40] sm:$0xff]
      %v264 = vld [vmem:[%s2] sm:$0x1]
      %v266 = vlaneseq
      %v267 = vshrl.u32 %v266, 7
      %v268 = vsub.s32 0, %v267
      %v269 = vrot.slane %v264, %v268
      %vm271 = vcmask 588800
      %v273 = vsel %vm271, %v223, 0
      %v276 = vsel %vm271, %v224, 0
      %v279 = vsel %vm271, %v225, 0
      %v282 = vsel %vm271, %v226, 0
      %v285 = vsel %vm271, %v227, 0
      %v288 = vsel %vm271, %v228, 0
      %v291 = vsel %vm271, %v229, 0
      %v294 = vsel %vm271, %v230, 0
      %v297 = vsel %vm271, %v231, 0
      %v300 = vsel %vm271, %v232, 0
      %v303 = vsel %vm271, %v233, 0
      %v306 = vsel %vm271, %v234, 0
      %v309 = vsel %vm271, %v235, 0
      %v312 = vsel %vm271, %v236, 0
      %v315 = vsel %vm271, %v237, 0
      %v318 = vsel %vm271, %v238, 0
      %v321 = vsel %vm271, %v239, 0
      %v324 = vsel %vm271, %v240, 0
      %v327 = vsel %vm271, %v241, 0
      %v330 = vsel %vm271, %v242, 0
      %v333 = vsel %vm271, %v243, 0
      %v336 = vsel %vm271, %v244, 0
      %v339 = vsel %vm271, %v245, 0
      %v342 = vsel %vm271, %v246, 0
      %v345 = vsel %vm271, %v247, 0
      %v348 = vsel %vm271, %v248, 0
      %v351 = vsel %vm271, %v249, 0
      %v354 = vsel %vm271, %v250, 0
      %v357 = vsel %vm271, %v251, 0
      %v360 = vsel %vm271, %v252, 0
      %v363 = vsel %vm271, %v253, 0
      %v366 = vsel %vm271, %v254, 0
      %368 = vmatprep.subr.mxu0 0.0
      %369 = vmatpush1.msra.mxu0 %v255
      %370 = vmatprep.subr.mxu0 0.0
      %371 = vmatpush1.msra.mxu0 %v256
      %372 = vmatprep.subr.mxu0 0.0
      %373 = vmatpush1.msra.mxu0 %v257
      %374 = vmatprep.subr.mxu0 0.0
      %375 = vmatpush1.msra.mxu0 %v258
      %376 = vmatprep.subr.mxu0 0.0
      %377 = vmatpush1.msra.mxu0 %v259
      %378 = vmatprep.subr.mxu0 0.0
      %379 = vmatpush1.msra.mxu0 %v260
      %380 = vmatprep.subr.mxu0 0.0
      %381 = vmatpush1.msra.mxu0 %v261
      %382 = vmatprep.subr.mxu0 0.0
      %383 = vmatpush1.msra.mxu0 %v262
      %384 = vmatprep.subr.mxu0 0.0
      %385 = vmatpush1.msra.mxu0 %v263
      %386 = vmatprep.subr.mxu0 0.0
      %387 = vmatpush1.msra.mxu0 0.0
      %388 = vmatprep.subr.mxu0 0.0
      %389 = vmatpush1.msra.mxu0 0.0
      %390 = vmatprep.subr.mxu0 0.0
      %391 = vmatpush1.msra.mxu0 0.0
      %392 = vmatprep.subr.mxu0 0.0
      %393 = vmatpush1.msra.mxu0 0.0
      %394 = vmatprep.subr.mxu0 0.0
      %395 = vmatpush1.msra.mxu0 0.0
      %396 = vmatprep.subr.mxu0 0.0
      %397 = vmatpush1.msra.mxu0 0.0
      %398 = vmatprep.subr.mxu0 0.0
      %399 = vmatpush1.msra.mxu0 0.0
      %400 = vmatprep.subr.mxu0 0.0
      %401 = vmatpush1.msra.mxu0 0.0
      %402 = vmatprep.subr.mxu0 0.0
      %403 = vmatpush1.msra.mxu0 0.0
      %404 = vmatprep.subr.mxu0 0.0
      %405 = vmatpush1.msra.mxu0 0.0
      %406 = vmatprep.subr.mxu0 0.0
      %407 = vmatpush1.msra.mxu0 0.0
      %408 = vmatprep.subr.mxu0 0.0
      %409 = vmatpush1.msra.mxu0 0.0
      %410 = vmatprep.subr.mxu0 0.0
      %411 = vmatpush1.msra.mxu0 0.0
      %412 = vmatprep.subr.mxu0 0.0
      %413 = vmatpush1.msra.mxu0 0.0
      %414 = vmatprep.subr.mxu0 0.0
      %415 = vmatpush1.msra.mxu0 0.0
      %416 = vmatprep.subr.mxu0 0.0
      %417 = vmatpush1.msra.mxu0 0.0
      %418 = vmatprep.subr.mxu0 0.0
      %419 = vmatpush1.msra.mxu0 0.0
      %420 = vmatprep.subr.mxu0 0.0
      %421 = vmatpush1.msra.mxu0 0.0
      %422 = vmatprep.subr.mxu0 0.0
      %423 = vmatpush1.msra.mxu0 0.0
      %424 = vmatprep.subr.mxu0 0.0
      %425 = vmatpush1.msra.mxu0 0.0
      %426 = vmatprep.subr.mxu0 0.0
      %427 = vmatpush1.msra.mxu0 0.0
      %428 = vmatprep.subr.mxu0 0.0
      %429 = vmatpush1.msra.mxu0 0.0
      %430 = vmatprep.subr.mxu0 0.0
      %431 = vmatpush1.msra.mxu0 0.0
      %432 = vmatprep.mubr.f32.mxu0 0.0
      %433 = vmatmul.mubr.f32.gmra.mrb[0].mxu0 %v273
      %v434 = vpop.f32.mrb[0].mxu0
      %v435 = vadd.f32 %v269, %v434
      %v436 = vpop.f32.mrb[0].mxu0
      %437 = vmatprep.mubr.f32.mxu0 0.0
      %438 = vmatmul.mubr.f32.gmra.mrb[0].mxu0 %v276
      %v439 = vpop.f32.mrb[0].mxu0
      %v440 = vadd.f32 %v269, %v439
      %v441 = vpop.f32.mrb[0].mxu0
      %442 = vmatprep.mubr.f32.mxu0 0.0
      %443 = vmatmul.mubr.f32.gmra.mrb[0].mxu0 %v279
      %v444 = vpop.f32.mrb[0].mxu0
      %v445 = vadd.f32 %v269, %v444
      %v446 = vpop.f32.mrb[0].mxu0
      %447 = vmatprep.mubr.f32.mxu0 0.0
      %448 = vmatmul.mubr.f32.gmra.mrb[0].mxu0 %v282
      %v449 = vpop.f32.mrb[0].mxu0
      %v450 = vadd.f32 %v269, %v449
      %v451 = vpop.f32.mrb[0].mxu0
      %452 = vmatprep.mubr.f32.mxu0 0.0
      %453 = vmatmul.mubr.f32.gmra.mrb[0].mxu0 %v285
      %v454 = vpop.f32.mrb[0].mxu0
      %v455 = vadd.f32 %v269, %v454
      %v456 = vpop.f32.mrb[0].mxu0
      %457 = vmatprep.mubr.f32.mxu0 0.0
      %458 = vmatmul.mubr.f32.gmra.mrb[0].mxu0 %v288
      %v459 = vpop.f32.mrb[0].mxu0
      %v460 = vadd.f32 %v269, %v459
      %v461 = vpop.f32.mrb[0].mxu0
      %462 = vmatprep.mubr.f32.mxu0 0.0
      %463 = vmatmul.mubr.f32.gmra.mrb[0].mxu0 %v291
      %v464 = vpop.f32.mrb[0].mxu0
      %v465 = vadd.f32 %v269, %v464
      %v466 = vpop.f32.mrb[0].mxu0
      %467 = vmatprep.mubr.f32.mxu0 0.0
      %468 = vmatmul.mubr.f32.gmra.mrb[0].mxu0 %v294
      %v469 = vpop.f32.mrb[0].mxu0
      %v470 = vadd.f32 %v269, %v469
      %v471 = vpop.f32.mrb[0].mxu0
      %472 = vmatprep.mubr.f32.mxu0 0.0
      %473 = vmatmul.mubr.f32.gmra.mrb[0].mxu0 %v297
      %v474 = vpop.f32.mrb[0].mxu0
      %v475 = vadd.f32 %v269, %v474
      %v476 = vpop.f32.mrb[0].mxu0
      %477 = vmatprep.mubr.f32.mxu0 0.0
      %478 = vmatmul.mubr.f32.gmra.mrb[0].mxu0 %v300
      %v479 = vpop.f32.mrb[0].mxu0
      %v480 = vadd.f32 %v269, %v479
      %v481 = vpop.f32.mrb[0].mxu0
      %482 = vmatprep.mubr.f32.mxu0 0.0
      %483 = vmatmul.mubr.f32.gmra.mrb[0].mxu0 %v303
      %v484 = vpop.f32.mrb[0].mxu0
      %v485 = vadd.f32 %v269, %v484
      %v486 = vpop.f32.mrb[0].mxu0
      %487 = vmatprep.mubr.f32.mxu0 0.0
      %488 = vmatmul.mubr.f32.gmra.mrb[0].mxu0 %v306
      %v489 = vpop.f32.mrb[0].mxu0
      %v490 = vadd.f32 %v269, %v489
      %v491 = vpop.f32.mrb[0].mxu0
      %492 = vmatprep.mubr.f32.mxu0 0.0
      %493 = vmatmul.mubr.f32.gmra.mrb[0].mxu0 %v309
      %v494 = vpop.f32.mrb[0].mxu0
      %v495 = vadd.f32 %v269, %v494
      %v496 = vpop.f32.mrb[0].mxu0
      %497 = vmatprep.mubr.f32.mxu0 0.0
      %498 = vmatmul.mubr.f32.gmra.mrb[0].mxu0 %v312
      %v499 = vpop.f32.mrb[0].mxu0
      %v500 = vadd.f32 %v269, %v499
      %v501 = vpop.f32.mrb[0].mxu0
      %502 = vmatprep.mubr.f32.mxu0 0.0
      %503 = vmatmul.mubr.f32.gmra.mrb[0].mxu0 %v315
      %v504 = vpop.f32.mrb[0].mxu0
      %v505 = vadd.f32 %v269, %v504
      %v506 = vpop.f32.mrb[0].mxu0
      %507 = vmatprep.mubr.f32.mxu0 0.0
      %508 = vmatmul.mubr.f32.gmra.mrb[0].mxu0 %v318
      %v509 = vpop.f32.mrb[0].mxu0
      %v510 = vadd.f32 %v269, %v509
      %v511 = vpop.f32.mrb[0].mxu0
      %512 = vmatprep.mubr.f32.mxu0 0.0
      %513 = vmatmul.mubr.f32.gmra.mrb[0].mxu0 %v321
      %v514 = vpop.f32.mrb[0].mxu0
      %v515 = vadd.f32 %v269, %v514
      %v516 = vpop.f32.mrb[0].mxu0
      %517 = vmatprep.mubr.f32.mxu0 0.0
      %518 = vmatmul.mubr.f32.gmra.mrb[0].mxu0 %v324
      %v519 = vpop.f32.mrb[0].mxu0
      %v520 = vadd.f32 %v269, %v519
      %v521 = vpop.f32.mrb[0].mxu0
      %522 = vmatprep.mubr.f32.mxu0 0.0
      %523 = vmatmul.mubr.f32.gmra.mrb[0].mxu0 %v327
      %v524 = vpop.f32.mrb[0].mxu0
      %v525 = vadd.f32 %v269, %v524
      %v526 = vpop.f32.mrb[0].mxu0
      %527 = vmatprep.mubr.f32.mxu0 0.0
      %528 = vmatmul.mubr.f32.gmra.mrb[0].mxu0 %v330
      %v529 = vpop.f32.mrb[0].mxu0
      %v530 = vadd.f32 %v269, %v529
      %v531 = vpop.f32.mrb[0].mxu0
      %532 = vmatprep.mubr.f32.mxu0 0.0
      %533 = vmatmul.mubr.f32.gmra.mrb[0].mxu0 %v333
      %v534 = vpop.f32.mrb[0].mxu0
      %v535 = vadd.f32 %v269, %v534
      %v536 = vpop.f32.mrb[0].mxu0
      %537 = vmatprep.mubr.f32.mxu0 0.0
      %538 = vmatmul.mubr.f32.gmra.mrb[0].mxu0 %v336
      %v539 = vpop.f32.mrb[0].mxu0
      %v540 = vadd.f32 %v269, %v539
      %v541 = vpop.f32.mrb[0].mxu0
      %542 = vmatprep.mubr.f32.mxu0 0.0
      %543 = vmatmul.mubr.f32.gmra.mrb[0].mxu0 %v339
      %v544 = vpop.f32.mrb[0].mxu0
      %v545 = vadd.f32 %v269, %v544
      %v546 = vpop.f32.mrb[0].mxu0
      %547 = vmatprep.mubr.f32.mxu0 0.0
      %548 = vmatmul.mubr.f32.gmra.mrb[0].mxu0 %v342
      %v549 = vpop.f32.mrb[0].mxu0
      %v550 = vadd.f32 %v269, %v549
      %v551 = vpop.f32.mrb[0].mxu0
      %552 = vmatprep.mubr.f32.mxu0 0.0
      %553 = vmatmul.mubr.f32.gmra.mrb[0].mxu0 %v345
      %v554 = vpop.f32.mrb[0].mxu0
      %v555 = vadd.f32 %v269, %v554
      %v556 = vpop.f32.mrb[0].mxu0
      %557 = vmatprep.mubr.f32.mxu0 0.0
      %558 = vmatmul.mubr.f32.gmra.mrb[0].mxu0 %v348
      %v559 = vpop.f32.mrb[0].mxu0
      %v560 = vadd.f32 %v269, %v559
      %v561 = vpop.f32.mrb[0].mxu0
      %562 = vmatprep.mubr.f32.mxu0 0.0
      %563 = vmatmul.mubr.f32.gmra.mrb[0].mxu0 %v351
      %v564 = vpop.f32.mrb[0].mxu0
      %v565 = vadd.f32 %v269, %v564
      %v566 = vpop.f32.mrb[0].mxu0
      %567 = vmatprep.mubr.f32.mxu0 0.0
      %568 = vmatmul.mubr.f32.gmra.mrb[0].mxu0 %v354
      %v569 = vpop.f32.mrb[0].mxu0
      %v570 = vadd.f32 %v269, %v569
      %v571 = vpop.f32.mrb[0].mxu0
      %572 = vmatprep.mubr.f32.mxu0 0.0
      %573 = vmatmul.mubr.f32.gmra.mrb[0].mxu0 %v357
      %v574 = vpop.f32.mrb[0].mxu0
      %v575 = vadd.f32 %v269, %v574
      %v576 = vpop.f32.mrb[0].mxu0
      %577 = vmatprep.mubr.f32.mxu0 0.0
      %578 = vmatmul.mubr.f32.gmra.mrb[0].mxu0 %v360
      %v579 = vpop.f32.mrb[0].mxu0
      %v580 = vadd.f32 %v269, %v579
      %v581 = vpop.f32.mrb[0].mxu0
      %582 = vmatprep.mubr.f32.mxu0 0.0
      %583 = vmatmul.mubr.f32.gmra.mrb[0].mxu0 %v363
      %v584 = vpop.f32.mrb[0].mxu0
      %v585 = vadd.f32 %v269, %v584
      %v586 = vpop.f32.mrb[0].mxu0
      %587 = vmatprep.mubr.f32.mxu0 0.0
      %588 = vmatmul.mubr.f32.gmra.mrb[0].mxu0 %v366
      %v589 = vpop.f32.mrb[0].mxu0
      %v590 = vadd.f32 %v269, %v589
      %v591 = vpop.f32.mrb[0].mxu0
      %592 = vdwg.mxu0
      %v593 = vld [vmem:[%s215] sm:$0xff]
      %v594 = vld [vmem:[%s215 + $0x8] sm:$0xff]
      %v595 = vld [vmem:[%s215 + $0x10] sm:$0xff]
      %v596 = vld [vmem:[%s215 + $0x18] sm:$0xff]
      %v597 = vld [vmem:[%s215 + $0x20] sm:$0xff]
      %v598 = vld [vmem:[%s215 + $0x28] sm:$0xff]
      %v599 = vld [vmem:[%s215 + $0x30] sm:$0xff]
      %v600 = vld [vmem:[%s215 + $0x38] sm:$0xff]
      %v601 = vld [vmem:[%s215 + $0x40] sm:$0xff]
      %v602 = vld [vmem:[%s215 + $0x48] sm:$0xff]
      %v603 = vld [vmem:[%s215 + $0x50] sm:$0xff]
      %v604 = vld [vmem:[%s215 + $0x58] sm:$0xff]
      %v605 = vld [vmem:[%s215 + $0x60] sm:$0xff]
      %v606 = vld [vmem:[%s215 + $0x68] sm:$0xff]
      %v607 = vld [vmem:[%s215 + $0x70] sm:$0xff]
      %v608 = vld [vmem:[%s215 + $0x78] sm:$0xff]
      %v609 = vld [vmem:[%s215 + $0x80] sm:$0xff]
      %v610 = vld [vmem:[%s215 + $0x88] sm:$0xff]
      %v611 = vld [vmem:[%s215 + $0x90] sm:$0xff]
      %v612 = vld [vmem:[%s215 + $0x98] sm:$0xff]
      %v613 = vld [vmem:[%s215 + $0xa0] sm:$0xff]
      %v614 = vld [vmem:[%s215 + $0xa8] sm:$0xff]
      %v615 = vld [vmem:[%s215 + $0xb0] sm:$0xff]
      %v616 = vld [vmem:[%s215 + $0xb8] sm:$0xff]
      %v617 = vld [vmem:[%s215 + $0xc0] sm:$0xff]
      %v618 = vld [vmem:[%s215 + $0xc8] sm:$0xff]
      %v619 = vld [vmem:[%s215 + $0xd0] sm:$0xff]
      %v620 = vld [vmem:[%s215 + $0xd8] sm:$0xff]
      %v621 = vld [vmem:[%s215 + $0xe0] sm:$0xff]
      %v622 = vld [vmem:[%s215 + $0xe8] sm:$0xff]
      %v623 = vld [vmem:[%s215 + $0xf0] sm:$0xff]
      %v624 = vld [vmem:[%s215 + $0xf8] sm:$0xff]
      %v625 = vadd.f32 %v435, %v593
      %v626 = vadd.f32 %v440, %v594
      %v627 = vadd.f32 %v445, %v595
      %v628 = vadd.f32 %v450, %v596
      %v629 = vadd.f32 %v455, %v597
      %v630 = vadd.f32 %v460, %v598
      %v631 = vadd.f32 %v465, %v599
      %v632 = vadd.f32 %v470, %v600
      %v633 = vadd.f32 %v475, %v601
      %v634 = vadd.f32 %v480, %v602
      %v635 = vadd.f32 %v485, %v603
      %v636 = vadd.f32 %v490, %v604
      %v637 = vadd.f32 %v495, %v605
      %v638 = vadd.f32 %v500, %v606
      %v639 = vadd.f32 %v505, %v607
      %v640 = vadd.f32 %v510, %v608
      %v641 = vadd.f32 %v515, %v609
      %v642 = vadd.f32 %v520, %v610
      %v643 = vadd.f32 %v525, %v611
      %v644 = vadd.f32 %v530, %v612
      %v645 = vadd.f32 %v535, %v613
      %v646 = vadd.f32 %v540, %v614
      %v647 = vadd.f32 %v545, %v615
      %v648 = vadd.f32 %v550, %v616
      %v649 = vadd.f32 %v555, %v617
      %v650 = vadd.f32 %v560, %v618
      %v651 = vadd.f32 %v565, %v619
      %v652 = vadd.f32 %v570, %v620
      %v653 = vadd.f32 %v575, %v621
      %v654 = vadd.f32 %v580, %v622
      %v655 = vadd.f32 %v585, %v623
      %v656 = vadd.f32 %v590, %v624
      %657 = vst [vmem:[%s221] sm:$0xff] %v625
      %658 = vst [vmem:[%s221 + $0x8] sm:$0xff] %v626
      %659 = vst [vmem:[%s221 + $0x10] sm:$0xff] %v627
      %660 = vst [vmem:[%s221 + $0x18] sm:$0xff] %v628
      %661 = vst [vmem:[%s221 + $0x20] sm:$0xff] %v629
      %662 = vst [vmem:[%s221 + $0x28] sm:$0xff] %v630
      %663 = vst [vmem:[%s221 + $0x30] sm:$0xff] %v631
      %664 = vst [vmem:[%s221 + $0x38] sm:$0xff] %v632
      %665 = vst [vmem:[%s221 + $0x40] sm:$0xff] %v633
      %666 = vst [vmem:[%s221 + $0x48] sm:$0xff] %v634
      %667 = vst [vmem:[%s221 + $0x50] sm:$0xff] %v635
      %668 = vst [vmem:[%s221 + $0x58] sm:$0xff] %v636
      %669 = vst [vmem:[%s221 + $0x60] sm:$0xff] %v637
      %670 = vst [vmem:[%s221 + $0x68] sm:$0xff] %v638
      %671 = vst [vmem:[%s221 + $0x70] sm:$0xff] %v639
      %672 = vst [vmem:[%s221 + $0x78] sm:$0xff] %v640
      %673 = vst [vmem:[%s221 + $0x80] sm:$0xff] %v641
      %674 = vst [vmem:[%s221 + $0x88] sm:$0xff] %v642
      %675 = vst [vmem:[%s221 + $0x90] sm:$0xff] %v643
      %676 = vst [vmem:[%s221 + $0x98] sm:$0xff] %v644
      %677 = vst [vmem:[%s221 + $0xa0] sm:$0xff] %v645
      %678 = vst [vmem:[%s221 + $0xa8] sm:$0xff] %v646
      %679 = vst [vmem:[%s221 + $0xb0] sm:$0xff] %v647
      %680 = vst [vmem:[%s221 + $0xb8] sm:$0xff] %v648
      %681 = vst [vmem:[%s221 + $0xc0] sm:$0xff] %v649
      %682 = vst [vmem:[%s221 + $0xc8] sm:$0xff] %v650
      %683 = vst [vmem:[%s221 + $0xd0] sm:$0xff] %v651
      %684 = vst [vmem:[%s221 + $0xd8] sm:$0xff] %v652
      %685 = vst [vmem:[%s221 + $0xe0] sm:$0xff] %v653
      %686 = vst [vmem:[%s221 + $0xe8] sm:$0xff] %v654
      %687 = vst [vmem:[%s221 + $0xf0] sm:$0xff] %v655
      %688 = vst [vmem:[%s221 + $0xf8] sm:$0xff] %v656
      %s689 = smul.u32 32, %s15
      %p690 = scmp.lt.s32.totalorder %s689, 63
      %s691 = scalar_select %p690, %s689, 63
      %s692 = smul.addr %s691, 8
      %s693 = scalar_lea.vmem %s4, %s692
      // Predicated region
      $region37: #{n3net_forward.12} parent=35 // pred_check
        %p694 = pneg %p127
      $region38: #{n3net_forward.12} parent=35 // pred_check_branch
        %696 = sbr.rel (%p694) target = $region40
      $region39: #{n3net_forward.12} parent=35 // pred_region
        %s697 = smul.u32 32, %s15
      $region40: #{n3net_forward.12} parent=35 // pred_fallthru
        _
    $region36: #{n3net_forward.12} parent=5 // pred_fallthru
      _
    %p698 = scmp.le.s32.totalorder 2, %s10
    // Predicated region
    $region41: #{n3net_forward.12} parent=5 // pred_check
      %p699 = pneg %p698
    $region42: #{n3net_forward.12} parent=5 // pred_check_branch
      %701 = sbr.rel (%p699) target = $region44
    $region43: #{n3net_forward.12} parent=5 // pred_region
      %s702 = ssub.s32 %s10, 2
      // Predicated region
      $region45: #{n3net_forward.12} parent=43 // pred_check
        %p703 = pneg %p133
      $region46: #{n3net_forward.12} parent=43 // pred_check_branch
        %705 = sbr.rel (%p703) target = $region48
      $region47: #{n3net_forward.12} parent=43 // pred_region
        %s706 = smul.u32 32, %s16
        %p707 = scmp.lt.s32.totalorder %s706, 63
        %s708 = scalar_select %p707, %s706, 63
        %s709 = smul.addr %s708, 8
        %s710 = scalar_lea.vmem %s4, %s709
      $region48: #{n3net_forward.12} parent=43 // pred_fallthru
        _
    $region44: #{n3net_forward.12} parent=5 // pred_fallthru
      _
  $region6: #{n3net_forward.12} parent=0 // loop_footer
    %s14 = sadd.s32 1, %s10
  $region7: #{n3net_forward.12} parent=0 // loop_footer_branch
    %9 = sbr.rel target = $region3
  $region8: #{n3net_forward.12} parent=0 // loop_exit
    _

// kernel: n3net_forward.11
$region0: #{n3net_forward.11}
  #allocation0 [shape = 'u32[]', space=smem, size = 0x4, offset = 0x4, fixed_abs, tag = 'smem constant byte address 0x4 - core index']
  #allocation1 [shape = 'u32[144,128]{1,0:T(1,128)}', space=vmem, size = 0x12000, scoped, tag = 'internal scratch']
  %s0 = inlined_call_operand.vmem [shape: f32[512,72], index: 0, kind: input, shape index: {}]
  %s1 = inlined_call_operand.vmem [shape: f32[72,128], index: 1, kind: input, shape index: {}]
  %s2 = inlined_call_operand.vmem [shape: f32[1,128], index: 2, kind: input, shape index: {}]
  %s3 = inlined_call_operand.vmem [shape: f32[1,128], index: 3, kind: input, shape index: {}]
  %s4 = inlined_call_operand.vmem [shape: f32[512,128], index: 4, kind: output, shape index: {}]
  %s5 = sld [smem:[#allocation0]]
  $region26: #{n3net_forward.11} parent=0
    _
  %s7 = ssub.s32 1, %s5
  %s8 = scalar_select 0, %s7, %s5
  // Predicated region
  $region2: #{n3net_forward.11} parent=0 // pred_check
    _
  $region3: #{n3net_forward.11} parent=0 // pred_check_branch
    %10 = sbr.rel (0) target = $region5
  $region4: #{n3net_forward.11} parent=0 // pred_region
    _
  $region5: #{n3net_forward.11} parent=0 // pred_fallthru
    _
  // Predicated region
  $region6: #{n3net_forward.11} parent=0 // pred_check
    _
  $region7: #{n3net_forward.11} parent=0 // pred_check_branch
    %12 = sbr.rel (0) target = $region9
  $region8: #{n3net_forward.11} parent=0 // pred_region
    _
  $region9: #{n3net_forward.11} parent=0 // pred_fallthru
    _
  // Predicated region
  $region10: #{n3net_forward.11} parent=0 // pred_check
    _
  $region11: #{n3net_forward.11} parent=0 // pred_check_branch
    %14 = sbr.rel (0) target = $region13
  $region12: #{n3net_forward.11} parent=0 // pred_region
    _
  $region13: #{n3net_forward.11} parent=0 // pred_fallthru
    _
  // Predicated region
  $region14: #{n3net_forward.11} parent=0 // pred_check
    _
  $region15: #{n3net_forward.11} parent=0 // pred_check_branch
    %16 = sbr.rel (0) target = $region17
  $region16: #{n3net_forward.11} parent=0 // pred_region
    _
  $region17: #{n3net_forward.11} parent=0 // pred_fallthru
    _
  %v17 = vld [vmem:[%s0] sm:$0xff]
  %v18 = vld [vmem:[%s0 + $0x8] sm:$0xff]
  %v19 = vld [vmem:[%s0 + $0x10] sm:$0xff]
  %v20 = vld [vmem:[%s0 + $0x18] sm:$0xff]
  %v21 = vld [vmem:[%s0 + $0x20] sm:$0xff]
  %v22 = vld [vmem:[%s0 + $0x28] sm:$0xff]
  %v23 = vld [vmem:[%s0 + $0x30] sm:$0xff]
  %v24 = vld [vmem:[%s0 + $0x38] sm:$0xff]
  %v25 = vld [vmem:[%s0 + $0x40] sm:$0xff]
  %v26 = vld [vmem:[%s0 + $0x48] sm:$0xff]
  %v27 = vld [vmem:[%s0 + $0x50] sm:$0xff]
  %v28 = vld [vmem:[%s0 + $0x58] sm:$0xff]
  %v29 = vld [vmem:[%s0 + $0x60] sm:$0xff]
  %v30 = vld [vmem:[%s0 + $0x68] sm:$0xff]
  %v31 = vld [vmem:[%s0 + $0x70] sm:$0xff]
  %v32 = vld [vmem:[%s0 + $0x78] sm:$0xff]
  %v33 = vld [vmem:[%s0 + $0x80] sm:$0xff]
  %v34 = vld [vmem:[%s0 + $0x88] sm:$0xff]
  %v35 = vld [vmem:[%s0 + $0x90] sm:$0xff]
  %v36 = vld [vmem:[%s0 + $0x98] sm:$0xff]
  %v37 = vld [vmem:[%s0 + $0xa0] sm:$0xff]
  %v38 = vld [vmem:[%s0 + $0xa8] sm:$0xff]
  %v39 = vld [vmem:[%s0 + $0xb0] sm:$0xff]
  %v40 = vld [vmem:[%s0 + $0xb8] sm:$0xff]
  %v41 = vld [vmem:[%s0 + $0xc0] sm:$0xff]
  %v42 = vld [vmem:[%s0 + $0xc8] sm:$0xff]
  %v43 = vld [vmem:[%s0 + $0xd0] sm:$0xff]
  %v44 = vld [vmem:[%s0 + $0xd8] sm:$0xff]
  %v45 = vld [vmem:[%s0 + $0xe0] sm:$0xff]
  %v46 = vld [vmem:[%s0 + $0xe8] sm:$0xff]
  %v47 = vld [vmem:[%s0 + $0xf0] sm:$0xff]
  %v48 = vld [vmem:[%s0 + $0xf8] sm:$0xff]
  %v49 = vld [vmem:[%s0 + $0x100] sm:$0xff]
  %v50 = vld [vmem:[%s0 + $0x108] sm:$0xff]
  %v51 = vld [vmem:[%s0 + $0x110] sm:$0xff]
  %v52 = vld [vmem:[%s0 + $0x118] sm:$0xff]
  %v53 = vld [vmem:[%s0 + $0x120] sm:$0xff]
  %v54 = vld [vmem:[%s0 + $0x128] sm:$0xff]
  %v55 = vld [vmem:[%s0 + $0x130] sm:$0xff]
  %v56 = vld [vmem:[%s0 + $0x138] sm:$0xff]
  %v57 = vld [vmem:[%s0 + $0x140] sm:$0xff]
  %v58 = vld [vmem:[%s0 + $0x148] sm:$0xff]
  %v59 = vld [vmem:[%s0 + $0x150] sm:$0xff]
  %v60 = vld [vmem:[%s0 + $0x158] sm:$0xff]
  %v61 = vld [vmem:[%s0 + $0x160] sm:$0xff]
  %v62 = vld [vmem:[%s0 + $0x168] sm:$0xff]
  %v63 = vld [vmem:[%s0 + $0x170] sm:$0xff]
  %v64 = vld [vmem:[%s0 + $0x178] sm:$0xff]
  %v65 = vld [vmem:[%s0 + $0x180] sm:$0xff]
  %v66 = vld [vmem:[%s0 + $0x188] sm:$0xff]
  %v67 = vld [vmem:[%s0 + $0x190] sm:$0xff]
  %v68 = vld [vmem:[%s0 + $0x198] sm:$0xff]
  %v69 = vld [vmem:[%s0 + $0x1a0] sm:$0xff]
  %v70 = vld [vmem:[%s0 + $0x1a8] sm:$0xff]
  %v71 = vld [vmem:[%s0 + $0x1b0] sm:$0xff]
  %v72 = vld [vmem:[%s0 + $0x1b8] sm:$0xff]
  %v73 = vld [vmem:[%s0 + $0x1c0] sm:$0xff]
  %v74 = vld [vmem:[%s0 + $0x1c8] sm:$0xff]
  %v75 = vld [vmem:[%s0 + $0x1d0] sm:$0xff]
  %v76 = vld [vmem:[%s0 + $0x1d8] sm:$0xff]
  %v77 = vld [vmem:[%s0 + $0x1e0] sm:$0xff]
  %v78 = vld [vmem:[%s0 + $0x1e8] sm:$0xff]
  %v79 = vld [vmem:[%s0 + $0x1f0] sm:$0xff]
  %v80 = vld [vmem:[%s0 + $0x1f8] sm:$0xff]
  %v81 = vld [vmem:[%s1] sm:$0xff]
  %v82 = vld [vmem:[%s1 + $0x8] sm:$0xff]
  %v83 = vld [vmem:[%s1 + $0x10] sm:$0xff]
  %v84 = vld [vmem:[%s1 + $0x18] sm:$0xff]
  %v85 = vld [vmem:[%s1 + $0x20] sm:$0xff]
  %v86 = vld [vmem:[%s1 + $0x28] sm:$0xff]
  %v87 = vld [vmem:[%s1 + $0x30] sm:$0xff]
  %v88 = vld [vmem:[%s1 + $0x38] sm:$0xff]
  %v89 = vld [vmem:[%s1 + $0x40] sm:$0xff]
  %vm90 = vcmask 588800
  %v92 = vsel %vm90, %v17, 0
  %v95 = vsel %vm90, %v18, 0
  %v98 = vsel %vm90, %v19, 0
  %v101 = vsel %vm90, %v20, 0
  %v104 = vsel %vm90, %v21, 0
  %v107 = vsel %vm90, %v22, 0
  %v110 = vsel %vm90, %v23, 0
  %v113 = vsel %vm90, %v24, 0
  %v116 = vsel %vm90, %v25, 0
  %v119 = vsel %vm90, %v26, 0
  %v122 = vsel %vm90, %v27, 0
  %v125 = vsel %vm90, %v28, 0
  %v128 = vsel %vm90, %v29, 0
  %v131 = vsel %vm90, %v30, 0
  %v134 = vsel %vm90, %v31, 0
  %v137 = vsel %vm90, %v32, 0
  %v140 = vsel %vm90, %v33, 0
  %v143 = vsel %vm90, %v34, 0
  %v146 = vsel %vm90, %v35, 0
  %v149 = vsel %vm90, %v36, 0
  %v152 = vsel %vm90, %v37, 0
  %v155 = vsel %vm90, %v38, 0
  %v158 = vsel %vm90, %v39, 0
  %v161 = vsel %vm90, %v40, 0
  %v164 = vsel %vm90, %v41, 0
  %v167 = vsel %vm90, %v42, 0
  %v170 = vsel %vm90, %v43, 0
  %v173 = vsel %vm90, %v44, 0
  %v176 = vsel %vm90, %v45, 0
  %v179 = vsel %vm90, %v46, 0
  %v182 = vsel %vm90, %v47, 0
  %v185 = vsel %vm90, %v48, 0
  %v188 = vsel %vm90, %v49, 0
  %v191 = vsel %vm90, %v50, 0
  %v194 = vsel %vm90, %v51, 0
  %v197 = vsel %vm90, %v52, 0
  %v200 = vsel %vm90, %v53, 0
  %v203 = vsel %vm90, %v54, 0
  %v206 = vsel %vm90, %v55, 0
  %v209 = vsel %vm90, %v56, 0
  %v212 = vsel %vm90, %v57, 0
  %v215 = vsel %vm90, %v58, 0
  %v218 = vsel %vm90, %v59, 0
  %v221 = vsel %vm90, %v60, 0
  %v224 = vsel %vm90, %v61, 0
  %v227 = vsel %vm90, %v62, 0
  %v230 = vsel %vm90, %v63, 0
  %v233 = vsel %vm90, %v64, 0
  %v236 = vsel %vm90, %v65, 0
  %v239 = vsel %vm90, %v66, 0
  %v242 = vsel %vm90, %v67, 0
  %v245 = vsel %vm90, %v68, 0
  %v248 = vsel %vm90, %v69, 0
  %v251 = vsel %vm90, %v70, 0
  %v254 = vsel %vm90, %v71, 0
  %v257 = vsel %vm90, %v72, 0
  %v260 = vsel %vm90, %v73, 0
  %v263 = vsel %vm90, %v74, 0
  %v266 = vsel %vm90, %v75, 0
  %v269 = vsel %vm90, %v76, 0
  %v272 = vsel %vm90, %v77, 0
  %v275 = vsel %vm90, %v78, 0
  %v278 = vsel %vm90, %v79, 0
  %v281 = vsel %vm90, %v80, 0
  %283 = vmatprep.subr.mxu0 0.0
  %284 = vmatpush1.msra.mxu0 %v81
  %285 = vmatprep.subr.mxu0 0.0
  %286 = vmatpush1.msra.mxu0 %v82
  %287 = vmatprep.subr.mxu0 0.0
  %288 = vmatpush1.msra.mxu0 %v83
  %289 = vmatprep.subr.mxu0 0.0
  %290 = vmatpush1.msra.mxu0 %v84
  %291 = vmatprep.subr.mxu0 0.0
  %292 = vmatpush1.msra.mxu0 %v85
  %293 = vmatprep.subr.mxu0 0.0
  %294 = vmatpush1.msra.mxu0 %v86
  %295 = vmatprep.subr.mxu0 0.0
  %296 = vmatpush1.msra.mxu0 %v87
  %297 = vmatprep.subr.mxu0 0.0
  %298 = vmatpush1.msra.mxu0 %v88
  %299 = vmatprep.subr.mxu0 0.0
  %300 = vmatpush1.msra.mxu0 %v89
  %301 = vmatprep.subr.mxu0 0.0
  %302 = vmatpush1.msra.mxu0 0.0
  %303 = vmatprep.subr.mxu0 0.0
  %304 = vmatpush1.msra.mxu0 0.0
  %305 = vmatprep.subr.mxu0 0.0
  %306 = vmatpush1.msra.mxu0 0.0
  %307 = vmatprep.subr.mxu0 0.0
  %308 = vmatpush1.msra.mxu0 0.0
  %309 = vmatprep.subr.mxu0 0.0
  %310 = vmatpush1.msra.mxu0 0.0
  %311 = vmatprep.subr.mxu0 0.0
  %312 = vmatpush1.msra.mxu0 0.0
  %313 = vmatprep.subr.mxu0 0.0
  %314 = vmatpush1.msra.mxu0 0.0
  %315 = vmatprep.subr.mxu0 0.0
  %316 = vmatpush1.msra.mxu0 0.0
  %317 = vmatprep.subr.mxu0 0.0
  %318 = vmatpush1.msra.mxu0 0.0
  %319 = vmatprep.subr.mxu0 0.0
  %320 = vmatpush1.msra.mxu0 0.0
  %321 = vmatprep.subr.mxu0 0.0
  %322 = vmatpush1.msra.mxu0 0.0
  %323 = vmatprep.subr.mxu0 0.0
  %324 = vmatpush1.msra.mxu0 0.0
  %325 = vmatprep.subr.mxu0 0.0
  %326 = vmatpush1.msra.mxu0 0.0
  %327 = vmatprep.subr.mxu0 0.0
  %328 = vmatpush1.msra.mxu0 0.0
  %329 = vmatprep.subr.mxu0 0.0
  %330 = vmatpush1.msra.mxu0 0.0
  %331 = vmatprep.subr.mxu0 0.0
  %332 = vmatpush1.msra.mxu0 0.0
  %333 = vmatprep.subr.mxu0 0.0
  %334 = vmatpush1.msra.mxu0 0.0
  %335 = vmatprep.subr.mxu0 0.0
  %336 = vmatpush1.msra.mxu0 0.0
  %337 = vmatprep.subr.mxu0 0.0
  %338 = vmatpush1.msra.mxu0 0.0
  %339 = vmatprep.subr.mxu0 0.0
  %340 = vmatpush1.msra.mxu0 0.0
  %341 = vmatprep.subr.mxu0 0.0
  %342 = vmatpush1.msra.mxu0 0.0
  %343 = vmatprep.subr.mxu0 0.0
  %344 = vmatpush1.msra.mxu0 0.0
  %345 = vmatprep.subr.mxu0 0.0
  %346 = vmatpush1.msra.mxu0 0.0
  %347 = vmatprep.mubr.f32.mxu0 0.0
  %348 = vmatmul.mubr.f32.gmra.mrb[0].mxu0 %v92
  %v349 = vpop.f32.mrb[0].mxu0
  %v350 = vadd.f32 0.0, %v349
  %v351 = vpop.f32.mrb[0].mxu0
  %352 = vmatprep.mubr.f32.mxu0 0.0
  %353 = vmatmul.mubr.f32.gmra.mrb[0].mxu0 %v95
  %v354 = vpop.f32.mrb[0].mxu0
  %v355 = vadd.f32 0.0, %v354
  %v356 = vpop.f32.mrb[0].mxu0
  %357 = vmatprep.mubr.f32.mxu0 0.0
  %358 = vmatmul.mubr.f32.gmra.mrb[0].mxu0 %v98
  %v359 = vpop.f32.mrb[0].mxu0
  %v360 = vadd.f32 0.0, %v359
  %v361 = vpop.f32.mrb[0].mxu0
  %362 = vmatprep.mubr.f32.mxu0 0.0
  %363 = vmatmul.mubr.f32.gmra.mrb[0].mxu0 %v101
  %v364 = vpop.f32.mrb[0].mxu0
  %v365 = vadd.f32 0.0, %v364
  %v366 = vpop.f32.mrb[0].mxu0
  %367 = vmatprep.mubr.f32.mxu0 0.0
  %368 = vmatmul.mubr.f32.gmra.mrb[0].mxu0 %v104
  %v369 = vpop.f32.mrb[0].mxu0
  %v370 = vadd.f32 0.0, %v369
  %v371 = vpop.f32.mrb[0].mxu0
  %372 = vmatprep.mubr.f32.mxu0 0.0
  %373 = vmatmul.mubr.f32.gmra.mrb[0].mxu0 %v107
  %v374 = vpop.f32.mrb[0].mxu0
  %v375 = vadd.f32 0.0, %v374
  %v376 = vpop.f32.mrb[0].mxu0
  %377 = vmatprep.mubr.f32.mxu0 0.0
  %378 = vmatmul.mubr.f32.gmra.mrb[0].mxu0 %v110
  %v379 = vpop.f32.mrb[0].mxu0
  %v380 = vadd.f32 0.0, %v379
  %v381 = vpop.f32.mrb[0].mxu0
  %382 = vmatprep.mubr.f32.mxu0 0.0
  %383 = vmatmul.mubr.f32.gmra.mrb[0].mxu0 %v113
  %v384 = vpop.f32.mrb[0].mxu0
  %v385 = vadd.f32 0.0, %v384
  %v386 = vpop.f32.mrb[0].mxu0
  %387 = vmatprep.mubr.f32.mxu0 0.0
  %388 = vmatmul.mubr.f32.gmra.mrb[0].mxu0 %v116
  %v389 = vpop.f32.mrb[0].mxu0
  %v390 = vadd.f32 0.0, %v389
  %v391 = vpop.f32.mrb[0].mxu0
  %392 = vmatprep.mubr.f32.mxu0 0.0
  %393 = vmatmul.mubr.f32.gmra.mrb[0].mxu0 %v119
  %v394 = vpop.f32.mrb[0].mxu0
  %v395 = vadd.f32 0.0, %v394
  %v396 = vpop.f32.mrb[0].mxu0
  %397 = vmatprep.mubr.f32.mxu0 0.0
  %398 = vmatmul.mubr.f32.gmra.mrb[0].mxu0 %v122
  %v399 = vpop.f32.mrb[0].mxu0
  %v400 = vadd.f32 0.0, %v399
  %v401 = vpop.f32.mrb[0].mxu0
  %402 = vmatprep.mubr.f32.mxu0 0.0
  %403 = vmatmul.mubr.f32.gmra.mrb[0].mxu0 %v125
  %v404 = vpop.f32.mrb[0].mxu0
  %v405 = vadd.f32 0.0, %v404
  %v406 = vpop.f32.mrb[0].mxu0
  %407 = vmatprep.mubr.f32.mxu0 0.0
  %408 = vmatmul.mubr.f32.gmra.mrb[0].mxu0 %v128
  %v409 = vpop.f32.mrb[0].mxu0
  %v410 = vadd.f32 0.0, %v409
  %v411 = vpop.f32.mrb[0].mxu0
  %412 = vmatprep.mubr.f32.mxu0 0.0
  %413 = vmatmul.mubr.f32.gmra.mrb[0].mxu0 %v131
  %v414 = vpop.f32.mrb[0].mxu0
  %v415 = vadd.f32 0.0, %v414
  %v416 = vpop.f32.mrb[0].mxu0
  %417 = vmatprep.mubr.f32.mxu0 0.0
  %418 = vmatmul.mubr.f32.gmra.mrb[0].mxu0 %v134
  %v419 = vpop.f32.mrb[0].mxu0
  %v420 = vadd.f32 0.0, %v419
  %v421 = vpop.f32.mrb[0].mxu0
  %422 = vmatprep.mubr.f32.mxu0 0.0
  %423 = vmatmul.mubr.f32.gmra.mrb[0].mxu0 %v137
  %v424 = vpop.f32.mrb[0].mxu0
  %v425 = vadd.f32 0.0, %v424
  %v426 = vpop.f32.mrb[0].mxu0
  %427 = vmatprep.mubr.f32.mxu0 0.0
  %428 = vmatmul.mubr.f32.gmra.mrb[0].mxu0 %v140
  %v429 = vpop.f32.mrb[0].mxu0
  %v430 = vadd.f32 0.0, %v429
  %v431 = vpop.f32.mrb[0].mxu0
  %432 = vmatprep.mubr.f32.mxu0 0.0
  %433 = vmatmul.mubr.f32.gmra.mrb[0].mxu0 %v143
  %v434 = vpop.f32.mrb[0].mxu0
  %v435 = vadd.f32 0.0, %v434
  %v436 = vpop.f32.mrb[0].mxu0
  %437 = vmatprep.mubr.f32.mxu0 0.0
  %438 = vmatmul.mubr.f32.gmra.mrb[0].mxu0 %v146
  %v439 = vpop.f32.mrb[0].mxu0
  %v440 = vadd.f32 0.0, %v439
  %v441 = vpop.f32.mrb[0].mxu0
  %442 = vmatprep.mubr.f32.mxu0 0.0
  %443 = vmatmul.mubr.f32.gmra.mrb[0].mxu0 %v149
  %v444 = vpop.f32.mrb[0].mxu0
  %v445 = vadd.f32 0.0, %v444
  %v446 = vpop.f32.mrb[0].mxu0
  %447 = vmatprep.mubr.f32.mxu0 0.0
  %448 = vmatmul.mubr.f32.gmra.mrb[0].mxu0 %v152
  %v449 = vpop.f32.mrb[0].mxu0
  %v450 = vadd.f32 0.0, %v449
  %v451 = vpop.f32.mrb[0].mxu0
  %452 = vmatprep.mubr.f32.mxu0 0.0
  %453 = vmatmul.mubr.f32.gmra.mrb[0].mxu0 %v155
  %v454 = vpop.f32.mrb[0].mxu0
  %v455 = vadd.f32 0.0, %v454
  %v456 = vpop.f32.mrb[0].mxu0
  %457 = vmatprep.mubr.f32.mxu0 0.0
  %458 = vmatmul.mubr.f32.gmra.mrb[0].mxu0 %v158
  %v459 = vpop.f32.mrb[0].mxu0
  %v460 = vadd.f32 0.0, %v459
  %v461 = vpop.f32.mrb[0].mxu0
  %462 = vmatprep.mubr.f32.mxu0 0.0
  %463 = vmatmul.mubr.f32.gmra.mrb[0].mxu0 %v161
  %v464 = vpop.f32.mrb[0].mxu0
  %v465 = vadd.f32 0.0, %v464
  %v466 = vpop.f32.mrb[0].mxu0
  %467 = vmatprep.mubr.f32.mxu0 0.0
  %468 = vmatmul.mubr.f32.gmra.mrb[0].mxu0 %v164
  %v469 = vpop.f32.mrb[0].mxu0
  %v470 = vadd.f32 0.0, %v469
  %v471 = vpop.f32.mrb[0].mxu0
  %472 = vmatprep.mubr.f32.mxu0 0.0
  %473 = vmatmul.mubr.f32.gmra.mrb[0].mxu0 %v167
  %v474 = vpop.f32.mrb[0].mxu0
  %v475 = vadd.f32 0.0, %v474
  %v476 = vpop.f32.mrb[0].mxu0
  %477 = vmatprep.mubr.f32.mxu0 0.0
  %478 = vmatmul.mubr.f32.gmra.mrb[0].mxu0 %v170
  %v479 = vpop.f32.mrb[0].mxu0
  %v480 = vadd.f32 0.0, %v479
  %v481 = vpop.f32.mrb[0].mxu0
  %482 = vmatprep.mubr.f32.mxu0 0.0
  %483 = vmatmul.mubr.f32.gmra.mrb[0].mxu0 %v173
  %v484 = vpop.f32.mrb[0].mxu0
  %v485 = vadd.f32 0.0, %v484
  %v486 = vpop.f32.mrb[0].mxu0
  %487 = vmatprep.mubr.f32.mxu0 0.0
  %488 = vmatmul.mubr.f32.gmra.mrb[0].mxu0 %v176
  %v489 = vpop.f32.mrb[0].mxu0
  %v490 = vadd.f32 0.0, %v489
  %v491 = vpop.f32.mrb[0].mxu0
  %492 = vmatprep.mubr.f32.mxu0 0.0
  %493 = vmatmul.mubr.f32.gmra.mrb[0].mxu0 %v179
  %v494 = vpop.f32.mrb[0].mxu0
  %v495 = vadd.f32 0.0, %v494
  %v496 = vpop.f32.mrb[0].mxu0
  %497 = vmatprep.mubr.f32.mxu0 0.0
  %498 = vmatmul.mubr.f32.gmra.mrb[0].mxu0 %v182
  %v499 = vpop.f32.mrb[0].mxu0
  %v500 = vadd.f32 0.0, %v499
  %v501 = vpop.f32.mrb[0].mxu0
  %502 = vmatprep.mubr.f32.mxu0 0.0
  %503 = vmatmul.mubr.f32.gmra.mrb[0].mxu0 %v185
  %v504 = vpop.f32.mrb[0].mxu0
  %v505 = vadd.f32 0.0, %v504
  %v506 = vpop.f32.mrb[0].mxu0
  %507 = vmatprep.mubr.f32.mxu0 0.0
  %508 = vmatmul.mubr.f32.gmra.mrb[0].mxu0 %v188
  %v509 = vpop.f32.mrb[0].mxu0
  %v510 = vadd.f32 0.0, %v509
  %v511 = vpop.f32.mrb[0].mxu0
  %512 = vmatprep.mubr.f32.mxu0 0.0
  %513 = vmatmul.mubr.f32.gmra.mrb[0].mxu0 %v191
  %v514 = vpop.f32.mrb[0].mxu0
  %v515 = vadd.f32 0.0, %v514
  %v516 = vpop.f32.mrb[0].mxu0
  %517 = vmatprep.mubr.f32.mxu0 0.0
  %518 = vmatmul.mubr.f32.gmra.mrb[0].mxu0 %v194
  %v519 = vpop.f32.mrb[0].mxu0
  %v520 = vadd.f32 0.0, %v519
  %v521 = vpop.f32.mrb[0].mxu0
  %522 = vmatprep.mubr.f32.mxu0 0.0
  %523 = vmatmul.mubr.f32.gmra.mrb[0].mxu0 %v197
  %v524 = vpop.f32.mrb[0].mxu0
  %v525 = vadd.f32 0.0, %v524
  %v526 = vpop.f32.mrb[0].mxu0
  %527 = vmatprep.mubr.f32.mxu0 0.0
  %528 = vmatmul.mubr.f32.gmra.mrb[0].mxu0 %v200
  %v529 = vpop.f32.mrb[0].mxu0
  %v530 = vadd.f32 0.0, %v529
  %v531 = vpop.f32.mrb[0].mxu0
  %532 = vmatprep.mubr.f32.mxu0 0.0
  %533 = vmatmul.mubr.f32.gmra.mrb[0].mxu0 %v203
  %v534 = vpop.f32.mrb[0].mxu0
  %v535 = vadd.f32 0.0, %v534
  %v536 = vpop.f32.mrb[0].mxu0
  %537 = vmatprep.mubr.f32.mxu0 0.0
  %538 = vmatmul.mubr.f32.gmra.mrb[0].mxu0 %v206
  %v539 = vpop.f32.mrb[0].mxu0
  %v540 = vadd.f32 0.0, %v539
  %v541 = vpop.f32.mrb[0].mxu0
  %542 = vmatprep.mubr.f32.mxu0 0.0
  %543 = vmatmul.mubr.f32.gmra.mrb[0].mxu0 %v209
  %v544 = vpop.f32.mrb[0].mxu0
  %v545 = vadd.f32 0.0, %v544
  %v546 = vpop.f32.mrb[0].mxu0
  %547 = vmatprep.mubr.f32.mxu0 0.0
  %548 = vmatmul.mubr.f32.gmra.mrb[0].mxu0 %v212
  %v549 = vpop.f32.mrb[0].mxu0
  %v550 = vadd.f32 0.0, %v549
  %v551 = vpop.f32.mrb[0].mxu0
  %552 = vmatprep.mubr.f32.mxu0 0.0
  %553 = vmatmul.mubr.f32.gmra.mrb[0].mxu0 %v215
  %v554 = vpop.f32.mrb[0].mxu0
  %v555 = vadd.f32 0.0, %v554
  %v556 = vpop.f32.mrb[0].mxu0
  %557 = vmatprep.mubr.f32.mxu0 0.0
  %558 = vmatmul.mubr.f32.gmra.mrb[0].mxu0 %v218
  %v559 = vpop.f32.mrb[0].mxu0
  %v560 = vadd.f32 0.0, %v559
  %v561 = vpop.f32.mrb[0].mxu0
  %562 = vmatprep.mubr.f32.mxu0 0.0
  %563 = vmatmul.mubr.f32.gmra.mrb[0].mxu0 %v221
  %v564 = vpop.f32.mrb[0].mxu0
  %v565 = vadd.f32 0.0, %v564
  %v566 = vpop.f32.mrb[0].mxu0
  %567 = vmatprep.mubr.f32.mxu0 0.0
  %568 = vmatmul.mubr.f32.gmra.mrb[0].mxu0 %v224
  %v569 = vpop.f32.mrb[0].mxu0
  %v570 = vadd.f32 0.0, %v569
  %v571 = vpop.f32.mrb[0].mxu0
  %572 = vmatprep.mubr.f32.mxu0 0.0
  %573 = vmatmul.mubr.f32.gmra.mrb[0].mxu0 %v227
  %v574 = vpop.f32.mrb[0].mxu0
  %v575 = vadd.f32 0.0, %v574
  %v576 = vpop.f32.mrb[0].mxu0
  %577 = vmatprep.mubr.f32.mxu0 0.0
  %578 = vmatmul.mubr.f32.gmra.mrb[0].mxu0 %v230
  %v579 = vpop.f32.mrb[0].mxu0
  %v580 = vadd.f32 0.0, %v579
  %v581 = vpop.f32.mrb[0].mxu0
  %582 = vmatprep.mubr.f32.mxu0 0.0
  %583 = vmatmul.mubr.f32.gmra.mrb[0].mxu0 %v233
  %v584 = vpop.f32.mrb[0].mxu0
  %v585 = vadd.f32 0.0, %v584
  %v586 = vpop.f32.mrb[0].mxu0
  %587 = vmatprep.mubr.f32.mxu0 0.0
  %588 = vmatmul.mubr.f32.gmra.mrb[0].mxu0 %v236
  %v589 = vpop.f32.mrb[0].mxu0
  %v590 = vadd.f32 0.0, %v589
  %v591 = vpop.f32.mrb[0].mxu0
  %592 = vmatprep.mubr.f32.mxu0 0.0
  %593 = vmatmul.mubr.f32.gmra.mrb[0].mxu0 %v239
  %v594 = vpop.f32.mrb[0].mxu0
  %v595 = vadd.f32 0.0, %v594
  %v596 = vpop.f32.mrb[0].mxu0
  %597 = vmatprep.mubr.f32.mxu0 0.0
  %598 = vmatmul.mubr.f32.gmra.mrb[0].mxu0 %v242
  %v599 = vpop.f32.mrb[0].mxu0
  %v600 = vadd.f32 0.0, %v599
  %v601 = vpop.f32.mrb[0].mxu0
  %602 = vmatprep.mubr.f32.mxu0 0.0
  %603 = vmatmul.mubr.f32.gmra.mrb[0].mxu0 %v245
  %v604 = vpop.f32.mrb[0].mxu0
  %v605 = vadd.f32 0.0, %v604
  %v606 = vpop.f32.mrb[0].mxu0
  %607 = vmatprep.mubr.f32.mxu0 0.0
  %608 = vmatmul.mubr.f32.gmra.mrb[0].mxu0 %v248
  %v609 = vpop.f32.mrb[0].mxu0
  %v610 = vadd.f32 0.0, %v609
  %v611 = vpop.f32.mrb[0].mxu0
  %612 = vmatprep.mubr.f32.mxu0 0.0
  %613 = vmatmul.mubr.f32.gmra.mrb[0].mxu0 %v251
  %v614 = vpop.f32.mrb[0].mxu0
  %v615 = vadd.f32 0.0, %v614
  %v616 = vpop.f32.mrb[0].mxu0
  %617 = vmatprep.mubr.f32.mxu0 0.0
  %618 = vmatmul.mubr.f32.gmra.mrb[0].mxu0 %v254
  %v619 = vpop.f32.mrb[0].mxu0
  %v620 = vadd.f32 0.0, %v619
  %v621 = vpop.f32.mrb[0].mxu0
  %622 = vmatprep.mubr.f32.mxu0 0.0
  %623 = vmatmul.mubr.f32.gmra.mrb[0].mxu0 %v257
  %v624 = vpop.f32.mrb[0].mxu0
  %v625 = vadd.f32 0.0, %v624
  %v626 = vpop.f32.mrb[0].mxu0
  %627 = vmatprep.mubr.f32.mxu0 0.0
  %628 = vmatmul.mubr.f32.gmra.mrb[0].mxu0 %v260
  %v629 = vpop.f32.mrb[0].mxu0
  %v630 = vadd.f32 0.0, %v629
  %v631 = vpop.f32.mrb[0].mxu0
  %632 = vmatprep.mubr.f32.mxu0 0.0
  %633 = vmatmul.mubr.f32.gmra.mrb[0].mxu0 %v263
  %v634 = vpop.f32.mrb[0].mxu0
  %v635 = vadd.f32 0.0, %v634
  %v636 = vpop.f32.mrb[0].mxu0
  %637 = vmatprep.mubr.f32.mxu0 0.0
  %638 = vmatmul.mubr.f32.gmra.mrb[0].mxu0 %v266
  %v639 = vpop.f32.mrb[0].mxu0
  %v640 = vadd.f32 0.0, %v639
  %v641 = vpop.f32.mrb[0].mxu0
  %642 = vmatprep.mubr.f32.mxu0 0.0
  %643 = vmatmul.mubr.f32.gmra.mrb[0].mxu0 %v269
  %v644 = vpop.f32.mrb[0].mxu0
  %v645 = vadd.f32 0.0, %v644
  %v646 = vpop.f32.mrb[0].mxu0
  %647 = vmatprep.mubr.f32.mxu0 0.0
  %648 = vmatmul.mubr.f32.gmra.mrb[0].mxu0 %v272
  %v649 = vpop.f32.mrb[0].mxu0
  %v650 = vadd.f32 0.0, %v649
  %v651 = vpop.f32.mrb[0].mxu0
  %652 = vmatprep.mubr.f32.mxu0 0.0
  %653 = vmatmul.mubr.f32.gmra.mrb[0].mxu0 %v275
  %v654 = vpop.f32.mrb[0].mxu0
  %v655 = vadd.f32 0.0, %v654
  %v656 = vpop.f32.mrb[0].mxu0
  %657 = vmatprep.mubr.f32.mxu0 0.0
  %658 = vmatmul.mubr.f32.gmra.mrb[0].mxu0 %v278
  %v659 = vpop.f32.mrb[0].mxu0
  %v660 = vadd.f32 0.0, %v659
  %v661 = vpop.f32.mrb[0].mxu0
  %662 = vmatprep.mubr.f32.mxu0 0.0
  %663 = vmatmul.mubr.f32.gmra.mrb[0].mxu0 %v281
  %v664 = vpop.f32.mrb[0].mxu0
  %v665 = vadd.f32 0.0, %v664
  %v666 = vpop.f32.mrb[0].mxu0
  %667 = vdwg.mxu0
  %v668 = vadd.f32 %v350, %v355
  %v669 = vadd.f32 %v668, %v360
  %v670 = vadd.f32 %v669, %v365
  %v671 = vadd.f32 %v670, %v370
  %v672 = vadd.f32 %v671, %v375
  %v673 = vadd.f32 %v672, %v380
  %v674 = vadd.f32 %v673, %v385
  %v675 = vadd.f32 %v674, %v390
  %v676 = vadd.f32 %v675, %v395
  %v677 = vadd.f32 %v676, %v400
  %v678 = vadd.f32 %v677, %v405
  %v679 = vadd.f32 %v678, %v410
  %v680 = vadd.f32 %v679, %v415
  %v681 = vadd.f32 %v680, %v420
  %v682 = vadd.f32 %v681, %v425
  %v683 = vadd.f32 %v682, %v430
  %v684 = vadd.f32 %v683, %v435
  %v685 = vadd.f32 %v684, %v440
  %v686 = vadd.f32 %v685, %v445
  %v687 = vadd.f32 %v686, %v450
  %v688 = vadd.f32 %v687, %v455
  %v689 = vadd.f32 %v688, %v460
  %v690 = vadd.f32 %v689, %v465
  %v691 = vadd.f32 %v690, %v470
  %v692 = vadd.f32 %v691, %v475
  %v693 = vadd.f32 %v692, %v480
  %v694 = vadd.f32 %v693, %v485
  %v695 = vadd.f32 %v694, %v490
  %v696 = vadd.f32 %v695, %v495
  %v697 = vadd.f32 %v696, %v500
  %v698 = vadd.f32 %v697, %v505
  %v699 = vadd.f32 %v698, %v510
  %v700 = vadd.f32 %v699, %v515
  %v701 = vadd.f32 %v700, %v520
  %v702 = vadd.f32 %v701, %v525
  %v703 = vadd.f32 %v702, %v530
  %v704 = vadd.f32 %v703, %v535
  %v705 = vadd.f32 %v704, %v540
  %v706 = vadd.f32 %v705, %v545
  %v707 = vadd.f32 %v706, %v550
  %v708 = vadd.f32 %v707, %v555
  %v709 = vadd.f32 %v708, %v560
  %v710 = vadd.f32 %v709, %v565
  %v711 = vadd.f32 %v710, %v570
  %v712 = vadd.f32 %v711, %v575
  %v713 = vadd.f32 %v712, %v580
  %v714 = vadd.f32 %v713, %v585
  %v715 = vadd.f32 %v714, %v590
  %v716 = vadd.f32 %v715, %v595
  %v717 = vadd.f32 %v716, %v600
  %v718 = vadd.f32 %v717, %v605
  %v719 = vadd.f32 %v718, %v610
  %v720 = vadd.f32 %v719, %v615
  %v721 = vadd.f32 %v720, %v620
  %v722 = vadd.f32 %v721, %v625
  %v723 = vadd.f32 %v722, %v630
  %v724 = vadd.f32 %v723, %v635
  %v725 = vadd.f32 %v724, %v640
  %v726 = vadd.f32 %v725, %v645
  %v727 = vadd.f32 %v726, %v650
  %v728 = vadd.f32 %v727, %v655
  %v729 = vadd.f32 %v728, %v660
  %v730 = vadd.f32 %v729, %v665
  %v731 = vrot.slane %v730, 4
  %v732 = vadd.f32 %v730, %v731
  %v733 = vrot.slane %v732, 2
  %v734 = vadd.f32 %v732, %v733
  %v735 = vrot.slane %v734, 1
  %v736 = vadd.f32 %v734, %v735
  %v737 = vrcp.pop 512.0
  %v738 = vmul.f32 %v736, %v737
  %v739 = vmul.f32 %v350, %v350
  %v740 = vmul.f32 %v355, %v355
  %v741 = vmul.f32 %v360, %v360
  %v742 = vmul.f32 %v365, %v365
  %v743 = vmul.f32 %v370, %v370
  %v744 = vmul.f32 %v375, %v375
  %v745 = vmul.f32 %v380, %v380
  %v746 = vmul.f32 %v385, %v385
  %v747 = vmul.f32 %v390, %v390
  %v748 = vmul.f32 %v395, %v395
  %v749 = vmul.f32 %v400, %v400
  %v750 = vmul.f32 %v405, %v405
  %v751 = vmul.f32 %v410, %v410
  %v752 = vmul.f32 %v415, %v415
  %v753 = vmul.f32 %v420, %v420
  %v754 = vmul.f32 %v425, %v425
  %v755 = vmul.f32 %v430, %v430
  %v756 = vmul.f32 %v435, %v435
  %v757 = vmul.f32 %v440, %v440
  %v758 = vmul.f32 %v445, %v445
  %v759 = vmul.f32 %v450, %v450
  %v760 = vmul.f32 %v455, %v455
  %v761 = vmul.f32 %v460, %v460
  %v762 = vmul.f32 %v465, %v465
  %v763 = vmul.f32 %v470, %v470
  %v764 = vmul.f32 %v475, %v475
  %v765 = vmul.f32 %v480, %v480
  %v766 = vmul.f32 %v485, %v485
  %v767 = vmul.f32 %v490, %v490
  %v768 = vmul.f32 %v495, %v495
  %v769 = vmul.f32 %v500, %v500
  %v770 = vmul.f32 %v505, %v505
  %v771 = vmul.f32 %v510, %v510
  %v772 = vmul.f32 %v515, %v515
  %v773 = vmul.f32 %v520, %v520
  %v774 = vmul.f32 %v525, %v525
  %v775 = vmul.f32 %v530, %v530
  %v776 = vmul.f32 %v535, %v535
  %v777 = vmul.f32 %v540, %v540
  %v778 = vmul.f32 %v545, %v545
  %v779 = vmul.f32 %v550, %v550
  %v780 = vmul.f32 %v555, %v555
  %v781 = vmul.f32 %v560, %v560
  %v782 = vmul.f32 %v565, %v565
  %v783 = vmul.f32 %v570, %v570
  %v784 = vmul.f32 %v575, %v575
  %v785 = vmul.f32 %v580, %v580
  %v786 = vmul.f32 %v585, %v585
  %v787 = vmul.f32 %v590, %v590
  %v788 = vmul.f32 %v595, %v595
  %v789 = vmul.f32 %v600, %v600
  %v790 = vmul.f32 %v605, %v605
  %v791 = vmul.f32 %v610, %v610
  %v792 = vmul.f32 %v615, %v615
  %v793 = vmul.f32 %v620, %v620
  %v794 = vmul.f32 %v625, %v625
  %v795 = vmul.f32 %v630, %v630
  %v796 = vmul.f32 %v635, %v635
  %v797 = vmul.f32 %v640, %v640
  %v798 = vmul.f32 %v645, %v645
  %v799 = vmul.f32 %v650, %v650
  %v800 = vmul.f32 %v655, %v655
  %v801 = vmul.f32 %v660, %v660
  %v802 = vmul.f32 %v665, %v665
  %v803 = vadd.f32 %v739, %v740
  %v804 = vadd.f32 %v803, %v741
  %v805 = vadd.f32 %v804, %v742
  %v806 = vadd.f32 %v805, %v743
  %v807 = vadd.f32 %v806, %v744
  %v808 = vadd.f32 %v807, %v745
  %v809 = vadd.f32 %v808, %v746
  %v810 = vadd.f32 %v809, %v747
  %v811 = vadd.f32 %v810, %v748
  %v812 = vadd.f32 %v811, %v749
  %v813 = vadd.f32 %v812, %v750
  %v814 = vadd.f32 %v813, %v751
  %v815 = vadd.f32 %v814, %v752
  %v816 = vadd.f32 %v815, %v753
  %v817 = vadd.f32 %v816, %v754
  %v818 = vadd.f32 %v817, %v755
  %v819 = vadd.f32 %v818, %v756
  %v820 = vadd.f32 %v819, %v757
  %v821 = vadd.f32 %v820, %v758
  %v822 = vadd.f32 %v821, %v759
  %v823 = vadd.f32 %v822, %v760
  %v824 = vadd.f32 %v823, %v761
  %v825 = vadd.f32 %v824, %v762
  %v826 = vadd.f32 %v825, %v763
  %v827 = vadd.f32 %v826, %v764
  %v828 = vadd.f32 %v827, %v765
  %v829 = vadd.f32 %v828, %v766
  %v830 = vadd.f32 %v829, %v767
  %v831 = vadd.f32 %v830, %v768
  %v832 = vadd.f32 %v831, %v769
  %v833 = vadd.f32 %v832, %v770
  %v834 = vadd.f32 %v833, %v771
  %v835 = vadd.f32 %v834, %v772
  %v836 = vadd.f32 %v835, %v773
  %v837 = vadd.f32 %v836, %v774
  %v838 = vadd.f32 %v837, %v775
  %v839 = vadd.f32 %v838, %v776
  %v840 = vadd.f32 %v839, %v777
  %v841 = vadd.f32 %v840, %v778
  %v842 = vadd.f32 %v841, %v779
  %v843 = vadd.f32 %v842, %v780
  %v844 = vadd.f32 %v843, %v781
  %v845 = vadd.f32 %v844, %v782
  %v846 = vadd.f32 %v845, %v783
  %v847 = vadd.f32 %v846, %v784
  %v848 = vadd.f32 %v847, %v785
  %v849 = vadd.f32 %v848, %v786
  %v850 = vadd.f32 %v849, %v787
  %v851 = vadd.f32 %v850, %v788
  %v852 = vadd.f32 %v851, %v789
  %v853 = vadd.f32 %v852, %v790
  %v854 = vadd.f32 %v853, %v791
  %v855 = vadd.f32 %v854, %v792
  %v856 = vadd.f32 %v855, %v793
  %v857 = vadd.f32 %v856, %v794
  %v858 = vadd.f32 %v857, %v795
  %v859 = vadd.f32 %v858, %v796
  %v860 = vadd.f32 %v859, %v797
  %v861 = vadd.f32 %v860, %v798
  %v862 = vadd.f32 %v861, %v799
  %v863 = vadd.f32 %v862, %v800
  %v864 = vadd.f32 %v863, %v801
  %v865 = vadd.f32 %v864, %v802
  %v866 = vrot.slane %v865, 4
  %v867 = vadd.f32 %v865, %v866
  %v868 = vrot.slane %v867, 2
  %v869 = vadd.f32 %v867, %v868
  %v870 = vrot.slane %v869, 1
  %v871 = vadd.f32 %v869, %v870
  %v872 = vmul.f32 %v871, %v737
  %v873 = vmul.f32 %v738, %v738
  %v874 = vsub.f32 %v872, %v873
  %v875 = vmax.f32 %v874, 0.0
  %v876 = vadd.f32 %v875, 1e-05
  %v877 = vrsqrt.pop %v876
  %v878 = vsub.f32 %v350, %v738
  %v879 = vsub.f32 %v355, %v738
  %v880 = vsub.f32 %v360, %v738
  %v881 = vsub.f32 %v365, %v738
  %v882 = vsub.f32 %v370, %v738
  %v883 = vsub.f32 %v375, %v738
  %v884 = vsub.f32 %v380, %v738
  %v885 = vsub.f32 %v385, %v738
  %v886 = vsub.f32 %v390, %v738
  %v887 = vsub.f32 %v395, %v738
  %v888 = vsub.f32 %v400, %v738
  %v889 = vsub.f32 %v405, %v738
  %v890 = vsub.f32 %v410, %v738
  %v891 = vsub.f32 %v415, %v738
  %v892 = vsub.f32 %v420, %v738
  %v893 = vsub.f32 %v425, %v738
  %v894 = vsub.f32 %v430, %v738
  %v895 = vsub.f32 %v435, %v738
  %v896 = vsub.f32 %v440, %v738
  %v897 = vsub.f32 %v445, %v738
  %v898 = vsub.f32 %v450, %v738
  %v899 = vsub.f32 %v455, %v738
  %v900 = vsub.f32 %v460, %v738
  %v901 = vsub.f32 %v465, %v738
  %v902 = vsub.f32 %v470, %v738
  %v903 = vsub.f32 %v475, %v738
  %v904 = vsub.f32 %v480, %v738
  %v905 = vsub.f32 %v485, %v738
  %v906 = vsub.f32 %v490, %v738
  %v907 = vsub.f32 %v495, %v738
  %v908 = vsub.f32 %v500, %v738
  %v909 = vsub.f32 %v505, %v738
  %v910 = vsub.f32 %v510, %v738
  %v911 = vsub.f32 %v515, %v738
  %v912 = vsub.f32 %v520, %v738
  %v913 = vsub.f32 %v525, %v738
  %v914 = vsub.f32 %v530, %v738
  %v915 = vsub.f32 %v535, %v738
  %v916 = vsub.f32 %v540, %v738
  %v917 = vsub.f32 %v545, %v738
  %v918 = vsub.f32 %v550, %v738
  %v919 = vsub.f32 %v555, %v738
  %v920 = vsub.f32 %v560, %v738
  %v921 = vsub.f32 %v565, %v738
  %v922 = vsub.f32 %v570, %v738
  %v923 = vsub.f32 %v575, %v738
  %v924 = vsub.f32 %v580, %v738
  %v925 = vsub.f32 %v585, %v738
  %v926 = vsub.f32 %v590, %v738
  %v927 = vsub.f32 %v595, %v738
  %v928 = vsub.f32 %v600, %v738
  %v929 = vsub.f32 %v605, %v738
  %v930 = vsub.f32 %v610, %v738
  %v931 = vsub.f32 %v615, %v738
  %v932 = vsub.f32 %v620, %v738
  %v933 = vsub.f32 %v625, %v738
  %v934 = vsub.f32 %v630, %v738
  %v935 = vsub.f32 %v635, %v738
  %v936 = vsub.f32 %v640, %v738
  %v937 = vsub.f32 %v645, %v738
  %v938 = vsub.f32 %v650, %v738
  %v939 = vsub.f32 %v655, %v738
  %v940 = vsub.f32 %v660, %v738
  %v941 = vsub.f32 %v665, %v738
  %v942 = vld [vmem:[%s2] sm:$0x1]
  %v943 = vmul.f32 %v942, %v877
  %v945 = vlaneseq
  %v946 = vshrl.u32 %v945, 7
  %v947 = vsub.s32 0, %v946
  %v948 = vrot.slane %v943, %v947
  %v950 = vmul.f32 %v878, %v948
  %v951 = vmul.f32 %v879, %v948
  %v952 = vmul.f32 %v880, %v948
  %v953 = vmul.f32 %v881, %v948
  %v954 = vmul.f32 %v882, %v948
  %v955 = vmul.f32 %v883, %v948
  %v956 = vmul.f32 %v884, %v948
  %v957 = vmul.f32 %v885, %v948
  %v958 = vmul.f32 %v886, %v948
  %v959 = vmul.f32 %v887, %v948
  %v960 = vmul.f32 %v888, %v948
  %v961 = vmul.f32 %v889, %v948
  %v962 = vmul.f32 %v890, %v948
  %v963 = vmul.f32 %v891, %v948
  %v964 = vmul.f32 %v892, %v948
  %v965 = vmul.f32 %v893, %v948
  %v966 = vmul.f32 %v894, %v948
  %v967 = vmul.f32 %v895, %v948
  %v968 = vmul.f32 %v896, %v948
  %v969 = vmul.f32 %v897, %v948
  %v970 = vmul.f32 %v898, %v948
  %v971 = vmul.f32 %v899, %v948
  %v972 = vmul.f32 %v900, %v948
  %v973 = vmul.f32 %v901, %v948
  %v974 = vmul.f32 %v902, %v948
  %v975 = vmul.f32 %v903, %v948
  %v976 = vmul.f32 %v904, %v948
  %v977 = vmul.f32 %v905, %v948
  %v978 = vmul.f32 %v906, %v948
  %v979 = vmul.f32 %v907, %v948
  %v980 = vmul.f32 %v908, %v948
  %v981 = vmul.f32 %v909, %v948
  %v982 = vmul.f32 %v910, %v948
  %v983 = vmul.f32 %v911, %v948
  %v984 = vmul.f32 %v912, %v948
  %v985 = vmul.f32 %v913, %v948
  %v986 = vmul.f32 %v914, %v948
  %v987 = vmul.f32 %v915, %v948
  %v988 = vmul.f32 %v916, %v948
  %v989 = vmul.f32 %v917, %v948
  %v990 = vmul.f32 %v918, %v948
  %v991 = vmul.f32 %v919, %v948
  %v992 = vmul.f32 %v920, %v948
  %v993 = vmul.f32 %v921, %v948
  %v994 = vmul.f32 %v922, %v948
  %v995 = vmul.f32 %v923, %v948
  %v996 = vmul.f32 %v924, %v948
  %v997 = vmul.f32 %v925, %v948
  %v998 = vmul.f32 %v926, %v948
  %v999 = vmul.f32 %v927, %v948
  %v1000 = vmul.f32 %v928, %v948
  %v1001 = vmul.f32 %v929, %v948
  %v1002 = vmul.f32 %v930, %v948
  %v1003 = vmul.f32 %v931, %v948
  %v1004 = vmul.f32 %v932, %v948
  %v1005 = vmul.f32 %v933, %v948
  %v1006 = vmul.f32 %v934, %v948
  %v1007 = vmul.f32 %v935, %v948
  %v1008 = vmul.f32 %v936, %v948
  %v1009 = vmul.f32 %v937, %v948
  %v1010 = vmul.f32 %v938, %v948
  %v1011 = vmul.f32 %v939, %v948
  %v1012 = vmul.f32 %v940, %v948
  %v1013 = vmul.f32 %v941, %v948
  %v1014 = vld [vmem:[%s3] sm:$0x1]
  %v1016 = vlaneseq
  %v1017 = vshrl.u32 %v1016, 7
  %v1018 = vsub.s32 0, %v1017
  %v1019 = vrot.slane %v1014, %v1018
  %v1021 = vadd.f32 %v950, %v1019
  %v1022 = vadd.f32 %v951, %v1019
  %v1023 = vadd.f32 %v952, %v1019
  %v1024 = vadd.f32 %v953, %v1019
  %v1025 = vadd.f32 %v954, %v1019
  %v1026 = vadd.f32 %v955, %v1019
  %v1027 = vadd.f32 %v956, %v1019
  %v1028 = vadd.f32 %v957, %v1019
  %v1029 = vadd.f32 %v958, %v1019
  %v1030 = vadd.f32 %v959, %v1019
  %v1031 = vadd.f32 %v960, %v1019
  %v1032 = vadd.f32 %v961, %v1019
  %v1033 = vadd.f32 %v962, %v1019
  %v1034 = vadd.f32 %v963, %v1019
  %v1035 = vadd.f32 %v964, %v1019
  %v1036 = vadd.f32 %v965, %v1019
  %v1037 = vadd.f32 %v966, %v1019
  %v1038 = vadd.f32 %v967, %v1019
  %v1039 = vadd.f32 %v968, %v1019
  %v1040 = vadd.f32 %v969, %v1019
  %v1041 = vadd.f32 %v970, %v1019
  %v1042 = vadd.f32 %v971, %v1019
  %v1043 = vadd.f32 %v972, %v1019
  %v1044 = vadd.f32 %v973, %v1019
  %v1045 = vadd.f32 %v974, %v1019
  %v1046 = vadd.f32 %v975, %v1019
  %v1047 = vadd.f32 %v976, %v1019
  %v1048 = vadd.f32 %v977, %v1019
  %v1049 = vadd.f32 %v978, %v1019
  %v1050 = vadd.f32 %v979, %v1019
  %v1051 = vadd.f32 %v980, %v1019
  %v1052 = vadd.f32 %v981, %v1019
  %v1053 = vadd.f32 %v982, %v1019
  %v1054 = vadd.f32 %v983, %v1019
  %v1055 = vadd.f32 %v984, %v1019
  %v1056 = vadd.f32 %v985, %v1019
  %v1057 = vadd.f32 %v986, %v1019
  %v1058 = vadd.f32 %v987, %v1019
  %v1059 = vadd.f32 %v988, %v1019
  %v1060 = vadd.f32 %v989, %v1019
  %v1061 = vadd.f32 %v990, %v1019
  %v1062 = vadd.f32 %v991, %v1019
  %v1063 = vadd.f32 %v992, %v1019
  %v1064 = vadd.f32 %v993, %v1019
  %v1065 = vadd.f32 %v994, %v1019
  %v1066 = vadd.f32 %v995, %v1019
  %v1067 = vadd.f32 %v996, %v1019
  %v1068 = vadd.f32 %v997, %v1019
  %v1069 = vadd.f32 %v998, %v1019
  %v1070 = vadd.f32 %v999, %v1019
  %v1071 = vadd.f32 %v1000, %v1019
  %v1072 = vadd.f32 %v1001, %v1019
  %v1073 = vadd.f32 %v1002, %v1019
  %v1074 = vadd.f32 %v1003, %v1019
  %v1075 = vadd.f32 %v1004, %v1019
  %v1076 = vadd.f32 %v1005, %v1019
  %v1077 = vadd.f32 %v1006, %v1019
  %v1078 = vadd.f32 %v1007, %v1019
  %v1079 = vadd.f32 %v1008, %v1019
  %v1080 = vadd.f32 %v1009, %v1019
  %v1081 = vadd.f32 %v1010, %v1019
  %v1082 = vadd.f32 %v1011, %v1019
  %v1083 = vadd.f32 %v1012, %v1019
  %v1084 = vadd.f32 %v1013, %v1019
  %v1085 = vmax.f32 %v1021, 0.0
  %v1086 = vmax.f32 %v1022, 0.0
  %v1087 = vmax.f32 %v1023, 0.0
  %v1088 = vmax.f32 %v1024, 0.0
  %v1089 = vmax.f32 %v1025, 0.0
  %v1090 = vmax.f32 %v1026, 0.0
  %v1091 = vmax.f32 %v1027, 0.0
  %v1092 = vmax.f32 %v1028, 0.0
  %v1093 = vmax.f32 %v1029, 0.0
  %v1094 = vmax.f32 %v1030, 0.0
  %v1095 = vmax.f32 %v1031, 0.0
  %v1096 = vmax.f32 %v1032, 0.0
  %v1097 = vmax.f32 %v1033, 0.0
  %v1098 = vmax.f32 %v1034, 0.0
  %v1099 = vmax.f32 %v1035, 0.0
  %v1100 = vmax.f32 %v1036, 0.0
  %v1101 = vmax.f32 %v1037, 0.0
  %v1102 = vmax.f32 %v1038, 0.0
  %v1103 = vmax.f32 %v1039, 0.0
  %v1104 = vmax.f32 %v1040, 0.0
  %v1105 = vmax.f32 %v1041, 0.0
  %v1106 = vmax.f32 %v1042, 0.0
  %v1107 = vmax.f32 %v1043, 0.0
  %v1108 = vmax.f32 %v1044, 0.0
  %v1109 = vmax.f32 %v1045, 0.0
  %v1110 = vmax.f32 %v1046, 0.0
  %v1111 = vmax.f32 %v1047, 0.0
  %v1112 = vmax.f32 %v1048, 0.0
  %v1113 = vmax.f32 %v1049, 0.0
  %v1114 = vmax.f32 %v1050, 0.0
  %v1115 = vmax.f32 %v1051, 0.0
  %v1116 = vmax.f32 %v1052, 0.0
  %v1117 = vmax.f32 %v1053, 0.0
  %v1118 = vmax.f32 %v1054, 0.0
  %v1119 = vmax.f32 %v1055, 0.0
  %v1120 = vmax.f32 %v1056, 0.0
  %v1121 = vmax.f32 %v1057, 0.0
  %v1122 = vmax.f32 %v1058, 0.0
  %v1123 = vmax.f32 %v1059, 0.0
  %v1124 = vmax.f32 %v1060, 0.0
  %v1125 = vmax.f32 %v1061, 0.0
  %v1126 = vmax.f32 %v1062, 0.0
  %v1127 = vmax.f32 %v1063, 0.0
  %v1128 = vmax.f32 %v1064, 0.0
  %v1129 = vmax.f32 %v1065, 0.0
  %v1130 = vmax.f32 %v1066, 0.0
  %v1131 = vmax.f32 %v1067, 0.0
  %v1132 = vmax.f32 %v1068, 0.0
  %v1133 = vmax.f32 %v1069, 0.0
  %v1134 = vmax.f32 %v1070, 0.0
  %v1135 = vmax.f32 %v1071, 0.0
  %v1136 = vmax.f32 %v1072, 0.0
  %v1137 = vmax.f32 %v1073, 0.0
  %v1138 = vmax.f32 %v1074, 0.0
  %v1139 = vmax.f32 %v1075, 0.0
  %v1140 = vmax.f32 %v1076, 0.0
  %v1141 = vmax.f32 %v1077, 0.0
  %v1142 = vmax.f32 %v1078, 0.0
  %v1143 = vmax.f32 %v1079, 0.0
  %v1144 = vmax.f32 %v1080, 0.0
  %v1145 = vmax.f32 %v1081, 0.0
  %v1146 = vmax.f32 %v1082, 0.0
  %v1147 = vmax.f32 %v1083, 0.0
  %v1148 = vmax.f32 %v1084, 0.0
  %1149 = vst [vmem:[%s4] sm:$0xff] %v1085
  %1150 = vst [vmem:[%s4 + $0x8] sm:$0xff] %v1086
  %1151 = vst [vmem:[%s4 + $0x10] sm:$0xff] %v1087
  %1152 = vst [vmem:[%s4 + $0x18] sm:$0xff] %v1088
  %1153 = vst [vmem:[%s4 + $0x20] sm:$0xff] %v1089
  %1154 = vst [vmem:[%s4 + $0x28] sm:$0xff] %v1090
  %1155 = vst [vmem:[%s4 + $0x30] sm:$0xff] %v1091
  %1156 = vst [vmem:[%s4 + $0x38] sm:$0xff] %v1092
  %1157 = vst [vmem:[%s4 + $0x40] sm:$0xff] %v1093
  %1158 = vst [vmem:[%s4 + $0x48] sm:$0xff] %v1094
  %1159 = vst [vmem:[%s4 + $0x50] sm:$0xff] %v1095
  %1160 = vst [vmem:[%s4 + $0x58] sm:$0xff] %v1096
  %1161 = vst [vmem:[%s4 + $0x60] sm:$0xff] %v1097
  %1162 = vst [vmem:[%s4 + $0x68] sm:$0xff] %v1098
  %1163 = vst [vmem:[%s4 + $0x70] sm:$0xff] %v1099
  %1164 = vst [vmem:[%s4 + $0x78] sm:$0xff] %v1100
  %1165 = vst [vmem:[%s4 + $0x80] sm:$0xff] %v1101
  %1166 = vst [vmem:[%s4 + $0x88] sm:$0xff] %v1102
  %1167 = vst [vmem:[%s4 + $0x90] sm:$0xff] %v1103
  %1168 = vst [vmem:[%s4 + $0x98] sm:$0xff] %v1104
  %1169 = vst [vmem:[%s4 + $0xa0] sm:$0xff] %v1105
  %1170 = vst [vmem:[%s4 + $0xa8] sm:$0xff] %v1106
  %1171 = vst [vmem:[%s4 + $0xb0] sm:$0xff] %v1107
  %1172 = vst [vmem:[%s4 + $0xb8] sm:$0xff] %v1108
  %1173 = vst [vmem:[%s4 + $0xc0] sm:$0xff] %v1109
  %1174 = vst [vmem:[%s4 + $0xc8] sm:$0xff] %v1110
  %1175 = vst [vmem:[%s4 + $0xd0] sm:$0xff] %v1111
  %1176 = vst [vmem:[%s4 + $0xd8] sm:$0xff] %v1112
  %1177 = vst [vmem:[%s4 + $0xe0] sm:$0xff] %v1113
  %1178 = vst [vmem:[%s4 + $0xe8] sm:$0xff] %v1114
  %1179 = vst [vmem:[%s4 + $0xf0] sm:$0xff] %v1115
  %1180 = vst [vmem:[%s4 + $0xf8] sm:$0xff] %v1116
  %1181 = vst [vmem:[%s4 + $0x100] sm:$0xff] %v1117
  %1182 = vst [vmem:[%s4 + $0x108] sm:$0xff] %v1118
  %1183 = vst [vmem:[%s4 + $0x110] sm:$0xff] %v1119
  %1184 = vst [vmem:[%s4 + $0x118] sm:$0xff] %v1120
  %1185 = vst [vmem:[%s4 + $0x120] sm:$0xff] %v1121
  %1186 = vst [vmem:[%s4 + $0x128] sm:$0xff] %v1122
  %1187 = vst [vmem:[%s4 + $0x130] sm:$0xff] %v1123
  %1188 = vst [vmem:[%s4 + $0x138] sm:$0xff] %v1124
  %1189 = vst [vmem:[%s4 + $0x140] sm:$0xff] %v1125
  %1190 = vst [vmem:[%s4 + $0x148] sm:$0xff] %v1126
  %1191 = vst [vmem:[%s4 + $0x150] sm:$0xff] %v1127
  %1192 = vst [vmem:[%s4 + $0x158] sm:$0xff] %v1128
  %1193 = vst [vmem:[%s4 + $0x160] sm:$0xff] %v1129
  %1194 = vst [vmem:[%s4 + $0x168] sm:$0xff] %v1130
  %1195 = vst [vmem:[%s4 + $0x170] sm:$0xff] %v1131
  %1196 = vst [vmem:[%s4 + $0x178] sm:$0xff] %v1132
  %1197 = vst [vmem:[%s4 + $0x180] sm:$0xff] %v1133
  %1198 = vst [vmem:[%s4 + $0x188] sm:$0xff] %v1134
  %1199 = vst [vmem:[%s4 + $0x190] sm:$0xff] %v1135
  %1200 = vst [vmem:[%s4 + $0x198] sm:$0xff] %v1136
  %1201 = vst [vmem:[%s4 + $0x1a0] sm:$0xff] %v1137
  %1202 = vst [vmem:[%s4 + $0x1a8] sm:$0xff] %v1138
  %1203 = vst [vmem:[%s4 + $0x1b0] sm:$0xff] %v1139
  %1204 = vst [vmem:[%s4 + $0x1b8] sm:$0xff] %v1140
  %1205 = vst [vmem:[%s4 + $0x1c0] sm:$0xff] %v1141
  %1206 = vst [vmem:[%s4 + $0x1c8] sm:$0xff] %v1142
  %1207 = vst [vmem:[%s4 + $0x1d0] sm:$0xff] %v1143
  %1208 = vst [vmem:[%s4 + $0x1d8] sm:$0xff] %v1144
  %1209 = vst [vmem:[%s4 + $0x1e0] sm:$0xff] %v1145
  %1210 = vst [vmem:[%s4 + $0x1e8] sm:$0xff] %v1146
  %1211 = vst [vmem:[%s4 + $0x1f0] sm:$0xff] %v1147
  %1212 = vst [vmem:[%s4 + $0x1f8] sm:$0xff] %v1148
  // Predicated region
  $region18: #{n3net_forward.11} parent=0 // pred_check
    _
  $region19: #{n3net_forward.11} parent=0 // pred_check_branch
    %1214 = sbr.rel (0) target = $region21
  $region20: #{n3net_forward.11} parent=0 // pred_region
    _
  $region21: #{n3net_forward.11} parent=0 // pred_fallthru
    _
  // Predicated region
  $region22: #{n3net_forward.11} parent=0 // pred_check
    _
  $region23: #{n3net_forward.11} parent=0 // pred_check_branch
    %1216 = sbr.rel (0) target = $region25
  $region24: #{n3net_forward.11} parent=0 // pred_region
    _
  $region25: #{n3net_forward.11} parent=0 // pred_fallthru
    _

// kernel: n3net_forward.14
$region0: #{n3net_forward.14}
  #allocation0 [shape = 'u32[]', space=smem, size = 0x4, offset = 0x4, fixed_abs, tag = 'smem constant byte address 0x4 - core index']
  #allocation1 [shape = 'u32[144,128]{1,0:T(1,128)}', space=vmem, size = 0x12000, scoped, tag = 'internal scratch']
  %s0 = inlined_call_operand.vmem [shape: f32[512,72], index: 0, kind: input, shape index: {}]
  %s1 = inlined_call_operand.vmem [shape: f32[72,128], index: 1, kind: input, shape index: {}]
  %s2 = inlined_call_operand.vmem [shape: f32[1,128], index: 2, kind: input, shape index: {}]
  %s3 = inlined_call_operand.vmem [shape: f32[512,128], index: 3, kind: output, shape index: {}]
  %s4 = sld [smem:[#allocation0]]
  $region45: #{n3net_forward.14} parent=0
    _
  %s6 = ssub.s32 1, %s4
  %s7 = scalar_select 0, %s6, %s4
  loop: start=0, step=1, limit=4
  $region2: #{n3net_forward.14} parent=0 // loop_pre_header
    _
  $region3: #{n3net_forward.14} parent=0 // loop_header
    %s9 = sphi 0, %s13
    %p10 = scmp.ge.s32.totalorder %s9, 4
    %s19 = sphi 0, %s21
    %s22 = sphi 0, %s19
    %s23 = sphi 0, %s22
    %s39 = sphi 0, %s23
    %s43 = sphi 0, %s43
    %s45 = sphi 0, %s43
    %s46 = sphi 0, %s45
    %s60 = sphi 0, %s46
    %s64 = sphi 0, %s64
    %s66 = sphi 0, %s64
    %s67 = sphi 0, %s66
    %s81 = sphi 0, %s67
    %s87 = sphi 0, %s89
    %s90 = sphi 0, %s87
    %s91 = sphi 0, %s90
    %s107 = sphi 0, %s91
  $region4: #{n3net_forward.14} parent=0 // loop_header_branch
    %12 = sbr.rel (%p10) target = $region8
  $region5: #{n3net_forward.14} parent=0 // loop_body
    %s14 = ssub.s32 %s9, 1
    %s15 = ssub.s32 %s9, 2
    %s16 = sadd.s32 %s9, 1
    %s17 = ssub.s32 %s9, %s16
    %p18 = scmp.eq.s32.totalorder %s17, 0
    %s20 = sadd.s32 %s19, 1
    %s21 = scalar_select %p18, %s19, %s20
    %p24 = pneg %p18
    %p25 = scmp.eq.s32.totalorder %s9, 1
    %p26 = por %p24, %p25
    %p27 = scmp.ne.s32.totalorder %s19, %s22
    %p28 = scmp.eq.s32.totalorder %s9, 0
    %p29 = por %p27, %p28
    %p30 = scmp.ne.s32.totalorder %s19, %s22
    %p31 = scmp.eq.s32.totalorder %s14, 1
    %p32 = por %p30, %p31
    %p33 = scmp.ne.s32.totalorder %s22, %s23
    %p34 = scmp.eq.s32.totalorder %s14, 0
    %p35 = por %p33, %p34
    %p36 = scmp.ne.s32.totalorder %s22, %s23
    %p37 = scmp.eq.s32.totalorder %s15, 1
    %p38 = por %p36, %p37
    %p40 = scmp.ne.s32.totalorder %s23, %s39
    %p41 = scmp.eq.s32.totalorder %s15, 0
    %p42 = por %p40, %p41
    %s44 = sadd.s32 %s43, 1
    %p47 = scmp.eq.s32.totalorder %s9, 1
    %p48 = scmp.ne.s32.totalorder %s43, %s45
    %p49 = scmp.eq.s32.totalorder %s9, 0
    %p50 = por %p48, %p49
    %p51 = scmp.ne.s32.totalorder %s43, %s45
    %p52 = scmp.eq.s32.totalorder %s14, 1
    %p53 = por %p51, %p52
    %p54 = scmp.ne.s32.totalorder %s45, %s46
    %p55 = scmp.eq.s32.totalorder %s14, 0
    %p56 = por %p54, %p55
    %p57 = scmp.ne.s32.totalorder %s45, %s46
    %p58 = scmp.eq.s32.totalorder %s15, 1
    %p59 = por %p57, %p58
    %p61 = scmp.ne.s32.totalorder %s46, %s60
    %p62 = scmp.eq.s32.totalorder %s15, 0
    %p63 = por %p61, %p62
    %s65 = sadd.s32 %s64, 1
    %p68 = scmp.eq.s32.totalorder %s9, 1
    %p69 = scmp.ne.s32.totalorder %s64, %s66
    %p70 = scmp.eq.s32.totalorder %s9, 0
    %p71 = por %p69, %p70
    %p72 = scmp.ne.s32.totalorder %s64, %s66
    %p73 = scmp.eq.s32.totalorder %s14, 1
    %p74 = por %p72, %p73
    %p75 = scmp.ne.s32.totalorder %s66, %s67
    %p76 = scmp.eq.s32.totalorder %s14, 0
    %p77 = por %p75, %p76
    %p78 = scmp.ne.s32.totalorder %s66, %s67
    %p79 = scmp.eq.s32.totalorder %s15, 1
    %p80 = por %p78, %p79
    %p82 = scmp.ne.s32.totalorder %s67, %s81
    %p83 = scmp.eq.s32.totalorder %s15, 0
    %p84 = por %p82, %p83
    %s85 = ssub.s32 %s9, %s16
    %p86 = scmp.eq.s32.totalorder %s85, 0
    %s88 = sadd.s32 %s87, 1
    %s89 = scalar_select %p86, %s87, %s88
    %p92 = pneg %p86
    %p93 = scmp.eq.s32.totalorder %s9, 1
    %p94 = por %p92, %p93
    %p95 = scmp.ne.s32.totalorder %s87, %s90
    %p96 = scmp.eq.s32.totalorder %s9, 0
    %p97 = por %p95, %p96
    %p98 = scmp.ne.s32.totalorder %s87, %s90
    %p99 = scmp.eq.s32.totalorder %s14, 1
    %p100 = por %p98, %p99
    %p101 = scmp.ne.s32.totalorder %s90, %s91
    %p102 = scmp.eq.s32.totalorder %s14, 0
    %p103 = por %p101, %p102
    %p104 = scmp.ne.s32.totalorder %s90, %s91
    %p105 = scmp.eq.s32.totalorder %s15, 1
    %p106 = por %p104, %p105
    %p108 = scmp.ne.s32.totalorder %s91, %s107
    %p109 = scmp.eq.s32.totalorder %s15, 0
    %p110 = por %p108, %p109
    %p111 = scmp.le.s32.totalorder 1, %s9
    %p112 = scmp.lt.s32.totalorder %s9, 3
    %p113 = pnand %p111, %p112
    %p114 = pneg %p113
    // Predicated region
    $region9: #{n3net_forward.14} parent=5 // pred_check
      _
    $region10: #{n3net_forward.14} parent=5 // pred_check_branch
      %116 = sbr.rel (%p113) target = $region12
    $region11: #{n3net_forward.14} parent=5 // pred_region
      %s117 = ssub.s32 %s9, 1
      // Predicated region
      $region13: #{n3net_forward.14} parent=11 // pred_check
        %p118 = pneg %p56
      $region14: #{n3net_forward.14} parent=11 // pred_check_branch
        %120 = sbr.rel (%p118) target = $region16
      $region15: #{n3net_forward.14} parent=11 // pred_region
        _
      $region16: #{n3net_forward.14} parent=11 // pred_fallthru
        _
      // Predicated region
      $region17: #{n3net_forward.14} parent=11 // pred_check
        %p121 = pneg %p77
      $region18: #{n3net_forward.14} parent=11 // pred_check_branch
        %123 = sbr.rel (%p121) target = $region20
      $region19: #{n3net_forward.14} parent=11 // pred_region
        _
      $region20: #{n3net_forward.14} parent=11 // pred_fallthru
        _
    $region12: #{n3net_forward.14} parent=5 // pred_fallthru
      _
    %p124 = scmp.lt.s32.totalorder %s9, 2
    // Predicated region
    $region21: #{n3net_forward.14} parent=5 // pred_check
      %p125 = pneg %p124
    $region22: #{n3net_forward.14} parent=5 // pred_check_branch
      %127 = sbr.rel (%p125) target = $region24
    $region23: #{n3net_forward.14} parent=5 // pred_region
      // Predicated region
      $region25: #{n3net_forward.14} parent=23 // pred_check
        %p128 = pneg %p29
      $region26: #{n3net_forward.14} parent=23 // pred_check_branch
        %130 = sbr.rel (%p128) target = $region28
      $region27: #{n3net_forward.14} parent=23 // pred_region
        %s131 = smul.u32 32, %s9
        %p132 = scmp.lt.s32.totalorder %s131, 63
        %s133 = scalar_select %p132, %s131, 63
        %s134 = smul.addr %s133, 8
        %s135 = scalar_lea.vmem %s0, %s134
        %s136 = smul.u32 32, %s9
      $region28: #{n3net_forward.14} parent=23 // pred_fallthru
        _
    $region24: #{n3net_forward.14} parent=5 // pred_fallthru
      _
    %p137 = scmp.le.s32.totalorder 1, %s9
    %p138 = scmp.lt.s32.totalorder %s9, 3
    %p139 = pnand %p137, %p138
    %p140 = pneg %p139
    // Predicated region
    $region29: #{n3net_forward.14} parent=5 // pred_check
      _
    $region30: #{n3net_forward.14} parent=5 // pred_check_branch
      %142 = sbr.rel (%p139) target = $region32
    $region31: #{n3net_forward.14} parent=5 // pred_region
      %s143 = ssub.s32 %s9, 1
      %s144 = smul.u32 32, %s14
      %p145 = scmp.lt.s32.totalorder %s144, 63
      %s146 = scalar_select %p145, %s144, 63
      %s147 = smul.addr %s146, 8
      %s148 = scalar_lea.vmem %s0, %s147
      %p149 = pneg %p35
      %p150 = pneg %p32
      %p151 = pneg %p56
      %p152 = pneg %p53
      %p153 = pneg %p77
      %p154 = pneg %p74
      %p155 = pneg %p103
      %p156 = pneg %p100
      %s157 = smul.u32 32, %s14
      %p158 = scmp.lt.s32.totalorder %s157, 63
      %s159 = scalar_select %p158, %s157, 63
      %s160 = smul.addr %s159, 8
      %s161 = scalar_lea.vmem %s3, %s160
      %s162 = smul.u32 32, %s14
      %p163 = scmp.lt.s32.totalorder %s162, 63
      %s164 = scalar_select %p163, %s162, 63
      %s165 = smul.addr %s164, 8
      %s166 = scalar_lea.vmem %s0, %s165
      %s167 = smul.u32 32, %s14
      %s168 = smul.u32 32, %s14
      %p169 = scmp.lt.s32.totalorder %s168, 63
      %s170 = scalar_select %p169, %s168, 63
      %s171 = smul.addr %s170, 8
      %s172 = scalar_lea.vmem %s3, %s171
      %s173 = smul.u32 32, %s14
      %v174 = vld [vmem:[%s166] sm:$0xff]
      %v175 = vld [vmem:[%s166 + $0x8] sm:$0xff]
      %v176 = vld [vmem:[%s166 + $0x10] sm:$0xff]
      %v177 = vld [vmem:[%s166 + $0x18] sm:$0xff]
      %v178 = vld [vmem:[%s166 + $0x20] sm:$0xff]
      %v179 = vld [vmem:[%s166 + $0x28] sm:$0xff]
      %v180 = vld [vmem:[%s166 + $0x30] sm:$0xff]
      %v181 = vld [vmem:[%s166 + $0x38] sm:$0xff]
      %v182 = vld [vmem:[%s166 + $0x40] sm:$0xff]
      %v183 = vld [vmem:[%s166 + $0x48] sm:$0xff]
      %v184 = vld [vmem:[%s166 + $0x50] sm:$0xff]
      %v185 = vld [vmem:[%s166 + $0x58] sm:$0xff]
      %v186 = vld [vmem:[%s166 + $0x60] sm:$0xff]
      %v187 = vld [vmem:[%s166 + $0x68] sm:$0xff]
      %v188 = vld [vmem:[%s166 + $0x70] sm:$0xff]
      %v189 = vld [vmem:[%s166 + $0x78] sm:$0xff]
      %v190 = vld [vmem:[%s166 + $0x80] sm:$0xff]
      %v191 = vld [vmem:[%s166 + $0x88] sm:$0xff]
      %v192 = vld [vmem:[%s166 + $0x90] sm:$0xff]
      %v193 = vld [vmem:[%s166 + $0x98] sm:$0xff]
      %v194 = vld [vmem:[%s166 + $0xa0] sm:$0xff]
      %v195 = vld [vmem:[%s166 + $0xa8] sm:$0xff]
      %v196 = vld [vmem:[%s166 + $0xb0] sm:$0xff]
      %v197 = vld [vmem:[%s166 + $0xb8] sm:$0xff]
      %v198 = vld [vmem:[%s166 + $0xc0] sm:$0xff]
      %v199 = vld [vmem:[%s166 + $0xc8] sm:$0xff]
      %v200 = vld [vmem:[%s166 + $0xd0] sm:$0xff]
      %v201 = vld [vmem:[%s166 + $0xd8] sm:$0xff]
      %v202 = vld [vmem:[%s166 + $0xe0] sm:$0xff]
      %v203 = vld [vmem:[%s166 + $0xe8] sm:$0xff]
      %v204 = vld [vmem:[%s166 + $0xf0] sm:$0xff]
      %v205 = vld [vmem:[%s166 + $0xf8] sm:$0xff]
      %v206 = vld [vmem:[%s1] sm:$0xff]
      %v207 = vld [vmem:[%s1 + $0x8] sm:$0xff]
      %v208 = vld [vmem:[%s1 + $0x10] sm:$0xff]
      %v209 = vld [vmem:[%s1 + $0x18] sm:$0xff]
      %v210 = vld [vmem:[%s1 + $0x20] sm:$0xff]
      %v211 = vld [vmem:[%s1 + $0x28] sm:$0xff]
      %v212 = vld [vmem:[%s1 + $0x30] sm:$0xff]
      %v213 = vld [vmem:[%s1 + $0x38] sm:$0xff]
      %v214 = vld [vmem:[%s1 + $0x40] sm:$0xff]
      %v215 = vld [vmem:[%s2] sm:$0x1]
      %v217 = vlaneseq
      %v218 = vshrl.u32 %v217, 7
      %v219 = vsub.s32 0, %v218
      %v220 = vrot.slane %v215, %v219
      %vm222 = vcmask 588800
      %v224 = vsel %vm222, %v174, 0
      %v227 = vsel %vm222, %v175, 0
      %v230 = vsel %vm222, %v176, 0
      %v233 = vsel %vm222, %v177, 0
      %v236 = vsel %vm222, %v178, 0
      %v239 = vsel %vm222, %v179, 0
      %v242 = vsel %vm222, %v180, 0
      %v245 = vsel %vm222, %v181, 0
      %v248 = vsel %vm222, %v182, 0
      %v251 = vsel %vm222, %v183, 0
      %v254 = vsel %vm222, %v184, 0
      %v257 = vsel %vm222, %v185, 0
      %v260 = vsel %vm222, %v186, 0
      %v263 = vsel %vm222, %v187, 0
      %v266 = vsel %vm222, %v188, 0
      %v269 = vsel %vm222, %v189, 0
      %v272 = vsel %vm222, %v190, 0
      %v275 = vsel %vm222, %v191, 0
      %v278 = vsel %vm222, %v192, 0
      %v281 = vsel %vm222, %v193, 0
      %v284 = vsel %vm222, %v194, 0
      %v287 = vsel %vm222, %v195, 0
      %v290 = vsel %vm222, %v196, 0
      %v293 = vsel %vm222, %v197, 0
      %v296 = vsel %vm222, %v198, 0
      %v299 = vsel %vm222, %v199, 0
      %v302 = vsel %vm222, %v200, 0
      %v305 = vsel %vm222, %v201, 0
      %v308 = vsel %vm222, %v202, 0
      %v311 = vsel %vm222, %v203, 0
      %v314 = vsel %vm222, %v204, 0
      %v317 = vsel %vm222, %v205, 0
      %319 = vmatprep.subr.mxu0 0.0
      %320 = vmatpush1.msra.mxu0 %v206
      %321 = vmatprep.subr.mxu0 0.0
      %322 = vmatpush1.msra.mxu0 %v207
      %323 = vmatprep.subr.mxu0 0.0
      %324 = vmatpush1.msra.mxu0 %v208
      %325 = vmatprep.subr.mxu0 0.0
      %326 = vmatpush1.msra.mxu0 %v209
      %327 = vmatprep.subr.mxu0 0.0
      %328 = vmatpush1.msra.mxu0 %v210
      %329 = vmatprep.subr.mxu0 0.0
      %330 = vmatpush1.msra.mxu0 %v211
      %331 = vmatprep.subr.mxu0 0.0
      %332 = vmatpush1.msra.mxu0 %v212
      %333 = vmatprep.subr.mxu0 0.0
      %334 = vmatpush1.msra.mxu0 %v213
      %335 = vmatprep.subr.mxu0 0.0
      %336 = vmatpush1.msra.mxu0 %v214
      %337 = vmatprep.subr.mxu0 0.0
      %338 = vmatpush1.msra.mxu0 0.0
      %339 = vmatprep.subr.mxu0 0.0
      %340 = vmatpush1.msra.mxu0 0.0
      %341 = vmatprep.subr.mxu0 0.0
      %342 = vmatpush1.msra.mxu0 0.0
      %343 = vmatprep.subr.mxu0 0.0
      %344 = vmatpush1.msra.mxu0 0.0
      %345 = vmatprep.subr.mxu0 0.0
      %346 = vmatpush1.msra.mxu0 0.0
      %347 = vmatprep.subr.mxu0 0.0
      %348 = vmatpush1.msra.mxu0 0.0
      %349 = vmatprep.subr.mxu0 0.0
      %350 = vmatpush1.msra.mxu0 0.0
      %351 = vmatprep.subr.mxu0 0.0
      %352 = vmatpush1.msra.mxu0 0.0
      %353 = vmatprep.subr.mxu0 0.0
      %354 = vmatpush1.msra.mxu0 0.0
      %355 = vmatprep.subr.mxu0 0.0
      %356 = vmatpush1.msra.mxu0 0.0
      %357 = vmatprep.subr.mxu0 0.0
      %358 = vmatpush1.msra.mxu0 0.0
      %359 = vmatprep.subr.mxu0 0.0
      %360 = vmatpush1.msra.mxu0 0.0
      %361 = vmatprep.subr.mxu0 0.0
      %362 = vmatpush1.msra.mxu0 0.0
      %363 = vmatprep.subr.mxu0 0.0
      %364 = vmatpush1.msra.mxu0 0.0
      %365 = vmatprep.subr.mxu0 0.0
      %366 = vmatpush1.msra.mxu0 0.0
      %367 = vmatprep.subr.mxu0 0.0
      %368 = vmatpush1.msra.mxu0 0.0
      %369 = vmatprep.subr.mxu0 0.0
      %370 = vmatpush1.msra.mxu0 0.0
      %371 = vmatprep.subr.mxu0 0.0
      %372 = vmatpush1.msra.mxu0 0.0
      %373 = vmatprep.subr.mxu0 0.0
      %374 = vmatpush1.msra.mxu0 0.0
      %375 = vmatprep.subr.mxu0 0.0
      %376 = vmatpush1.msra.mxu0 0.0
      %377 = vmatprep.subr.mxu0 0.0
      %378 = vmatpush1.msra.mxu0 0.0
      %379 = vmatprep.subr.mxu0 0.0
      %380 = vmatpush1.msra.mxu0 0.0
      %381 = vmatprep.subr.mxu0 0.0
      %382 = vmatpush1.msra.mxu0 0.0
      %383 = vmatprep.mubr.f32.mxu0 0.0
      %384 = vmatmul.mubr.f32.gmra.mrb[0].mxu0 %v224
      %v385 = vpop.f32.mrb[0].mxu0
      %v386 = vadd.f32 %v220, %v385
      %v387 = vpop.f32.mrb[0].mxu0
      %388 = vmatprep.mubr.f32.mxu0 0.0
      %389 = vmatmul.mubr.f32.gmra.mrb[0].mxu0 %v227
      %v390 = vpop.f32.mrb[0].mxu0
      %v391 = vadd.f32 %v220, %v390
      %v392 = vpop.f32.mrb[0].mxu0
      %393 = vmatprep.mubr.f32.mxu0 0.0
      %394 = vmatmul.mubr.f32.gmra.mrb[0].mxu0 %v230
      %v395 = vpop.f32.mrb[0].mxu0
      %v396 = vadd.f32 %v220, %v395
      %v397 = vpop.f32.mrb[0].mxu0
      %398 = vmatprep.mubr.f32.mxu0 0.0
      %399 = vmatmul.mubr.f32.gmra.mrb[0].mxu0 %v233
      %v400 = vpop.f32.mrb[0].mxu0
      %v401 = vadd.f32 %v220, %v400
      %v402 = vpop.f32.mrb[0].mxu0
      %403 = vmatprep.mubr.f32.mxu0 0.0
      %404 = vmatmul.mubr.f32.gmra.mrb[0].mxu0 %v236
      %v405 = vpop.f32.mrb[0].mxu0
      %v406 = vadd.f32 %v220, %v405
      %v407 = vpop.f32.mrb[0].mxu0
      %408 = vmatprep.mubr.f32.mxu0 0.0
      %409 = vmatmul.mubr.f32.gmra.mrb[0].mxu0 %v239
      %v410 = vpop.f32.mrb[0].mxu0
      %v411 = vadd.f32 %v220, %v410
      %v412 = vpop.f32.mrb[0].mxu0
      %413 = vmatprep.mubr.f32.mxu0 0.0
      %414 = vmatmul.mubr.f32.gmra.mrb[0].mxu0 %v242
      %v415 = vpop.f32.mrb[0].mxu0
      %v416 = vadd.f32 %v220, %v415
      %v417 = vpop.f32.mrb[0].mxu0
      %418 = vmatprep.mubr.f32.mxu0 0.0
      %419 = vmatmul.mubr.f32.gmra.mrb[0].mxu0 %v245
      %v420 = vpop.f32.mrb[0].mxu0
      %v421 = vadd.f32 %v220, %v420
      %v422 = vpop.f32.mrb[0].mxu0
      %423 = vmatprep.mubr.f32.mxu0 0.0
      %424 = vmatmul.mubr.f32.gmra.mrb[0].mxu0 %v248
      %v425 = vpop.f32.mrb[0].mxu0
      %v426 = vadd.f32 %v220, %v425
      %v427 = vpop.f32.mrb[0].mxu0
      %428 = vmatprep.mubr.f32.mxu0 0.0
      %429 = vmatmul.mubr.f32.gmra.mrb[0].mxu0 %v251
      %v430 = vpop.f32.mrb[0].mxu0
      %v431 = vadd.f32 %v220, %v430
      %v432 = vpop.f32.mrb[0].mxu0
      %433 = vmatprep.mubr.f32.mxu0 0.0
      %434 = vmatmul.mubr.f32.gmra.mrb[0].mxu0 %v254
      %v435 = vpop.f32.mrb[0].mxu0
      %v436 = vadd.f32 %v220, %v435
      %v437 = vpop.f32.mrb[0].mxu0
      %438 = vmatprep.mubr.f32.mxu0 0.0
      %439 = vmatmul.mubr.f32.gmra.mrb[0].mxu0 %v257
      %v440 = vpop.f32.mrb[0].mxu0
      %v441 = vadd.f32 %v220, %v440
      %v442 = vpop.f32.mrb[0].mxu0
      %443 = vmatprep.mubr.f32.mxu0 0.0
      %444 = vmatmul.mubr.f32.gmra.mrb[0].mxu0 %v260
      %v445 = vpop.f32.mrb[0].mxu0
      %v446 = vadd.f32 %v220, %v445
      %v447 = vpop.f32.mrb[0].mxu0
      %448 = vmatprep.mubr.f32.mxu0 0.0
      %449 = vmatmul.mubr.f32.gmra.mrb[0].mxu0 %v263
      %v450 = vpop.f32.mrb[0].mxu0
      %v451 = vadd.f32 %v220, %v450
      %v452 = vpop.f32.mrb[0].mxu0
      %453 = vmatprep.mubr.f32.mxu0 0.0
      %454 = vmatmul.mubr.f32.gmra.mrb[0].mxu0 %v266
      %v455 = vpop.f32.mrb[0].mxu0
      %v456 = vadd.f32 %v220, %v455
      %v457 = vpop.f32.mrb[0].mxu0
      %458 = vmatprep.mubr.f32.mxu0 0.0
      %459 = vmatmul.mubr.f32.gmra.mrb[0].mxu0 %v269
      %v460 = vpop.f32.mrb[0].mxu0
      %v461 = vadd.f32 %v220, %v460
      %v462 = vpop.f32.mrb[0].mxu0
      %463 = vmatprep.mubr.f32.mxu0 0.0
      %464 = vmatmul.mubr.f32.gmra.mrb[0].mxu0 %v272
      %v465 = vpop.f32.mrb[0].mxu0
      %v466 = vadd.f32 %v220, %v465
      %v467 = vpop.f32.mrb[0].mxu0
      %468 = vmatprep.mubr.f32.mxu0 0.0
      %469 = vmatmul.mubr.f32.gmra.mrb[0].mxu0 %v275
      %v470 = vpop.f32.mrb[0].mxu0
      %v471 = vadd.f32 %v220, %v470
      %v472 = vpop.f32.mrb[0].mxu0
      %473 = vmatprep.mubr.f32.mxu0 0.0
      %474 = vmatmul.mubr.f32.gmra.mrb[0].mxu0 %v278
      %v475 = vpop.f32.mrb[0].mxu0
      %v476 = vadd.f32 %v220, %v475
      %v477 = vpop.f32.mrb[0].mxu0
      %478 = vmatprep.mubr.f32.mxu0 0.0
      %479 = vmatmul.mubr.f32.gmra.mrb[0].mxu0 %v281
      %v480 = vpop.f32.mrb[0].mxu0
      %v481 = vadd.f32 %v220, %v480
      %v482 = vpop.f32.mrb[0].mxu0
      %483 = vmatprep.mubr.f32.mxu0 0.0
      %484 = vmatmul.mubr.f32.gmra.mrb[0].mxu0 %v284
      %v485 = vpop.f32.mrb[0].mxu0
      %v486 = vadd.f32 %v220, %v485
      %v487 = vpop.f32.mrb[0].mxu0
      %488 = vmatprep.mubr.f32.mxu0 0.0
      %489 = vmatmul.mubr.f32.gmra.mrb[0].mxu0 %v287
      %v490 = vpop.f32.mrb[0].mxu0
      %v491 = vadd.f32 %v220, %v490
      %v492 = vpop.f32.mrb[0].mxu0
      %493 = vmatprep.mubr.f32.mxu0 0.0
      %494 = vmatmul.mubr.f32.gmra.mrb[0].mxu0 %v290
      %v495 = vpop.f32.mrb[0].mxu0
      %v496 = vadd.f32 %v220, %v495
      %v497 = vpop.f32.mrb[0].mxu0
      %498 = vmatprep.mubr.f32.mxu0 0.0
      %499 = vmatmul.mubr.f32.gmra.mrb[0].mxu0 %v293
      %v500 = vpop.f32.mrb[0].mxu0
      %v501 = vadd.f32 %v220, %v500
      %v502 = vpop.f32.mrb[0].mxu0
      %503 = vmatprep.mubr.f32.mxu0 0.0
      %504 = vmatmul.mubr.f32.gmra.mrb[0].mxu0 %v296
      %v505 = vpop.f32.mrb[0].mxu0
      %v506 = vadd.f32 %v220, %v505
      %v507 = vpop.f32.mrb[0].mxu0
      %508 = vmatprep.mubr.f32.mxu0 0.0
      %509 = vmatmul.mubr.f32.gmra.mrb[0].mxu0 %v299
      %v510 = vpop.f32.mrb[0].mxu0
      %v511 = vadd.f32 %v220, %v510
      %v512 = vpop.f32.mrb[0].mxu0
      %513 = vmatprep.mubr.f32.mxu0 0.0
      %514 = vmatmul.mubr.f32.gmra.mrb[0].mxu0 %v302
      %v515 = vpop.f32.mrb[0].mxu0
      %v516 = vadd.f32 %v220, %v515
      %v517 = vpop.f32.mrb[0].mxu0
      %518 = vmatprep.mubr.f32.mxu0 0.0
      %519 = vmatmul.mubr.f32.gmra.mrb[0].mxu0 %v305
      %v520 = vpop.f32.mrb[0].mxu0
      %v521 = vadd.f32 %v220, %v520
      %v522 = vpop.f32.mrb[0].mxu0
      %523 = vmatprep.mubr.f32.mxu0 0.0
      %524 = vmatmul.mubr.f32.gmra.mrb[0].mxu0 %v308
      %v525 = vpop.f32.mrb[0].mxu0
      %v526 = vadd.f32 %v220, %v525
      %v527 = vpop.f32.mrb[0].mxu0
      %528 = vmatprep.mubr.f32.mxu0 0.0
      %529 = vmatmul.mubr.f32.gmra.mrb[0].mxu0 %v311
      %v530 = vpop.f32.mrb[0].mxu0
      %v531 = vadd.f32 %v220, %v530
      %v532 = vpop.f32.mrb[0].mxu0
      %533 = vmatprep.mubr.f32.mxu0 0.0
      %534 = vmatmul.mubr.f32.gmra.mrb[0].mxu0 %v314
      %v535 = vpop.f32.mrb[0].mxu0
      %v536 = vadd.f32 %v220, %v535
      %v537 = vpop.f32.mrb[0].mxu0
      %538 = vmatprep.mubr.f32.mxu0 0.0
      %539 = vmatmul.mubr.f32.gmra.mrb[0].mxu0 %v317
      %v540 = vpop.f32.mrb[0].mxu0
      %v541 = vadd.f32 %v220, %v540
      %v542 = vpop.f32.mrb[0].mxu0
      %543 = vdwg.mxu0
      %544 = vst [vmem:[%s172] sm:$0xff] %v386
      %545 = vst [vmem:[%s172 + $0x8] sm:$0xff] %v391
      %546 = vst [vmem:[%s172 + $0x10] sm:$0xff] %v396
      %547 = vst [vmem:[%s172 + $0x18] sm:$0xff] %v401
      %548 = vst [vmem:[%s172 + $0x20] sm:$0xff] %v406
      %549 = vst [vmem:[%s172 + $0x28] sm:$0xff] %v411
      %550 = vst [vmem:[%s172 + $0x30] sm:$0xff] %v416
      %551 = vst [vmem:[%s172 + $0x38] sm:$0xff] %v421
      %552 = vst [vmem:[%s172 + $0x40] sm:$0xff] %v426
      %553 = vst [vmem:[%s172 + $0x48] sm:$0xff] %v431
      %554 = vst [vmem:[%s172 + $0x50] sm:$0xff] %v436
      %555 = vst [vmem:[%s172 + $0x58] sm:$0xff] %v441
      %556 = vst [vmem:[%s172 + $0x60] sm:$0xff] %v446
      %557 = vst [vmem:[%s172 + $0x68] sm:$0xff] %v451
      %558 = vst [vmem:[%s172 + $0x70] sm:$0xff] %v456
      %559 = vst [vmem:[%s172 + $0x78] sm:$0xff] %v461
      %560 = vst [vmem:[%s172 + $0x80] sm:$0xff] %v466
      %561 = vst [vmem:[%s172 + $0x88] sm:$0xff] %v471
      %562 = vst [vmem:[%s172 + $0x90] sm:$0xff] %v476
      %563 = vst [vmem:[%s172 + $0x98] sm:$0xff] %v481
      %564 = vst [vmem:[%s172 + $0xa0] sm:$0xff] %v486
      %565 = vst [vmem:[%s172 + $0xa8] sm:$0xff] %v491
      %566 = vst [vmem:[%s172 + $0xb0] sm:$0xff] %v496
      %567 = vst [vmem:[%s172 + $0xb8] sm:$0xff] %v501
      %568 = vst [vmem:[%s172 + $0xc0] sm:$0xff] %v506
      %569 = vst [vmem:[%s172 + $0xc8] sm:$0xff] %v511
      %570 = vst [vmem:[%s172 + $0xd0] sm:$0xff] %v516
      %571 = vst [vmem:[%s172 + $0xd8] sm:$0xff] %v521
      %572 = vst [vmem:[%s172 + $0xe0] sm:$0xff] %v526
      %573 = vst [vmem:[%s172 + $0xe8] sm:$0xff] %v531
      %574 = vst [vmem:[%s172 + $0xf0] sm:$0xff] %v536
      %575 = vst [vmem:[%s172 + $0xf8] sm:$0xff] %v541
      %s576 = smul.u32 32, %s14
      %p577 = scmp.lt.s32.totalorder %s576, 63
      %s578 = scalar_select %p577, %s576, 63
      %s579 = smul.addr %s578, 8
      %s580 = scalar_lea.vmem %s3, %s579
      // Predicated region
      $region33: #{n3net_forward.14} parent=31 // pred_check
        %p581 = pneg %p100
      $region34: #{n3net_forward.14} parent=31 // pred_check_branch
        %583 = sbr.rel (%p581) target = $region36
      $region35: #{n3net_forward.14} parent=31 // pred_region
        %s584 = smul.u32 32, %s14
      $region36: #{n3net_forward.14} parent=31 // pred_fallthru
        _
    $region32: #{n3net_forward.14} parent=5 // pred_fallthru
      _
    %p585 = scmp.le.s32.totalorder 2, %s9
    // Predicated region
    $region37: #{n3net_forward.14} parent=5 // pred_check
      %p586 = pneg %p585
    $region38: #{n3net_forward.14} parent=5 // pred_check_branch
      %588 = sbr.rel (%p586) target = $region40
    $region39: #{n3net_forward.14} parent=5 // pred_region
      %s589 = ssub.s32 %s9, 2
      // Predicated region
      $region41: #{n3net_forward.14} parent=39 // pred_check
        %p590 = pneg %p106
      $region42: #{n3net_forward.14} parent=39 // pred_check_branch
        %592 = sbr.rel (%p590) target = $region44
      $region43: #{n3net_forward.14} parent=39 // pred_region
        %s593 = smul.u32 32, %s15
        %p594 = scmp.lt.s32.totalorder %s593, 63
        %s595 = scalar_select %p594, %s593, 63
        %s596 = smul.addr %s595, 8
        %s597 = scalar_lea.vmem %s3, %s596
      $region44: #{n3net_forward.14} parent=39 // pred_fallthru
        _
    $region40: #{n3net_forward.14} parent=5 // pred_fallthru
      _
  $region6: #{n3net_forward.14} parent=0 // loop_footer
    %s13 = sadd.s32 1, %s9
  $region7: #{n3net_forward.14} parent=0 // loop_footer_branch
    %8 = sbr.rel target = $region3
  $region8: #{n3net_forward.14} parent=0 // loop_exit
    _

// kernel: n3net_forward.15
$region0: #{n3net_forward.15}
  #allocation0 [shape = 'u32[]', space=smem, size = 0x4, offset = 0x4, fixed_abs, tag = 'smem constant byte address 0x4 - core index']
  #allocation1 [shape = 'u32[144,128]{1,0:T(1,128)}', space=vmem, size = 0x12000, scoped, tag = 'internal scratch']
  %s0 = inlined_call_operand.vmem [shape: f32[2,9,512], index: 0, kind: input, shape index: {}]
  %s1 = inlined_call_operand.vmem [shape: f32[2,9,512], index: 1, kind: input, shape index: {}]
  %s2 = inlined_call_operand.vmem [shape: f32[2,2,9,512], index: 2, kind: output, shape index: {}]
  %s3 = sld [smem:[#allocation0]]
  $region41: #{n3net_forward.15} parent=0
    _
  %s5 = ssub.s32 1, %s3
  %s6 = scalar_select 0, %s5, %s3
  loop: start=0, step=1, limit=4
  $region2: #{n3net_forward.15} parent=0 // loop_pre_header
    _
  $region3: #{n3net_forward.15} parent=0 // loop_header
    %s8 = sphi 0, %s12
    %p9 = scmp.ge.s32.totalorder %s8, 4
    %s18 = sphi 0, %s20
    %s21 = sphi 0, %s18
    %s22 = sphi 0, %s21
    %s38 = sphi 0, %s22
    %s44 = sphi 0, %s46
    %s47 = sphi 0, %s44
    %s48 = sphi 0, %s47
    %s64 = sphi 0, %s48
    %s70 = sphi 0, %s72
    %s73 = sphi 0, %s70
    %s74 = sphi 0, %s73
    %s90 = sphi 0, %s74
  $region4: #{n3net_forward.15} parent=0 // loop_header_branch
    %11 = sbr.rel (%p9) target = $region8
  $region5: #{n3net_forward.15} parent=0 // loop_body
    %s13 = ssub.s32 %s8, 1
    %s14 = ssub.s32 %s8, 2
    %s15 = sadd.s32 %s8, 1
    %s16 = ssub.s32 %s8, %s15
    %p17 = scmp.eq.s32.totalorder %s16, 0
    %s19 = sadd.s32 %s18, 1
    %s20 = scalar_select %p17, %s18, %s19
    %p23 = pneg %p17
    %p24 = scmp.eq.s32.totalorder %s8, 1
    %p25 = por %p23, %p24
    %p26 = scmp.ne.s32.totalorder %s18, %s21
    %p27 = scmp.eq.s32.totalorder %s8, 0
    %p28 = por %p26, %p27
    %p29 = scmp.ne.s32.totalorder %s18, %s21
    %p30 = scmp.eq.s32.totalorder %s13, 1
    %p31 = por %p29, %p30
    %p32 = scmp.ne.s32.totalorder %s21, %s22
    %p33 = scmp.eq.s32.totalorder %s13, 0
    %p34 = por %p32, %p33
    %p35 = scmp.ne.s32.totalorder %s21, %s22
    %p36 = scmp.eq.s32.totalorder %s14, 1
    %p37 = por %p35, %p36
    %p39 = scmp.ne.s32.totalorder %s22, %s38
    %p40 = scmp.eq.s32.totalorder %s14, 0
    %p41 = por %p39, %p40
    %s42 = ssub.s32 %s8, %s15
    %p43 = scmp.eq.s32.totalorder %s42, 0
    %s45 = sadd.s32 %s44, 1
    %s46 = scalar_select %p43, %s44, %s45
    %p49 = pneg %p43
    %p50 = scmp.eq.s32.totalorder %s8, 1
    %p51 = por %p49, %p50
    %p52 = scmp.ne.s32.totalorder %s44, %s47
    %p53 = scmp.eq.s32.totalorder %s8, 0
    %p54 = por %p52, %p53
    %p55 = scmp.ne.s32.totalorder %s44, %s47
    %p56 = scmp.eq.s32.totalorder %s13, 1
    %p57 = por %p55, %p56
    %p58 = scmp.ne.s32.totalorder %s47, %s48
    %p59 = scmp.eq.s32.totalorder %s13, 0
    %p60 = por %p58, %p59
    %p61 = scmp.ne.s32.totalorder %s47, %s48
    %p62 = scmp.eq.s32.totalorder %s14, 1
    %p63 = por %p61, %p62
    %p65 = scmp.ne.s32.totalorder %s48, %s64
    %p66 = scmp.eq.s32.totalorder %s14, 0
    %p67 = por %p65, %p66
    %s68 = ssub.s32 %s8, %s15
    %p69 = scmp.eq.s32.totalorder %s68, 0
    %s71 = sadd.s32 %s70, 1
    %s72 = scalar_select %p69, %s70, %s71
    %p75 = pneg %p69
    %p76 = scmp.eq.s32.totalorder %s8, 1
    %p77 = por %p75, %p76
    %p78 = scmp.ne.s32.totalorder %s70, %s73
    %p79 = scmp.eq.s32.totalorder %s8, 0
    %p80 = por %p78, %p79
    %p81 = scmp.ne.s32.totalorder %s70, %s73
    %p82 = scmp.eq.s32.totalorder %s13, 1
    %p83 = por %p81, %p82
    %p84 = scmp.ne.s32.totalorder %s73, %s74
    %p85 = scmp.eq.s32.totalorder %s13, 0
    %p86 = por %p84, %p85
    %p87 = scmp.ne.s32.totalorder %s73, %s74
    %p88 = scmp.eq.s32.totalorder %s14, 1
    %p89 = por %p87, %p88
    %p91 = scmp.ne.s32.totalorder %s74, %s90
    %p92 = scmp.eq.s32.totalorder %s14, 0
    %p93 = por %p91, %p92
    %p94 = scmp.le.s32.totalorder 1, %s8
    %p95 = scmp.lt.s32.totalorder %s8, 3
    %p96 = pnand %p94, %p95
    %p97 = pneg %p96
    // Predicated region
    $region9: #{n3net_forward.15} parent=5 // pred_check
      _
    $region10: #{n3net_forward.15} parent=5 // pred_check_branch
      %99 = sbr.rel (%p96) target = $region12
    $region11: #{n3net_forward.15} parent=5 // pred_region
      %s100 = ssub.s32 %s8, 1
    $region12: #{n3net_forward.15} parent=5 // pred_fallthru
      _
    %p101 = scmp.lt.s32.totalorder %s8, 2
    // Predicated region
    $region13: #{n3net_forward.15} parent=5 // pred_check
      %p102 = pneg %p101
    $region14: #{n3net_forward.15} parent=5 // pred_check_branch
      %104 = sbr.rel (%p102) target = $region16
    $region15: #{n3net_forward.15} parent=5 // pred_region
      // Predicated region
      $region17: #{n3net_forward.15} parent=15 // pred_check
        %p105 = pneg %p28
      $region18: #{n3net_forward.15} parent=15 // pred_check_branch
        %107 = sbr.rel (%p105) target = $region20
      $region19: #{n3net_forward.15} parent=15 // pred_region
        %p108 = scmp.lt.s32.totalorder %s8, 1
        %s109 = scalar_select %p108, %s8, 1
        %s110 = smul.addr %s109, 8
        %s111 = smul.addr %s110, 8
        %s112 = scalar_lea.vmem %s0, %s111
      $region20: #{n3net_forward.15} parent=15 // pred_fallthru
        _
      // Predicated region
      $region21: #{n3net_forward.15} parent=15 // pred_check
        %p113 = pneg %p54
      $region22: #{n3net_forward.15} parent=15 // pred_check_branch
        %115 = sbr.rel (%p113) target = $region24
      $region23: #{n3net_forward.15} parent=15 // pred_region
        %p116 = scmp.lt.s32.totalorder %s8, 1
        %s117 = scalar_select %p116, %s8, 1
        %s118 = smul.addr %s117, 8
        %s119 = smul.addr %s118, 8
        %s120 = scalar_lea.vmem %s1, %s119
      $region24: #{n3net_forward.15} parent=15 // pred_fallthru
        _
    $region16: #{n3net_forward.15} parent=5 // pred_fallthru
      _
    %p121 = scmp.le.s32.totalorder 1, %s8
    %p122 = scmp.lt.s32.totalorder %s8, 3
    %p123 = pnand %p121, %p122
    %p124 = pneg %p123
    // Predicated region
    $region25: #{n3net_forward.15} parent=5 // pred_check
      _
    $region26: #{n3net_forward.15} parent=5 // pred_check_branch
      %126 = sbr.rel (%p123) target = $region28
    $region27: #{n3net_forward.15} parent=5 // pred_region
      %s127 = ssub.s32 %s8, 1
      %p128 = scmp.lt.s32.totalorder %s13, 1
      %s129 = scalar_select %p128, %s13, 1
      %s130 = smul.addr %s129, 8
      %s131 = smul.addr %s130, 8
      %s132 = scalar_lea.vmem %s0, %s131
      %p133 = pneg %p34
      %p134 = pneg %p31
      %p135 = scmp.lt.s32.totalorder %s13, 1
      %s136 = scalar_select %p135, %s13, 1
      %s137 = smul.addr %s136, 8
      %s138 = smul.addr %s137, 8
      %s139 = scalar_lea.vmem %s1, %s138
      %p140 = pneg %p60
      %p141 = pneg %p57
      %p142 = pneg %p86
      %p143 = pneg %p83
      %p144 = scmp.lt.s32.totalorder %s13, 1
      %s145 = scalar_select %p144, %s13, 1
      %s146 = smul.addr %s145, 16
      %s147 = smul.addr %s146, 8
      %s148 = scalar_lea.vmem %s2, %s147
      %p149 = scmp.lt.s32.totalorder %s13, 1
      %s150 = scalar_select %p149, %s13, 1
      %s151 = smul.addr %s150, 8
      %s152 = smul.addr %s151, 8
      %s153 = scalar_lea.vmem %s0, %s152
      %p154 = scmp.lt.s32.totalorder %s13, 1
      %s155 = scalar_select %p154, %s13, 1
      %s156 = smul.addr %s155, 8
      %s157 = smul.addr %s156, 8
      %s158 = scalar_lea.vmem %s1, %s157
      %p159 = scmp.lt.s32.totalorder %s13, 1
      %s160 = scalar_select %p159, %s13, 1
      %s161 = smul.addr %s160, 16
      %s162 = smul.addr %s161, 8
      %s163 = scalar_lea.vmem %s2, %s162
      %v164 = vld [vmem:[%s153] sm:$0xff]
      %v165 = vld [vmem:[%s153 + $0x8] sm:$0xff]
      %v166 = vld [vmem:[%s153 + $0x10] sm:$0xff]
      %v167 = vld [vmem:[%s153 + $0x18] sm:$0xff]
      %v168 = vld [vmem:[%s153 + $0x20] sm:$0x1]
      %v169 = vld [vmem:[%s153 + $0x28] sm:$0x1]
      %v170 = vld [vmem:[%s153 + $0x30] sm:$0x1]
      %v171 = vld [vmem:[%s153 + $0x38] sm:$0x1]
      %v172 = vld [vmem:[%s158] sm:$0xff]
      %v173 = vld [vmem:[%s158 + $0x8] sm:$0xff]
      %v174 = vld [vmem:[%s158 + $0x10] sm:$0xff]
      %v175 = vld [vmem:[%s158 + $0x18] sm:$0xff]
      %v176 = vld [vmem:[%s158 + $0x20] sm:$0x1]
      %v177 = vld [vmem:[%s158 + $0x28] sm:$0x1]
      %v178 = vld [vmem:[%s158 + $0x30] sm:$0x1]
      %v179 = vld [vmem:[%s158 + $0x38] sm:$0x1]
      %v180 = vmul.f32 %v164, %v164
      %v181 = vmul.f32 %v165, %v165
      %v182 = vmul.f32 %v166, %v166
      %v183 = vmul.f32 %v167, %v167
      %v184 = vmul.f32 %v168, %v168
      %v185 = vmul.f32 %v169, %v169
      %v186 = vmul.f32 %v170, %v170
      %v187 = vmul.f32 %v171, %v171
      %v188 = vadd.f32 %v180, %v181
      %v189 = vadd.f32 %v188, %v182
      %v190 = vadd.f32 %v189, %v183
      %191 = vadd.xlane.f32.xlu0 %v190
      %v192 = vpop.xlane.xlu0 %191
      %vm193 = vcmask 1040384
      %v194 = vsel %vm193, %v184, 0.0
      %v195 = vsel %vm193, %v185, 0.0
      %v196 = vadd.f32 %v194, %v195
      %v197 = vsel %vm193, %v186, 0.0
      %v198 = vadd.f32 %v196, %v197
      %v199 = vsel %vm193, %v187, 0.0
      %v200 = vadd.f32 %v198, %v199
      %201 = vadd.xlane.f32.xlu0 %v200
      %v202 = vpop.xlane.xlu0 %201
      %203 = vmatprep.subr.mxu0 %v165
      %204 = vmatpush1.xpose.msra.mxu0 %v164
      %205 = vmatprep.subr.mxu0 %v169
      %206 = vmatpush1.xpose.msra.mxu0 %v168
      %207 = vmatprep.subr.mxu0 0.0
      %208 = vmatpush1.xpose.msra.mxu0 0.0
      %209 = vmatprep.subr.mxu0 0.0
      %210 = vmatpush1.xpose.msra.mxu0 0.0
      %211 = vmatprep.subr.mxu0 0.0
      %212 = vmatpush1.xpose.msra.mxu0 0.0
      %213 = vmatprep.subr.mxu0 0.0
      %214 = vmatpush1.xpose.msra.mxu0 0.0
      %215 = vmatprep.subr.mxu0 0.0
      %216 = vmatpush1.xpose.msra.mxu0 0.0
      %217 = vmatprep.subr.mxu0 0.0
      %218 = vmatpush1.xpose.msra.mxu0 0.0
      %219 = vmatprep.subr.mxu0 0.0
      %220 = vmatpush1.xpose.msra.mxu0 0.0
      %221 = vmatprep.subr.mxu0 0.0
      %222 = vmatpush1.xpose.msra.mxu0 0.0
      %223 = vmatprep.subr.mxu0 0.0
      %224 = vmatpush1.xpose.msra.mxu0 0.0
      %225 = vmatprep.subr.mxu0 0.0
      %226 = vmatpush1.xpose.msra.mxu0 0.0
      %227 = vmatprep.subr.mxu0 0.0
      %228 = vmatpush1.xpose.msra.mxu0 0.0
      %229 = vmatprep.subr.mxu0 0.0
      %230 = vmatpush1.xpose.msra.mxu0 0.0
      %231 = vmatprep.subr.mxu0 0.0
      %232 = vmatpush1.xpose.msra.mxu0 0.0
      %233 = vmatprep.subr.mxu0 0.0
      %234 = vmatpush1.xpose.msra.mxu0 0.0
      %235 = vmatprep.subr.mxu0 0.0
      %236 = vmatpush1.xpose.msra.mxu0 0.0
      %237 = vmatprep.subr.mxu0 0.0
      %238 = vmatpush1.xpose.msra.mxu0 0.0
      %239 = vmatprep.subr.mxu0 0.0
      %240 = vmatpush1.xpose.msra.mxu0 0.0
      %241 = vmatprep.subr.mxu0 0.0
      %242 = vmatpush1.xpose.msra.mxu0 0.0
      %243 = vmatprep.subr.mxu0 0.0
      %244 = vmatpush1.xpose.msra.mxu0 0.0
      %245 = vmatprep.subr.mxu0 0.0
      %246 = vmatpush1.xpose.msra.mxu0 0.0
      %247 = vmatprep.subr.mxu0 0.0
      %248 = vmatpush1.xpose.msra.mxu0 0.0
      %249 = vmatprep.subr.mxu0 0.0
      %250 = vmatpush1.xpose.msra.mxu0 0.0
      %251 = vmatprep.subr.mxu0 0.0
      %252 = vmatpush1.xpose.msra.mxu0 0.0
      %253 = vmatprep.subr.mxu0 0.0
      %254 = vmatpush1.xpose.msra.mxu0 0.0
      %255 = vmatprep.subr.mxu0 0.0
      %256 = vmatpush1.xpose.msra.mxu0 0.0
      %257 = vmatprep.subr.mxu0 0.0
      %258 = vmatpush1.xpose.msra.mxu0 0.0
      %259 = vmatprep.subr.mxu0 0.0
      %260 = vmatpush1.xpose.msra.mxu0 0.0
      %261 = vmatprep.subr.mxu0 0.0
      %262 = vmatpush1.xpose.msra.mxu0 0.0
      %263 = vmatprep.subr.mxu0 0.0
      %264 = vmatpush1.xpose.msra.mxu0 0.0
      %265 = vmatprep.subr.mxu0 0.0
      %266 = vmatpush1.xpose.msra.mxu0 0.0
      %267 = vmatprep.mubr.f32.mxu0 %v165
      %268 = vmatmul.mubr.f32.gmra.mrb[0].mxu0 %v164
      %v269 = vpop.f32.mrb[0].mxu0
      %v270 = vadd.f32 0.0, %v269
      %v271 = vpop.f32.mrb[0].mxu0
      %272 = vmatprep.mubr.f32.mxu0 %v169
      %273 = vmatmul.mubr.f32.gmra.mrb[0].mxu0 %v168
      %v274 = vpop.f32.mrb[0].mxu0
      %v275 = vadd.f32 0.0, %v274
      %v276 = vpop.f32.mrb[0].mxu0
      %277 = vdwg.mxu0
      %278 = vmatprep.subr.mxu0 %v167
      %279 = vmatpush1.xpose.msra.mxu0 %v166
      %280 = vmatprep.subr.mxu0 %v171
      %281 = vmatpush1.xpose.msra.mxu0 %v170
      %282 = vmatprep.subr.mxu0 0.0
      %283 = vmatpush1.xpose.msra.mxu0 0.0
      %284 = vmatprep.subr.mxu0 0.0
      %285 = vmatpush1.xpose.msra.mxu0 0.0
      %286 = vmatprep.subr.mxu0 0.0
      %287 = vmatpush1.xpose.msra.mxu0 0.0
      %288 = vmatprep.subr.mxu0 0.0
      %289 = vmatpush1.xpose.msra.mxu0 0.0
      %290 = vmatprep.subr.mxu0 0.0
      %291 = vmatpush1.xpose.msra.mxu0 0.0
      %292 = vmatprep.subr.mxu0 0.0
      %293 = vmatpush1.xpose.msra.mxu0 0.0
      %294 = vmatprep.subr.mxu0 0.0
      %295 = vmatpush1.xpose.msra.mxu0 0.0
      %296 = vmatprep.subr.mxu0 0.0
      %297 = vmatpush1.xpose.msra.mxu0 0.0
      %298 = vmatprep.subr.mxu0 0.0
      %299 = vmatpush1.xpose.msra.mxu0 0.0
      %300 = vmatprep.subr.mxu0 0.0
      %301 = vmatpush1.xpose.msra.mxu0 0.0
      %302 = vmatprep.subr.mxu0 0.0
      %303 = vmatpush1.xpose.msra.mxu0 0.0
      %304 = vmatprep.subr.mxu0 0.0
      %305 = vmatpush1.xpose.msra.mxu0 0.0
      %306 = vmatprep.subr.mxu0 0.0
      %307 = vmatpush1.xpose.msra.mxu0 0.0
      %308 = vmatprep.subr.mxu0 0.0
      %309 = vmatpush1.xpose.msra.mxu0 0.0
      %310 = vmatprep.subr.mxu0 0.0
      %311 = vmatpush1.xpose.msra.mxu0 0.0
      %312 = vmatprep.subr.mxu0 0.0
      %313 = vmatpush1.xpose.msra.mxu0 0.0
      %314 = vmatprep.subr.mxu0 0.0
      %315 = vmatpush1.xpose.msra.mxu0 0.0
      %316 = vmatprep.subr.mxu0 0.0
      %317 = vmatpush1.xpose.msra.mxu0 0.0
      %318 = vmatprep.subr.mxu0 0.0
      %319 = vmatpush1.xpose.msra.mxu0 0.0
      %320 = vmatprep.subr.mxu0 0.0
      %321 = vmatpush1.xpose.msra.mxu0 0.0
      %322 = vmatprep.subr.mxu0 0.0
      %323 = vmatpush1.xpose.msra.mxu0 0.0
      %324 = vmatprep.subr.mxu0 0.0
      %325 = vmatpush1.xpose.msra.mxu0 0.0
      %326 = vmatprep.subr.mxu0 0.0
      %327 = vmatpush1.xpose.msra.mxu0 0.0
      %328 = vmatprep.subr.mxu0 0.0
      %329 = vmatpush1.xpose.msra.mxu0 0.0
      %330 = vmatprep.subr.mxu0 0.0
      %331 = vmatpush1.xpose.msra.mxu0 0.0
      %332 = vmatprep.subr.mxu0 0.0
      %333 = vmatpush1.xpose.msra.mxu0 0.0
      %334 = vmatprep.subr.mxu0 0.0
      %335 = vmatpush1.xpose.msra.mxu0 0.0
      %336 = vmatprep.subr.mxu0 0.0
      %337 = vmatpush1.xpose.msra.mxu0 0.0
      %338 = vmatprep.subr.mxu0 0.0
      %339 = vmatpush1.xpose.msra.mxu0 0.0
      %340 = vmatprep.subr.mxu0 0.0
      %341 = vmatpush1.xpose.msra.mxu0 0.0
      %342 = vmatprep.mubr.f32.mxu0 %v167
      %343 = vmatmul.mubr.f32.gmra.mrb[0].mxu0 %v166
      %v344 = vpop.f32.mrb[0].mxu0
      %v345 = vadd.f32 %v270, %v344
      %v346 = vpop.f32.mrb[0].mxu0
      %347 = vmatprep.mubr.f32.mxu0 %v171
      %348 = vmatmul.mubr.f32.gmra.mrb[0].mxu0 %v170
      %v349 = vpop.f32.mrb[0].mxu0
      %v350 = vadd.f32 %v275, %v349
      %v351 = vpop.f32.mrb[0].mxu0
      %352 = vdwg.mxu0
      %353 = vxpose.xlu0.b32.start [1/16] %v192, 128
      %354 = vxpose.xlu0.b32.cont [2/16] %v202, 128
      %355 = vxpose.xlu0.b32.cont [3/16] 0.0, 128
      %356 = vxpose.xlu0.b32.cont [4/16] 0.0, 128
      %357 = vxpose.xlu0.b32.cont [5/16] 0.0, 128
      %358 = vxpose.xlu0.b32.cont [6/16] 0.0, 128
      %359 = vxpose.xlu0.b32.cont [7/16] 0.0, 128
      %360 = vxpose.xlu0.b32.cont [8/16] 0.0, 128
      %361 = vxpose.xlu0.b32.cont [9/16] 0.0, 128
      %362 = vxpose.xlu0.b32.cont [10/16] 0.0, 128
      %363 = vxpose.xlu0.b32.cont [11/16] 0.0, 128
      %364 = vxpose.xlu0.b32.cont [12/16] 0.0, 128
      %365 = vxpose.xlu0.b32.cont [13/16] 0.0, 128
      %366 = vxpose.xlu0.b32.cont [14/16] 0.0, 128
      %367 = vxpose.xlu0.b32.cont [15/16] 0.0, 128
      %368 = vxpose.xlu0.b32.end [16/16] 0.0, 128
      %v369 = vpop.trf.xlu0
      %v370 = vpop.trf.xlu0
      %v371 = vpop.trf.xlu0
      %v372 = vpop.trf.xlu0
      %v373 = vpop.trf.xlu0
      %v374 = vpop.trf.xlu0
      %v375 = vpop.trf.xlu0
      %v376 = vpop.trf.xlu0
      %v377 = vpop.trf.xlu0
      %v378 = vpop.trf.xlu0
      %v379 = vpop.trf.xlu0
      %v380 = vpop.trf.xlu0
      %v381 = vpop.trf.xlu0
      %v382 = vpop.trf.xlu0
      %v383 = vpop.trf.xlu0
      %v384 = vpop.trf.xlu0
      %v385 = vlaneseq
      %v386 = vshrl.u32 %v385, 7
      %v387 = vsub.s32 0, %v386
      %v388 = vrot.slane %v369, %v387
      %v389 = vadd.f32 %v192, %v388
      %v390 = vadd.f32 %v202, %v388
      %v391 = vmul.f32 %v345, 2.0
      %v392 = vmul.f32 %v350, 2.0
      %v393 = vsub.f32 %v389, %v391
      %v394 = vsub.f32 %v390, %v392
      %v395 = vmax.f32 %v393, 0.0
      %v396 = vmax.f32 %v394, 0.0
      %v397 = vlaneseq
      %v398 = vshrl.u32 %v397, 7
      %v399 = vadd.s32 %v398, 8
      %v400 = vlaneseq
      %v401 = vand.u32 %v400, 127
      %vm402 = vcmp.eq.s32.totalorder %v398, %v401
      %vm403 = vcmp.eq.s32.totalorder %v399, %v401
      %v404 = vsub.f32 0.0, %v395
      %v405 = vsub.f32 0.0, %v396
      %v406 = vsel %vm402, -1e+30, %v404
      %v407 = vsel %vm403, -1e+30, %v405
      %vm408 = vcmask 72704
      %v409 = vsel %vm408, %v406, -inf
      %410 = vmax.xlane.f32.xlu0 %v409
      %v411 = vpop.xlane.xlu0 %410
      %vm412 = vcmask 65536
      %v413 = vsel %vm412, %v407, -inf
      %414 = vmax.xlane.f32.xlu0 %v413
      %v415 = vpop.xlane.xlu0 %414
      %v416 = vsub.f32 %v406, %v411
      %v417 = vsub.f32 %v407, %v415
      %v418 = vmul.f32 %v416, 1.442695
      %v419 = vpow.pop %v418
      %v420 = vmul.f32 %v417, 1.442695
      %v421 = vpow.pop %v420
      %v422 = vsel %vm408, %v419, 0.0
      %423 = vadd.xlane.f32.xlu0 %v422
      %v424 = vpop.xlane.xlu0 %423
      %v425 = vsel %vm412, %v421, 0.0
      %426 = vadd.xlane.f32.xlu0 %v425
      %v427 = vpop.xlane.xlu0 %426
      %v428 = vrcp.pop %v424
      %v429 = vrcp.pop %v427
      %v430 = vmul.f32 %v419, %v428
      %v431 = vmul.f32 %v421, %v429
      %v433 = vsel %vm408, %v430, 0
      %v436 = vsel %vm408, %v431, 0
      %v439 = vsel %vm193, %v176, 0
      %v442 = vsel %vm193, %v177, 0
      %v445 = vsel %vm193, %v178, 0
      %v448 = vsel %vm193, %v179, 0
      %450 = vmatprep.subr.mxu0 %v173
      %451 = vmatpush1.msra.mxu0 %v172
      %452 = vmatprep.subr.mxu0 %v442
      %453 = vmatpush1.msra.mxu0 %v439
      %454 = vmatprep.subr.mxu0 0.0
      %455 = vmatpush1.msra.mxu0 0.0
      %456 = vmatprep.subr.mxu0 0.0
      %457 = vmatpush1.msra.mxu0 0.0
      %458 = vmatprep.subr.mxu0 0.0
      %459 = vmatpush1.msra.mxu0 0.0
      %460 = vmatprep.subr.mxu0 0.0
      %461 = vmatpush1.msra.mxu0 0.0
      %462 = vmatprep.subr.mxu0 0.0
      %463 = vmatpush1.msra.mxu0 0.0
      %464 = vmatprep.subr.mxu0 0.0
      %465 = vmatpush1.msra.mxu0 0.0
      %466 = vmatprep.subr.mxu0 0.0
      %467 = vmatpush1.msra.mxu0 0.0
      %468 = vmatprep.subr.mxu0 0.0
      %469 = vmatpush1.msra.mxu0 0.0
      %470 = vmatprep.subr.mxu0 0.0
      %471 = vmatpush1.msra.mxu0 0.0
      %472 = vmatprep.subr.mxu0 0.0
      %473 = vmatpush1.msra.mxu0 0.0
      %474 = vmatprep.subr.mxu0 0.0
      %475 = vmatpush1.msra.mxu0 0.0
      %476 = vmatprep.subr.mxu0 0.0
      %477 = vmatpush1.msra.mxu0 0.0
      %478 = vmatprep.subr.mxu0 0.0
      %479 = vmatpush1.msra.mxu0 0.0
      %480 = vmatprep.subr.mxu0 0.0
      %481 = vmatpush1.msra.mxu0 0.0
      %482 = vmatprep.subr.mxu0 0.0
      %483 = vmatpush1.msra.mxu0 0.0
      %484 = vmatprep.subr.mxu0 0.0
      %485 = vmatpush1.msra.mxu0 0.0
      %486 = vmatprep.subr.mxu0 0.0
      %487 = vmatpush1.msra.mxu0 0.0
      %488 = vmatprep.subr.mxu0 0.0
      %489 = vmatpush1.msra.mxu0 0.0
      %490 = vmatprep.subr.mxu0 0.0
      %491 = vmatpush1.msra.mxu0 0.0
      %492 = vmatprep.subr.mxu0 0.0
      %493 = vmatpush1.msra.mxu0 0.0
      %494 = vmatprep.subr.mxu0 0.0
      %495 = vmatpush1.msra.mxu0 0.0
      %496 = vmatprep.subr.mxu0 0.0
      %497 = vmatpush1.msra.mxu0 0.0
      %498 = vmatprep.subr.mxu0 0.0
      %499 = vmatpush1.msra.mxu0 0.0
      %500 = vmatprep.subr.mxu0 0.0
      %501 = vmatpush1.msra.mxu0 0.0
      %502 = vmatprep.subr.mxu0 0.0
      %503 = vmatpush1.msra.mxu0 0.0
      %504 = vmatprep.subr.mxu0 0.0
      %505 = vmatpush1.msra.mxu0 0.0
      %506 = vmatprep.subr.mxu0 0.0
      %507 = vmatpush1.msra.mxu0 0.0
      %508 = vmatprep.subr.mxu0 0.0
      %509 = vmatpush1.msra.mxu0 0.0
      %510 = vmatprep.subr.mxu0 0.0
      %511 = vmatpush1.msra.mxu0 0.0
      %512 = vmatprep.subr.mxu0 0.0
      %513 = vmatpush1.msra.mxu0 0.0
      %514 = vmatprep.mubr.f32.mxu0 0.0
      %515 = vmatmul.mubr.f32.gmra.mrb[0].mxu0 %v433
      %v516 = vpop.f32.mrb[0].mxu0
      %v517 = vadd.f32 0.0, %v516
      %v518 = vpop.f32.mrb[0].mxu0
      %v519 = vadd.f32 0.0, %v518
      %520 = vmatprep.mubr.f32.mxu0 0.0
      %521 = vmatmul.mubr.f32.gmra.mrb[0].mxu0 %v436
      %v522 = vpop.f32.mrb[0].mxu0
      %v523 = vadd.f32 0.0, %v522
      %v524 = vpop.f32.mrb[0].mxu0
      %v525 = vadd.f32 0.0, %v524
      %526 = vdwg.mxu0
      %527 = vmatprep.subr.mxu0 %v175
      %528 = vmatpush1.msra.mxu0 %v174
      %529 = vmatprep.subr.mxu0 %v448
      %530 = vmatpush1.msra.mxu0 %v445
      %531 = vmatprep.subr.mxu0 0.0
      %532 = vmatpush1.msra.mxu0 0.0
      %533 = vmatprep.subr.mxu0 0.0
      %534 = vmatpush1.msra.mxu0 0.0
      %535 = vmatprep.subr.mxu0 0.0
      %536 = vmatpush1.msra.mxu0 0.0
      %537 = vmatprep.subr.mxu0 0.0
      %538 = vmatpush1.msra.mxu0 0.0
      %539 = vmatprep.subr.mxu0 0.0
      %540 = vmatpush1.msra.mxu0 0.0
      %541 = vmatprep.subr.mxu0 0.0
      %542 = vmatpush1.msra.mxu0 0.0
      %543 = vmatprep.subr.mxu0 0.0
      %544 = vmatpush1.msra.mxu0 0.0
      %545 = vmatprep.subr.mxu0 0.0
      %546 = vmatpush1.msra.mxu0 0.0
      %547 = vmatprep.subr.mxu0 0.0
      %548 = vmatpush1.msra.mxu0 0.0
      %549 = vmatprep.subr.mxu0 0.0
      %550 = vmatpush1.msra.mxu0 0.0
      %551 = vmatprep.subr.mxu0 0.0
      %552 = vmatpush1.msra.mxu0 0.0
      %553 = vmatprep.subr.mxu0 0.0
      %554 = vmatpush1.msra.mxu0 0.0
      %555 = vmatprep.subr.mxu0 0.0
      %556 = vmatpush1.msra.mxu0 0.0
      %557 = vmatprep.subr.mxu0 0.0
      %558 = vmatpush1.msra.mxu0 0.0
      %559 = vmatprep.subr.mxu0 0.0
      %560 = vmatpush1.msra.mxu0 0.0
      %561 = vmatprep.subr.mxu0 0.0
      %562 = vmatpush1.msra.mxu0 0.0
      %563 = vmatprep.subr.mxu0 0.0
      %564 = vmatpush1.msra.mxu0 0.0
      %565 = vmatprep.subr.mxu0 0.0
      %566 = vmatpush1.msra.mxu0 0.0
      %567 = vmatprep.subr.mxu0 0.0
      %568 = vmatpush1.msra.mxu0 0.0
      %569 = vmatprep.subr.mxu0 0.0
      %570 = vmatpush1.msra.mxu0 0.0
      %571 = vmatprep.subr.mxu0 0.0
      %572 = vmatpush1.msra.mxu0 0.0
      %573 = vmatprep.subr.mxu0 0.0
      %574 = vmatpush1.msra.mxu0 0.0
      %575 = vmatprep.subr.mxu0 0.0
      %576 = vmatpush1.msra.mxu0 0.0
      %577 = vmatprep.subr.mxu0 0.0
      %578 = vmatpush1.msra.mxu0 0.0
      %579 = vmatprep.subr.mxu0 0.0
      %580 = vmatpush1.msra.mxu0 0.0
      %581 = vmatprep.subr.mxu0 0.0
      %582 = vmatpush1.msra.mxu0 0.0
      %583 = vmatprep.subr.mxu0 0.0
      %584 = vmatpush1.msra.mxu0 0.0
      %585 = vmatprep.subr.mxu0 0.0
      %586 = vmatpush1.msra.mxu0 0.0
      %587 = vmatprep.subr.mxu0 0.0
      %588 = vmatpush1.msra.mxu0 0.0
      %589 = vmatprep.subr.mxu0 0.0
      %590 = vmatpush1.msra.mxu0 0.0
      %591 = vmatprep.mubr.f32.mxu0 0.0
      %592 = vmatmul.mubr.f32.gmra.mrb[0].mxu0 %v433
      %v593 = vpop.f32.mrb[0].mxu0
      %v594 = vadd.f32 0.0, %v593
      %v595 = vpop.f32.mrb[0].mxu0
      %v596 = vadd.f32 0.0, %v595
      %597 = vmatprep.mubr.f32.mxu0 0.0
      %598 = vmatmul.mubr.f32.gmra.mrb[0].mxu0 %v436
      %v599 = vpop.f32.mrb[0].mxu0
      %v600 = vadd.f32 0.0, %v599
      %v601 = vpop.f32.mrb[0].mxu0
      %v602 = vadd.f32 0.0, %v601
      %603 = vdwg.mxu0
      %604 = vst [vmem:[%s163] sm:$0xff] %v517
      %605 = vst [vmem:[%s163 + $0x8] sm:$0xff] %v519
      %606 = vst [vmem:[%s163 + $0x10] sm:$0xff] %v594
      %607 = vst [vmem:[%s163 + $0x18] sm:$0xff] %v596
      %608 = vst [vmem:[%s163 + $0x20] sm:$0x1] %v523
      %609 = vst [vmem:[%s163 + $0x28] sm:$0x1] %v525
      %610 = vst [vmem:[%s163 + $0x30] sm:$0x1] %v600
      %611 = vst [vmem:[%s163 + $0x38] sm:$0x1] %v602
      %v612 = vsub.f32 1.0, %v430
      %v613 = vsub.f32 1.0, %v431
      %v614 = vmax.f32 %v612, 1e-12
      %v615 = vmax.f32 %v613, 1e-12
      %v616 = vlog2.pop %v614
      %v617 = vmul.f32 %v616, 0.6931472
      %v618 = vlog2.pop %v615
      %v619 = vmul.f32 %v618, 0.6931472
      %v620 = vadd.f32 %v406, %v617
      %v621 = vadd.f32 %v407, %v619
      %v622 = vsel %vm408, %v620, -inf
      %623 = vmax.xlane.f32.xlu0 %v622
      %v624 = vpop.xlane.xlu0 %623
      %v625 = vsel %vm412, %v621, -inf
      %626 = vmax.xlane.f32.xlu0 %v625
      %v627 = vpop.xlane.xlu0 %626
      %v628 = vsub.f32 %v620, %v624
      %v629 = vsub.f32 %v621, %v627
      %v630 = vmul.f32 %v628, 1.442695
      %v631 = vpow.pop %v630
      %v632 = vmul.f32 %v629, 1.442695
      %v633 = vpow.pop %v632
      %v634 = vsel %vm408, %v631, 0.0
      %635 = vadd.xlane.f32.xlu0 %v634
      %v636 = vpop.xlane.xlu0 %635
      %v637 = vsel %vm412, %v633, 0.0
      %638 = vadd.xlane.f32.xlu0 %v637
      %v639 = vpop.xlane.xlu0 %638
      %v640 = vrcp.pop %v636
      %v641 = vrcp.pop %v639
      %v642 = vmul.f32 %v631, %v640
      %v643 = vmul.f32 %v633, %v641
      %v645 = vsel %vm408, %v642, 0
      %v648 = vsel %vm408, %v643, 0
      %650 = vmatprep.subr.mxu0 %v173
      %651 = vmatpush1.msra.mxu0 %v172
      %652 = vmatprep.subr.mxu0 %v442
      %653 = vmatpush1.msra.mxu0 %v439
      %654 = vmatprep.subr.mxu0 0.0
      %655 = vmatpush1.msra.mxu0 0.0
      %656 = vmatprep.subr.mxu0 0.0
      %657 = vmatpush1.msra.mxu0 0.0
      %658 = vmatprep.subr.mxu0 0.0
      %659 = vmatpush1.msra.mxu0 0.0
      %660 = vmatprep.subr.mxu0 0.0
      %661 = vmatpush1.msra.mxu0 0.0
      %662 = vmatprep.subr.mxu0 0.0
      %663 = vmatpush1.msra.mxu0 0.0
      %664 = vmatprep.subr.mxu0 0.0
      %665 = vmatpush1.msra.mxu0 0.0
      %666 = vmatprep.subr.mxu0 0.0
      %667 = vmatpush1.msra.mxu0 0.0
      %668 = vmatprep.subr.mxu0 0.0
      %669 = vmatpush1.msra.mxu0 0.0
      %670 = vmatprep.subr.mxu0 0.0
      %671 = vmatpush1.msra.mxu0 0.0
      %672 = vmatprep.subr.mxu0 0.0
      %673 = vmatpush1.msra.mxu0 0.0
      %674 = vmatprep.subr.mxu0 0.0
      %675 = vmatpush1.msra.mxu0 0.0
      %676 = vmatprep.subr.mxu0 0.0
      %677 = vmatpush1.msra.mxu0 0.0
      %678 = vmatprep.subr.mxu0 0.0
      %679 = vmatpush1.msra.mxu0 0.0
      %680 = vmatprep.subr.mxu0 0.0
      %681 = vmatpush1.msra.mxu0 0.0
      %682 = vmatprep.subr.mxu0 0.0
      %683 = vmatpush1.msra.mxu0 0.0
      %684 = vmatprep.subr.mxu0 0.0
      %685 = vmatpush1.msra.mxu0 0.0
      %686 = vmatprep.subr.mxu0 0.0
      %687 = vmatpush1.msra.mxu0 0.0
      %688 = vmatprep.subr.mxu0 0.0
      %689 = vmatpush1.msra.mxu0 0.0
      %690 = vmatprep.subr.mxu0 0.0
      %691 = vmatpush1.msra.mxu0 0.0
      %692 = vmatprep.subr.mxu0 0.0
      %693 = vmatpush1.msra.mxu0 0.0
      %694 = vmatprep.subr.mxu0 0.0
      %695 = vmatpush1.msra.mxu0 0.0
      %696 = vmatprep.subr.mxu0 0.0
      %697 = vmatpush1.msra.mxu0 0.0
      %698 = vmatprep.subr.mxu0 0.0
      %699 = vmatpush1.msra.mxu0 0.0
      %700 = vmatprep.subr.mxu0 0.0
      %701 = vmatpush1.msra.mxu0 0.0
      %702 = vmatprep.subr.mxu0 0.0
      %703 = vmatpush1.msra.mxu0 0.0
      %704 = vmatprep.subr.mxu0 0.0
      %705 = vmatpush1.msra.mxu0 0.0
      %706 = vmatprep.subr.mxu0 0.0
      %707 = vmatpush1.msra.mxu0 0.0
      %708 = vmatprep.subr.mxu0 0.0
      %709 = vmatpush1.msra.mxu0 0.0
      %710 = vmatprep.subr.mxu0 0.0
      %711 = vmatpush1.msra.mxu0 0.0
      %712 = vmatprep.subr.mxu0 0.0
      %713 = vmatpush1.msra.mxu0 0.0
      %714 = vmatprep.mubr.f32.mxu0 0.0
      %715 = vmatmul.mubr.f32.gmra.mrb[0].mxu0 %v645
      %v716 = vpop.f32.mrb[0].mxu0
      %v717 = vadd.f32 0.0, %v716
      %v718 = vpop.f32.mrb[0].mxu0
      %v719 = vadd.f32 0.0, %v718
      %720 = vmatprep.mubr.f32.mxu0 0.0
      %721 = vmatmul.mubr.f32.gmra.mrb[0].mxu0 %v648
      %v722 = vpop.f32.mrb[0].mxu0
      %v723 = vadd.f32 0.0, %v722
      %v724 = vpop.f32.mrb[0].mxu0
      %v725 = vadd.f32 0.0, %v724
      %726 = vdwg.mxu0
      %727 = vmatprep.subr.mxu0 %v175
      %728 = vmatpush1.msra.mxu0 %v174
      %729 = vmatprep.subr.mxu0 %v448
      %730 = vmatpush1.msra.mxu0 %v445
      %731 = vmatprep.subr.mxu0 0.0
      %732 = vmatpush1.msra.mxu0 0.0
      %733 = vmatprep.subr.mxu0 0.0
      %734 = vmatpush1.msra.mxu0 0.0
      %735 = vmatprep.subr.mxu0 0.0
      %736 = vmatpush1.msra.mxu0 0.0
      %737 = vmatprep.subr.mxu0 0.0
      %738 = vmatpush1.msra.mxu0 0.0
      %739 = vmatprep.subr.mxu0 0.0
      %740 = vmatpush1.msra.mxu0 0.0
      %741 = vmatprep.subr.mxu0 0.0
      %742 = vmatpush1.msra.mxu0 0.0
      %743 = vmatprep.subr.mxu0 0.0
      %744 = vmatpush1.msra.mxu0 0.0
      %745 = vmatprep.subr.mxu0 0.0
      %746 = vmatpush1.msra.mxu0 0.0
      %747 = vmatprep.subr.mxu0 0.0
      %748 = vmatpush1.msra.mxu0 0.0
      %749 = vmatprep.subr.mxu0 0.0
      %750 = vmatpush1.msra.mxu0 0.0
      %751 = vmatprep.subr.mxu0 0.0
      %752 = vmatpush1.msra.mxu0 0.0
      %753 = vmatprep.subr.mxu0 0.0
      %754 = vmatpush1.msra.mxu0 0.0
      %755 = vmatprep.subr.mxu0 0.0
      %756 = vmatpush1.msra.mxu0 0.0
      %757 = vmatprep.subr.mxu0 0.0
      %758 = vmatpush1.msra.mxu0 0.0
      %759 = vmatprep.subr.mxu0 0.0
      %760 = vmatpush1.msra.mxu0 0.0
      %761 = vmatprep.subr.mxu0 0.0
      %762 = vmatpush1.msra.mxu0 0.0
      %763 = vmatprep.subr.mxu0 0.0
      %764 = vmatpush1.msra.mxu0 0.0
      %765 = vmatprep.subr.mxu0 0.0
      %766 = vmatpush1.msra.mxu0 0.0
      %767 = vmatprep.subr.mxu0 0.0
      %768 = vmatpush1.msra.mxu0 0.0
      %769 = vmatprep.subr.mxu0 0.0
      %770 = vmatpush1.msra.mxu0 0.0
      %771 = vmatprep.subr.mxu0 0.0
      %772 = vmatpush1.msra.mxu0 0.0
      %773 = vmatprep.subr.mxu0 0.0
      %774 = vmatpush1.msra.mxu0 0.0
      %775 = vmatprep.subr.mxu0 0.0
      %776 = vmatpush1.msra.mxu0 0.0
      %777 = vmatprep.subr.mxu0 0.0
      %778 = vmatpush1.msra.mxu0 0.0
      %779 = vmatprep.subr.mxu0 0.0
      %780 = vmatpush1.msra.mxu0 0.0
      %781 = vmatprep.subr.mxu0 0.0
      %782 = vmatpush1.msra.mxu0 0.0
      %783 = vmatprep.subr.mxu0 0.0
      %784 = vmatpush1.msra.mxu0 0.0
      %785 = vmatprep.subr.mxu0 0.0
      %786 = vmatpush1.msra.mxu0 0.0
      %787 = vmatprep.subr.mxu0 0.0
      %788 = vmatpush1.msra.mxu0 0.0
      %789 = vmatprep.subr.mxu0 0.0
      %790 = vmatpush1.msra.mxu0 0.0
      %791 = vmatprep.mubr.f32.mxu0 0.0
      %792 = vmatmul.mubr.f32.gmra.mrb[0].mxu0 %v645
      %v793 = vpop.f32.mrb[0].mxu0
      %v794 = vadd.f32 0.0, %v793
      %v795 = vpop.f32.mrb[0].mxu0
      %v796 = vadd.f32 0.0, %v795
      %797 = vmatprep.mubr.f32.mxu0 0.0
      %798 = vmatmul.mubr.f32.gmra.mrb[0].mxu0 %v648
      %v799 = vpop.f32.mrb[0].mxu0
      %v800 = vadd.f32 0.0, %v799
      %v801 = vpop.f32.mrb[0].mxu0
      %v802 = vadd.f32 0.0, %v801
      %803 = vdwg.mxu0
      %s804 = scalar_lea.vmem %s163, 64
      %805 = vst [vmem:[%s804] sm:$0xff] %v717
      %806 = vst [vmem:[%s804 + $0x8] sm:$0xff] %v719
      %807 = vst [vmem:[%s804 + $0x10] sm:$0xff] %v794
      %808 = vst [vmem:[%s804 + $0x18] sm:$0xff] %v796
      %809 = vst [vmem:[%s804 + $0x20] sm:$0x1] %v723
      %810 = vst [vmem:[%s804 + $0x28] sm:$0x1] %v725
      %811 = vst [vmem:[%s804 + $0x30] sm:$0x1] %v800
      %812 = vst [vmem:[%s804 + $0x38] sm:$0x1] %v802
      %p813 = scmp.lt.s32.totalorder %s13, 1
      %s814 = scalar_select %p813, %s13, 1
      %s815 = smul.addr %s814, 16
      %s816 = smul.addr %s815, 8
      %s817 = scalar_lea.vmem %s2, %s816
      // Predicated region
      $region29: #{n3net_forward.15} parent=27 // pred_check
        %p818 = pneg %p83
      $region30: #{n3net_forward.15} parent=27 // pred_check_branch
        %820 = sbr.rel (%p818) target = $region32
      $region31: #{n3net_forward.15} parent=27 // pred_region
        _
      $region32: #{n3net_forward.15} parent=27 // pred_fallthru
        _
    $region28: #{n3net_forward.15} parent=5 // pred_fallthru
      _
    %p821 = scmp.le.s32.totalorder 2, %s8
    // Predicated region
    $region33: #{n3net_forward.15} parent=5 // pred_check
      %p822 = pneg %p821
    $region34: #{n3net_forward.15} parent=5 // pred_check_branch
      %824 = sbr.rel (%p822) target = $region36
    $region35: #{n3net_forward.15} parent=5 // pred_region
      %s825 = ssub.s32 %s8, 2
      // Predicated region
      $region37: #{n3net_forward.15} parent=35 // pred_check
        %p826 = pneg %p89
      $region38: #{n3net_forward.15} parent=35 // pred_check_branch
        %828 = sbr.rel (%p826) target = $region40
      $region39: #{n3net_forward.15} parent=35 // pred_region
        %p829 = scmp.lt.s32.totalorder %s14, 1
        %s830 = scalar_select %p829, %s14, 1
        %s831 = smul.addr %s830, 16
        %s832 = smul.addr %s831, 8
        %s833 = scalar_lea.vmem %s2, %s832
      $region40: #{n3net_forward.15} parent=35 // pred_fallthru
        _
    $region36: #{n3net_forward.15} parent=5 // pred_fallthru
      _
  $region6: #{n3net_forward.15} parent=0 // loop_footer
    %s12 = sadd.s32 1, %s8
  $region7: #{n3net_forward.15} parent=0 // loop_footer_branch
    %7 = sbr.rel target = $region3
  $region8: #{n3net_forward.15} parent=0 // loop_exit
    _

// kernel: n3net_forward.16
$region0: #{n3net_forward.16}
  #allocation0 [shape = 'u32[]', space=smem, size = 0x4, offset = 0x4, fixed_abs, tag = 'smem constant byte address 0x4 - core index']
  #allocation1 [shape = 'u32[144,128]{1,0:T(1,128)}', space=vmem, size = 0x12000, scoped, tag = 'internal scratch']
  %s0 = inlined_call_operand.vmem [shape: f32[2,2,576,8], index: 0, kind: input, shape index: {}]
  %s1 = inlined_call_operand.vmem [shape: f32[2,256,8], index: 1, kind: input, shape index: {}]
  %s2 = inlined_call_operand.vmem [shape: f32[256,576], index: 2, kind: input, shape index: {}]
  %s3 = inlined_call_operand.vmem [shape: f32[2,256,24], index: 3, kind: output, shape index: {}]
  %s4 = sld [smem:[#allocation0]]
  $region45: #{n3net_forward.16} parent=0
    _
  %s6 = ssub.s32 1, %s4
  %s7 = scalar_select 0, %s6, %s4
  loop: start=0, step=1, limit=4
  $region2: #{n3net_forward.16} parent=0 // loop_pre_header
    _
  $region3: #{n3net_forward.16} parent=0 // loop_header
    %s9 = sphi 0, %s13
    %p10 = scmp.ge.s32.totalorder %s9, 4
    %s19 = sphi 0, %s21
    %s22 = sphi 0, %s19
    %s23 = sphi 0, %s22
    %s39 = sphi 0, %s23
    %s45 = sphi 0, %s47
    %s48 = sphi 0, %s45
    %s49 = sphi 0, %s48
    %s65 = sphi 0, %s49
    %s69 = sphi 0, %s69
    %s71 = sphi 0, %s69
    %s72 = sphi 0, %s71
    %s86 = sphi 0, %s72
    %s92 = sphi 0, %s94
    %s95 = sphi 0, %s92
    %s96 = sphi 0, %s95
    %s112 = sphi 0, %s96
  $region4: #{n3net_forward.16} parent=0 // loop_header_branch
    %12 = sbr.rel (%p10) target = $region8
  $region5: #{n3net_forward.16} parent=0 // loop_body
    %s14 = ssub.s32 %s9, 1
    %s15 = ssub.s32 %s9, 2
    %s16 = sadd.s32 %s9, 1
    %s17 = ssub.s32 %s9, %s16
    %p18 = scmp.eq.s32.totalorder %s17, 0
    %s20 = sadd.s32 %s19, 1
    %s21 = scalar_select %p18, %s19, %s20
    %p24 = pneg %p18
    %p25 = scmp.eq.s32.totalorder %s9, 1
    %p26 = por %p24, %p25
    %p27 = scmp.ne.s32.totalorder %s19, %s22
    %p28 = scmp.eq.s32.totalorder %s9, 0
    %p29 = por %p27, %p28
    %p30 = scmp.ne.s32.totalorder %s19, %s22
    %p31 = scmp.eq.s32.totalorder %s14, 1
    %p32 = por %p30, %p31
    %p33 = scmp.ne.s32.totalorder %s22, %s23
    %p34 = scmp.eq.s32.totalorder %s14, 0
    %p35 = por %p33, %p34
    %p36 = scmp.ne.s32.totalorder %s22, %s23
    %p37 = scmp.eq.s32.totalorder %s15, 1
    %p38 = por %p36, %p37
    %p40 = scmp.ne.s32.totalorder %s23, %s39
    %p41 = scmp.eq.s32.totalorder %s15, 0
    %p42 = por %p40, %p41
    %s43 = ssub.s32 %s9, %s16
    %p44 = scmp.eq.s32.totalorder %s43, 0
    %s46 = sadd.s32 %s45, 1
    %s47 = scalar_select %p44, %s45, %s46
    %p50 = pneg %p44
    %p51 = scmp.eq.s32.totalorder %s9, 1
    %p52 = por %p50, %p51
    %p53 = scmp.ne.s32.totalorder %s45, %s48
    %p54 = scmp.eq.s32.totalorder %s9, 0
    %p55 = por %p53, %p54
    %p56 = scmp.ne.s32.totalorder %s45, %s48
    %p57 = scmp.eq.s32.totalorder %s14, 1
    %p58 = por %p56, %p57
    %p59 = scmp.ne.s32.totalorder %s48, %s49
    %p60 = scmp.eq.s32.totalorder %s14, 0
    %p61 = por %p59, %p60
    %p62 = scmp.ne.s32.totalorder %s48, %s49
    %p63 = scmp.eq.s32.totalorder %s15, 1
    %p64 = por %p62, %p63
    %p66 = scmp.ne.s32.totalorder %s49, %s65
    %p67 = scmp.eq.s32.totalorder %s15, 0
    %p68 = por %p66, %p67
    %s70 = sadd.s32 %s69, 1
    %p73 = scmp.eq.s32.totalorder %s9, 1
    %p74 = scmp.ne.s32.totalorder %s69, %s71
    %p75 = scmp.eq.s32.totalorder %s9, 0
    %p76 = por %p74, %p75
    %p77 = scmp.ne.s32.totalorder %s69, %s71
    %p78 = scmp.eq.s32.totalorder %s14, 1
    %p79 = por %p77, %p78
    %p80 = scmp.ne.s32.totalorder %s71, %s72
    %p81 = scmp.eq.s32.totalorder %s14, 0
    %p82 = por %p80, %p81
    %p83 = scmp.ne.s32.totalorder %s71, %s72
    %p84 = scmp.eq.s32.totalorder %s15, 1
    %p85 = por %p83, %p84
    %p87 = scmp.ne.s32.totalorder %s72, %s86
    %p88 = scmp.eq.s32.totalorder %s15, 0
    %p89 = por %p87, %p88
    %s90 = ssub.s32 %s9, %s16
    %p91 = scmp.eq.s32.totalorder %s90, 0
    %s93 = sadd.s32 %s92, 1
    %s94 = scalar_select %p91, %s92, %s93
    %p97 = pneg %p91
    %p98 = scmp.eq.s32.totalorder %s9, 1
    %p99 = por %p97, %p98
    %p100 = scmp.ne.s32.totalorder %s92, %s95
    %p101 = scmp.eq.s32.totalorder %s9, 0
    %p102 = por %p100, %p101
    %p103 = scmp.ne.s32.totalorder %s92, %s95
    %p104 = scmp.eq.s32.totalorder %s14, 1
    %p105 = por %p103, %p104
    %p106 = scmp.ne.s32.totalorder %s95, %s96
    %p107 = scmp.eq.s32.totalorder %s14, 0
    %p108 = por %p106, %p107
    %p109 = scmp.ne.s32.totalorder %s95, %s96
    %p110 = scmp.eq.s32.totalorder %s15, 1
    %p111 = por %p109, %p110
    %p113 = scmp.ne.s32.totalorder %s96, %s112
    %p114 = scmp.eq.s32.totalorder %s15, 0
    %p115 = por %p113, %p114
    %p116 = scmp.le.s32.totalorder 1, %s9
    %p117 = scmp.lt.s32.totalorder %s9, 3
    %p118 = pnand %p116, %p117
    %p119 = pneg %p118
    // Predicated region
    $region9: #{n3net_forward.16} parent=5 // pred_check
      _
    $region10: #{n3net_forward.16} parent=5 // pred_check_branch
      %121 = sbr.rel (%p118) target = $region12
    $region11: #{n3net_forward.16} parent=5 // pred_region
      %s122 = ssub.s32 %s9, 1
      // Predicated region
      $region13: #{n3net_forward.16} parent=11 // pred_check
        %p123 = pneg %p82
      $region14: #{n3net_forward.16} parent=11 // pred_check_branch
        %125 = sbr.rel (%p123) target = $region16
      $region15: #{n3net_forward.16} parent=11 // pred_region
        _
      $region16: #{n3net_forward.16} parent=11 // pred_fallthru
        _
    $region12: #{n3net_forward.16} parent=5 // pred_fallthru
      _
    %p126 = scmp.lt.s32.totalorder %s9, 2
    // Predicated region
    $region17: #{n3net_forward.16} parent=5 // pred_check
      %p127 = pneg %p126
    $region18: #{n3net_forward.16} parent=5 // pred_check_branch
      %129 = sbr.rel (%p127) target = $region20
    $region19: #{n3net_forward.16} parent=5 // pred_region
      // Predicated region
      $region21: #{n3net_forward.16} parent=19 // pred_check
        %p130 = pneg %p29
      $region22: #{n3net_forward.16} parent=19 // pred_check_branch
        %132 = sbr.rel (%p130) target = $region24
      $region23: #{n3net_forward.16} parent=19 // pred_region
        %p133 = scmp.lt.s32.totalorder %s9, 1
        %s134 = scalar_select %p133, %s9, 1
        %s135 = smul.addr %s134, 144
        %s136 = smul.addr %s135, 8
        %s137 = scalar_lea.vmem %s0, %s136
      $region24: #{n3net_forward.16} parent=19 // pred_fallthru
        _
      // Predicated region
      $region25: #{n3net_forward.16} parent=19 // pred_check
        %p138 = pneg %p55
      $region26: #{n3net_forward.16} parent=19 // pred_check_branch
        %140 = sbr.rel (%p138) target = $region28
      $region27: #{n3net_forward.16} parent=19 // pred_region
        %p141 = scmp.lt.s32.totalorder %s9, 1
        %s142 = scalar_select %p141, %s9, 1
        %s143 = smul.addr %s142, 32
        %s144 = smul.addr %s143, 8
        %s145 = scalar_lea.vmem %s1, %s144
      $region28: #{n3net_forward.16} parent=19 // pred_fallthru
        _
    $region20: #{n3net_forward.16} parent=5 // pred_fallthru
      _
    %p146 = scmp.le.s32.totalorder 1, %s9
    %p147 = scmp.lt.s32.totalorder %s9, 3
    %p148 = pnand %p146, %p147
    %p149 = pneg %p148
    // Predicated region
    $region29: #{n3net_forward.16} parent=5 // pred_check
      _
    $region30: #{n3net_forward.16} parent=5 // pred_check_branch
      %151 = sbr.rel (%p148) target = $region32
    $region31: #{n3net_forward.16} parent=5 // pred_region
      %s152 = ssub.s32 %s9, 1
      %p153 = scmp.lt.s32.totalorder %s14, 1
      %s154 = scalar_select %p153, %s14, 1
      %s155 = smul.addr %s154, 144
      %s156 = smul.addr %s155, 8
      %s157 = scalar_lea.vmem %s0, %s156
      %p158 = pneg %p35
      %p159 = pneg %p32
      %p160 = scmp.lt.s32.totalorder %s14, 1
      %s161 = scalar_select %p160, %s14, 1
      %s162 = smul.addr %s161, 32
      %s163 = smul.addr %s162, 8
      %s164 = scalar_lea.vmem %s1, %s163
      %p165 = pneg %p61
      %p166 = pneg %p58
      %p167 = pneg %p82
      %p168 = pneg %p79
      %p169 = pneg %p108
      %p170 = pneg %p105
      %p171 = scmp.lt.s32.totalorder %s14, 1
      %s172 = scalar_select %p171, %s14, 1
      %s173 = smul.addr %s172, 32
      %s174 = smul.addr %s173, 8
      %s175 = scalar_lea.vmem %s3, %s174
      %p176 = scmp.lt.s32.totalorder %s14, 1
      %s177 = scalar_select %p176, %s14, 1
      %s178 = smul.addr %s177, 144
      %s179 = smul.addr %s178, 8
      %s180 = scalar_lea.vmem %s0, %s179
      %p181 = scmp.lt.s32.totalorder %s14, 1
      %s182 = scalar_select %p181, %s14, 1
      %s183 = smul.addr %s182, 32
      %s184 = smul.addr %s183, 8
      %s185 = scalar_lea.vmem %s1, %s184
      %p186 = scmp.lt.s32.totalorder %s14, 1
      %s187 = scalar_select %p186, %s14, 1
      %s188 = smul.addr %s187, 32
      %s189 = smul.addr %s188, 8
      %s190 = scalar_lea.vmem %s3, %s189
      %v191 = vld [vmem:[%s2] sm:$0xff]
      %v192 = vld [vmem:[%s2 + $0x8] sm:$0xff]
      %v193 = vld [vmem:[%s2 + $0x10] sm:$0xff]
      %v194 = vld [vmem:[%s2 + $0x18] sm:$0xff]
      %v195 = vld [vmem:[%s2 + $0x20] sm:$0xff]
      %v196 = vld [vmem:[%s2 + $0x28] sm:$0xff]
      %v197 = vld [vmem:[%s2 + $0x30] sm:$0xff]
      %v198 = vld [vmem:[%s2 + $0x38] sm:$0xff]
      %v199 = vld [vmem:[%s2 + $0x40] sm:$0xff]
      %v200 = vld [vmem:[%s2 + $0x48] sm:$0xff]
      %v201 = vld [vmem:[%s2 + $0x50] sm:$0xff]
      %v202 = vld [vmem:[%s2 + $0x58] sm:$0xff]
      %v203 = vld [vmem:[%s2 + $0x60] sm:$0xff]
      %v204 = vld [vmem:[%s2 + $0x68] sm:$0xff]
      %v205 = vld [vmem:[%s2 + $0x70] sm:$0xff]
      %v206 = vld [vmem:[%s2 + $0x78] sm:$0xff]
      %v207 = vld [vmem:[%s2 + $0x80] sm:$0xff]
      %v208 = vld [vmem:[%s2 + $0x88] sm:$0xff]
      %v209 = vld [vmem:[%s2 + $0x90] sm:$0xff]
      %v210 = vld [vmem:[%s2 + $0x98] sm:$0xff]
      %v211 = vld [vmem:[%s2 + $0xa0] sm:$0xff]
      %v212 = vld [vmem:[%s2 + $0xa8] sm:$0xff]
      %v213 = vld [vmem:[%s2 + $0xb0] sm:$0xff]
      %v214 = vld [vmem:[%s2 + $0xb8] sm:$0xff]
      %v215 = vld [vmem:[%s2 + $0xc0] sm:$0xff]
      %v216 = vld [vmem:[%s2 + $0xc8] sm:$0xff]
      %v217 = vld [vmem:[%s2 + $0xd0] sm:$0xff]
      %v218 = vld [vmem:[%s2 + $0xd8] sm:$0xff]
      %v219 = vld [vmem:[%s2 + $0xe0] sm:$0xff]
      %v220 = vld [vmem:[%s2 + $0xe8] sm:$0xff]
      %v221 = vld [vmem:[%s2 + $0xf0] sm:$0xff]
      %v222 = vld [vmem:[%s2 + $0xf8] sm:$0xff]
      %v223 = vld [vmem:[%s2 + $0x100] sm:$0xff]
      %v224 = vld [vmem:[%s2 + $0x108] sm:$0xff]
      %v225 = vld [vmem:[%s2 + $0x110] sm:$0xff]
      %v226 = vld [vmem:[%s2 + $0x118] sm:$0xff]
      %v227 = vld [vmem:[%s2 + $0x120] sm:$0xff]
      %v228 = vld [vmem:[%s2 + $0x128] sm:$0xff]
      %v229 = vld [vmem:[%s2 + $0x130] sm:$0xff]
      %v230 = vld [vmem:[%s2 + $0x138] sm:$0xff]
      %v231 = vld [vmem:[%s2 + $0x140] sm:$0xff]
      %v232 = vld [vmem:[%s2 + $0x148] sm:$0xff]
      %v233 = vld [vmem:[%s2 + $0x150] sm:$0xff]
      %v234 = vld [vmem:[%s2 + $0x158] sm:$0xff]
      %v235 = vld [vmem:[%s2 + $0x160] sm:$0xff]
      %v236 = vld [vmem:[%s2 + $0x168] sm:$0xff]
      %v237 = vld [vmem:[%s2 + $0x170] sm:$0xff]
      %v238 = vld [vmem:[%s2 + $0x178] sm:$0xff]
      %v239 = vld [vmem:[%s2 + $0x180] sm:$0xff]
      %v240 = vld [vmem:[%s2 + $0x188] sm:$0xff]
      %v241 = vld [vmem:[%s2 + $0x190] sm:$0xff]
      %v242 = vld [vmem:[%s2 + $0x198] sm:$0xff]
      %v243 = vld [vmem:[%s2 + $0x1a0] sm:$0xff]
      %v244 = vld [vmem:[%s2 + $0x1a8] sm:$0xff]
      %v245 = vld [vmem:[%s2 + $0x1b0] sm:$0xff]
      %v246 = vld [vmem:[%s2 + $0x1b8] sm:$0xff]
      %v247 = vld [vmem:[%s2 + $0x1c0] sm:$0xff]
      %v248 = vld [vmem:[%s2 + $0x1c8] sm:$0xff]
      %v249 = vld [vmem:[%s2 + $0x1d0] sm:$0xff]
      %v250 = vld [vmem:[%s2 + $0x1d8] sm:$0xff]
      %v251 = vld [vmem:[%s2 + $0x1e0] sm:$0xff]
      %v252 = vld [vmem:[%s2 + $0x1e8] sm:$0xff]
      %v253 = vld [vmem:[%s2 + $0x1f0] sm:$0xff]
      %v254 = vld [vmem:[%s2 + $0x1f8] sm:$0xff]
      %v255 = vld [vmem:[%s2 + $0x200] sm:$0xff]
      %v256 = vld [vmem:[%s2 + $0x208] sm:$0xff]
      %v257 = vld [vmem:[%s2 + $0x210] sm:$0xff]
      %v258 = vld [vmem:[%s2 + $0x218] sm:$0xff]
      %v259 = vld [vmem:[%s2 + $0x220] sm:$0xff]
      %v260 = vld [vmem:[%s2 + $0x228] sm:$0xff]
      %v261 = vld [vmem:[%s2 + $0x230] sm:$0xff]
      %v262 = vld [vmem:[%s2 + $0x238] sm:$0xff]
      %v263 = vld [vmem:[%s2 + $0x240] sm:$0xff]
      %v264 = vld [vmem:[%s2 + $0x248] sm:$0xff]
      %v265 = vld [vmem:[%s2 + $0x250] sm:$0xff]
      %v266 = vld [vmem:[%s2 + $0x258] sm:$0xff]
      %v267 = vld [vmem:[%s2 + $0x260] sm:$0xff]
      %v268 = vld [vmem:[%s2 + $0x268] sm:$0xff]
      %v269 = vld [vmem:[%s2 + $0x270] sm:$0xff]
      %v270 = vld [vmem:[%s2 + $0x278] sm:$0xff]
      %v271 = vld [vmem:[%s2 + $0x280] sm:$0xff]
      %v272 = vld [vmem:[%s2 + $0x288] sm:$0xff]
      %v273 = vld [vmem:[%s2 + $0x290] sm:$0xff]
      %v274 = vld [vmem:[%s2 + $0x298] sm:$0xff]
      %v275 = vld [vmem:[%s2 + $0x2a0] sm:$0xff]
      %v276 = vld [vmem:[%s2 + $0x2a8] sm:$0xff]
      %v277 = vld [vmem:[%s2 + $0x2b0] sm:$0xff]
      %v278 = vld [vmem:[%s2 + $0x2b8] sm:$0xff]
      %v279 = vld [vmem:[%s2 + $0x2c0] sm:$0xff]
      %v280 = vld [vmem:[%s2 + $0x2c8] sm:$0xff]
      %v281 = vld [vmem:[%s2 + $0x2d0] sm:$0xff]
      %v282 = vld [vmem:[%s2 + $0x2d8] sm:$0xff]
      %v283 = vld [vmem:[%s2 + $0x2e0] sm:$0xff]
      %v284 = vld [vmem:[%s2 + $0x2e8] sm:$0xff]
      %v285 = vld [vmem:[%s2 + $0x2f0] sm:$0xff]
      %v286 = vld [vmem:[%s2 + $0x2f8] sm:$0xff]
      %v287 = vld [vmem:[%s2 + $0x300] sm:$0xff]
      %v288 = vld [vmem:[%s2 + $0x308] sm:$0xff]
      %v289 = vld [vmem:[%s2 + $0x310] sm:$0xff]
      %v290 = vld [vmem:[%s2 + $0x318] sm:$0xff]
      %v291 = vld [vmem:[%s2 + $0x320] sm:$0xff]
      %v292 = vld [vmem:[%s2 + $0x328] sm:$0xff]
      %v293 = vld [vmem:[%s2 + $0x330] sm:$0xff]
      %v294 = vld [vmem:[%s2 + $0x338] sm:$0xff]
      %v295 = vld [vmem:[%s2 + $0x340] sm:$0xff]
      %v296 = vld [vmem:[%s2 + $0x348] sm:$0xff]
      %v297 = vld [vmem:[%s2 + $0x350] sm:$0xff]
      %v298 = vld [vmem:[%s2 + $0x358] sm:$0xff]
      %v299 = vld [vmem:[%s2 + $0x360] sm:$0xff]
      %v300 = vld [vmem:[%s2 + $0x368] sm:$0xff]
      %v301 = vld [vmem:[%s2 + $0x370] sm:$0xff]
      %v302 = vld [vmem:[%s2 + $0x378] sm:$0xff]
      %v303 = vld [vmem:[%s2 + $0x380] sm:$0xff]
      %v304 = vld [vmem:[%s2 + $0x388] sm:$0xff]
      %v305 = vld [vmem:[%s2 + $0x390] sm:$0xff]
      %v306 = vld [vmem:[%s2 + $0x398] sm:$0xff]
      %v307 = vld [vmem:[%s2 + $0x3a0] sm:$0xff]
      %v308 = vld [vmem:[%s2 + $0x3a8] sm:$0xff]
      %v309 = vld [vmem:[%s2 + $0x3b0] sm:$0xff]
      %v310 = vld [vmem:[%s2 + $0x3b8] sm:$0xff]
      %v311 = vld [vmem:[%s2 + $0x3c0] sm:$0xff]
      %v312 = vld [vmem:[%s2 + $0x3c8] sm:$0xff]
      %v313 = vld [vmem:[%s2 + $0x3d0] sm:$0xff]
      %v314 = vld [vmem:[%s2 + $0x3d8] sm:$0xff]
      %v315 = vld [vmem:[%s2 + $0x3e0] sm:$0xff]
      %v316 = vld [vmem:[%s2 + $0x3e8] sm:$0xff]
      %v317 = vld [vmem:[%s2 + $0x3f0] sm:$0xff]
      %v318 = vld [vmem:[%s2 + $0x3f8] sm:$0xff]
      %v319 = vld [vmem:[%s2 + $0x400] sm:$0xff]
      %v320 = vld [vmem:[%s2 + $0x408] sm:$0xff]
      %v321 = vld [vmem:[%s2 + $0x410] sm:$0xff]
      %v322 = vld [vmem:[%s2 + $0x418] sm:$0xff]
      %v323 = vld [vmem:[%s2 + $0x420] sm:$0xff]
      %v324 = vld [vmem:[%s2 + $0x428] sm:$0xff]
      %v325 = vld [vmem:[%s2 + $0x430] sm:$0xff]
      %v326 = vld [vmem:[%s2 + $0x438] sm:$0xff]
      %v327 = vld [vmem:[%s2 + $0x440] sm:$0xff]
      %v328 = vld [vmem:[%s2 + $0x448] sm:$0xff]
      %v329 = vld [vmem:[%s2 + $0x450] sm:$0xff]
      %v330 = vld [vmem:[%s2 + $0x458] sm:$0xff]
      %v331 = vld [vmem:[%s2 + $0x460] sm:$0xff]
      %v332 = vld [vmem:[%s2 + $0x468] sm:$0xff]
      %v333 = vld [vmem:[%s2 + $0x470] sm:$0xff]
      %v334 = vld [vmem:[%s2 + $0x478] sm:$0xff]
      %v335 = vld [vmem:[%s2 + $0x480] sm:$0xff]
      %v336 = vld [vmem:[%s2 + $0x488] sm:$0xff]
      %v337 = vld [vmem:[%s2 + $0x490] sm:$0xff]
      %v338 = vld [vmem:[%s2 + $0x498] sm:$0xff]
      %v339 = vld [vmem:[%s2 + $0x4a0] sm:$0xff]
      %v340 = vld [vmem:[%s2 + $0x4a8] sm:$0xff]
      %v341 = vld [vmem:[%s2 + $0x4b0] sm:$0xff]
      %v342 = vld [vmem:[%s2 + $0x4b8] sm:$0xff]
      %v343 = vld [vmem:[%s2 + $0x4c0] sm:$0xff]
      %v344 = vld [vmem:[%s2 + $0x4c8] sm:$0xff]
      %v345 = vld [vmem:[%s2 + $0x4d0] sm:$0xff]
      %v346 = vld [vmem:[%s2 + $0x4d8] sm:$0xff]
      %v347 = vld [vmem:[%s2 + $0x4e0] sm:$0xff]
      %v348 = vld [vmem:[%s2 + $0x4e8] sm:$0xff]
      %v349 = vld [vmem:[%s2 + $0x4f0] sm:$0xff]
      %v350 = vld [vmem:[%s2 + $0x4f8] sm:$0xff]
      %v351 = vld [vmem:[%s185] sm:$0xff]
      %v352 = vld [vmem:[%s185 + $0x8] sm:$0xff]
      %v353 = vld [vmem:[%s185 + $0x10] sm:$0xff]
      %v354 = vld [vmem:[%s185 + $0x18] sm:$0xff]
      %v355 = vld [vmem:[%s185 + $0x20] sm:$0xff]
      %v356 = vld [vmem:[%s185 + $0x28] sm:$0xff]
      %v357 = vld [vmem:[%s185 + $0x30] sm:$0xff]
      %v358 = vld [vmem:[%s185 + $0x38] sm:$0xff]
      %v359 = vld [vmem:[%s185 + $0x40] sm:$0xff]
      %v360 = vld [vmem:[%s185 + $0x48] sm:$0xff]
      %v361 = vld [vmem:[%s185 + $0x50] sm:$0xff]
      %v362 = vld [vmem:[%s185 + $0x58] sm:$0xff]
      %v363 = vld [vmem:[%s185 + $0x60] sm:$0xff]
      %v364 = vld [vmem:[%s185 + $0x68] sm:$0xff]
      %v365 = vld [vmem:[%s185 + $0x70] sm:$0xff]
      %v366 = vld [vmem:[%s185 + $0x78] sm:$0xff]
      %v367 = vld [vmem:[%s185 + $0x80] sm:$0xff]
      %v368 = vld [vmem:[%s185 + $0x88] sm:$0xff]
      %v369 = vld [vmem:[%s185 + $0x90] sm:$0xff]
      %v370 = vld [vmem:[%s185 + $0x98] sm:$0xff]
      %v371 = vld [vmem:[%s185 + $0xa0] sm:$0xff]
      %v372 = vld [vmem:[%s185 + $0xa8] sm:$0xff]
      %v373 = vld [vmem:[%s185 + $0xb0] sm:$0xff]
      %v374 = vld [vmem:[%s185 + $0xb8] sm:$0xff]
      %v375 = vld [vmem:[%s185 + $0xc0] sm:$0xff]
      %v376 = vld [vmem:[%s185 + $0xc8] sm:$0xff]
      %v377 = vld [vmem:[%s185 + $0xd0] sm:$0xff]
      %v378 = vld [vmem:[%s185 + $0xd8] sm:$0xff]
      %v379 = vld [vmem:[%s185 + $0xe0] sm:$0xff]
      %v380 = vld [vmem:[%s185 + $0xe8] sm:$0xff]
      %v381 = vld [vmem:[%s185 + $0xf0] sm:$0xff]
      %v382 = vld [vmem:[%s185 + $0xf8] sm:$0xff]
      %vm383 = vcmask 64512
      %384 = vst.msk [vmem:[%s190] sm:$0xff] %vm383, %v351
      %385 = vst.msk [vmem:[%s190 + $0x8] sm:$0xff] %vm383, %v352
      %386 = vst.msk [vmem:[%s190 + $0x10] sm:$0xff] %vm383, %v353
      %387 = vst.msk [vmem:[%s190 + $0x18] sm:$0xff] %vm383, %v354
      %388 = vst.msk [vmem:[%s190 + $0x20] sm:$0xff] %vm383, %v355
      %389 = vst.msk [vmem:[%s190 + $0x28] sm:$0xff] %vm383, %v356
      %390 = vst.msk [vmem:[%s190 + $0x30] sm:$0xff] %vm383, %v357
      %391 = vst.msk [vmem:[%s190 + $0x38] sm:$0xff] %vm383, %v358
      %392 = vst.msk [vmem:[%s190 + $0x40] sm:$0xff] %vm383, %v359
      %393 = vst.msk [vmem:[%s190 + $0x48] sm:$0xff] %vm383, %v360
      %394 = vst.msk [vmem:[%s190 + $0x50] sm:$0xff] %vm383, %v361
      %395 = vst.msk [vmem:[%s190 + $0x58] sm:$0xff] %vm383, %v362
      %396 = vst.msk [vmem:[%s190 + $0x60] sm:$0xff] %vm383, %v363
      %397 = vst.msk [vmem:[%s190 + $0x68] sm:$0xff] %vm383, %v364
      %398 = vst.msk [vmem:[%s190 + $0x70] sm:$0xff] %vm383, %v365
      %399 = vst.msk [vmem:[%s190 + $0x78] sm:$0xff] %vm383, %v366
      %400 = vst.msk [vmem:[%s190 + $0x80] sm:$0xff] %vm383, %v367
      %401 = vst.msk [vmem:[%s190 + $0x88] sm:$0xff] %vm383, %v368
      %402 = vst.msk [vmem:[%s190 + $0x90] sm:$0xff] %vm383, %v369
      %403 = vst.msk [vmem:[%s190 + $0x98] sm:$0xff] %vm383, %v370
      %404 = vst.msk [vmem:[%s190 + $0xa0] sm:$0xff] %vm383, %v371
      %405 = vst.msk [vmem:[%s190 + $0xa8] sm:$0xff] %vm383, %v372
      %406 = vst.msk [vmem:[%s190 + $0xb0] sm:$0xff] %vm383, %v373
      %407 = vst.msk [vmem:[%s190 + $0xb8] sm:$0xff] %vm383, %v374
      %408 = vst.msk [vmem:[%s190 + $0xc0] sm:$0xff] %vm383, %v375
      %409 = vst.msk [vmem:[%s190 + $0xc8] sm:$0xff] %vm383, %v376
      %410 = vst.msk [vmem:[%s190 + $0xd0] sm:$0xff] %vm383, %v377
      %411 = vst.msk [vmem:[%s190 + $0xd8] sm:$0xff] %vm383, %v378
      %412 = vst.msk [vmem:[%s190 + $0xe0] sm:$0xff] %vm383, %v379
      %413 = vst.msk [vmem:[%s190 + $0xe8] sm:$0xff] %vm383, %v380
      %414 = vst.msk [vmem:[%s190 + $0xf0] sm:$0xff] %vm383, %v381
      %415 = vst.msk [vmem:[%s190 + $0xf8] sm:$0xff] %vm383, %v382
      %v416 = vld [vmem:[%s180] sm:$0xff]
      %v417 = vld [vmem:[%s180 + $0x8] sm:$0xff]
      %v418 = vld [vmem:[%s180 + $0x10] sm:$0xff]
      %v419 = vld [vmem:[%s180 + $0x18] sm:$0xff]
      %v420 = vld [vmem:[%s180 + $0x20] sm:$0xff]
      %v421 = vld [vmem:[%s180 + $0x28] sm:$0xff]
      %v422 = vld [vmem:[%s180 + $0x30] sm:$0xff]
      %v423 = vld [vmem:[%s180 + $0x38] sm:$0xff]
      %v424 = vld [vmem:[%s180 + $0x40] sm:$0xff]
      %v425 = vld [vmem:[%s180 + $0x48] sm:$0xff]
      %v426 = vld [vmem:[%s180 + $0x50] sm:$0xff]
      %v427 = vld [vmem:[%s180 + $0x58] sm:$0xff]
      %v428 = vld [vmem:[%s180 + $0x60] sm:$0xff]
      %v429 = vld [vmem:[%s180 + $0x68] sm:$0xff]
      %v430 = vld [vmem:[%s180 + $0x70] sm:$0xff]
      %v431 = vld [vmem:[%s180 + $0x78] sm:$0xff]
      %v432 = vld [vmem:[%s180 + $0x80] sm:$0xff]
      %v433 = vld [vmem:[%s180 + $0x88] sm:$0xff]
      %v434 = vld [vmem:[%s180 + $0x90] sm:$0xff]
      %v435 = vld [vmem:[%s180 + $0x98] sm:$0xff]
      %v436 = vld [vmem:[%s180 + $0xa0] sm:$0xff]
      %v437 = vld [vmem:[%s180 + $0xa8] sm:$0xff]
      %v438 = vld [vmem:[%s180 + $0xb0] sm:$0xff]
      %v439 = vld [vmem:[%s180 + $0xb8] sm:$0xff]
      %v440 = vld [vmem:[%s180 + $0xc0] sm:$0xff]
      %v441 = vld [vmem:[%s180 + $0xc8] sm:$0xff]
      %v442 = vld [vmem:[%s180 + $0xd0] sm:$0xff]
      %v443 = vld [vmem:[%s180 + $0xd8] sm:$0xff]
      %v444 = vld [vmem:[%s180 + $0xe0] sm:$0xff]
      %v445 = vld [vmem:[%s180 + $0xe8] sm:$0xff]
      %v446 = vld [vmem:[%s180 + $0xf0] sm:$0xff]
      %v447 = vld [vmem:[%s180 + $0xf8] sm:$0xff]
      %v448 = vld [vmem:[%s180 + $0x100] sm:$0xff]
      %v449 = vld [vmem:[%s180 + $0x108] sm:$0xff]
      %v450 = vld [vmem:[%s180 + $0x110] sm:$0xff]
      %v451 = vld [vmem:[%s180 + $0x118] sm:$0xff]
      %v452 = vld [vmem:[%s180 + $0x120] sm:$0xff]
      %v453 = vld [vmem:[%s180 + $0x128] sm:$0xff]
      %v454 = vld [vmem:[%s180 + $0x130] sm:$0xff]
      %v455 = vld [vmem:[%s180 + $0x138] sm:$0xff]
      %v456 = vld [vmem:[%s180 + $0x140] sm:$0xff]
      %v457 = vld [vmem:[%s180 + $0x148] sm:$0xff]
      %v458 = vld [vmem:[%s180 + $0x150] sm:$0xff]
      %v459 = vld [vmem:[%s180 + $0x158] sm:$0xff]
      %v460 = vld [vmem:[%s180 + $0x160] sm:$0xff]
      %v461 = vld [vmem:[%s180 + $0x168] sm:$0xff]
      %v462 = vld [vmem:[%s180 + $0x170] sm:$0xff]
      %v463 = vld [vmem:[%s180 + $0x178] sm:$0xff]
      %v464 = vld [vmem:[%s180 + $0x180] sm:$0xff]
      %v465 = vld [vmem:[%s180 + $0x188] sm:$0xff]
      %v466 = vld [vmem:[%s180 + $0x190] sm:$0xff]
      %v467 = vld [vmem:[%s180 + $0x198] sm:$0xff]
      %v468 = vld [vmem:[%s180 + $0x1a0] sm:$0xff]
      %v469 = vld [vmem:[%s180 + $0x1a8] sm:$0xff]
      %v470 = vld [vmem:[%s180 + $0x1b0] sm:$0xff]
      %v471 = vld [vmem:[%s180 + $0x1b8] sm:$0xff]
      %v472 = vld [vmem:[%s180 + $0x1c0] sm:$0xff]
      %v473 = vld [vmem:[%s180 + $0x1c8] sm:$0xff]
      %v474 = vld [vmem:[%s180 + $0x1d0] sm:$0xff]
      %v475 = vld [vmem:[%s180 + $0x1d8] sm:$0xff]
      %v476 = vld [vmem:[%s180 + $0x1e0] sm:$0xff]
      %v477 = vld [vmem:[%s180 + $0x1e8] sm:$0xff]
      %v478 = vld [vmem:[%s180 + $0x1f0] sm:$0xff]
      %v479 = vld [vmem:[%s180 + $0x1f8] sm:$0xff]
      %v480 = vld [vmem:[%s180 + $0x200] sm:$0xff]
      %v481 = vld [vmem:[%s180 + $0x208] sm:$0xff]
      %v482 = vld [vmem:[%s180 + $0x210] sm:$0xff]
      %v483 = vld [vmem:[%s180 + $0x218] sm:$0xff]
      %v484 = vld [vmem:[%s180 + $0x220] sm:$0xff]
      %v485 = vld [vmem:[%s180 + $0x228] sm:$0xff]
      %v486 = vld [vmem:[%s180 + $0x230] sm:$0xff]
      %v487 = vld [vmem:[%s180 + $0x238] sm:$0xff]
      %vm488 = vcmask 523264
      %v490 = vsel %vm488, %v195, 0
      %v493 = vsel %vm488, %v200, 0
      %v496 = vsel %vm488, %v205, 0
      %v499 = vsel %vm488, %v210, 0
      %v502 = vsel %vm488, %v215, 0
      %v505 = vsel %vm488, %v220, 0
      %v508 = vsel %vm488, %v225, 0
      %v511 = vsel %vm488, %v230, 0
      %v514 = vsel %vm488, %v235, 0
      %v517 = vsel %vm488, %v240, 0
      %v520 = vsel %vm488, %v245, 0
      %v523 = vsel %vm488, %v250, 0
      %v526 = vsel %vm488, %v255, 0
      %v529 = vsel %vm488, %v260, 0
      %v532 = vsel %vm488, %v265, 0
      %v535 = vsel %vm488, %v270, 0
      %v538 = vsel %vm488, %v275, 0
      %v541 = vsel %vm488, %v280, 0
      %v544 = vsel %vm488, %v285, 0
      %v547 = vsel %vm488, %v290, 0
      %v550 = vsel %vm488, %v295, 0
      %v553 = vsel %vm488, %v300, 0
      %v556 = vsel %vm488, %v305, 0
      %v559 = vsel %vm488, %v310, 0
      %v562 = vsel %vm488, %v315, 0
      %v565 = vsel %vm488, %v320, 0
      %v568 = vsel %vm488, %v325, 0
      %v571 = vsel %vm488, %v330, 0
      %v574 = vsel %vm488, %v335, 0
      %v577 = vsel %vm488, %v340, 0
      %v580 = vsel %vm488, %v345, 0
      %v583 = vsel %vm488, %v350, 0
      %585 = vmatprep.subr.mxu0 0.0
      %586 = vmatpush1.msra.mxu0 %v416
      %587 = vmatprep.subr.mxu0 0.0
      %588 = vmatpush1.msra.mxu0 %v417
      %589 = vmatprep.subr.mxu0 0.0
      %590 = vmatpush1.msra.mxu0 %v418
      %591 = vmatprep.subr.mxu0 0.0
      %592 = vmatpush1.msra.mxu0 %v419
      %593 = vmatprep.subr.mxu0 0.0
      %594 = vmatpush1.msra.mxu0 %v420
      %595 = vmatprep.subr.mxu0 0.0
      %596 = vmatpush1.msra.mxu0 %v421
      %597 = vmatprep.subr.mxu0 0.0
      %598 = vmatpush1.msra.mxu0 %v422
      %599 = vmatprep.subr.mxu0 0.0
      %600 = vmatpush1.msra.mxu0 %v423
      %601 = vmatprep.subr.mxu0 0.0
      %602 = vmatpush1.msra.mxu0 %v424
      %603 = vmatprep.subr.mxu0 0.0
      %604 = vmatpush1.msra.mxu0 %v425
      %605 = vmatprep.subr.mxu0 0.0
      %606 = vmatpush1.msra.mxu0 %v426
      %607 = vmatprep.subr.mxu0 0.0
      %608 = vmatpush1.msra.mxu0 %v427
      %609 = vmatprep.subr.mxu0 0.0
      %610 = vmatpush1.msra.mxu0 %v428
      %611 = vmatprep.subr.mxu0 0.0
      %612 = vmatpush1.msra.mxu0 %v429
      %613 = vmatprep.subr.mxu0 0.0
      %614 = vmatpush1.msra.mxu0 %v430
      %615 = vmatprep.subr.mxu0 0.0
      %616 = vmatpush1.msra.mxu0 %v431
      %617 = vmatprep.subr.mxu0 0.0
      %618 = vmatpush1.msra.mxu0 %v432
      %619 = vmatprep.subr.mxu0 0.0
      %620 = vmatpush1.msra.mxu0 %v433
      %621 = vmatprep.subr.mxu0 0.0
      %622 = vmatpush1.msra.mxu0 %v434
      %623 = vmatprep.subr.mxu0 0.0
      %624 = vmatpush1.msra.mxu0 %v435
      %625 = vmatprep.subr.mxu0 0.0
      %626 = vmatpush1.msra.mxu0 %v436
      %627 = vmatprep.subr.mxu0 0.0
      %628 = vmatpush1.msra.mxu0 %v437
      %629 = vmatprep.subr.mxu0 0.0
      %630 = vmatpush1.msra.mxu0 %v438
      %631 = vmatprep.subr.mxu0 0.0
      %632 = vmatpush1.msra.mxu0 %v439
      %633 = vmatprep.subr.mxu0 0.0
      %634 = vmatpush1.msra.mxu0 %v440
      %635 = vmatprep.subr.mxu0 0.0
      %636 = vmatpush1.msra.mxu0 %v441
      %637 = vmatprep.subr.mxu0 0.0
      %638 = vmatpush1.msra.mxu0 %v442
      %639 = vmatprep.subr.mxu0 0.0
      %640 = vmatpush1.msra.mxu0 %v443
      %641 = vmatprep.subr.mxu0 0.0
      %642 = vmatpush1.msra.mxu0 %v444
      %643 = vmatprep.subr.mxu0 0.0
      %644 = vmatpush1.msra.mxu0 %v445
      %645 = vmatprep.subr.mxu0 0.0
      %646 = vmatpush1.msra.mxu0 %v446
      %647 = vmatprep.subr.mxu0 0.0
      %648 = vmatpush1.msra.mxu0 %v447
      %649 = vmatprep.mubr.f32.mxu0 %v192
      %650 = vmatmul.mubr.f32.gmra.mrb[0].mxu0 %v191
      %v651 = vpop.f32.mrb[0].mxu0
      %v652 = vadd.f32 0.0, %v651
      %v653 = vpop.f32.mrb[0].mxu0
      %654 = vmatprep.mubr.f32.mxu0 %v197
      %655 = vmatmul.mubr.f32.gmra.mrb[0].mxu0 %v196
      %v656 = vpop.f32.mrb[0].mxu0
      %v657 = vadd.f32 0.0, %v656
      %v658 = vpop.f32.mrb[0].mxu0
      %659 = vmatprep.mubr.f32.mxu0 %v202
      %660 = vmatmul.mubr.f32.gmra.mrb[0].mxu0 %v201
      %v661 = vpop.f32.mrb[0].mxu0
      %v662 = vadd.f32 0.0, %v661
      %v663 = vpop.f32.mrb[0].mxu0
      %664 = vmatprep.mubr.f32.mxu0 %v207
      %665 = vmatmul.mubr.f32.gmra.mrb[0].mxu0 %v206
      %v666 = vpop.f32.mrb[0].mxu0
      %v667 = vadd.f32 0.0, %v666
      %v668 = vpop.f32.mrb[0].mxu0
      %669 = vmatprep.mubr.f32.mxu0 %v212
      %670 = vmatmul.mubr.f32.gmra.mrb[0].mxu0 %v211
      %v671 = vpop.f32.mrb[0].mxu0
      %v672 = vadd.f32 0.0, %v671
      %v673 = vpop.f32.mrb[0].mxu0
      %674 = vmatprep.mubr.f32.mxu0 %v217
      %675 = vmatmul.mubr.f32.gmra.mrb[0].mxu0 %v216
      %v676 = vpop.f32.mrb[0].mxu0
      %v677 = vadd.f32 0.0, %v676
      %v678 = vpop.f32.mrb[0].mxu0
      %679 = vmatprep.mubr.f32.mxu0 %v222
      %680 = vmatmul.mubr.f32.gmra.mrb[0].mxu0 %v221
      %v681 = vpop.f32.mrb[0].mxu0
      %v682 = vadd.f32 0.0, %v681
      %v683 = vpop.f32.mrb[0].mxu0
      %684 = vmatprep.mubr.f32.mxu0 %v227
      %685 = vmatmul.mubr.f32.gmra.mrb[0].mxu0 %v226
      %v686 = vpop.f32.mrb[0].mxu0
      %v687 = vadd.f32 0.0, %v686
      %v688 = vpop.f32.mrb[0].mxu0
      %689 = vmatprep.mubr.f32.mxu0 %v232
      %690 = vmatmul.mubr.f32.gmra.mrb[0].mxu0 %v231
      %v691 = vpop.f32.mrb[0].mxu0
      %v692 = vadd.f32 0.0, %v691
      %v693 = vpop.f32.mrb[0].mxu0
      %694 = vmatprep.mubr.f32.mxu0 %v237
      %695 = vmatmul.mubr.f32.gmra.mrb[0].mxu0 %v236
      %v696 = vpop.f32.mrb[0].mxu0
      %v697 = vadd.f32 0.0, %v696
      %v698 = vpop.f32.mrb[0].mxu0
      %699 = vmatprep.mubr.f32.mxu0 %v242
      %700 = vmatmul.mubr.f32.gmra.mrb[0].mxu0 %v241
      %v701 = vpop.f32.mrb[0].mxu0
      %v702 = vadd.f32 0.0, %v701
      %v703 = vpop.f32.mrb[0].mxu0
      %704 = vmatprep.mubr.f32.mxu0 %v247
      %705 = vmatmul.mubr.f32.gmra.mrb[0].mxu0 %v246
      %v706 = vpop.f32.mrb[0].mxu0
      %v707 = vadd.f32 0.0, %v706
      %v708 = vpop.f32.mrb[0].mxu0
      %709 = vmatprep.mubr.f32.mxu0 %v252
      %710 = vmatmul.mubr.f32.gmra.mrb[0].mxu0 %v251
      %v711 = vpop.f32.mrb[0].mxu0
      %v712 = vadd.f32 0.0, %v711
      %v713 = vpop.f32.mrb[0].mxu0
      %714 = vmatprep.mubr.f32.mxu0 %v257
      %715 = vmatmul.mubr.f32.gmra.mrb[0].mxu0 %v256
      %v716 = vpop.f32.mrb[0].mxu0
      %v717 = vadd.f32 0.0, %v716
      %v718 = vpop.f32.mrb[0].mxu0
      %719 = vmatprep.mubr.f32.mxu0 %v262
      %720 = vmatmul.mubr.f32.gmra.mrb[0].mxu0 %v261
      %v721 = vpop.f32.mrb[0].mxu0
      %v722 = vadd.f32 0.0, %v721
      %v723 = vpop.f32.mrb[0].mxu0
      %724 = vmatprep.mubr.f32.mxu0 %v267
      %725 = vmatmul.mubr.f32.gmra.mrb[0].mxu0 %v266
      %v726 = vpop.f32.mrb[0].mxu0
      %v727 = vadd.f32 0.0, %v726
      %v728 = vpop.f32.mrb[0].mxu0
      %729 = vmatprep.mubr.f32.mxu0 %v272
      %730 = vmatmul.mubr.f32.gmra.mrb[0].mxu0 %v271
      %v731 = vpop.f32.mrb[0].mxu0
      %v732 = vadd.f32 0.0, %v731
      %v733 = vpop.f32.mrb[0].mxu0
      %734 = vmatprep.mubr.f32.mxu0 %v277
      %735 = vmatmul.mubr.f32.gmra.mrb[0].mxu0 %v276
      %v736 = vpop.f32.mrb[0].mxu0
      %v737 = vadd.f32 0.0, %v736
      %v738 = vpop.f32.mrb[0].mxu0
      %739 = vmatprep.mubr.f32.mxu0 %v282
      %740 = vmatmul.mubr.f32.gmra.mrb[0].mxu0 %v281
      %v741 = vpop.f32.mrb[0].mxu0
      %v742 = vadd.f32 0.0, %v741
      %v743 = vpop.f32.mrb[0].mxu0
      %744 = vmatprep.mubr.f32.mxu0 %v287
      %745 = vmatmul.mubr.f32.gmra.mrb[0].mxu0 %v286
      %v746 = vpop.f32.mrb[0].mxu0
      %v747 = vadd.f32 0.0, %v746
      %v748 = vpop.f32.mrb[0].mxu0
      %749 = vmatprep.mubr.f32.mxu0 %v292
      %750 = vmatmul.mubr.f32.gmra.mrb[0].mxu0 %v291
      %v751 = vpop.f32.mrb[0].mxu0
      %v752 = vadd.f32 0.0, %v751
      %v753 = vpop.f32.mrb[0].mxu0
      %754 = vmatprep.mubr.f32.mxu0 %v297
      %755 = vmatmul.mubr.f32.gmra.mrb[0].mxu0 %v296
      %v756 = vpop.f32.mrb[0].mxu0
      %v757 = vadd.f32 0.0, %v756
      %v758 = vpop.f32.mrb[0].mxu0
      %759 = vmatprep.mubr.f32.mxu0 %v302
      %760 = vmatmul.mubr.f32.gmra.mrb[0].mxu0 %v301
      %v761 = vpop.f32.mrb[0].mxu0
      %v762 = vadd.f32 0.0, %v761
      %v763 = vpop.f32.mrb[0].mxu0
      %764 = vmatprep.mubr.f32.mxu0 %v307
      %765 = vmatmul.mubr.f32.gmra.mrb[0].mxu0 %v306
      %v766 = vpop.f32.mrb[0].mxu0
      %v767 = vadd.f32 0.0, %v766
      %v768 = vpop.f32.mrb[0].mxu0
      %769 = vmatprep.mubr.f32.mxu0 %v312
      %770 = vmatmul.mubr.f32.gmra.mrb[0].mxu0 %v311
      %v771 = vpop.f32.mrb[0].mxu0
      %v772 = vadd.f32 0.0, %v771
      %v773 = vpop.f32.mrb[0].mxu0
      %774 = vmatprep.mubr.f32.mxu0 %v317
      %775 = vmatmul.mubr.f32.gmra.mrb[0].mxu0 %v316
      %v776 = vpop.f32.mrb[0].mxu0
      %v777 = vadd.f32 0.0, %v776
      %v778 = vpop.f32.mrb[0].mxu0
      %779 = vmatprep.mubr.f32.mxu0 %v322
      %780 = vmatmul.mubr.f32.gmra.mrb[0].mxu0 %v321
      %v781 = vpop.f32.mrb[0].mxu0
      %v782 = vadd.f32 0.0, %v781
      %v783 = vpop.f32.mrb[0].mxu0
      %784 = vmatprep.mubr.f32.mxu0 %v327
      %785 = vmatmul.mubr.f32.gmra.mrb[0].mxu0 %v326
      %v786 = vpop.f32.mrb[0].mxu0
      %v787 = vadd.f32 0.0, %v786
      %v788 = vpop.f32.mrb[0].mxu0
      %789 = vmatprep.mubr.f32.mxu0 %v332
      %790 = vmatmul.mubr.f32.gmra.mrb[0].mxu0 %v331
      %v791 = vpop.f32.mrb[0].mxu0
      %v792 = vadd.f32 0.0, %v791
      %v793 = vpop.f32.mrb[0].mxu0
      %794 = vmatprep.mubr.f32.mxu0 %v337
      %795 = vmatmul.mubr.f32.gmra.mrb[0].mxu0 %v336
      %v796 = vpop.f32.mrb[0].mxu0
      %v797 = vadd.f32 0.0, %v796
      %v798 = vpop.f32.mrb[0].mxu0
      %799 = vmatprep.mubr.f32.mxu0 %v342
      %800 = vmatmul.mubr.f32.gmra.mrb[0].mxu0 %v341
      %v801 = vpop.f32.mrb[0].mxu0
      %v802 = vadd.f32 0.0, %v801
      %v803 = vpop.f32.mrb[0].mxu0
      %804 = vmatprep.mubr.f32.mxu0 %v347
      %805 = vmatmul.mubr.f32.gmra.mrb[0].mxu0 %v346
      %v806 = vpop.f32.mrb[0].mxu0
      %v807 = vadd.f32 0.0, %v806
      %v808 = vpop.f32.mrb[0].mxu0
      %809 = vdwg.mxu0
      %810 = vmatprep.subr.mxu0 0.0
      %811 = vmatpush1.msra.mxu0 %v448
      %812 = vmatprep.subr.mxu0 0.0
      %813 = vmatpush1.msra.mxu0 %v449
      %814 = vmatprep.subr.mxu0 0.0
      %815 = vmatpush1.msra.mxu0 %v450
      %816 = vmatprep.subr.mxu0 0.0
      %817 = vmatpush1.msra.mxu0 %v451
      %818 = vmatprep.subr.mxu0 0.0
      %819 = vmatpush1.msra.mxu0 %v452
      %820 = vmatprep.subr.mxu0 0.0
      %821 = vmatpush1.msra.mxu0 %v453
      %822 = vmatprep.subr.mxu0 0.0
      %823 = vmatpush1.msra.mxu0 %v454
      %824 = vmatprep.subr.mxu0 0.0
      %825 = vmatpush1.msra.mxu0 %v455
      %826 = vmatprep.subr.mxu0 0.0
      %827 = vmatpush1.msra.mxu0 %v456
      %828 = vmatprep.subr.mxu0 0.0
      %829 = vmatpush1.msra.mxu0 %v457
      %830 = vmatprep.subr.mxu0 0.0
      %831 = vmatpush1.msra.mxu0 %v458
      %832 = vmatprep.subr.mxu0 0.0
      %833 = vmatpush1.msra.mxu0 %v459
      %834 = vmatprep.subr.mxu0 0.0
      %835 = vmatpush1.msra.mxu0 %v460
      %836 = vmatprep.subr.mxu0 0.0
      %837 = vmatpush1.msra.mxu0 %v461
      %838 = vmatprep.subr.mxu0 0.0
      %839 = vmatpush1.msra.mxu0 %v462
      %840 = vmatprep.subr.mxu0 0.0
      %841 = vmatpush1.msra.mxu0 %v463
      %842 = vmatprep.subr.mxu0 0.0
      %843 = vmatpush1.msra.mxu0 %v464
      %844 = vmatprep.subr.mxu0 0.0
      %845 = vmatpush1.msra.mxu0 %v465
      %846 = vmatprep.subr.mxu0 0.0
      %847 = vmatpush1.msra.mxu0 %v466
      %848 = vmatprep.subr.mxu0 0.0
      %849 = vmatpush1.msra.mxu0 %v467
      %850 = vmatprep.subr.mxu0 0.0
      %851 = vmatpush1.msra.mxu0 %v468
      %852 = vmatprep.subr.mxu0 0.0
      %853 = vmatpush1.msra.mxu0 %v469
      %854 = vmatprep.subr.mxu0 0.0
      %855 = vmatpush1.msra.mxu0 %v470
      %856 = vmatprep.subr.mxu0 0.0
      %857 = vmatpush1.msra.mxu0 %v471
      %858 = vmatprep.subr.mxu0 0.0
      %859 = vmatpush1.msra.mxu0 %v472
      %860 = vmatprep.subr.mxu0 0.0
      %861 = vmatpush1.msra.mxu0 %v473
      %862 = vmatprep.subr.mxu0 0.0
      %863 = vmatpush1.msra.mxu0 %v474
      %864 = vmatprep.subr.mxu0 0.0
      %865 = vmatpush1.msra.mxu0 %v475
      %866 = vmatprep.subr.mxu0 0.0
      %867 = vmatpush1.msra.mxu0 %v476
      %868 = vmatprep.subr.mxu0 0.0
      %869 = vmatpush1.msra.mxu0 %v477
      %870 = vmatprep.subr.mxu0 0.0
      %871 = vmatpush1.msra.mxu0 %v478
      %872 = vmatprep.subr.mxu0 0.0
      %873 = vmatpush1.msra.mxu0 %v479
      %874 = vmatprep.mubr.f32.mxu0 %v194
      %875 = vmatmul.mubr.f32.gmra.mrb[0].mxu0 %v193
      %v876 = vpop.f32.mrb[0].mxu0
      %v877 = vadd.f32 %v652, %v876
      %v878 = vpop.f32.mrb[0].mxu0
      %879 = vmatprep.mubr.f32.mxu0 %v199
      %880 = vmatmul.mubr.f32.gmra.mrb[0].mxu0 %v198
      %v881 = vpop.f32.mrb[0].mxu0
      %v882 = vadd.f32 %v657, %v881
      %v883 = vpop.f32.mrb[0].mxu0
      %884 = vmatprep.mubr.f32.mxu0 %v204
      %885 = vmatmul.mubr.f32.gmra.mrb[0].mxu0 %v203
      %v886 = vpop.f32.mrb[0].mxu0
      %v887 = vadd.f32 %v662, %v886
      %v888 = vpop.f32.mrb[0].mxu0
      %889 = vmatprep.mubr.f32.mxu0 %v209
      %890 = vmatmul.mubr.f32.gmra.mrb[0].mxu0 %v208
      %v891 = vpop.f32.mrb[0].mxu0
      %v892 = vadd.f32 %v667, %v891
      %v893 = vpop.f32.mrb[0].mxu0
      %894 = vmatprep.mubr.f32.mxu0 %v214
      %895 = vmatmul.mubr.f32.gmra.mrb[0].mxu0 %v213
      %v896 = vpop.f32.mrb[0].mxu0
      %v897 = vadd.f32 %v672, %v896
      %v898 = vpop.f32.mrb[0].mxu0
      %899 = vmatprep.mubr.f32.mxu0 %v219
      %900 = vmatmul.mubr.f32.gmra.mrb[0].mxu0 %v218
      %v901 = vpop.f32.mrb[0].mxu0
      %v902 = vadd.f32 %v677, %v901
      %v903 = vpop.f32.mrb[0].mxu0
      %904 = vmatprep.mubr.f32.mxu0 %v224
      %905 = vmatmul.mubr.f32.gmra.mrb[0].mxu0 %v223
      %v906 = vpop.f32.mrb[0].mxu0
      %v907 = vadd.f32 %v682, %v906
      %v908 = vpop.f32.mrb[0].mxu0
      %909 = vmatprep.mubr.f32.mxu0 %v229
      %910 = vmatmul.mubr.f32.gmra.mrb[0].mxu0 %v228
      %v911 = vpop.f32.mrb[0].mxu0
      %v912 = vadd.f32 %v687, %v911
      %v913 = vpop.f32.mrb[0].mxu0
      %914 = vmatprep.mubr.f32.mxu0 %v234
      %915 = vmatmul.mubr.f32.gmra.mrb[0].mxu0 %v233
      %v916 = vpop.f32.mrb[0].mxu0
      %v917 = vadd.f32 %v692, %v916
      %v918 = vpop.f32.mrb[0].mxu0
      %919 = vmatprep.mubr.f32.mxu0 %v239
      %920 = vmatmul.mubr.f32.gmra.mrb[0].mxu0 %v238
      %v921 = vpop.f32.mrb[0].mxu0
      %v922 = vadd.f32 %v697, %v921
      %v923 = vpop.f32.mrb[0].mxu0
      %924 = vmatprep.mubr.f32.mxu0 %v244
      %925 = vmatmul.mubr.f32.gmra.mrb[0].mxu0 %v243
      %v926 = vpop.f32.mrb[0].mxu0
      %v927 = vadd.f32 %v702, %v926
      %v928 = vpop.f32.mrb[0].mxu0
      %929 = vmatprep.mubr.f32.mxu0 %v249
      %930 = vmatmul.mubr.f32.gmra.mrb[0].mxu0 %v248
      %v931 = vpop.f32.mrb[0].mxu0
      %v932 = vadd.f32 %v707, %v931
      %v933 = vpop.f32.mrb[0].mxu0
      %934 = vmatprep.mubr.f32.mxu0 %v254
      %935 = vmatmul.mubr.f32.gmra.mrb[0].mxu0 %v253
      %v936 = vpop.f32.mrb[0].mxu0
      %v937 = vadd.f32 %v712, %v936
      %v938 = vpop.f32.mrb[0].mxu0
      %939 = vmatprep.mubr.f32.mxu0 %v259
      %940 = vmatmul.mubr.f32.gmra.mrb[0].mxu0 %v258
      %v941 = vpop.f32.mrb[0].mxu0
      %v942 = vadd.f32 %v717, %v941
      %v943 = vpop.f32.mrb[0].mxu0
      %944 = vmatprep.mubr.f32.mxu0 %v264
      %945 = vmatmul.mubr.f32.gmra.mrb[0].mxu0 %v263
      %v946 = vpop.f32.mrb[0].mxu0
      %v947 = vadd.f32 %v722, %v946
      %v948 = vpop.f32.mrb[0].mxu0
      %949 = vmatprep.mubr.f32.mxu0 %v269
      %950 = vmatmul.mubr.f32.gmra.mrb[0].mxu0 %v268
      %v951 = vpop.f32.mrb[0].mxu0
      %v952 = vadd.f32 %v727, %v951
      %v953 = vpop.f32.mrb[0].mxu0
      %954 = vmatprep.mubr.f32.mxu0 %v274
      %955 = vmatmul.mubr.f32.gmra.mrb[0].mxu0 %v273
      %v956 = vpop.f32.mrb[0].mxu0
      %v957 = vadd.f32 %v732, %v956
      %v958 = vpop.f32.mrb[0].mxu0
      %959 = vmatprep.mubr.f32.mxu0 %v279
      %960 = vmatmul.mubr.f32.gmra.mrb[0].mxu0 %v278
      %v961 = vpop.f32.mrb[0].mxu0
      %v962 = vadd.f32 %v737, %v961
      %v963 = vpop.f32.mrb[0].mxu0
      %964 = vmatprep.mubr.f32.mxu0 %v284
      %965 = vmatmul.mubr.f32.gmra.mrb[0].mxu0 %v283
      %v966 = vpop.f32.mrb[0].mxu0
      %v967 = vadd.f32 %v742, %v966
      %v968 = vpop.f32.mrb[0].mxu0
      %969 = vmatprep.mubr.f32.mxu0 %v289
      %970 = vmatmul.mubr.f32.gmra.mrb[0].mxu0 %v288
      %v971 = vpop.f32.mrb[0].mxu0
      %v972 = vadd.f32 %v747, %v971
      %v973 = vpop.f32.mrb[0].mxu0
      %974 = vmatprep.mubr.f32.mxu0 %v294
      %975 = vmatmul.mubr.f32.gmra.mrb[0].mxu0 %v293
      %v976 = vpop.f32.mrb[0].mxu0
      %v977 = vadd.f32 %v752, %v976
      %v978 = vpop.f32.mrb[0].mxu0
      %979 = vmatprep.mubr.f32.mxu0 %v299
      %980 = vmatmul.mubr.f32.gmra.mrb[0].mxu0 %v298
      %v981 = vpop.f32.mrb[0].mxu0
      %v982 = vadd.f32 %v757, %v981
      %v983 = vpop.f32.mrb[0].mxu0
      %984 = vmatprep.mubr.f32.mxu0 %v304
      %985 = vmatmul.mubr.f32.gmra.mrb[0].mxu0 %v303
      %v986 = vpop.f32.mrb[0].mxu0
      %v987 = vadd.f32 %v762, %v986
      %v988 = vpop.f32.mrb[0].mxu0
      %989 = vmatprep.mubr.f32.mxu0 %v309
      %990 = vmatmul.mubr.f32.gmra.mrb[0].mxu0 %v308
      %v991 = vpop.f32.mrb[0].mxu0
      %v992 = vadd.f32 %v767, %v991
      %v993 = vpop.f32.mrb[0].mxu0
      %994 = vmatprep.mubr.f32.mxu0 %v314
      %995 = vmatmul.mubr.f32.gmra.mrb[0].mxu0 %v313
      %v996 = vpop.f32.mrb[0].mxu0
      %v997 = vadd.f32 %v772, %v996
      %v998 = vpop.f32.mrb[0].mxu0
      %999 = vmatprep.mubr.f32.mxu0 %v319
      %1000 = vmatmul.mubr.f32.gmra.mrb[0].mxu0 %v318
      %v1001 = vpop.f32.mrb[0].mxu0
      %v1002 = vadd.f32 %v777, %v1001
      %v1003 = vpop.f32.mrb[0].mxu0
      %1004 = vmatprep.mubr.f32.mxu0 %v324
      %1005 = vmatmul.mubr.f32.gmra.mrb[0].mxu0 %v323
      %v1006 = vpop.f32.mrb[0].mxu0
      %v1007 = vadd.f32 %v782, %v1006
      %v1008 = vpop.f32.mrb[0].mxu0
      %1009 = vmatprep.mubr.f32.mxu0 %v329
      %1010 = vmatmul.mubr.f32.gmra.mrb[0].mxu0 %v328
      %v1011 = vpop.f32.mrb[0].mxu0
      %v1012 = vadd.f32 %v787, %v1011
      %v1013 = vpop.f32.mrb[0].mxu0
      %1014 = vmatprep.mubr.f32.mxu0 %v334
      %1015 = vmatmul.mubr.f32.gmra.mrb[0].mxu0 %v333
      %v1016 = vpop.f32.mrb[0].mxu0
      %v1017 = vadd.f32 %v792, %v1016
      %v1018 = vpop.f32.mrb[0].mxu0
      %1019 = vmatprep.mubr.f32.mxu0 %v339
      %1020 = vmatmul.mubr.f32.gmra.mrb[0].mxu0 %v338
      %v1021 = vpop.f32.mrb[0].mxu0
      %v1022 = vadd.f32 %v797, %v1021
      %v1023 = vpop.f32.mrb[0].mxu0
      %1024 = vmatprep.mubr.f32.mxu0 %v344
      %1025 = vmatmul.mubr.f32.gmra.mrb[0].mxu0 %v343
      %v1026 = vpop.f32.mrb[0].mxu0
      %v1027 = vadd.f32 %v802, %v1026
      %v1028 = vpop.f32.mrb[0].mxu0
      %1029 = vmatprep.mubr.f32.mxu0 %v349
      %1030 = vmatmul.mubr.f32.gmra.mrb[0].mxu0 %v348
      %v1031 = vpop.f32.mrb[0].mxu0
      %v1032 = vadd.f32 %v807, %v1031
      %v1033 = vpop.f32.mrb[0].mxu0
      %1034 = vdwg.mxu0
      %1035 = vmatprep.subr.mxu0 0.0
      %1036 = vmatpush1.msra.mxu0 %v480
      %1037 = vmatprep.subr.mxu0 0.0
      %1038 = vmatpush1.msra.mxu0 %v481
      %1039 = vmatprep.subr.mxu0 0.0
      %1040 = vmatpush1.msra.mxu0 %v482
      %1041 = vmatprep.subr.mxu0 0.0
      %1042 = vmatpush1.msra.mxu0 %v483
      %1043 = vmatprep.subr.mxu0 0.0
      %1044 = vmatpush1.msra.mxu0 %v484
      %1045 = vmatprep.subr.mxu0 0.0
      %1046 = vmatpush1.msra.mxu0 %v485
      %1047 = vmatprep.subr.mxu0 0.0
      %1048 = vmatpush1.msra.mxu0 %v486
      %1049 = vmatprep.subr.mxu0 0.0
      %1050 = vmatpush1.msra.mxu0 %v487
      %1051 = vmatprep.subr.mxu0 0.0
      %1052 = vmatpush1.msra.mxu0 0.0
      %1053 = vmatprep.subr.mxu0 0.0
      %1054 = vmatpush1.msra.mxu0 0.0
      %1055 = vmatprep.subr.mxu0 0.0
      %1056 = vmatpush1.msra.mxu0 0.0
      %1057 = vmatprep.subr.mxu0 0.0
      %1058 = vmatpush1.msra.mxu0 0.0
      %1059 = vmatprep.subr.mxu0 0.0
      %1060 = vmatpush1.msra.mxu0 0.0
      %1061 = vmatprep.subr.mxu0 0.0
      %1062 = vmatpush1.msra.mxu0 0.0
      %1063 = vmatprep.subr.mxu0 0.0
      %1064 = vmatpush1.msra.mxu0 0.0
      %1065 = vmatprep.subr.mxu0 0.0
      %1066 = vmatpush1.msra.mxu0 0.0
      %1067 = vmatprep.subr.mxu0 0.0
      %1068 = vmatpush1.msra.mxu0 0.0
      %1069 = vmatprep.subr.mxu0 0.0
      %1070 = vmatpush1.msra.mxu0 0.0
      %1071 = vmatprep.subr.mxu0 0.0
      %1072 = vmatpush1.msra.mxu0 0.0
      %1073 = vmatprep.subr.mxu0 0.0
      %1074 = vmatpush1.msra.mxu0 0.0
      %1075 = vmatprep.subr.mxu0 0.0
      %1076 = vmatpush1.msra.mxu0 0.0
      %1077 = vmatprep.subr.mxu0 0.0
      %1078 = vmatpush1.msra.mxu0 0.0
      %1079 = vmatprep.subr.mxu0 0.0
      %1080 = vmatpush1.msra.mxu0 0.0
      %1081 = vmatprep.subr.mxu0 0.0
      %1082 = vmatpush1.msra.mxu0 0.0
      %1083 = vmatprep.subr.mxu0 0.0
      %1084 = vmatpush1.msra.mxu0 0.0
      %1085 = vmatprep.subr.mxu0 0.0
      %1086 = vmatpush1.msra.mxu0 0.0
      %1087 = vmatprep.subr.mxu0 0.0
      %1088 = vmatpush1.msra.mxu0 0.0
      %1089 = vmatprep.subr.mxu0 0.0
      %1090 = vmatpush1.msra.mxu0 0.0
      %1091 = vmatprep.subr.mxu0 0.0
      %1092 = vmatpush1.msra.mxu0 0.0
      %1093 = vmatprep.subr.mxu0 0.0
      %1094 = vmatpush1.msra.mxu0 0.0
      %1095 = vmatprep.subr.mxu0 0.0
      %1096 = vmatpush1.msra.mxu0 0.0
      %1097 = vmatprep.subr.mxu0 0.0
      %1098 = vmatpush1.msra.mxu0 0.0
      %1099 = vmatprep.mubr.f32.mxu0 0.0
      %1100 = vmatmul.mubr.f32.gmra.mrb[0].mxu0 %v490
      %v1101 = vpop.f32.mrb[0].mxu0
      %v1102 = vadd.f32 %v877, %v1101
      %v1103 = vpop.f32.mrb[0].mxu0
      %1104 = vmatprep.mubr.f32.mxu0 0.0
      %1105 = vmatmul.mubr.f32.gmra.mrb[0].mxu0 %v493
      %v1106 = vpop.f32.mrb[0].mxu0
      %v1107 = vadd.f32 %v882, %v1106
      %v1108 = vpop.f32.mrb[0].mxu0
      %1109 = vmatprep.mubr.f32.mxu0 0.0
      %1110 = vmatmul.mubr.f32.gmra.mrb[0].mxu0 %v496
      %v1111 = vpop.f32.mrb[0].mxu0
      %v1112 = vadd.f32 %v887, %v1111
      %v1113 = vpop.f32.mrb[0].mxu0
      %1114 = vmatprep.mubr.f32.mxu0 0.0
      %1115 = vmatmul.mubr.f32.gmra.mrb[0].mxu0 %v499
      %v1116 = vpop.f32.mrb[0].mxu0
      %v1117 = vadd.f32 %v892, %v1116
      %v1118 = vpop.f32.mrb[0].mxu0
      %1119 = vmatprep.mubr.f32.mxu0 0.0
      %1120 = vmatmul.mubr.f32.gmra.mrb[0].mxu0 %v502
      %v1121 = vpop.f32.mrb[0].mxu0
      %v1122 = vadd.f32 %v897, %v1121
      %v1123 = vpop.f32.mrb[0].mxu0
      %1124 = vmatprep.mubr.f32.mxu0 0.0
      %1125 = vmatmul.mubr.f32.gmra.mrb[0].mxu0 %v505
      %v1126 = vpop.f32.mrb[0].mxu0
      %v1127 = vadd.f32 %v902, %v1126
      %v1128 = vpop.f32.mrb[0].mxu0
      %1129 = vmatprep.mubr.f32.mxu0 0.0
      %1130 = vmatmul.mubr.f32.gmra.mrb[0].mxu0 %v508
      %v1131 = vpop.f32.mrb[0].mxu0
      %v1132 = vadd.f32 %v907, %v1131
      %v1133 = vpop.f32.mrb[0].mxu0
      %1134 = vmatprep.mubr.f32.mxu0 0.0
      %1135 = vmatmul.mubr.f32.gmra.mrb[0].mxu0 %v511
      %v1136 = vpop.f32.mrb[0].mxu0
      %v1137 = vadd.f32 %v912, %v1136
      %v1138 = vpop.f32.mrb[0].mxu0
      %1139 = vmatprep.mubr.f32.mxu0 0.0
      %1140 = vmatmul.mubr.f32.gmra.mrb[0].mxu0 %v514
      %v1141 = vpop.f32.mrb[0].mxu0
      %v1142 = vadd.f32 %v917, %v1141
      %v1143 = vpop.f32.mrb[0].mxu0
      %1144 = vmatprep.mubr.f32.mxu0 0.0
      %1145 = vmatmul.mubr.f32.gmra.mrb[0].mxu0 %v517
      %v1146 = vpop.f32.mrb[0].mxu0
      %v1147 = vadd.f32 %v922, %v1146
      %v1148 = vpop.f32.mrb[0].mxu0
      %1149 = vmatprep.mubr.f32.mxu0 0.0
      %1150 = vmatmul.mubr.f32.gmra.mrb[0].mxu0 %v520
      %v1151 = vpop.f32.mrb[0].mxu0
      %v1152 = vadd.f32 %v927, %v1151
      %v1153 = vpop.f32.mrb[0].mxu0
      %1154 = vmatprep.mubr.f32.mxu0 0.0
      %1155 = vmatmul.mubr.f32.gmra.mrb[0].mxu0 %v523
      %v1156 = vpop.f32.mrb[0].mxu0
      %v1157 = vadd.f32 %v932, %v1156
      %v1158 = vpop.f32.mrb[0].mxu0
      %1159 = vmatprep.mubr.f32.mxu0 0.0
      %1160 = vmatmul.mubr.f32.gmra.mrb[0].mxu0 %v526
      %v1161 = vpop.f32.mrb[0].mxu0
      %v1162 = vadd.f32 %v937, %v1161
      %v1163 = vpop.f32.mrb[0].mxu0
      %1164 = vmatprep.mubr.f32.mxu0 0.0
      %1165 = vmatmul.mubr.f32.gmra.mrb[0].mxu0 %v529
      %v1166 = vpop.f32.mrb[0].mxu0
      %v1167 = vadd.f32 %v942, %v1166
      %v1168 = vpop.f32.mrb[0].mxu0
      %1169 = vmatprep.mubr.f32.mxu0 0.0
      %1170 = vmatmul.mubr.f32.gmra.mrb[0].mxu0 %v532
      %v1171 = vpop.f32.mrb[0].mxu0
      %v1172 = vadd.f32 %v947, %v1171
      %v1173 = vpop.f32.mrb[0].mxu0
      %1174 = vmatprep.mubr.f32.mxu0 0.0
      %1175 = vmatmul.mubr.f32.gmra.mrb[0].mxu0 %v535
      %v1176 = vpop.f32.mrb[0].mxu0
      %v1177 = vadd.f32 %v952, %v1176
      %v1178 = vpop.f32.mrb[0].mxu0
      %1179 = vmatprep.mubr.f32.mxu0 0.0
      %1180 = vmatmul.mubr.f32.gmra.mrb[0].mxu0 %v538
      %v1181 = vpop.f32.mrb[0].mxu0
      %v1182 = vadd.f32 %v957, %v1181
      %v1183 = vpop.f32.mrb[0].mxu0
      %1184 = vmatprep.mubr.f32.mxu0 0.0
      %1185 = vmatmul.mubr.f32.gmra.mrb[0].mxu0 %v541
      %v1186 = vpop.f32.mrb[0].mxu0
      %v1187 = vadd.f32 %v962, %v1186
      %v1188 = vpop.f32.mrb[0].mxu0
      %1189 = vmatprep.mubr.f32.mxu0 0.0
      %1190 = vmatmul.mubr.f32.gmra.mrb[0].mxu0 %v544
      %v1191 = vpop.f32.mrb[0].mxu0
      %v1192 = vadd.f32 %v967, %v1191
      %v1193 = vpop.f32.mrb[0].mxu0
      %1194 = vmatprep.mubr.f32.mxu0 0.0
      %1195 = vmatmul.mubr.f32.gmra.mrb[0].mxu0 %v547
      %v1196 = vpop.f32.mrb[0].mxu0
      %v1197 = vadd.f32 %v972, %v1196
      %v1198 = vpop.f32.mrb[0].mxu0
      %1199 = vmatprep.mubr.f32.mxu0 0.0
      %1200 = vmatmul.mubr.f32.gmra.mrb[0].mxu0 %v550
      %v1201 = vpop.f32.mrb[0].mxu0
      %v1202 = vadd.f32 %v977, %v1201
      %v1203 = vpop.f32.mrb[0].mxu0
      %1204 = vmatprep.mubr.f32.mxu0 0.0
      %1205 = vmatmul.mubr.f32.gmra.mrb[0].mxu0 %v553
      %v1206 = vpop.f32.mrb[0].mxu0
      %v1207 = vadd.f32 %v982, %v1206
      %v1208 = vpop.f32.mrb[0].mxu0
      %1209 = vmatprep.mubr.f32.mxu0 0.0
      %1210 = vmatmul.mubr.f32.gmra.mrb[0].mxu0 %v556
      %v1211 = vpop.f32.mrb[0].mxu0
      %v1212 = vadd.f32 %v987, %v1211
      %v1213 = vpop.f32.mrb[0].mxu0
      %1214 = vmatprep.mubr.f32.mxu0 0.0
      %1215 = vmatmul.mubr.f32.gmra.mrb[0].mxu0 %v559
      %v1216 = vpop.f32.mrb[0].mxu0
      %v1217 = vadd.f32 %v992, %v1216
      %v1218 = vpop.f32.mrb[0].mxu0
      %1219 = vmatprep.mubr.f32.mxu0 0.0
      %1220 = vmatmul.mubr.f32.gmra.mrb[0].mxu0 %v562
      %v1221 = vpop.f32.mrb[0].mxu0
      %v1222 = vadd.f32 %v997, %v1221
      %v1223 = vpop.f32.mrb[0].mxu0
      %1224 = vmatprep.mubr.f32.mxu0 0.0
      %1225 = vmatmul.mubr.f32.gmra.mrb[0].mxu0 %v565
      %v1226 = vpop.f32.mrb[0].mxu0
      %v1227 = vadd.f32 %v1002, %v1226
      %v1228 = vpop.f32.mrb[0].mxu0
      %1229 = vmatprep.mubr.f32.mxu0 0.0
      %1230 = vmatmul.mubr.f32.gmra.mrb[0].mxu0 %v568
      %v1231 = vpop.f32.mrb[0].mxu0
      %v1232 = vadd.f32 %v1007, %v1231
      %v1233 = vpop.f32.mrb[0].mxu0
      %1234 = vmatprep.mubr.f32.mxu0 0.0
      %1235 = vmatmul.mubr.f32.gmra.mrb[0].mxu0 %v571
      %v1236 = vpop.f32.mrb[0].mxu0
      %v1237 = vadd.f32 %v1012, %v1236
      %v1238 = vpop.f32.mrb[0].mxu0
      %1239 = vmatprep.mubr.f32.mxu0 0.0
      %1240 = vmatmul.mubr.f32.gmra.mrb[0].mxu0 %v574
      %v1241 = vpop.f32.mrb[0].mxu0
      %v1242 = vadd.f32 %v1017, %v1241
      %v1243 = vpop.f32.mrb[0].mxu0
      %1244 = vmatprep.mubr.f32.mxu0 0.0
      %1245 = vmatmul.mubr.f32.gmra.mrb[0].mxu0 %v577
      %v1246 = vpop.f32.mrb[0].mxu0
      %v1247 = vadd.f32 %v1022, %v1246
      %v1248 = vpop.f32.mrb[0].mxu0
      %1249 = vmatprep.mubr.f32.mxu0 0.0
      %1250 = vmatmul.mubr.f32.gmra.mrb[0].mxu0 %v580
      %v1251 = vpop.f32.mrb[0].mxu0
      %v1252 = vadd.f32 %v1027, %v1251
      %v1253 = vpop.f32.mrb[0].mxu0
      %1254 = vmatprep.mubr.f32.mxu0 0.0
      %1255 = vmatmul.mubr.f32.gmra.mrb[0].mxu0 %v583
      %v1256 = vpop.f32.mrb[0].mxu0
      %v1257 = vadd.f32 %v1032, %v1256
      %v1258 = vpop.f32.mrb[0].mxu0
      %1259 = vdwg.mxu0
      %1292 = vrot.lane.b32.xlu0 %v1102, 8
      %v1293 = vpop.permute.xlu0 %1292
      %1294 = vrot.lane.b32.xlu0 %v1107, 8
      %v1295 = vpop.permute.xlu0 %1294
      %1296 = vrot.lane.b32.xlu0 %v1112, 8
      %v1297 = vpop.permute.xlu0 %1296
      %1298 = vrot.lane.b32.xlu0 %v1117, 8
      %v1299 = vpop.permute.xlu0 %1298
      %1300 = vrot.lane.b32.xlu0 %v1122, 8
      %v1301 = vpop.permute.xlu0 %1300
      %1302 = vrot.lane.b32.xlu0 %v1127, 8
      %v1303 = vpop.permute.xlu0 %1302
      %1304 = vrot.lane.b32.xlu0 %v1132, 8
      %v1305 = vpop.permute.xlu0 %1304
      %1306 = vrot.lane.b32.xlu0 %v1137, 8
      %v1307 = vpop.permute.xlu0 %1306
      %1308 = vrot.lane.b32.xlu0 %v1142, 8
      %v1309 = vpop.permute.xlu0 %1308
      %1310 = vrot.lane.b32.xlu0 %v1147, 8
      %v1311 = vpop.permute.xlu0 %1310
      %1312 = vrot.lane.b32.xlu0 %v1152, 8
      %v1313 = vpop.permute.xlu0 %1312
      %1314 = vrot.lane.b32.xlu0 %v1157, 8
      %v1315 = vpop.permute.xlu0 %1314
      %1316 = vrot.lane.b32.xlu0 %v1162, 8
      %v1317 = vpop.permute.xlu0 %1316
      %1318 = vrot.lane.b32.xlu0 %v1167, 8
      %v1319 = vpop.permute.xlu0 %1318
      %1320 = vrot.lane.b32.xlu0 %v1172, 8
      %v1321 = vpop.permute.xlu0 %1320
      %1322 = vrot.lane.b32.xlu0 %v1177, 8
      %v1323 = vpop.permute.xlu0 %1322
      %1324 = vrot.lane.b32.xlu0 %v1182, 8
      %v1325 = vpop.permute.xlu0 %1324
      %1326 = vrot.lane.b32.xlu0 %v1187, 8
      %v1327 = vpop.permute.xlu0 %1326
      %1328 = vrot.lane.b32.xlu0 %v1192, 8
      %v1329 = vpop.permute.xlu0 %1328
      %1330 = vrot.lane.b32.xlu0 %v1197, 8
      %v1331 = vpop.permute.xlu0 %1330
      %1332 = vrot.lane.b32.xlu0 %v1202, 8
      %v1333 = vpop.permute.xlu0 %1332
      %1334 = vrot.lane.b32.xlu0 %v1207, 8
      %v1335 = vpop.permute.xlu0 %1334
      %1336 = vrot.lane.b32.xlu0 %v1212, 8
      %v1337 = vpop.permute.xlu0 %1336
      %1338 = vrot.lane.b32.xlu0 %v1217, 8
      %v1339 = vpop.permute.xlu0 %1338
      %1340 = vrot.lane.b32.xlu0 %v1222, 8
      %v1341 = vpop.permute.xlu0 %1340
      %1342 = vrot.lane.b32.xlu0 %v1227, 8
      %v1343 = vpop.permute.xlu0 %1342
      %1344 = vrot.lane.b32.xlu0 %v1232, 8
      %v1345 = vpop.permute.xlu0 %1344
      %1346 = vrot.lane.b32.xlu0 %v1237, 8
      %v1347 = vpop.permute.xlu0 %1346
      %1348 = vrot.lane.b32.xlu0 %v1242, 8
      %v1349 = vpop.permute.xlu0 %1348
      %1350 = vrot.lane.b32.xlu0 %v1247, 8
      %v1351 = vpop.permute.xlu0 %1350
      %1352 = vrot.lane.b32.xlu0 %v1252, 8
      %v1353 = vpop.permute.xlu0 %1352
      %1354 = vrot.lane.b32.xlu0 %v1257, 8
      %v1355 = vpop.permute.xlu0 %1354
      %vm1388 = vcmask 130112
      %1389 = vst.msk [vmem:[%s190] sm:$0xff] %vm1388, %v1293
      %1390 = vst.msk [vmem:[%s190 + $0x8] sm:$0xff] %vm1388, %v1295
      %1391 = vst.msk [vmem:[%s190 + $0x10] sm:$0xff] %vm1388, %v1297
      %1392 = vst.msk [vmem:[%s190 + $0x18] sm:$0xff] %vm1388, %v1299
      %1393 = vst.msk [vmem:[%s190 + $0x20] sm:$0xff] %vm1388, %v1301
      %1394 = vst.msk [vmem:[%s190 + $0x28] sm:$0xff] %vm1388, %v1303
      %1395 = vst.msk [vmem:[%s190 + $0x30] sm:$0xff] %vm1388, %v1305
      %1396 = vst.msk [vmem:[%s190 + $0x38] sm:$0xff] %vm1388, %v1307
      %1397 = vst.msk [vmem:[%s190 + $0x40] sm:$0xff] %vm1388, %v1309
      %1398 = vst.msk [vmem:[%s190 + $0x48] sm:$0xff] %vm1388, %v1311
      %1399 = vst.msk [vmem:[%s190 + $0x50] sm:$0xff] %vm1388, %v1313
      %1400 = vst.msk [vmem:[%s190 + $0x58] sm:$0xff] %vm1388, %v1315
      %1401 = vst.msk [vmem:[%s190 + $0x60] sm:$0xff] %vm1388, %v1317
      %1402 = vst.msk [vmem:[%s190 + $0x68] sm:$0xff] %vm1388, %v1319
      %1403 = vst.msk [vmem:[%s190 + $0x70] sm:$0xff] %vm1388, %v1321
      %1404 = vst.msk [vmem:[%s190 + $0x78] sm:$0xff] %vm1388, %v1323
      %1405 = vst.msk [vmem:[%s190 + $0x80] sm:$0xff] %vm1388, %v1325
      %1406 = vst.msk [vmem:[%s190 + $0x88] sm:$0xff] %vm1388, %v1327
      %1407 = vst.msk [vmem:[%s190 + $0x90] sm:$0xff] %vm1388, %v1329
      %1408 = vst.msk [vmem:[%s190 + $0x98] sm:$0xff] %vm1388, %v1331
      %1409 = vst.msk [vmem:[%s190 + $0xa0] sm:$0xff] %vm1388, %v1333
      %1410 = vst.msk [vmem:[%s190 + $0xa8] sm:$0xff] %vm1388, %v1335
      %1411 = vst.msk [vmem:[%s190 + $0xb0] sm:$0xff] %vm1388, %v1337
      %1412 = vst.msk [vmem:[%s190 + $0xb8] sm:$0xff] %vm1388, %v1339
      %1413 = vst.msk [vmem:[%s190 + $0xc0] sm:$0xff] %vm1388, %v1341
      %1414 = vst.msk [vmem:[%s190 + $0xc8] sm:$0xff] %vm1388, %v1343
      %1415 = vst.msk [vmem:[%s190 + $0xd0] sm:$0xff] %vm1388, %v1345
      %1416 = vst.msk [vmem:[%s190 + $0xd8] sm:$0xff] %vm1388, %v1347
      %1417 = vst.msk [vmem:[%s190 + $0xe0] sm:$0xff] %vm1388, %v1349
      %1418 = vst.msk [vmem:[%s190 + $0xe8] sm:$0xff] %vm1388, %v1351
      %1419 = vst.msk [vmem:[%s190 + $0xf0] sm:$0xff] %vm1388, %v1353
      %1420 = vst.msk [vmem:[%s190 + $0xf8] sm:$0xff] %vm1388, %v1355
      %s1421 = scalar_lea.vmem %s180, 576
      %v1422 = vld [vmem:[%s1421] sm:$0xff]
      %v1423 = vld [vmem:[%s1421 + $0x8] sm:$0xff]
      %v1424 = vld [vmem:[%s1421 + $0x10] sm:$0xff]
      %v1425 = vld [vmem:[%s1421 + $0x18] sm:$0xff]
      %v1426 = vld [vmem:[%s1421 + $0x20] sm:$0xff]
      %v1427 = vld [vmem:[%s1421 + $0x28] sm:$0xff]
      %v1428 = vld [vmem:[%s1421 + $0x30] sm:$0xff]
      %v1429 = vld [vmem:[%s1421 + $0x38] sm:$0xff]
      %v1430 = vld [vmem:[%s1421 + $0x40] sm:$0xff]
      %v1431 = vld [vmem:[%s1421 + $0x48] sm:$0xff]
      %v1432 = vld [vmem:[%s1421 + $0x50] sm:$0xff]
      %v1433 = vld [vmem:[%s1421 + $0x58] sm:$0xff]
      %v1434 = vld [vmem:[%s1421 + $0x60] sm:$0xff]
      %v1435 = vld [vmem:[%s1421 + $0x68] sm:$0xff]
      %v1436 = vld [vmem:[%s1421 + $0x70] sm:$0xff]
      %v1437 = vld [vmem:[%s1421 + $0x78] sm:$0xff]
      %v1438 = vld [vmem:[%s1421 + $0x80] sm:$0xff]
      %v1439 = vld [vmem:[%s1421 + $0x88] sm:$0xff]
      %v1440 = vld [vmem:[%s1421 + $0x90] sm:$0xff]
      %v1441 = vld [vmem:[%s1421 + $0x98] sm:$0xff]
      %v1442 = vld [vmem:[%s1421 + $0xa0] sm:$0xff]
      %v1443 = vld [vmem:[%s1421 + $0xa8] sm:$0xff]
      %v1444 = vld [vmem:[%s1421 + $0xb0] sm:$0xff]
      %v1445 = vld [vmem:[%s1421 + $0xb8] sm:$0xff]
      %v1446 = vld [vmem:[%s1421 + $0xc0] sm:$0xff]
      %v1447 = vld [vmem:[%s1421 + $0xc8] sm:$0xff]
      %v1448 = vld [vmem:[%s1421 + $0xd0] sm:$0xff]
      %v1449 = vld [vmem:[%s1421 + $0xd8] sm:$0xff]
      %v1450 = vld [vmem:[%s1421 + $0xe0] sm:$0xff]
      %v1451 = vld [vmem:[%s1421 + $0xe8] sm:$0xff]
      %v1452 = vld [vmem:[%s1421 + $0xf0] sm:$0xff]
      %v1453 = vld [vmem:[%s1421 + $0xf8] sm:$0xff]
      %v1454 = vld [vmem:[%s1421 + $0x100] sm:$0xff]
      %v1455 = vld [vmem:[%s1421 + $0x108] sm:$0xff]
      %v1456 = vld [vmem:[%s1421 + $0x110] sm:$0xff]
      %v1457 = vld [vmem:[%s1421 + $0x118] sm:$0xff]
      %v1458 = vld [vmem:[%s1421 + $0x120] sm:$0xff]
      %v1459 = vld [vmem:[%s1421 + $0x128] sm:$0xff]
      %v1460 = vld [vmem:[%s1421 + $0x130] sm:$0xff]
      %v1461 = vld [vmem:[%s1421 + $0x138] sm:$0xff]
      %v1462 = vld [vmem:[%s1421 + $0x140] sm:$0xff]
      %v1463 = vld [vmem:[%s1421 + $0x148] sm:$0xff]
      %v1464 = vld [vmem:[%s1421 + $0x150] sm:$0xff]
      %v1465 = vld [vmem:[%s1421 + $0x158] sm:$0xff]
      %v1466 = vld [vmem:[%s1421 + $0x160] sm:$0xff]
      %v1467 = vld [vmem:[%s1421 + $0x168] sm:$0xff]
      %v1468 = vld [vmem:[%s1421 + $0x170] sm:$0xff]
      %v1469 = vld [vmem:[%s1421 + $0x178] sm:$0xff]
      %v1470 = vld [vmem:[%s1421 + $0x180] sm:$0xff]
      %v1471 = vld [vmem:[%s1421 + $0x188] sm:$0xff]
      %v1472 = vld [vmem:[%s1421 + $0x190] sm:$0xff]
      %v1473 = vld [vmem:[%s1421 + $0x198] sm:$0xff]
      %v1474 = vld [vmem:[%s1421 + $0x1a0] sm:$0xff]
      %v1475 = vld [vmem:[%s1421 + $0x1a8] sm:$0xff]
      %v1476 = vld [vmem:[%s1421 + $0x1b0] sm:$0xff]
      %v1477 = vld [vmem:[%s1421 + $0x1b8] sm:$0xff]
      %v1478 = vld [vmem:[%s1421 + $0x1c0] sm:$0xff]
      %v1479 = vld [vmem:[%s1421 + $0x1c8] sm:$0xff]
      %v1480 = vld [vmem:[%s1421 + $0x1d0] sm:$0xff]
      %v1481 = vld [vmem:[%s1421 + $0x1d8] sm:$0xff]
      %v1482 = vld [vmem:[%s1421 + $0x1e0] sm:$0xff]
      %v1483 = vld [vmem:[%s1421 + $0x1e8] sm:$0xff]
      %v1484 = vld [vmem:[%s1421 + $0x1f0] sm:$0xff]
      %v1485 = vld [vmem:[%s1421 + $0x1f8] sm:$0xff]
      %v1486 = vld [vmem:[%s1421 + $0x200] sm:$0xff]
      %v1487 = vld [vmem:[%s1421 + $0x208] sm:$0xff]
      %v1488 = vld [vmem:[%s1421 + $0x210] sm:$0xff]
      %v1489 = vld [vmem:[%s1421 + $0x218] sm:$0xff]
      %v1490 = vld [vmem:[%s1421 + $0x220] sm:$0xff]
      %v1491 = vld [vmem:[%s1421 + $0x228] sm:$0xff]
      %v1492 = vld [vmem:[%s1421 + $0x230] sm:$0xff]
      %v1493 = vld [vmem:[%s1421 + $0x238] sm:$0xff]
      %1494 = vmatprep.subr.mxu0 0.0
      %1495 = vmatpush1.msra.mxu0 %v1422
      %1496 = vmatprep.subr.mxu0 0.0
      %1497 = vmatpush1.msra.mxu0 %v1423
      %1498 = vmatprep.subr.mxu0 0.0
      %1499 = vmatpush1.msra.mxu0 %v1424
      %1500 = vmatprep.subr.mxu0 0.0
      %1501 = vmatpush1.msra.mxu0 %v1425
      %1502 = vmatprep.subr.mxu0 0.0
      %1503 = vmatpush1.msra.mxu0 %v1426
      %1504 = vmatprep.subr.mxu0 0.0
      %1505 = vmatpush1.msra.mxu0 %v1427
      %1506 = vmatprep.subr.mxu0 0.0
      %1507 = vmatpush1.msra.mxu0 %v1428
      %1508 = vmatprep.subr.mxu0 0.0
      %1509 = vmatpush1.msra.mxu0 %v1429
      %1510 = vmatprep.subr.mxu0 0.0
      %1511 = vmatpush1.msra.mxu0 %v1430
      %1512 = vmatprep.subr.mxu0 0.0
      %1513 = vmatpush1.msra.mxu0 %v1431
      %1514 = vmatprep.subr.mxu0 0.0
      %1515 = vmatpush1.msra.mxu0 %v1432
      %1516 = vmatprep.subr.mxu0 0.0
      %1517 = vmatpush1.msra.mxu0 %v1433
      %1518 = vmatprep.subr.mxu0 0.0
      %1519 = vmatpush1.msra.mxu0 %v1434
      %1520 = vmatprep.subr.mxu0 0.0
      %1521 = vmatpush1.msra.mxu0 %v1435
      %1522 = vmatprep.subr.mxu0 0.0
      %1523 = vmatpush1.msra.mxu0 %v1436
      %1524 = vmatprep.subr.mxu0 0.0
      %1525 = vmatpush1.msra.mxu0 %v1437
      %1526 = vmatprep.subr.mxu0 0.0
      %1527 = vmatpush1.msra.mxu0 %v1438
      %1528 = vmatprep.subr.mxu0 0.0
      %1529 = vmatpush1.msra.mxu0 %v1439
      %1530 = vmatprep.subr.mxu0 0.0
      %1531 = vmatpush1.msra.mxu0 %v1440
      %1532 = vmatprep.subr.mxu0 0.0
      %1533 = vmatpush1.msra.mxu0 %v1441
      %1534 = vmatprep.subr.mxu0 0.0
      %1535 = vmatpush1.msra.mxu0 %v1442
      %1536 = vmatprep.subr.mxu0 0.0
      %1537 = vmatpush1.msra.mxu0 %v1443
      %1538 = vmatprep.subr.mxu0 0.0
      %1539 = vmatpush1.msra.mxu0 %v1444
      %1540 = vmatprep.subr.mxu0 0.0
      %1541 = vmatpush1.msra.mxu0 %v1445
      %1542 = vmatprep.subr.mxu0 0.0
      %1543 = vmatpush1.msra.mxu0 %v1446
      %1544 = vmatprep.subr.mxu0 0.0
      %1545 = vmatpush1.msra.mxu0 %v1447
      %1546 = vmatprep.subr.mxu0 0.0
      %1547 = vmatpush1.msra.mxu0 %v1448
      %1548 = vmatprep.subr.mxu0 0.0
      %1549 = vmatpush1.msra.mxu0 %v1449
      %1550 = vmatprep.subr.mxu0 0.0
      %1551 = vmatpush1.msra.mxu0 %v1450
      %1552 = vmatprep.subr.mxu0 0.0
      %1553 = vmatpush1.msra.mxu0 %v1451
      %1554 = vmatprep.subr.mxu0 0.0
      %1555 = vmatpush1.msra.mxu0 %v1452
      %1556 = vmatprep.subr.mxu0 0.0
      %1557 = vmatpush1.msra.mxu0 %v1453
      %1558 = vmatprep.mubr.f32.mxu0 %v192
      %1559 = vmatmul.mubr.f32.gmra.mrb[0].mxu0 %v191
      %v1560 = vpop.f32.mrb[0].mxu0
      %v1561 = vadd.f32 0.0, %v1560
      %v1562 = vpop.f32.mrb[0].mxu0
      %1563 = vmatprep.mubr.f32.mxu0 %v197
      %1564 = vmatmul.mubr.f32.gmra.mrb[0].mxu0 %v196
      %v1565 = vpop.f32.mrb[0].mxu0
      %v1566 = vadd.f32 0.0, %v1565
      %v1567 = vpop.f32.mrb[0].mxu0
      %1568 = vmatprep.mubr.f32.mxu0 %v202
      %1569 = vmatmul.mubr.f32.gmra.mrb[0].mxu0 %v201
      %v1570 = vpop.f32.mrb[0].mxu0
      %v1571 = vadd.f32 0.0, %v1570
      %v1572 = vpop.f32.mrb[0].mxu0
      %1573 = vmatprep.mubr.f32.mxu0 %v207
      %1574 = vmatmul.mubr.f32.gmra.mrb[0].mxu0 %v206
      %v1575 = vpop.f32.mrb[0].mxu0
      %v1576 = vadd.f32 0.0, %v1575
      %v1577 = vpop.f32.mrb[0].mxu0
      %1578 = vmatprep.mubr.f32.mxu0 %v212
      %1579 = vmatmul.mubr.f32.gmra.mrb[0].mxu0 %v211
      %v1580 = vpop.f32.mrb[0].mxu0
      %v1581 = vadd.f32 0.0, %v1580
      %v1582 = vpop.f32.mrb[0].mxu0
      %1583 = vmatprep.mubr.f32.mxu0 %v217
      %1584 = vmatmul.mubr.f32.gmra.mrb[0].mxu0 %v216
      %v1585 = vpop.f32.mrb[0].mxu0
      %v1586 = vadd.f32 0.0, %v1585
      %v1587 = vpop.f32.mrb[0].mxu0
      %1588 = vmatprep.mubr.f32.mxu0 %v222
      %1589 = vmatmul.mubr.f32.gmra.mrb[0].mxu0 %v221
      %v1590 = vpop.f32.mrb[0].mxu0
      %v1591 = vadd.f32 0.0, %v1590
      %v1592 = vpop.f32.mrb[0].mxu0
      %1593 = vmatprep.mubr.f32.mxu0 %v227
      %1594 = vmatmul.mubr.f32.gmra.mrb[0].mxu0 %v226
      %v1595 = vpop.f32.mrb[0].mxu0
      %v1596 = vadd.f32 0.0, %v1595
      %v1597 = vpop.f32.mrb[0].mxu0
      %1598 = vmatprep.mubr.f32.mxu0 %v232
      %1599 = vmatmul.mubr.f32.gmra.mrb[0].mxu0 %v231
      %v1600 = vpop.f32.mrb[0].mxu0
      %v1601 = vadd.f32 0.0, %v1600
      %v1602 = vpop.f32.mrb[0].mxu0
      %1603 = vmatprep.mubr.f32.mxu0 %v237
      %1604 = vmatmul.mubr.f32.gmra.mrb[0].mxu0 %v236
      %v1605 = vpop.f32.mrb[0].mxu0
      %v1606 = vadd.f32 0.0, %v1605
      %v1607 = vpop.f32.mrb[0].mxu0
      %1608 = vmatprep.mubr.f32.mxu0 %v242
      %1609 = vmatmul.mubr.f32.gmra.mrb[0].mxu0 %v241
      %v1610 = vpop.f32.mrb[0].mxu0
      %v1611 = vadd.f32 0.0, %v1610
      %v1612 = vpop.f32.mrb[0].mxu0
      %1613 = vmatprep.mubr.f32.mxu0 %v247
      %1614 = vmatmul.mubr.f32.gmra.mrb[0].mxu0 %v246
      %v1615 = vpop.f32.mrb[0].mxu0
      %v1616 = vadd.f32 0.0, %v1615
      %v1617 = vpop.f32.mrb[0].mxu0
      %1618 = vmatprep.mubr.f32.mxu0 %v252
      %1619 = vmatmul.mubr.f32.gmra.mrb[0].mxu0 %v251
      %v1620 = vpop.f32.mrb[0].mxu0
      %v1621 = vadd.f32 0.0, %v1620
      %v1622 = vpop.f32.mrb[0].mxu0
      %1623 = vmatprep.mubr.f32.mxu0 %v257
      %1624 = vmatmul.mubr.f32.gmra.mrb[0].mxu0 %v256
      %v1625 = vpop.f32.mrb[0].mxu0
      %v1626 = vadd.f32 0.0, %v1625
      %v1627 = vpop.f32.mrb[0].mxu0
      %1628 = vmatprep.mubr.f32.mxu0 %v262
      %1629 = vmatmul.mubr.f32.gmra.mrb[0].mxu0 %v261
      %v1630 = vpop.f32.mrb[0].mxu0
      %v1631 = vadd.f32 0.0, %v1630
      %v1632 = vpop.f32.mrb[0].mxu0
      %1633 = vmatprep.mubr.f32.mxu0 %v267
      %1634 = vmatmul.mubr.f32.gmra.mrb[0].mxu0 %v266
      %v1635 = vpop.f32.mrb[0].mxu0
      %v1636 = vadd.f32 0.0, %v1635
      %v1637 = vpop.f32.mrb[0].mxu0
      %1638 = vmatprep.mubr.f32.mxu0 %v272
      %1639 = vmatmul.mubr.f32.gmra.mrb[0].mxu0 %v271
      %v1640 = vpop.f32.mrb[0].mxu0
      %v1641 = vadd.f32 0.0, %v1640
      %v1642 = vpop.f32.mrb[0].mxu0
      %1643 = vmatprep.mubr.f32.mxu0 %v277
      %1644 = vmatmul.mubr.f32.gmra.mrb[0].mxu0 %v276
      %v1645 = vpop.f32.mrb[0].mxu0
      %v1646 = vadd.f32 0.0, %v1645
      %v1647 = vpop.f32.mrb[0].mxu0
      %1648 = vmatprep.mubr.f32.mxu0 %v282
      %1649 = vmatmul.mubr.f32.gmra.mrb[0].mxu0 %v281
      %v1650 = vpop.f32.mrb[0].mxu0
      %v1651 = vadd.f32 0.0, %v1650
      %v1652 = vpop.f32.mrb[0].mxu0
      %1653 = vmatprep.mubr.f32.mxu0 %v287
      %1654 = vmatmul.mubr.f32.gmra.mrb[0].mxu0 %v286
      %v1655 = vpop.f32.mrb[0].mxu0
      %v1656 = vadd.f32 0.0, %v1655
      %v1657 = vpop.f32.mrb[0].mxu0
      %1658 = vmatprep.mubr.f32.mxu0 %v292
      %1659 = vmatmul.mubr.f32.gmra.mrb[0].mxu0 %v291
      %v1660 = vpop.f32.mrb[0].mxu0
      %v1661 = vadd.f32 0.0, %v1660
      %v1662 = vpop.f32.mrb[0].mxu0
      %1663 = vmatprep.mubr.f32.mxu0 %v297
      %1664 = vmatmul.mubr.f32.gmra.mrb[0].mxu0 %v296
      %v1665 = vpop.f32.mrb[0].mxu0
      %v1666 = vadd.f32 0.0, %v1665
      %v1667 = vpop.f32.mrb[0].mxu0
      %1668 = vmatprep.mubr.f32.mxu0 %v302
      %1669 = vmatmul.mubr.f32.gmra.mrb[0].mxu0 %v301
      %v1670 = vpop.f32.mrb[0].mxu0
      %v1671 = vadd.f32 0.0, %v1670
      %v1672 = vpop.f32.mrb[0].mxu0
      %1673 = vmatprep.mubr.f32.mxu0 %v307
      %1674 = vmatmul.mubr.f32.gmra.mrb[0].mxu0 %v306
      %v1675 = vpop.f32.mrb[0].mxu0
      %v1676 = vadd.f32 0.0, %v1675
      %v1677 = vpop.f32.mrb[0].mxu0
      %1678 = vmatprep.mubr.f32.mxu0 %v312
      %1679 = vmatmul.mubr.f32.gmra.mrb[0].mxu0 %v311
      %v1680 = vpop.f32.mrb[0].mxu0
      %v1681 = vadd.f32 0.0, %v1680
      %v1682 = vpop.f32.mrb[0].mxu0
      %1683 = vmatprep.mubr.f32.mxu0 %v317
      %1684 = vmatmul.mubr.f32.gmra.mrb[0].mxu0 %v316
      %v1685 = vpop.f32.mrb[0].mxu0
      %v1686 = vadd.f32 0.0, %v1685
      %v1687 = vpop.f32.mrb[0].mxu0
      %1688 = vmatprep.mubr.f32.mxu0 %v322
      %1689 = vmatmul.mubr.f32.gmra.mrb[0].mxu0 %v321
      %v1690 = vpop.f32.mrb[0].mxu0
      %v1691 = vadd.f32 0.0, %v1690
      %v1692 = vpop.f32.mrb[0].mxu0
      %1693 = vmatprep.mubr.f32.mxu0 %v327
      %1694 = vmatmul.mubr.f32.gmra.mrb[0].mxu0 %v326
      %v1695 = vpop.f32.mrb[0].mxu0
      %v1696 = vadd.f32 0.0, %v1695
      %v1697 = vpop.f32.mrb[0].mxu0
      %1698 = vmatprep.mubr.f32.mxu0 %v332
      %1699 = vmatmul.mubr.f32.gmra.mrb[0].mxu0 %v331
      %v1700 = vpop.f32.mrb[0].mxu0
      %v1701 = vadd.f32 0.0, %v1700
      %v1702 = vpop.f32.mrb[0].mxu0
      %1703 = vmatprep.mubr.f32.mxu0 %v337
      %1704 = vmatmul.mubr.f32.gmra.mrb[0].mxu0 %v336
      %v1705 = vpop.f32.mrb[0].mxu0
      %v1706 = vadd.f32 0.0, %v1705
      %v1707 = vpop.f32.mrb[0].mxu0
      %1708 = vmatprep.mubr.f32.mxu0 %v342
      %1709 = vmatmul.mubr.f32.gmra.mrb[0].mxu0 %v341
      %v1710 = vpop.f32.mrb[0].mxu0
      %v1711 = vadd.f32 0.0, %v1710
      %v1712 = vpop.f32.mrb[0].mxu0
      %1713 = vmatprep.mubr.f32.mxu0 %v347
      %1714 = vmatmul.mubr.f32.gmra.mrb[0].mxu0 %v346
      %v1715 = vpop.f32.mrb[0].mxu0
      %v1716 = vadd.f32 0.0, %v1715
      %v1717 = vpop.f32.mrb[0].mxu0
      %1718 = vdwg.mxu0
      %1719 = vmatprep.subr.mxu0 0.0
      %1720 = vmatpush1.msra.mxu0 %v1454
      %1721 = vmatprep.subr.mxu0 0.0
      %1722 = vmatpush1.msra.mxu0 %v1455
      %1723 = vmatprep.subr.mxu0 0.0
      %1724 = vmatpush1.msra.mxu0 %v1456
      %1725 = vmatprep.subr.mxu0 0.0
      %1726 = vmatpush1.msra.mxu0 %v1457
      %1727 = vmatprep.subr.mxu0 0.0
      %1728 = vmatpush1.msra.mxu0 %v1458
      %1729 = vmatprep.subr.mxu0 0.0
      %1730 = vmatpush1.msra.mxu0 %v1459
      %1731 = vmatprep.subr.mxu0 0.0
      %1732 = vmatpush1.msra.mxu0 %v1460
      %1733 = vmatprep.subr.mxu0 0.0
      %1734 = vmatpush1.msra.mxu0 %v1461
      %1735 = vmatprep.subr.mxu0 0.0
      %1736 = vmatpush1.msra.mxu0 %v1462
      %1737 = vmatprep.subr.mxu0 0.0
      %1738 = vmatpush1.msra.mxu0 %v1463
      %1739 = vmatprep.subr.mxu0 0.0
      %1740 = vmatpush1.msra.mxu0 %v1464
      %1741 = vmatprep.subr.mxu0 0.0
      %1742 = vmatpush1.msra.mxu0 %v1465
      %1743 = vmatprep.subr.mxu0 0.0
      %1744 = vmatpush1.msra.mxu0 %v1466
      %1745 = vmatprep.subr.mxu0 0.0
      %1746 = vmatpush1.msra.mxu0 %v1467
      %1747 = vmatprep.subr.mxu0 0.0
      %1748 = vmatpush1.msra.mxu0 %v1468
      %1749 = vmatprep.subr.mxu0 0.0
      %1750 = vmatpush1.msra.mxu0 %v1469
      %1751 = vmatprep.subr.mxu0 0.0
      %1752 = vmatpush1.msra.mxu0 %v1470
      %1753 = vmatprep.subr.mxu0 0.0
      %1754 = vmatpush1.msra.mxu0 %v1471
      %1755 = vmatprep.subr.mxu0 0.0
      %1756 = vmatpush1.msra.mxu0 %v1472
      %1757 = vmatprep.subr.mxu0 0.0
      %1758 = vmatpush1.msra.mxu0 %v1473
      %1759 = vmatprep.subr.mxu0 0.0
      %1760 = vmatpush1.msra.mxu0 %v1474
      %1761 = vmatprep.subr.mxu0 0.0
      %1762 = vmatpush1.msra.mxu0 %v1475
      %1763 = vmatprep.subr.mxu0 0.0
      %1764 = vmatpush1.msra.mxu0 %v1476
      %1765 = vmatprep.subr.mxu0 0.0
      %1766 = vmatpush1.msra.mxu0 %v1477
      %1767 = vmatprep.subr.mxu0 0.0
      %1768 = vmatpush1.msra.mxu0 %v1478
      %1769 = vmatprep.subr.mxu0 0.0
      %1770 = vmatpush1.msra.mxu0 %v1479
      %1771 = vmatprep.subr.mxu0 0.0
      %1772 = vmatpush1.msra.mxu0 %v1480
      %1773 = vmatprep.subr.mxu0 0.0
      %1774 = vmatpush1.msra.mxu0 %v1481
      %1775 = vmatprep.subr.mxu0 0.0
      %1776 = vmatpush1.msra.mxu0 %v1482
      %1777 = vmatprep.subr.mxu0 0.0
      %1778 = vmatpush1.msra.mxu0 %v1483
      %1779 = vmatprep.subr.mxu0 0.0
      %1780 = vmatpush1.msra.mxu0 %v1484
      %1781 = vmatprep.subr.mxu0 0.0
      %1782 = vmatpush1.msra.mxu0 %v1485
      %1783 = vmatprep.mubr.f32.mxu0 %v194
      %1784 = vmatmul.mubr.f32.gmra.mrb[0].mxu0 %v193
      %v1785 = vpop.f32.mrb[0].mxu0
      %v1786 = vadd.f32 %v1561, %v1785
      %v1787 = vpop.f32.mrb[0].mxu0
      %1788 = vmatprep.mubr.f32.mxu0 %v199
      %1789 = vmatmul.mubr.f32.gmra.mrb[0].mxu0 %v198
      %v1790 = vpop.f32.mrb[0].mxu0
      %v1791 = vadd.f32 %v1566, %v1790
      %v1792 = vpop.f32.mrb[0].mxu0
      %1793 = vmatprep.mubr.f32.mxu0 %v204
      %1794 = vmatmul.mubr.f32.gmra.mrb[0].mxu0 %v203
      %v1795 = vpop.f32.mrb[0].mxu0
      %v1796 = vadd.f32 %v1571, %v1795
      %v1797 = vpop.f32.mrb[0].mxu0
      %1798 = vmatprep.mubr.f32.mxu0 %v209
      %1799 = vmatmul.mubr.f32.gmra.mrb[0].mxu0 %v208
      %v1800 = vpop.f32.mrb[0].mxu0
      %v1801 = vadd.f32 %v1576, %v1800
      %v1802 = vpop.f32.mrb[0].mxu0
      %1803 = vmatprep.mubr.f32.mxu0 %v214
      %1804 = vmatmul.mubr.f32.gmra.mrb[0].mxu0 %v213
      %v1805 = vpop.f32.mrb[0].mxu0
      %v1806 = vadd.f32 %v1581, %v1805
      %v1807 = vpop.f32.mrb[0].mxu0
      %1808 = vmatprep.mubr.f32.mxu0 %v219
      %1809 = vmatmul.mubr.f32.gmra.mrb[0].mxu0 %v218
      %v1810 = vpop.f32.mrb[0].mxu0
      %v1811 = vadd.f32 %v1586, %v1810
      %v1812 = vpop.f32.mrb[0].mxu0
      %1813 = vmatprep.mubr.f32.mxu0 %v224
      %1814 = vmatmul.mubr.f32.gmra.mrb[0].mxu0 %v223
      %v1815 = vpop.f32.mrb[0].mxu0
      %v1816 = vadd.f32 %v1591, %v1815
      %v1817 = vpop.f32.mrb[0].mxu0
      %1818 = vmatprep.mubr.f32.mxu0 %v229
      %1819 = vmatmul.mubr.f32.gmra.mrb[0].mxu0 %v228
      %v1820 = vpop.f32.mrb[0].mxu0
      %v1821 = vadd.f32 %v1596, %v1820
      %v1822 = vpop.f32.mrb[0].mxu0
      %1823 = vmatprep.mubr.f32.mxu0 %v234
      %1824 = vmatmul.mubr.f32.gmra.mrb[0].mxu0 %v233
      %v1825 = vpop.f32.mrb[0].mxu0
      %v1826 = vadd.f32 %v1601, %v1825
      %v1827 = vpop.f32.mrb[0].mxu0
      %1828 = vmatprep.mubr.f32.mxu0 %v239
      %1829 = vmatmul.mubr.f32.gmra.mrb[0].mxu0 %v238
      %v1830 = vpop.f32.mrb[0].mxu0
      %v1831 = vadd.f32 %v1606, %v1830
      %v1832 = vpop.f32.mrb[0].mxu0
      %1833 = vmatprep.mubr.f32.mxu0 %v244
      %1834 = vmatmul.mubr.f32.gmra.mrb[0].mxu0 %v243
      %v1835 = vpop.f32.mrb[0].mxu0
      %v1836 = vadd.f32 %v1611, %v1835
      %v1837 = vpop.f32.mrb[0].mxu0
      %1838 = vmatprep.mubr.f32.mxu0 %v249
      %1839 = vmatmul.mubr.f32.gmra.mrb[0].mxu0 %v248
      %v1840 = vpop.f32.mrb[0].mxu0
      %v1841 = vadd.f32 %v1616, %v1840
      %v1842 = vpop.f32.mrb[0].mxu0
      %1843 = vmatprep.mubr.f32.mxu0 %v254
      %1844 = vmatmul.mubr.f32.gmra.mrb[0].mxu0 %v253
      %v1845 = vpop.f32.mrb[0].mxu0
      %v1846 = vadd.f32 %v1621, %v1845
      %v1847 = vpop.f32.mrb[0].mxu0
      %1848 = vmatprep.mubr.f32.mxu0 %v259
      %1849 = vmatmul.mubr.f32.gmra.mrb[0].mxu0 %v258
      %v1850 = vpop.f32.mrb[0].mxu0
      %v1851 = vadd.f32 %v1626, %v1850
      %v1852 = vpop.f32.mrb[0].mxu0
      %1853 = vmatprep.mubr.f32.mxu0 %v264
      %1854 = vmatmul.mubr.f32.gmra.mrb[0].mxu0 %v263
      %v1855 = vpop.f32.mrb[0].mxu0
      %v1856 = vadd.f32 %v1631, %v1855
      %v1857 = vpop.f32.mrb[0].mxu0
      %1858 = vmatprep.mubr.f32.mxu0 %v269
      %1859 = vmatmul.mubr.f32.gmra.mrb[0].mxu0 %v268
      %v1860 = vpop.f32.mrb[0].mxu0
      %v1861 = vadd.f32 %v1636, %v1860
      %v1862 = vpop.f32.mrb[0].mxu0
      %1863 = vmatprep.mubr.f32.mxu0 %v274
      %1864 = vmatmul.mubr.f32.gmra.mrb[0].mxu0 %v273
      %v1865 = vpop.f32.mrb[0].mxu0
      %v1866 = vadd.f32 %v1641, %v1865
      %v1867 = vpop.f32.mrb[0].mxu0
      %1868 = vmatprep.mubr.f32.mxu0 %v279
      %1869 = vmatmul.mubr.f32.gmra.mrb[0].mxu0 %v278
      %v1870 = vpop.f32.mrb[0].mxu0
      %v1871 = vadd.f32 %v1646, %v1870
      %v1872 = vpop.f32.mrb[0].mxu0
      %1873 = vmatprep.mubr.f32.mxu0 %v284
      %1874 = vmatmul.mubr.f32.gmra.mrb[0].mxu0 %v283
      %v1875 = vpop.f32.mrb[0].mxu0
      %v1876 = vadd.f32 %v1651, %v1875
      %v1877 = vpop.f32.mrb[0].mxu0
      %1878 = vmatprep.mubr.f32.mxu0 %v289
      %1879 = vmatmul.mubr.f32.gmra.mrb[0].mxu0 %v288
      %v1880 = vpop.f32.mrb[0].mxu0
      %v1881 = vadd.f32 %v1656, %v1880
      %v1882 = vpop.f32.mrb[0].mxu0
      %1883 = vmatprep.mubr.f32.mxu0 %v294
      %1884 = vmatmul.mubr.f32.gmra.mrb[0].mxu0 %v293
      %v1885 = vpop.f32.mrb[0].mxu0
      %v1886 = vadd.f32 %v1661, %v1885
      %v1887 = vpop.f32.mrb[0].mxu0
      %1888 = vmatprep.mubr.f32.mxu0 %v299
      %1889 = vmatmul.mubr.f32.gmra.mrb[0].mxu0 %v298
      %v1890 = vpop.f32.mrb[0].mxu0
      %v1891 = vadd.f32 %v1666, %v1890
      %v1892 = vpop.f32.mrb[0].mxu0
      %1893 = vmatprep.mubr.f32.mxu0 %v304
      %1894 = vmatmul.mubr.f32.gmra.mrb[0].mxu0 %v303
      %v1895 = vpop.f32.mrb[0].mxu0
      %v1896 = vadd.f32 %v1671, %v1895
      %v1897 = vpop.f32.mrb[0].mxu0
      %1898 = vmatprep.mubr.f32.mxu0 %v309
      %1899 = vmatmul.mubr.f32.gmra.mrb[0].mxu0 %v308
      %v1900 = vpop.f32.mrb[0].mxu0
      %v1901 = vadd.f32 %v1676, %v1900
      %v1902 = vpop.f32.mrb[0].mxu0
      %1903 = vmatprep.mubr.f32.mxu0 %v314
      %1904 = vmatmul.mubr.f32.gmra.mrb[0].mxu0 %v313
      %v1905 = vpop.f32.mrb[0].mxu0
      %v1906 = vadd.f32 %v1681, %v1905
      %v1907 = vpop.f32.mrb[0].mxu0
      %1908 = vmatprep.mubr.f32.mxu0 %v319
      %1909 = vmatmul.mubr.f32.gmra.mrb[0].mxu0 %v318
      %v1910 = vpop.f32.mrb[0].mxu0
      %v1911 = vadd.f32 %v1686, %v1910
      %v1912 = vpop.f32.mrb[0].mxu0
      %1913 = vmatprep.mubr.f32.mxu0 %v324
      %1914 = vmatmul.mubr.f32.gmra.mrb[0].mxu0 %v323
      %v1915 = vpop.f32.mrb[0].mxu0
      %v1916 = vadd.f32 %v1691, %v1915
      %v1917 = vpop.f32.mrb[0].mxu0
      %1918 = vmatprep.mubr.f32.mxu0 %v329
      %1919 = vmatmul.mubr.f32.gmra.mrb[0].mxu0 %v328
      %v1920 = vpop.f32.mrb[0].mxu0
      %v1921 = vadd.f32 %v1696, %v1920
      %v1922 = vpop.f32.mrb[0].mxu0
      %1923 = vmatprep.mubr.f32.mxu0 %v334
      %1924 = vmatmul.mubr.f32.gmra.mrb[0].mxu0 %v333
      %v1925 = vpop.f32.mrb[0].mxu0
      %v1926 = vadd.f32 %v1701, %v1925
      %v1927 = vpop.f32.mrb[0].mxu0
      %1928 = vmatprep.mubr.f32.mxu0 %v339
      %1929 = vmatmul.mubr.f32.gmra.mrb[0].mxu0 %v338
      %v1930 = vpop.f32.mrb[0].mxu0
      %v1931 = vadd.f32 %v1706, %v1930
      %v1932 = vpop.f32.mrb[0].mxu0
      %1933 = vmatprep.mubr.f32.mxu0 %v344
      %1934 = vmatmul.mubr.f32.gmra.mrb[0].mxu0 %v343
      %v1935 = vpop.f32.mrb[0].mxu0
      %v1936 = vadd.f32 %v1711, %v1935
      %v1937 = vpop.f32.mrb[0].mxu0
      %1938 = vmatprep.mubr.f32.mxu0 %v349
      %1939 = vmatmul.mubr.f32.gmra.mrb[0].mxu0 %v348
      %v1940 = vpop.f32.mrb[0].mxu0
      %v1941 = vadd.f32 %v1716, %v1940
      %v1942 = vpop.f32.mrb[0].mxu0
      %1943 = vdwg.mxu0
      %1944 = vmatprep.subr.mxu0 0.0
      %1945 = vmatpush1.msra.mxu0 %v1486
      %1946 = vmatprep.subr.mxu0 0.0
      %1947 = vmatpush1.msra.mxu0 %v1487
      %1948 = vmatprep.subr.mxu0 0.0
      %1949 = vmatpush1.msra.mxu0 %v1488
      %1950 = vmatprep.subr.mxu0 0.0
      %1951 = vmatpush1.msra.mxu0 %v1489
      %1952 = vmatprep.subr.mxu0 0.0
      %1953 = vmatpush1.msra.mxu0 %v1490
      %1954 = vmatprep.subr.mxu0 0.0
      %1955 = vmatpush1.msra.mxu0 %v1491
      %1956 = vmatprep.subr.mxu0 0.0
      %1957 = vmatpush1.msra.mxu0 %v1492
      %1958 = vmatprep.subr.mxu0 0.0
      %1959 = vmatpush1.msra.mxu0 %v1493
      %1960 = vmatprep.subr.mxu0 0.0
      %1961 = vmatpush1.msra.mxu0 0.0
      %1962 = vmatprep.subr.mxu0 0.0
      %1963 = vmatpush1.msra.mxu0 0.0
      %1964 = vmatprep.subr.mxu0 0.0
      %1965 = vmatpush1.msra.mxu0 0.0
      %1966 = vmatprep.subr.mxu0 0.0
      %1967 = vmatpush1.msra.mxu0 0.0
      %1968 = vmatprep.subr.mxu0 0.0
      %1969 = vmatpush1.msra.mxu0 0.0
      %1970 = vmatprep.subr.mxu0 0.0
      %1971 = vmatpush1.msra.mxu0 0.0
      %1972 = vmatprep.subr.mxu0 0.0
      %1973 = vmatpush1.msra.mxu0 0.0
      %1974 = vmatprep.subr.mxu0 0.0
      %1975 = vmatpush1.msra.mxu0 0.0
      %1976 = vmatprep.subr.mxu0 0.0
      %1977 = vmatpush1.msra.mxu0 0.0
      %1978 = vmatprep.subr.mxu0 0.0
      %1979 = vmatpush1.msra.mxu0 0.0
      %1980 = vmatprep.subr.mxu0 0.0
      %1981 = vmatpush1.msra.mxu0 0.0
      %1982 = vmatprep.subr.mxu0 0.0
      %1983 = vmatpush1.msra.mxu0 0.0
      %1984 = vmatprep.subr.mxu0 0.0
      %1985 = vmatpush1.msra.mxu0 0.0
      %1986 = vmatprep.subr.mxu0 0.0
      %1987 = vmatpush1.msra.mxu0 0.0
      %1988 = vmatprep.subr.mxu0 0.0
      %1989 = vmatpush1.msra.mxu0 0.0
      %1990 = vmatprep.subr.mxu0 0.0
      %1991 = vmatpush1.msra.mxu0 0.0
      %1992 = vmatprep.subr.mxu0 0.0
      %1993 = vmatpush1.msra.mxu0 0.0
      %1994 = vmatprep.subr.mxu0 0.0
      %1995 = vmatpush1.msra.mxu0 0.0
      %1996 = vmatprep.subr.mxu0 0.0
      %1997 = vmatpush1.msra.mxu0 0.0
      %1998 = vmatprep.subr.mxu0 0.0
      %1999 = vmatpush1.msra.mxu0 0.0
      %2000 = vmatprep.subr.mxu0 0.0
      %2001 = vmatpush1.msra.mxu0 0.0
      %2002 = vmatprep.subr.mxu0 0.0
      %2003 = vmatpush1.msra.mxu0 0.0
      %2004 = vmatprep.subr.mxu0 0.0
      %2005 = vmatpush1.msra.mxu0 0.0
      %2006 = vmatprep.subr.mxu0 0.0
      %2007 = vmatpush1.msra.mxu0 0.0
      %2008 = vmatprep.mubr.f32.mxu0 0.0
      %2009 = vmatmul.mubr.f32.gmra.mrb[0].mxu0 %v490
      %v2010 = vpop.f32.mrb[0].mxu0
      %v2011 = vadd.f32 %v1786, %v2010
      %v2012 = vpop.f32.mrb[0].mxu0
      %2013 = vmatprep.mubr.f32.mxu0 0.0
      %2014 = vmatmul.mubr.f32.gmra.mrb[0].mxu0 %v493
      %v2015 = vpop.f32.mrb[0].mxu0
      %v2016 = vadd.f32 %v1791, %v2015
      %v2017 = vpop.f32.mrb[0].mxu0
      %2018 = vmatprep.mubr.f32.mxu0 0.0
      %2019 = vmatmul.mubr.f32.gmra.mrb[0].mxu0 %v496
      %v2020 = vpop.f32.mrb[0].mxu0
      %v2021 = vadd.f32 %v1796, %v2020
      %v2022 = vpop.f32.mrb[0].mxu0
      %2023 = vmatprep.mubr.f32.mxu0 0.0
      %2024 = vmatmul.mubr.f32.gmra.mrb[0].mxu0 %v499
      %v2025 = vpop.f32.mrb[0].mxu0
      %v2026 = vadd.f32 %v1801, %v2025
      %v2027 = vpop.f32.mrb[0].mxu0
      %2028 = vmatprep.mubr.f32.mxu0 0.0
      %2029 = vmatmul.mubr.f32.gmra.mrb[0].mxu0 %v502
      %v2030 = vpop.f32.mrb[0].mxu0
      %v2031 = vadd.f32 %v1806, %v2030
      %v2032 = vpop.f32.mrb[0].mxu0
      %2033 = vmatprep.mubr.f32.mxu0 0.0
      %2034 = vmatmul.mubr.f32.gmra.mrb[0].mxu0 %v505
      %v2035 = vpop.f32.mrb[0].mxu0
      %v2036 = vadd.f32 %v1811, %v2035
      %v2037 = vpop.f32.mrb[0].mxu0
      %2038 = vmatprep.mubr.f32.mxu0 0.0
      %2039 = vmatmul.mubr.f32.gmra.mrb[0].mxu0 %v508
      %v2040 = vpop.f32.mrb[0].mxu0
      %v2041 = vadd.f32 %v1816, %v2040
      %v2042 = vpop.f32.mrb[0].mxu0
      %2043 = vmatprep.mubr.f32.mxu0 0.0
      %2044 = vmatmul.mubr.f32.gmra.mrb[0].mxu0 %v511
      %v2045 = vpop.f32.mrb[0].mxu0
      %v2046 = vadd.f32 %v1821, %v2045
      %v2047 = vpop.f32.mrb[0].mxu0
      %2048 = vmatprep.mubr.f32.mxu0 0.0
      %2049 = vmatmul.mubr.f32.gmra.mrb[0].mxu0 %v514
      %v2050 = vpop.f32.mrb[0].mxu0
      %v2051 = vadd.f32 %v1826, %v2050
      %v2052 = vpop.f32.mrb[0].mxu0
      %2053 = vmatprep.mubr.f32.mxu0 0.0
      %2054 = vmatmul.mubr.f32.gmra.mrb[0].mxu0 %v517
      %v2055 = vpop.f32.mrb[0].mxu0
      %v2056 = vadd.f32 %v1831, %v2055
      %v2057 = vpop.f32.mrb[0].mxu0
      %2058 = vmatprep.mubr.f32.mxu0 0.0
      %2059 = vmatmul.mubr.f32.gmra.mrb[0].mxu0 %v520
      %v2060 = vpop.f32.mrb[0].mxu0
      %v2061 = vadd.f32 %v1836, %v2060
      %v2062 = vpop.f32.mrb[0].mxu0
      %2063 = vmatprep.mubr.f32.mxu0 0.0
      %2064 = vmatmul.mubr.f32.gmra.mrb[0].mxu0 %v523
      %v2065 = vpop.f32.mrb[0].mxu0
      %v2066 = vadd.f32 %v1841, %v2065
      %v2067 = vpop.f32.mrb[0].mxu0
      %2068 = vmatprep.mubr.f32.mxu0 0.0
      %2069 = vmatmul.mubr.f32.gmra.mrb[0].mxu0 %v526
      %v2070 = vpop.f32.mrb[0].mxu0
      %v2071 = vadd.f32 %v1846, %v2070
      %v2072 = vpop.f32.mrb[0].mxu0
      %2073 = vmatprep.mubr.f32.mxu0 0.0
      %2074 = vmatmul.mubr.f32.gmra.mrb[0].mxu0 %v529
      %v2075 = vpop.f32.mrb[0].mxu0
      %v2076 = vadd.f32 %v1851, %v2075
      %v2077 = vpop.f32.mrb[0].mxu0
      %2078 = vmatprep.mubr.f32.mxu0 0.0
      %2079 = vmatmul.mubr.f32.gmra.mrb[0].mxu0 %v532
      %v2080 = vpop.f32.mrb[0].mxu0
      %v2081 = vadd.f32 %v1856, %v2080
      %v2082 = vpop.f32.mrb[0].mxu0
      %2083 = vmatprep.mubr.f32.mxu0 0.0
      %2084 = vmatmul.mubr.f32.gmra.mrb[0].mxu0 %v535
      %v2085 = vpop.f32.mrb[0].mxu0
      %v2086 = vadd.f32 %v1861, %v2085
      %v2087 = vpop.f32.mrb[0].mxu0
      %2088 = vmatprep.mubr.f32.mxu0 0.0
      %2089 = vmatmul.mubr.f32.gmra.mrb[0].mxu0 %v538
      %v2090 = vpop.f32.mrb[0].mxu0
      %v2091 = vadd.f32 %v1866, %v2090
      %v2092 = vpop.f32.mrb[0].mxu0
      %2093 = vmatprep.mubr.f32.mxu0 0.0
      %2094 = vmatmul.mubr.f32.gmra.mrb[0].mxu0 %v541
      %v2095 = vpop.f32.mrb[0].mxu0
      %v2096 = vadd.f32 %v1871, %v2095
      %v2097 = vpop.f32.mrb[0].mxu0
      %2098 = vmatprep.mubr.f32.mxu0 0.0
      %2099 = vmatmul.mubr.f32.gmra.mrb[0].mxu0 %v544
      %v2100 = vpop.f32.mrb[0].mxu0
      %v2101 = vadd.f32 %v1876, %v2100
      %v2102 = vpop.f32.mrb[0].mxu0
      %2103 = vmatprep.mubr.f32.mxu0 0.0
      %2104 = vmatmul.mubr.f32.gmra.mrb[0].mxu0 %v547
      %v2105 = vpop.f32.mrb[0].mxu0
      %v2106 = vadd.f32 %v1881, %v2105
      %v2107 = vpop.f32.mrb[0].mxu0
      %2108 = vmatprep.mubr.f32.mxu0 0.0
      %2109 = vmatmul.mubr.f32.gmra.mrb[0].mxu0 %v550
      %v2110 = vpop.f32.mrb[0].mxu0
      %v2111 = vadd.f32 %v1886, %v2110
      %v2112 = vpop.f32.mrb[0].mxu0
      %2113 = vmatprep.mubr.f32.mxu0 0.0
      %2114 = vmatmul.mubr.f32.gmra.mrb[0].mxu0 %v553
      %v2115 = vpop.f32.mrb[0].mxu0
      %v2116 = vadd.f32 %v1891, %v2115
      %v2117 = vpop.f32.mrb[0].mxu0
      %2118 = vmatprep.mubr.f32.mxu0 0.0
      %2119 = vmatmul.mubr.f32.gmra.mrb[0].mxu0 %v556
      %v2120 = vpop.f32.mrb[0].mxu0
      %v2121 = vadd.f32 %v1896, %v2120
      %v2122 = vpop.f32.mrb[0].mxu0
      %2123 = vmatprep.mubr.f32.mxu0 0.0
      %2124 = vmatmul.mubr.f32.gmra.mrb[0].mxu0 %v559
      %v2125 = vpop.f32.mrb[0].mxu0
      %v2126 = vadd.f32 %v1901, %v2125
      %v2127 = vpop.f32.mrb[0].mxu0
      %2128 = vmatprep.mubr.f32.mxu0 0.0
      %2129 = vmatmul.mubr.f32.gmra.mrb[0].mxu0 %v562
      %v2130 = vpop.f32.mrb[0].mxu0
      %v2131 = vadd.f32 %v1906, %v2130
      %v2132 = vpop.f32.mrb[0].mxu0
      %2133 = vmatprep.mubr.f32.mxu0 0.0
      %2134 = vmatmul.mubr.f32.gmra.mrb[0].mxu0 %v565
      %v2135 = vpop.f32.mrb[0].mxu0
      %v2136 = vadd.f32 %v1911, %v2135
      %v2137 = vpop.f32.mrb[0].mxu0
      %2138 = vmatprep.mubr.f32.mxu0 0.0
      %2139 = vmatmul.mubr.f32.gmra.mrb[0].mxu0 %v568
      %v2140 = vpop.f32.mrb[0].mxu0
      %v2141 = vadd.f32 %v1916, %v2140
      %v2142 = vpop.f32.mrb[0].mxu0
      %2143 = vmatprep.mubr.f32.mxu0 0.0
      %2144 = vmatmul.mubr.f32.gmra.mrb[0].mxu0 %v571
      %v2145 = vpop.f32.mrb[0].mxu0
      %v2146 = vadd.f32 %v1921, %v2145
      %v2147 = vpop.f32.mrb[0].mxu0
      %2148 = vmatprep.mubr.f32.mxu0 0.0
      %2149 = vmatmul.mubr.f32.gmra.mrb[0].mxu0 %v574
      %v2150 = vpop.f32.mrb[0].mxu0
      %v2151 = vadd.f32 %v1926, %v2150
      %v2152 = vpop.f32.mrb[0].mxu0
      %2153 = vmatprep.mubr.f32.mxu0 0.0
      %2154 = vmatmul.mubr.f32.gmra.mrb[0].mxu0 %v577
      %v2155 = vpop.f32.mrb[0].mxu0
      %v2156 = vadd.f32 %v1931, %v2155
      %v2157 = vpop.f32.mrb[0].mxu0
      %2158 = vmatprep.mubr.f32.mxu0 0.0
      %2159 = vmatmul.mubr.f32.gmra.mrb[0].mxu0 %v580
      %v2160 = vpop.f32.mrb[0].mxu0
      %v2161 = vadd.f32 %v1936, %v2160
      %v2162 = vpop.f32.mrb[0].mxu0
      %2163 = vmatprep.mubr.f32.mxu0 0.0
      %2164 = vmatmul.mubr.f32.gmra.mrb[0].mxu0 %v583
      %v2165 = vpop.f32.mrb[0].mxu0
      %v2166 = vadd.f32 %v1941, %v2165
      %v2167 = vpop.f32.mrb[0].mxu0
      %2168 = vdwg.mxu0
      %2201 = vrot.lane.b32.xlu0 %v2011, 16
      %v2202 = vpop.permute.xlu0 %2201
      %2203 = vrot.lane.b32.xlu0 %v2016, 16
      %v2204 = vpop.permute.xlu0 %2203
      %2205 = vrot.lane.b32.xlu0 %v2021, 16
      %v2206 = vpop.permute.xlu0 %2205
      %2207 = vrot.lane.b32.xlu0 %v2026, 16
      %v2208 = vpop.permute.xlu0 %2207
      %2209 = vrot.lane.b32.xlu0 %v2031, 16
      %v2210 = vpop.permute.xlu0 %2209
      %2211 = vrot.lane.b32.xlu0 %v2036, 16
      %v2212 = vpop.permute.xlu0 %2211
      %2213 = vrot.lane.b32.xlu0 %v2041, 16
      %v2214 = vpop.permute.xlu0 %2213
      %2215 = vrot.lane.b32.xlu0 %v2046, 16
      %v2216 = vpop.permute.xlu0 %2215
      %2217 = vrot.lane.b32.xlu0 %v2051, 16
      %v2218 = vpop.permute.xlu0 %2217
      %2219 = vrot.lane.b32.xlu0 %v2056, 16
      %v2220 = vpop.permute.xlu0 %2219
      %2221 = vrot.lane.b32.xlu0 %v2061, 16
      %v2222 = vpop.permute.xlu0 %2221
      %2223 = vrot.lane.b32.xlu0 %v2066, 16
      %v2224 = vpop.permute.xlu0 %2223
      %2225 = vrot.lane.b32.xlu0 %v2071, 16
      %v2226 = vpop.permute.xlu0 %2225
      %2227 = vrot.lane.b32.xlu0 %v2076, 16
      %v2228 = vpop.permute.xlu0 %2227
      %2229 = vrot.lane.b32.xlu0 %v2081, 16
      %v2230 = vpop.permute.xlu0 %2229
      %2231 = vrot.lane.b32.xlu0 %v2086, 16
      %v2232 = vpop.permute.xlu0 %2231
      %2233 = vrot.lane.b32.xlu0 %v2091, 16
      %v2234 = vpop.permute.xlu0 %2233
      %2235 = vrot.lane.b32.xlu0 %v2096, 16
      %v2236 = vpop.permute.xlu0 %2235
      %2237 = vrot.lane.b32.xlu0 %v2101, 16
      %v2238 = vpop.permute.xlu0 %2237
      %2239 = vrot.lane.b32.xlu0 %v2106, 16
      %v2240 = vpop.permute.xlu0 %2239
      %2241 = vrot.lane.b32.xlu0 %v2111, 16
      %v2242 = vpop.permute.xlu0 %2241
      %2243 = vrot.lane.b32.xlu0 %v2116, 16
      %v2244 = vpop.permute.xlu0 %2243
      %2245 = vrot.lane.b32.xlu0 %v2121, 16
      %v2246 = vpop.permute.xlu0 %2245
      %2247 = vrot.lane.b32.xlu0 %v2126, 16
      %v2248 = vpop.permute.xlu0 %2247
      %2249 = vrot.lane.b32.xlu0 %v2131, 16
      %v2250 = vpop.permute.xlu0 %2249
      %2251 = vrot.lane.b32.xlu0 %v2136, 16
      %v2252 = vpop.permute.xlu0 %2251
      %2253 = vrot.lane.b32.xlu0 %v2141, 16
      %v2254 = vpop.permute.xlu0 %2253
      %2255 = vrot.lane.b32.xlu0 %v2146, 16
      %v2256 = vpop.permute.xlu0 %2255
      %2257 = vrot.lane.b32.xlu0 %v2151, 16
      %v2258 = vpop.permute.xlu0 %2257
      %2259 = vrot.lane.b32.xlu0 %v2156, 16
      %v2260 = vpop.permute.xlu0 %2259
      %2261 = vrot.lane.b32.xlu0 %v2161, 16
      %v2262 = vpop.permute.xlu0 %2261
      %2263 = vrot.lane.b32.xlu0 %v2166, 16
      %v2264 = vpop.permute.xlu0 %2263
      %vm2297 = vcmask 195712
      %2298 = vst.msk [vmem:[%s190] sm:$0xff] %vm2297, %v2202
      %2299 = vst.msk [vmem:[%s190 + $0x8] sm:$0xff] %vm2297, %v2204
      %2300 = vst.msk [vmem:[%s190 + $0x10] sm:$0xff] %vm2297, %v2206
      %2301 = vst.msk [vmem:[%s190 + $0x18] sm:$0xff] %vm2297, %v2208
      %2302 = vst.msk [vmem:[%s190 + $0x20] sm:$0xff] %vm2297, %v2210
      %2303 = vst.msk [vmem:[%s190 + $0x28] sm:$0xff] %vm2297, %v2212
      %2304 = vst.msk [vmem:[%s190 + $0x30] sm:$0xff] %vm2297, %v2214
      %2305 = vst.msk [vmem:[%s190 + $0x38] sm:$0xff] %vm2297, %v2216
      %2306 = vst.msk [vmem:[%s190 + $0x40] sm:$0xff] %vm2297, %v2218
      %2307 = vst.msk [vmem:[%s190 + $0x48] sm:$0xff] %vm2297, %v2220
      %2308 = vst.msk [vmem:[%s190 + $0x50] sm:$0xff] %vm2297, %v2222
      %2309 = vst.msk [vmem:[%s190 + $0x58] sm:$0xff] %vm2297, %v2224
      %2310 = vst.msk [vmem:[%s190 + $0x60] sm:$0xff] %vm2297, %v2226
      %2311 = vst.msk [vmem:[%s190 + $0x68] sm:$0xff] %vm2297, %v2228
      %2312 = vst.msk [vmem:[%s190 + $0x70] sm:$0xff] %vm2297, %v2230
      %2313 = vst.msk [vmem:[%s190 + $0x78] sm:$0xff] %vm2297, %v2232
      %2314 = vst.msk [vmem:[%s190 + $0x80] sm:$0xff] %vm2297, %v2234
      %2315 = vst.msk [vmem:[%s190 + $0x88] sm:$0xff] %vm2297, %v2236
      %2316 = vst.msk [vmem:[%s190 + $0x90] sm:$0xff] %vm2297, %v2238
      %2317 = vst.msk [vmem:[%s190 + $0x98] sm:$0xff] %vm2297, %v2240
      %2318 = vst.msk [vmem:[%s190 + $0xa0] sm:$0xff] %vm2297, %v2242
      %2319 = vst.msk [vmem:[%s190 + $0xa8] sm:$0xff] %vm2297, %v2244
      %2320 = vst.msk [vmem:[%s190 + $0xb0] sm:$0xff] %vm2297, %v2246
      %2321 = vst.msk [vmem:[%s190 + $0xb8] sm:$0xff] %vm2297, %v2248
      %2322 = vst.msk [vmem:[%s190 + $0xc0] sm:$0xff] %vm2297, %v2250
      %2323 = vst.msk [vmem:[%s190 + $0xc8] sm:$0xff] %vm2297, %v2252
      %2324 = vst.msk [vmem:[%s190 + $0xd0] sm:$0xff] %vm2297, %v2254
      %2325 = vst.msk [vmem:[%s190 + $0xd8] sm:$0xff] %vm2297, %v2256
      %2326 = vst.msk [vmem:[%s190 + $0xe0] sm:$0xff] %vm2297, %v2258
      %2327 = vst.msk [vmem:[%s190 + $0xe8] sm:$0xff] %vm2297, %v2260
      %2328 = vst.msk [vmem:[%s190 + $0xf0] sm:$0xff] %vm2297, %v2262
      %2329 = vst.msk [vmem:[%s190 + $0xf8] sm:$0xff] %vm2297, %v2264
      %p2330 = scmp.lt.s32.totalorder %s14, 1
      %s2331 = scalar_select %p2330, %s14, 1
      %s2332 = smul.addr %s2331, 32
      %s2333 = smul.addr %s2332, 8
      %s2334 = scalar_lea.vmem %s3, %s2333
      // Predicated region
      $region33: #{n3net_forward.16} parent=31 // pred_check
        %p2335 = pneg %p105
      $region34: #{n3net_forward.16} parent=31 // pred_check_branch
        %2337 = sbr.rel (%p2335) target = $region36
      $region35: #{n3net_forward.16} parent=31 // pred_region
        _
      $region36: #{n3net_forward.16} parent=31 // pred_fallthru
        _
    $region32: #{n3net_forward.16} parent=5 // pred_fallthru
      _
    %p2338 = scmp.le.s32.totalorder 2, %s9
    // Predicated region
    $region37: #{n3net_forward.16} parent=5 // pred_check
      %p2339 = pneg %p2338
    $region38: #{n3net_forward.16} parent=5 // pred_check_branch
      %2341 = sbr.rel (%p2339) target = $region40
    $region39: #{n3net_forward.16} parent=5 // pred_region
      %s2342 = ssub.s32 %s9, 2
      // Predicated region
      $region41: #{n3net_forward.16} parent=39 // pred_check
        %p2343 = pneg %p111
      $region42: #{n3net_forward.16} parent=39 // pred_check_branch
        %2345 = sbr.rel (%p2343) target = $region44
      $region43: #{n3net_forward.16} parent=39 // pred_region
        %p2346 = scmp.lt.s32.totalorder %s15, 1
        %s2347 = scalar_select %p2346, %s15, 1
        %s2348 = smul.addr %s2347, 32
        %s2349 = smul.addr %s2348, 8
        %s2350 = scalar_lea.vmem %s3, %s2349
      $region44: #{n3net_forward.16} parent=39 // pred_fallthru
        _
    $region40: #{n3net_forward.16} parent=5 // pred_fallthru
      _
  $region6: #{n3net_forward.16} parent=0 // loop_footer
    %s13 = sadd.s32 1, %s9
  $region7: #{n3net_forward.16} parent=0 // loop_footer_branch
    %8 = sbr.rel target = $region3
  $region8: #{n3net_forward.16} parent=0 // loop_exit
    _

// kernel: n3net_forward.17
$region0: #{n3net_forward.17}
  #allocation0 [shape = 'u32[]', space=smem, size = 0x4, offset = 0x4, fixed_abs, tag = 'smem constant byte address 0x4 - core index']
  #allocation1 [shape = 'u32[144,128]{1,0:T(1,128)}', space=vmem, size = 0x12000, scoped, tag = 'internal scratch']
  %s0 = inlined_call_operand.vmem [shape: f32[512,216], index: 0, kind: input, shape index: {}]
  %s1 = inlined_call_operand.vmem [shape: f32[216,128], index: 1, kind: input, shape index: {}]
  %s2 = inlined_call_operand.vmem [shape: f32[1,128], index: 2, kind: input, shape index: {}]
  %s3 = inlined_call_operand.vmem [shape: f32[512,128], index: 3, kind: output, shape index: {}]
  %s4 = sld [smem:[#allocation0]]
  $region45: #{n3net_forward.17} parent=0
    _
  %s6 = ssub.s32 1, %s4
  %s7 = scalar_select 0, %s6, %s4
  loop: start=0, step=1, limit=4
  $region2: #{n3net_forward.17} parent=0 // loop_pre_header
    _
  $region3: #{n3net_forward.17} parent=0 // loop_header
    %s9 = sphi 0, %s13
    %p10 = scmp.ge.s32.totalorder %s9, 4
    %s19 = sphi 0, %s21
    %s22 = sphi 0, %s19
    %s23 = sphi 0, %s22
    %s39 = sphi 0, %s23
    %s43 = sphi 0, %s43
    %s45 = sphi 0, %s43
    %s46 = sphi 0, %s45
    %s60 = sphi 0, %s46
    %s64 = sphi 0, %s64
    %s66 = sphi 0, %s64
    %s67 = sphi 0, %s66
    %s81 = sphi 0, %s67
    %s87 = sphi 0, %s89
    %s90 = sphi 0, %s87
    %s91 = sphi 0, %s90
    %s107 = sphi 0, %s91
  $region4: #{n3net_forward.17} parent=0 // loop_header_branch
    %12 = sbr.rel (%p10) target = $region8
  $region5: #{n3net_forward.17} parent=0 // loop_body
    %s14 = ssub.s32 %s9, 1
    %s15 = ssub.s32 %s9, 2
    %s16 = sadd.s32 %s9, 1
    %s17 = ssub.s32 %s9, %s16
    %p18 = scmp.eq.s32.totalorder %s17, 0
    %s20 = sadd.s32 %s19, 1
    %s21 = scalar_select %p18, %s19, %s20
    %p24 = pneg %p18
    %p25 = scmp.eq.s32.totalorder %s9, 1
    %p26 = por %p24, %p25
    %p27 = scmp.ne.s32.totalorder %s19, %s22
    %p28 = scmp.eq.s32.totalorder %s9, 0
    %p29 = por %p27, %p28
    %p30 = scmp.ne.s32.totalorder %s19, %s22
    %p31 = scmp.eq.s32.totalorder %s14, 1
    %p32 = por %p30, %p31
    %p33 = scmp.ne.s32.totalorder %s22, %s23
    %p34 = scmp.eq.s32.totalorder %s14, 0
    %p35 = por %p33, %p34
    %p36 = scmp.ne.s32.totalorder %s22, %s23
    %p37 = scmp.eq.s32.totalorder %s15, 1
    %p38 = por %p36, %p37
    %p40 = scmp.ne.s32.totalorder %s23, %s39
    %p41 = scmp.eq.s32.totalorder %s15, 0
    %p42 = por %p40, %p41
    %s44 = sadd.s32 %s43, 1
    %p47 = scmp.eq.s32.totalorder %s9, 1
    %p48 = scmp.ne.s32.totalorder %s43, %s45
    %p49 = scmp.eq.s32.totalorder %s9, 0
    %p50 = por %p48, %p49
    %p51 = scmp.ne.s32.totalorder %s43, %s45
    %p52 = scmp.eq.s32.totalorder %s14, 1
    %p53 = por %p51, %p52
    %p54 = scmp.ne.s32.totalorder %s45, %s46
    %p55 = scmp.eq.s32.totalorder %s14, 0
    %p56 = por %p54, %p55
    %p57 = scmp.ne.s32.totalorder %s45, %s46
    %p58 = scmp.eq.s32.totalorder %s15, 1
    %p59 = por %p57, %p58
    %p61 = scmp.ne.s32.totalorder %s46, %s60
    %p62 = scmp.eq.s32.totalorder %s15, 0
    %p63 = por %p61, %p62
    %s65 = sadd.s32 %s64, 1
    %p68 = scmp.eq.s32.totalorder %s9, 1
    %p69 = scmp.ne.s32.totalorder %s64, %s66
    %p70 = scmp.eq.s32.totalorder %s9, 0
    %p71 = por %p69, %p70
    %p72 = scmp.ne.s32.totalorder %s64, %s66
    %p73 = scmp.eq.s32.totalorder %s14, 1
    %p74 = por %p72, %p73
    %p75 = scmp.ne.s32.totalorder %s66, %s67
    %p76 = scmp.eq.s32.totalorder %s14, 0
    %p77 = por %p75, %p76
    %p78 = scmp.ne.s32.totalorder %s66, %s67
    %p79 = scmp.eq.s32.totalorder %s15, 1
    %p80 = por %p78, %p79
    %p82 = scmp.ne.s32.totalorder %s67, %s81
    %p83 = scmp.eq.s32.totalorder %s15, 0
    %p84 = por %p82, %p83
    %s85 = ssub.s32 %s9, %s16
    %p86 = scmp.eq.s32.totalorder %s85, 0
    %s88 = sadd.s32 %s87, 1
    %s89 = scalar_select %p86, %s87, %s88
    %p92 = pneg %p86
    %p93 = scmp.eq.s32.totalorder %s9, 1
    %p94 = por %p92, %p93
    %p95 = scmp.ne.s32.totalorder %s87, %s90
    %p96 = scmp.eq.s32.totalorder %s9, 0
    %p97 = por %p95, %p96
    %p98 = scmp.ne.s32.totalorder %s87, %s90
    %p99 = scmp.eq.s32.totalorder %s14, 1
    %p100 = por %p98, %p99
    %p101 = scmp.ne.s32.totalorder %s90, %s91
    %p102 = scmp.eq.s32.totalorder %s14, 0
    %p103 = por %p101, %p102
    %p104 = scmp.ne.s32.totalorder %s90, %s91
    %p105 = scmp.eq.s32.totalorder %s15, 1
    %p106 = por %p104, %p105
    %p108 = scmp.ne.s32.totalorder %s91, %s107
    %p109 = scmp.eq.s32.totalorder %s15, 0
    %p110 = por %p108, %p109
    %p111 = scmp.le.s32.totalorder 1, %s9
    %p112 = scmp.lt.s32.totalorder %s9, 3
    %p113 = pnand %p111, %p112
    %p114 = pneg %p113
    // Predicated region
    $region9: #{n3net_forward.17} parent=5 // pred_check
      _
    $region10: #{n3net_forward.17} parent=5 // pred_check_branch
      %116 = sbr.rel (%p113) target = $region12
    $region11: #{n3net_forward.17} parent=5 // pred_region
      %s117 = ssub.s32 %s9, 1
      // Predicated region
      $region13: #{n3net_forward.17} parent=11 // pred_check
        %p118 = pneg %p56
      $region14: #{n3net_forward.17} parent=11 // pred_check_branch
        %120 = sbr.rel (%p118) target = $region16
      $region15: #{n3net_forward.17} parent=11 // pred_region
        _
      $region16: #{n3net_forward.17} parent=11 // pred_fallthru
        _
      // Predicated region
      $region17: #{n3net_forward.17} parent=11 // pred_check
        %p121 = pneg %p77
      $region18: #{n3net_forward.17} parent=11 // pred_check_branch
        %123 = sbr.rel (%p121) target = $region20
      $region19: #{n3net_forward.17} parent=11 // pred_region
        _
      $region20: #{n3net_forward.17} parent=11 // pred_fallthru
        _
    $region12: #{n3net_forward.17} parent=5 // pred_fallthru
      _
    %p124 = scmp.lt.s32.totalorder %s9, 2
    // Predicated region
    $region21: #{n3net_forward.17} parent=5 // pred_check
      %p125 = pneg %p124
    $region22: #{n3net_forward.17} parent=5 // pred_check_branch
      %127 = sbr.rel (%p125) target = $region24
    $region23: #{n3net_forward.17} parent=5 // pred_region
      // Predicated region
      $region25: #{n3net_forward.17} parent=23 // pred_check
        %p128 = pneg %p29
      $region26: #{n3net_forward.17} parent=23 // pred_check_branch
        %130 = sbr.rel (%p128) target = $region28
      $region27: #{n3net_forward.17} parent=23 // pred_region
        %s131 = smul.u32 32, %s9
        %p132 = scmp.lt.s32.totalorder %s131, 63
        %s133 = scalar_select %p132, %s131, 63
        %s134 = smul.addr %s133, 2
        %s135 = smul.addr %s134, 8
        %s136 = scalar_lea.vmem %s0, %s135
        %s137 = smul.u32 32, %s9
      $region28: #{n3net_forward.17} parent=23 // pred_fallthru
        _
    $region24: #{n3net_forward.17} parent=5 // pred_fallthru
      _
    %p138 = scmp.le.s32.totalorder 1, %s9
    %p139 = scmp.lt.s32.totalorder %s9, 3
    %p140 = pnand %p138, %p139
    %p141 = pneg %p140
    // Predicated region
    $region29: #{n3net_forward.17} parent=5 // pred_check
      _
    $region30: #{n3net_forward.17} parent=5 // pred_check_branch
      %143 = sbr.rel (%p140) target = $region32
    $region31: #{n3net_forward.17} parent=5 // pred_region
      %s144 = ssub.s32 %s9, 1
      %s145 = smul.u32 32, %s14
      %p146 = scmp.lt.s32.totalorder %s145, 63
      %s147 = scalar_select %p146, %s145, 63
      %s148 = smul.addr %s147, 2
      %s149 = smul.addr %s148, 8
      %s150 = scalar_lea.vmem %s0, %s149
      %p151 = pneg %p35
      %p152 = pneg %p32
      %p153 = pneg %p56
      %p154 = pneg %p53
      %p155 = pneg %p77
      %p156 = pneg %p74
      %p157 = pneg %p103
      %p158 = pneg %p100
      %s159 = smul.u32 32, %s14
      %p160 = scmp.lt.s32.totalorder %s159, 63
      %s161 = scalar_select %p160, %s159, 63
      %s162 = smul.addr %s161, 8
      %s163 = scalar_lea.vmem %s3, %s162
      %s164 = smul.u32 32, %s14
      %p165 = scmp.lt.s32.totalorder %s164, 63
      %s166 = scalar_select %p165, %s164, 63
      %s167 = smul.addr %s166, 2
      %s168 = smul.addr %s167, 8
      %s169 = scalar_lea.vmem %s0, %s168
      %s170 = smul.u32 32, %s14
      %s171 = smul.u32 32, %s14
      %p172 = scmp.lt.s32.totalorder %s171, 63
      %s173 = scalar_select %p172, %s171, 63
      %s174 = smul.addr %s173, 8
      %s175 = scalar_lea.vmem %s3, %s174
      %s176 = smul.u32 32, %s14
      %v177 = vld [vmem:[%s169] sm:$0xff]
      %v178 = vld [vmem:[%s169 + $0x8] sm:$0xff]
      %v179 = vld [vmem:[%s169 + $0x10] sm:$0xff]
      %v180 = vld [vmem:[%s169 + $0x18] sm:$0xff]
      %v181 = vld [vmem:[%s169 + $0x20] sm:$0xff]
      %v182 = vld [vmem:[%s169 + $0x28] sm:$0xff]
      %v183 = vld [vmem:[%s169 + $0x30] sm:$0xff]
      %v184 = vld [vmem:[%s169 + $0x38] sm:$0xff]
      %v185 = vld [vmem:[%s169 + $0x40] sm:$0xff]
      %v186 = vld [vmem:[%s169 + $0x48] sm:$0xff]
      %v187 = vld [vmem:[%s169 + $0x50] sm:$0xff]
      %v188 = vld [vmem:[%s169 + $0x58] sm:$0xff]
      %v189 = vld [vmem:[%s169 + $0x60] sm:$0xff]
      %v190 = vld [vmem:[%s169 + $0x68] sm:$0xff]
      %v191 = vld [vmem:[%s169 + $0x70] sm:$0xff]
      %v192 = vld [vmem:[%s169 + $0x78] sm:$0xff]
      %v193 = vld [vmem:[%s169 + $0x80] sm:$0xff]
      %v194 = vld [vmem:[%s169 + $0x88] sm:$0xff]
      %v195 = vld [vmem:[%s169 + $0x90] sm:$0xff]
      %v196 = vld [vmem:[%s169 + $0x98] sm:$0xff]
      %v197 = vld [vmem:[%s169 + $0xa0] sm:$0xff]
      %v198 = vld [vmem:[%s169 + $0xa8] sm:$0xff]
      %v199 = vld [vmem:[%s169 + $0xb0] sm:$0xff]
      %v200 = vld [vmem:[%s169 + $0xb8] sm:$0xff]
      %v201 = vld [vmem:[%s169 + $0xc0] sm:$0xff]
      %v202 = vld [vmem:[%s169 + $0xc8] sm:$0xff]
      %v203 = vld [vmem:[%s169 + $0xd0] sm:$0xff]
      %v204 = vld [vmem:[%s169 + $0xd8] sm:$0xff]
      %v205 = vld [vmem:[%s169 + $0xe0] sm:$0xff]
      %v206 = vld [vmem:[%s169 + $0xe8] sm:$0xff]
      %v207 = vld [vmem:[%s169 + $0xf0] sm:$0xff]
      %v208 = vld [vmem:[%s169 + $0xf8] sm:$0xff]
      %v209 = vld [vmem:[%s169 + $0x100] sm:$0xff]
      %v210 = vld [vmem:[%s169 + $0x108] sm:$0xff]
      %v211 = vld [vmem:[%s169 + $0x110] sm:$0xff]
      %v212 = vld [vmem:[%s169 + $0x118] sm:$0xff]
      %v213 = vld [vmem:[%s169 + $0x120] sm:$0xff]
      %v214 = vld [vmem:[%s169 + $0x128] sm:$0xff]
      %v215 = vld [vmem:[%s169 + $0x130] sm:$0xff]
      %v216 = vld [vmem:[%s169 + $0x138] sm:$0xff]
      %v217 = vld [vmem:[%s169 + $0x140] sm:$0xff]
      %v218 = vld [vmem:[%s169 + $0x148] sm:$0xff]
      %v219 = vld [vmem:[%s169 + $0x150] sm:$0xff]
      %v220 = vld [vmem:[%s169 + $0x158] sm:$0xff]
      %v221 = vld [vmem:[%s169 + $0x160] sm:$0xff]
      %v222 = vld [vmem:[%s169 + $0x168] sm:$0xff]
      %v223 = vld [vmem:[%s169 + $0x170] sm:$0xff]
      %v224 = vld [vmem:[%s169 + $0x178] sm:$0xff]
      %v225 = vld [vmem:[%s169 + $0x180] sm:$0xff]
      %v226 = vld [vmem:[%s169 + $0x188] sm:$0xff]
      %v227 = vld [vmem:[%s169 + $0x190] sm:$0xff]
      %v228 = vld [vmem:[%s169 + $0x198] sm:$0xff]
      %v229 = vld [vmem:[%s169 + $0x1a0] sm:$0xff]
      %v230 = vld [vmem:[%s169 + $0x1a8] sm:$0xff]
      %v231 = vld [vmem:[%s169 + $0x1b0] sm:$0xff]
      %v232 = vld [vmem:[%s169 + $0x1b8] sm:$0xff]
      %v233 = vld [vmem:[%s169 + $0x1c0] sm:$0xff]
      %v234 = vld [vmem:[%s169 + $0x1c8] sm:$0xff]
      %v235 = vld [vmem:[%s169 + $0x1d0] sm:$0xff]
      %v236 = vld [vmem:[%s169 + $0x1d8] sm:$0xff]
      %v237 = vld [vmem:[%s169 + $0x1e0] sm:$0xff]
      %v238 = vld [vmem:[%s169 + $0x1e8] sm:$0xff]
      %v239 = vld [vmem:[%s169 + $0x1f0] sm:$0xff]
      %v240 = vld [vmem:[%s169 + $0x1f8] sm:$0xff]
      %v241 = vld [vmem:[%s1] sm:$0xff]
      %v242 = vld [vmem:[%s1 + $0x8] sm:$0xff]
      %v243 = vld [vmem:[%s1 + $0x10] sm:$0xff]
      %v244 = vld [vmem:[%s1 + $0x18] sm:$0xff]
      %v245 = vld [vmem:[%s1 + $0x20] sm:$0xff]
      %v246 = vld [vmem:[%s1 + $0x28] sm:$0xff]
      %v247 = vld [vmem:[%s1 + $0x30] sm:$0xff]
      %v248 = vld [vmem:[%s1 + $0x38] sm:$0xff]
      %v249 = vld [vmem:[%s1 + $0x40] sm:$0xff]
      %v250 = vld [vmem:[%s1 + $0x48] sm:$0xff]
      %v251 = vld [vmem:[%s1 + $0x50] sm:$0xff]
      %v252 = vld [vmem:[%s1 + $0x58] sm:$0xff]
      %v253 = vld [vmem:[%s1 + $0x60] sm:$0xff]
      %v254 = vld [vmem:[%s1 + $0x68] sm:$0xff]
      %v255 = vld [vmem:[%s1 + $0x70] sm:$0xff]
      %v256 = vld [vmem:[%s1 + $0x78] sm:$0xff]
      %v257 = vld [vmem:[%s1 + $0x80] sm:$0xff]
      %v258 = vld [vmem:[%s1 + $0x88] sm:$0xff]
      %v259 = vld [vmem:[%s1 + $0x90] sm:$0xff]
      %v260 = vld [vmem:[%s1 + $0x98] sm:$0xff]
      %v261 = vld [vmem:[%s1 + $0xa0] sm:$0xff]
      %v262 = vld [vmem:[%s1 + $0xa8] sm:$0xff]
      %v263 = vld [vmem:[%s1 + $0xb0] sm:$0xff]
      %v264 = vld [vmem:[%s1 + $0xb8] sm:$0xff]
      %v265 = vld [vmem:[%s1 + $0xc0] sm:$0xff]
      %v266 = vld [vmem:[%s1 + $0xc8] sm:$0xff]
      %v267 = vld [vmem:[%s1 + $0xd0] sm:$0xff]
      %v268 = vld [vmem:[%s2] sm:$0x1]
      %v270 = vlaneseq
      %v271 = vshrl.u32 %v270, 7
      %v272 = vsub.s32 0, %v271
      %v273 = vrot.slane %v268, %v272
      %vm275 = vcmask 719872
      %v277 = vsel %vm275, %v178, 0
      %v280 = vsel %vm275, %v180, 0
      %v283 = vsel %vm275, %v182, 0
      %v286 = vsel %vm275, %v184, 0
      %v289 = vsel %vm275, %v186, 0
      %v292 = vsel %vm275, %v188, 0
      %v295 = vsel %vm275, %v190, 0
      %v298 = vsel %vm275, %v192, 0
      %v301 = vsel %vm275, %v194, 0
      %v304 = vsel %vm275, %v196, 0
      %v307 = vsel %vm275, %v198, 0
      %v310 = vsel %vm275, %v200, 0
      %v313 = vsel %vm275, %v202, 0
      %v316 = vsel %vm275, %v204, 0
      %v319 = vsel %vm275, %v206, 0
      %v322 = vsel %vm275, %v208, 0
      %v325 = vsel %vm275, %v210, 0
      %v328 = vsel %vm275, %v212, 0
      %v331 = vsel %vm275, %v214, 0
      %v334 = vsel %vm275, %v216, 0
      %v337 = vsel %vm275, %v218, 0
      %v340 = vsel %vm275, %v220, 0
      %v343 = vsel %vm275, %v222, 0
      %v346 = vsel %vm275, %v224, 0
      %v349 = vsel %vm275, %v226, 0
      %v352 = vsel %vm275, %v228, 0
      %v355 = vsel %vm275, %v230, 0
      %v358 = vsel %vm275, %v232, 0
      %v361 = vsel %vm275, %v234, 0
      %v364 = vsel %vm275, %v236, 0
      %v367 = vsel %vm275, %v238, 0
      %v370 = vsel %vm275, %v240, 0
      %372 = vmatprep.subr.mxu0 0.0
      %373 = vmatpush1.msra.mxu0 %v241
      %374 = vmatprep.subr.mxu0 0.0
      %375 = vmatpush1.msra.mxu0 %v242
      %376 = vmatprep.subr.mxu0 0.0
      %377 = vmatpush1.msra.mxu0 %v243
      %378 = vmatprep.subr.mxu0 0.0
      %379 = vmatpush1.msra.mxu0 %v244
      %380 = vmatprep.subr.mxu0 0.0
      %381 = vmatpush1.msra.mxu0 %v245
      %382 = vmatprep.subr.mxu0 0.0
      %383 = vmatpush1.msra.mxu0 %v246
      %384 = vmatprep.subr.mxu0 0.0
      %385 = vmatpush1.msra.mxu0 %v247
      %386 = vmatprep.subr.mxu0 0.0
      %387 = vmatpush1.msra.mxu0 %v248
      %388 = vmatprep.subr.mxu0 0.0
      %389 = vmatpush1.msra.mxu0 %v249
      %390 = vmatprep.subr.mxu0 0.0
      %391 = vmatpush1.msra.mxu0 %v250
      %392 = vmatprep.subr.mxu0 0.0
      %393 = vmatpush1.msra.mxu0 %v251
      %394 = vmatprep.subr.mxu0 0.0
      %395 = vmatpush1.msra.mxu0 %v252
      %396 = vmatprep.subr.mxu0 0.0
      %397 = vmatpush1.msra.mxu0 %v253
      %398 = vmatprep.subr.mxu0 0.0
      %399 = vmatpush1.msra.mxu0 %v254
      %400 = vmatprep.subr.mxu0 0.0
      %401 = vmatpush1.msra.mxu0 %v255
      %402 = vmatprep.subr.mxu0 0.0
      %403 = vmatpush1.msra.mxu0 %v256
      %404 = vmatprep.subr.mxu0 0.0
      %405 = vmatpush1.msra.mxu0 %v257
      %406 = vmatprep.subr.mxu0 0.0
      %407 = vmatpush1.msra.mxu0 %v258
      %408 = vmatprep.subr.mxu0 0.0
      %409 = vmatpush1.msra.mxu0 %v259
      %410 = vmatprep.subr.mxu0 0.0
      %411 = vmatpush1.msra.mxu0 %v260
      %412 = vmatprep.subr.mxu0 0.0
      %413 = vmatpush1.msra.mxu0 %v261
      %414 = vmatprep.subr.mxu0 0.0
      %415 = vmatpush1.msra.mxu0 %v262
      %416 = vmatprep.subr.mxu0 0.0
      %417 = vmatpush1.msra.mxu0 %v263
      %418 = vmatprep.subr.mxu0 0.0
      %419 = vmatpush1.msra.mxu0 %v264
      %420 = vmatprep.subr.mxu0 0.0
      %421 = vmatpush1.msra.mxu0 %v265
      %422 = vmatprep.subr.mxu0 0.0
      %423 = vmatpush1.msra.mxu0 %v266
      %424 = vmatprep.subr.mxu0 0.0
      %425 = vmatpush1.msra.mxu0 %v267
      %426 = vmatprep.subr.mxu0 0.0
      %427 = vmatpush1.msra.mxu0 0.0
      %428 = vmatprep.subr.mxu0 0.0
      %429 = vmatpush1.msra.mxu0 0.0
      %430 = vmatprep.subr.mxu0 0.0
      %431 = vmatpush1.msra.mxu0 0.0
      %432 = vmatprep.subr.mxu0 0.0
      %433 = vmatpush1.msra.mxu0 0.0
      %434 = vmatprep.subr.mxu0 0.0
      %435 = vmatpush1.msra.mxu0 0.0
      %436 = vmatprep.mubr.f32.mxu0 %v277
      %437 = vmatmul.mubr.f32.gmra.mrb[0].mxu0 %v177
      %v438 = vpop.f32.mrb[0].mxu0
      %v439 = vadd.f32 %v273, %v438
      %v440 = vpop.f32.mrb[0].mxu0
      %441 = vmatprep.mubr.f32.mxu0 %v280
      %442 = vmatmul.mubr.f32.gmra.mrb[0].mxu0 %v179
      %v443 = vpop.f32.mrb[0].mxu0
      %v444 = vadd.f32 %v273, %v443
      %v445 = vpop.f32.mrb[0].mxu0
      %446 = vmatprep.mubr.f32.mxu0 %v283
      %447 = vmatmul.mubr.f32.gmra.mrb[0].mxu0 %v181
      %v448 = vpop.f32.mrb[0].mxu0
      %v449 = vadd.f32 %v273, %v448
      %v450 = vpop.f32.mrb[0].mxu0
      %451 = vmatprep.mubr.f32.mxu0 %v286
      %452 = vmatmul.mubr.f32.gmra.mrb[0].mxu0 %v183
      %v453 = vpop.f32.mrb[0].mxu0
      %v454 = vadd.f32 %v273, %v453
      %v455 = vpop.f32.mrb[0].mxu0
      %456 = vmatprep.mubr.f32.mxu0 %v289
      %457 = vmatmul.mubr.f32.gmra.mrb[0].mxu0 %v185
      %v458 = vpop.f32.mrb[0].mxu0
      %v459 = vadd.f32 %v273, %v458
      %v460 = vpop.f32.mrb[0].mxu0
      %461 = vmatprep.mubr.f32.mxu0 %v292
      %462 = vmatmul.mubr.f32.gmra.mrb[0].mxu0 %v187
      %v463 = vpop.f32.mrb[0].mxu0
      %v464 = vadd.f32 %v273, %v463
      %v465 = vpop.f32.mrb[0].mxu0
      %466 = vmatprep.mubr.f32.mxu0 %v295
      %467 = vmatmul.mubr.f32.gmra.mrb[0].mxu0 %v189
      %v468 = vpop.f32.mrb[0].mxu0
      %v469 = vadd.f32 %v273, %v468
      %v470 = vpop.f32.mrb[0].mxu0
      %471 = vmatprep.mubr.f32.mxu0 %v298
      %472 = vmatmul.mubr.f32.gmra.mrb[0].mxu0 %v191
      %v473 = vpop.f32.mrb[0].mxu0
      %v474 = vadd.f32 %v273, %v473
      %v475 = vpop.f32.mrb[0].mxu0
      %476 = vmatprep.mubr.f32.mxu0 %v301
      %477 = vmatmul.mubr.f32.gmra.mrb[0].mxu0 %v193
      %v478 = vpop.f32.mrb[0].mxu0
      %v479 = vadd.f32 %v273, %v478
      %v480 = vpop.f32.mrb[0].mxu0
      %481 = vmatprep.mubr.f32.mxu0 %v304
      %482 = vmatmul.mubr.f32.gmra.mrb[0].mxu0 %v195
      %v483 = vpop.f32.mrb[0].mxu0
      %v484 = vadd.f32 %v273, %v483
      %v485 = vpop.f32.mrb[0].mxu0
      %486 = vmatprep.mubr.f32.mxu0 %v307
      %487 = vmatmul.mubr.f32.gmra.mrb[0].mxu0 %v197
      %v488 = vpop.f32.mrb[0].mxu0
      %v489 = vadd.f32 %v273, %v488
      %v490 = vpop.f32.mrb[0].mxu0
      %491 = vmatprep.mubr.f32.mxu0 %v310
      %492 = vmatmul.mubr.f32.gmra.mrb[0].mxu0 %v199
      %v493 = vpop.f32.mrb[0].mxu0
      %v494 = vadd.f32 %v273, %v493
      %v495 = vpop.f32.mrb[0].mxu0
      %496 = vmatprep.mubr.f32.mxu0 %v313
      %497 = vmatmul.mubr.f32.gmra.mrb[0].mxu0 %v201
      %v498 = vpop.f32.mrb[0].mxu0
      %v499 = vadd.f32 %v273, %v498
      %v500 = vpop.f32.mrb[0].mxu0
      %501 = vmatprep.mubr.f32.mxu0 %v316
      %502 = vmatmul.mubr.f32.gmra.mrb[0].mxu0 %v203
      %v503 = vpop.f32.mrb[0].mxu0
      %v504 = vadd.f32 %v273, %v503
      %v505 = vpop.f32.mrb[0].mxu0
      %506 = vmatprep.mubr.f32.mxu0 %v319
      %507 = vmatmul.mubr.f32.gmra.mrb[0].mxu0 %v205
      %v508 = vpop.f32.mrb[0].mxu0
      %v509 = vadd.f32 %v273, %v508
      %v510 = vpop.f32.mrb[0].mxu0
      %511 = vmatprep.mubr.f32.mxu0 %v322
      %512 = vmatmul.mubr.f32.gmra.mrb[0].mxu0 %v207
      %v513 = vpop.f32.mrb[0].mxu0
      %v514 = vadd.f32 %v273, %v513
      %v515 = vpop.f32.mrb[0].mxu0
      %516 = vmatprep.mubr.f32.mxu0 %v325
      %517 = vmatmul.mubr.f32.gmra.mrb[0].mxu0 %v209
      %v518 = vpop.f32.mrb[0].mxu0
      %v519 = vadd.f32 %v273, %v518
      %v520 = vpop.f32.mrb[0].mxu0
      %521 = vmatprep.mubr.f32.mxu0 %v328
      %522 = vmatmul.mubr.f32.gmra.mrb[0].mxu0 %v211
      %v523 = vpop.f32.mrb[0].mxu0
      %v524 = vadd.f32 %v273, %v523
      %v525 = vpop.f32.mrb[0].mxu0
      %526 = vmatprep.mubr.f32.mxu0 %v331
      %527 = vmatmul.mubr.f32.gmra.mrb[0].mxu0 %v213
      %v528 = vpop.f32.mrb[0].mxu0
      %v529 = vadd.f32 %v273, %v528
      %v530 = vpop.f32.mrb[0].mxu0
      %531 = vmatprep.mubr.f32.mxu0 %v334
      %532 = vmatmul.mubr.f32.gmra.mrb[0].mxu0 %v215
      %v533 = vpop.f32.mrb[0].mxu0
      %v534 = vadd.f32 %v273, %v533
      %v535 = vpop.f32.mrb[0].mxu0
      %536 = vmatprep.mubr.f32.mxu0 %v337
      %537 = vmatmul.mubr.f32.gmra.mrb[0].mxu0 %v217
      %v538 = vpop.f32.mrb[0].mxu0
      %v539 = vadd.f32 %v273, %v538
      %v540 = vpop.f32.mrb[0].mxu0
      %541 = vmatprep.mubr.f32.mxu0 %v340
      %542 = vmatmul.mubr.f32.gmra.mrb[0].mxu0 %v219
      %v543 = vpop.f32.mrb[0].mxu0
      %v544 = vadd.f32 %v273, %v543
      %v545 = vpop.f32.mrb[0].mxu0
      %546 = vmatprep.mubr.f32.mxu0 %v343
      %547 = vmatmul.mubr.f32.gmra.mrb[0].mxu0 %v221
      %v548 = vpop.f32.mrb[0].mxu0
      %v549 = vadd.f32 %v273, %v548
      %v550 = vpop.f32.mrb[0].mxu0
      %551 = vmatprep.mubr.f32.mxu0 %v346
      %552 = vmatmul.mubr.f32.gmra.mrb[0].mxu0 %v223
      %v553 = vpop.f32.mrb[0].mxu0
      %v554 = vadd.f32 %v273, %v553
      %v555 = vpop.f32.mrb[0].mxu0
      %556 = vmatprep.mubr.f32.mxu0 %v349
      %557 = vmatmul.mubr.f32.gmra.mrb[0].mxu0 %v225
      %v558 = vpop.f32.mrb[0].mxu0
      %v559 = vadd.f32 %v273, %v558
      %v560 = vpop.f32.mrb[0].mxu0
      %561 = vmatprep.mubr.f32.mxu0 %v352
      %562 = vmatmul.mubr.f32.gmra.mrb[0].mxu0 %v227
      %v563 = vpop.f32.mrb[0].mxu0
      %v564 = vadd.f32 %v273, %v563
      %v565 = vpop.f32.mrb[0].mxu0
      %566 = vmatprep.mubr.f32.mxu0 %v355
      %567 = vmatmul.mubr.f32.gmra.mrb[0].mxu0 %v229
      %v568 = vpop.f32.mrb[0].mxu0
      %v569 = vadd.f32 %v273, %v568
      %v570 = vpop.f32.mrb[0].mxu0
      %571 = vmatprep.mubr.f32.mxu0 %v358
      %572 = vmatmul.mubr.f32.gmra.mrb[0].mxu0 %v231
      %v573 = vpop.f32.mrb[0].mxu0
      %v574 = vadd.f32 %v273, %v573
      %v575 = vpop.f32.mrb[0].mxu0
      %576 = vmatprep.mubr.f32.mxu0 %v361
      %577 = vmatmul.mubr.f32.gmra.mrb[0].mxu0 %v233
      %v578 = vpop.f32.mrb[0].mxu0
      %v579 = vadd.f32 %v273, %v578
      %v580 = vpop.f32.mrb[0].mxu0
      %581 = vmatprep.mubr.f32.mxu0 %v364
      %582 = vmatmul.mubr.f32.gmra.mrb[0].mxu0 %v235
      %v583 = vpop.f32.mrb[0].mxu0
      %v584 = vadd.f32 %v273, %v583
      %v585 = vpop.f32.mrb[0].mxu0
      %586 = vmatprep.mubr.f32.mxu0 %v367
      %587 = vmatmul.mubr.f32.gmra.mrb[0].mxu0 %v237
      %v588 = vpop.f32.mrb[0].mxu0
      %v589 = vadd.f32 %v273, %v588
      %v590 = vpop.f32.mrb[0].mxu0
      %591 = vmatprep.mubr.f32.mxu0 %v370
      %592 = vmatmul.mubr.f32.gmra.mrb[0].mxu0 %v239
      %v593 = vpop.f32.mrb[0].mxu0
      %v594 = vadd.f32 %v273, %v593
      %v595 = vpop.f32.mrb[0].mxu0
      %596 = vdwg.mxu0
      %v597 = vmax.f32 %v439, 0.0
      %v598 = vmax.f32 %v444, 0.0
      %v599 = vmax.f32 %v449, 0.0
      %v600 = vmax.f32 %v454, 0.0
      %v601 = vmax.f32 %v459, 0.0
      %v602 = vmax.f32 %v464, 0.0
      %v603 = vmax.f32 %v469, 0.0
      %v604 = vmax.f32 %v474, 0.0
      %v605 = vmax.f32 %v479, 0.0
      %v606 = vmax.f32 %v484, 0.0
      %v607 = vmax.f32 %v489, 0.0
      %v608 = vmax.f32 %v494, 0.0
      %v609 = vmax.f32 %v499, 0.0
      %v610 = vmax.f32 %v504, 0.0
      %v611 = vmax.f32 %v509, 0.0
      %v612 = vmax.f32 %v514, 0.0
      %v613 = vmax.f32 %v519, 0.0
      %v614 = vmax.f32 %v524, 0.0
      %v615 = vmax.f32 %v529, 0.0
      %v616 = vmax.f32 %v534, 0.0
      %v617 = vmax.f32 %v539, 0.0
      %v618 = vmax.f32 %v544, 0.0
      %v619 = vmax.f32 %v549, 0.0
      %v620 = vmax.f32 %v554, 0.0
      %v621 = vmax.f32 %v559, 0.0
      %v622 = vmax.f32 %v564, 0.0
      %v623 = vmax.f32 %v569, 0.0
      %v624 = vmax.f32 %v574, 0.0
      %v625 = vmax.f32 %v579, 0.0
      %v626 = vmax.f32 %v584, 0.0
      %v627 = vmax.f32 %v589, 0.0
      %v628 = vmax.f32 %v594, 0.0
      %629 = vst [vmem:[%s175] sm:$0xff] %v597
      %630 = vst [vmem:[%s175 + $0x8] sm:$0xff] %v598
      %631 = vst [vmem:[%s175 + $0x10] sm:$0xff] %v599
      %632 = vst [vmem:[%s175 + $0x18] sm:$0xff] %v600
      %633 = vst [vmem:[%s175 + $0x20] sm:$0xff] %v601
      %634 = vst [vmem:[%s175 + $0x28] sm:$0xff] %v602
      %635 = vst [vmem:[%s175 + $0x30] sm:$0xff] %v603
      %636 = vst [vmem:[%s175 + $0x38] sm:$0xff] %v604
      %637 = vst [vmem:[%s175 + $0x40] sm:$0xff] %v605
      %638 = vst [vmem:[%s175 + $0x48] sm:$0xff] %v606
      %639 = vst [vmem:[%s175 + $0x50] sm:$0xff] %v607
      %640 = vst [vmem:[%s175 + $0x58] sm:$0xff] %v608
      %641 = vst [vmem:[%s175 + $0x60] sm:$0xff] %v609
      %642 = vst [vmem:[%s175 + $0x68] sm:$0xff] %v610
      %643 = vst [vmem:[%s175 + $0x70] sm:$0xff] %v611
      %644 = vst [vmem:[%s175 + $0x78] sm:$0xff] %v612
      %645 = vst [vmem:[%s175 + $0x80] sm:$0xff] %v613
      %646 = vst [vmem:[%s175 + $0x88] sm:$0xff] %v614
      %647 = vst [vmem:[%s175 + $0x90] sm:$0xff] %v615
      %648 = vst [vmem:[%s175 + $0x98] sm:$0xff] %v616
      %649 = vst [vmem:[%s175 + $0xa0] sm:$0xff] %v617
      %650 = vst [vmem:[%s175 + $0xa8] sm:$0xff] %v618
      %651 = vst [vmem:[%s175 + $0xb0] sm:$0xff] %v619
      %652 = vst [vmem:[%s175 + $0xb8] sm:$0xff] %v620
      %653 = vst [vmem:[%s175 + $0xc0] sm:$0xff] %v621
      %654 = vst [vmem:[%s175 + $0xc8] sm:$0xff] %v622
      %655 = vst [vmem:[%s175 + $0xd0] sm:$0xff] %v623
      %656 = vst [vmem:[%s175 + $0xd8] sm:$0xff] %v624
      %657 = vst [vmem:[%s175 + $0xe0] sm:$0xff] %v625
      %658 = vst [vmem:[%s175 + $0xe8] sm:$0xff] %v626
      %659 = vst [vmem:[%s175 + $0xf0] sm:$0xff] %v627
      %660 = vst [vmem:[%s175 + $0xf8] sm:$0xff] %v628
      %s661 = smul.u32 32, %s14
      %p662 = scmp.lt.s32.totalorder %s661, 63
      %s663 = scalar_select %p662, %s661, 63
      %s664 = smul.addr %s663, 8
      %s665 = scalar_lea.vmem %s3, %s664
      // Predicated region
      $region33: #{n3net_forward.17} parent=31 // pred_check
        %p666 = pneg %p100
      $region34: #{n3net_forward.17} parent=31 // pred_check_branch
        %668 = sbr.rel (%p666) target = $region36
      $region35: #{n3net_forward.17} parent=31 // pred_region
        %s669 = smul.u32 32, %s14
      $region36: #{n3net_forward.17} parent=31 // pred_fallthru
        _
    $region32: #{n3net_forward.17} parent=5 // pred_fallthru
      _
    %p670 = scmp.le.s32.totalorder 2, %s9
    // Predicated region
    $region37: #{n3net_forward.17} parent=5 // pred_check
      %p671 = pneg %p670
    $region38: #{n3net_forward.17} parent=5 // pred_check_branch
      %673 = sbr.rel (%p671) target = $region40
    $region39: #{n3net_forward.17} parent=5 // pred_region
      %s674 = ssub.s32 %s9, 2
      // Predicated region
      $region41: #{n3net_forward.17} parent=39 // pred_check
        %p675 = pneg %p106
      $region42: #{n3net_forward.17} parent=39 // pred_check_branch
        %677 = sbr.rel (%p675) target = $region44
      $region43: #{n3net_forward.17} parent=39 // pred_region
        %s678 = smul.u32 32, %s15
        %p679 = scmp.lt.s32.totalorder %s678, 63
        %s680 = scalar_select %p679, %s678, 63
        %s681 = smul.addr %s680, 8
        %s682 = scalar_lea.vmem %s3, %s681
      $region44: #{n3net_forward.17} parent=39 // pred_fallthru
        _
    $region40: #{n3net_forward.17} parent=5 // pred_fallthru
      _
  $region6: #{n3net_forward.17} parent=0 // loop_footer
    %s13 = sadd.s32 1, %s9
  $region7: #{n3net_forward.17} parent=0 // loop_footer_branch
    %8 = sbr.rel target = $region3
  $region8: #{n3net_forward.17} parent=0 // loop_exit
    _

</llo_original>
